<compile_context>
chip_gen: v7x
topology: tpu7x:2x2x1
jax: 0.10.0
libtpu: 0.0.40
codegen_flags: <defaults>
</compile_context>

<pallas_src>
import functools
import math

import numpy as np

import jax
import jax.numpy as jnp
from jax.experimental import pallas as pl
from jax.experimental.pallas import tpu as pltpu


def _zero_map(ndim, i):
    return (0,) * ndim


def _sigmoid(x):
    return 1.0 / (1.0 + jnp.exp(-x))


# ---------------------------------------------------------------------------
# The fused kernel
# ---------------------------------------------------------------------------
_N_CONV_REFS = 16   # w1 b1 w2_0 w2_1 w2_2 b2 w3 b3 w4_0 w4_1 w4_2 b4 w5 b5 w6 b6


def _make_kernel(T, H, num_layers):
    H2, H6 = 2 * H, 6 * H

    def kernel(x_ref, *refs):
        out_ref = refs[-1]
        refs = refs[:-1]

        conv = refs[:_N_CONV_REFS]
        pos = _N_CONV_REFS
        lstm = []
        for li in range(num_layers):
            n = 3 if li == 0 else 4
            lstm.append(refs[pos:pos + n])
            pos += n
        fc1f, fc1l, fc1b, fc2w, fc2b = refs[pos:pos + 5]
        assert pos + 5 == len(refs)

        (w1, b1, w2a, w2b, w2c, b2, w3, b3,
         w4a, w4b, w4c, b4, w5, b5, w6, b6) = conv

        f32 = jnp.float32

        def mm(a, w_ref):
            # weights streamed from VMEM refs at the call site (not hoisted into values)
            return jnp.dot(a, w_ref[...], preferred_element_type=f32)

        # ---- conv stack as banded matmuls on the (B, pos*chan) flattened layout -----------
        x = x_ref[...]                                   # (B, 128) lane-dense
        a = mm(x, w1) + b1[...]                          # conv1 (k5,s2)        -> (B, 62*8)

        # conv2 (1x1) + BN1 + ReLU, with maxpool(k3,s2) folded as column-subsampled mats
        t0 = jnp.maximum(mm(a, w2a) + b2[...], 0.0)
        t1 = jnp.maximum(mm(a, w2b) + b2[...], 0.0)
        t2 = jnp.maximum(mm(a, w2c) + b2[...], 0.0)
        a = jnp.maximum(jnp.maximum(t0, t1), t2)         #                       -> (B, 30*16)

        a = mm(a, w3) + b3[...]                          # conv3 (k3,s2)        -> (B, 14*32)

        # conv4 (1x1) + BN2 + ReLU, with maxpool(k3,s1) folded
        t0 = jnp.maximum(mm(a, w4a) + b4[...], 0.0)
        t1 = jnp.maximum(mm(a, w4b) + b4[...], 0.0)
        t2 = jnp.maximum(mm(a, w4c) + b4[...], 0.0)
        a = jnp.maximum(jnp.maximum(t0, t1), t2)         #                       -> (B, 12*32)

        a = mm(a, w5) + b5[...]                          # conv5 (k4,s1)        -> (B, 9*8)
        a = mm(a, w6) + b6[...]                          # conv6 (k4,s1)        -> (B, T)

        B = x.shape[0]

        # ---- bidirectional LSTM, both directions fused into one 8H-wide gate vector -------
        # gate columns: [i_f i_b f_f f_b o_f o_b g_f g_b]; state layout h/c = [fwd | bwd].
        h_seq = None
        for li in range(num_layers):
            bias = lstm[li][-1][...]                     # (1, 8H) -- the only hoisted weight
            h = jnp.zeros((B, H2), f32)
            c = jnp.zeros((B, H2), f32)
            new_seq = []
            for t in range(T):                           # fully unrolled recurrence
                if li == 0:
                    wih = lstm[0][0]                     # (2, 8H) ref
                    whh = lstm[0][1]                     # (2H, 8H) ref
                    gx = (a[:, t:t + 1] * wih[0:1, :]
                          + a[:, T - 1 - t:T - t] * wih[1:2, :])
                else:
                    pmat, qmat, whh = lstm[li][0], lstm[li][1], lstm[li][2]
                    gx = mm(h_seq[t], pmat) + mm(h_seq[T - 1 - t], qmat)
                gates = gx + mm(h, whh) + bias           # (B, 8H)
                sig = _sigmoid(gates[:, :H6])            # one wide sigmoid: i/f/o both dirs
                g = jnp.tanh(gates[:, H6:])              # one tanh: g of both dirs
                c = sig[:, H2:2 * H2] * c + sig[:, :H2] * g
                h = sig[:, 2 * H2:3 * H2] * jnp.tanh(c)
                new_seq.append(h)
            h_seq = new_seq

        # ---- fused FC head: only h_seq[0] and h_seq[T-1] are needed ------------------------
        fc1 = mm(h_seq[0], fc1f) + mm(h_seq[T - 1], fc1l) + fc1b[...]
        out_ref[...] = mm(fc1, fc2w) + fc2b[...]         # (B, 3)

    return kernel


# ---------------------------------------------------------------------------
# One-time host-side weight repacking: BN fold + banded conv/pool + fused LSTM gate layout
# ---------------------------------------------------------------------------
def prep_params(p, hidden, L):
    H = hidden
    f32 = np.float32
    kp = {}

    def fold_bn(wname, bname, scale=None, shift=None):
        w = np.asarray(p[wname], f32)                    # (Cout, Cin, K)
        b = np.asarray(p[bname], f32)                    # (Cout,)
        if scale is not None:
            scale = np.asarray(scale, f32)
            shift = np.asarray(shift, f32)
            w = w * scale[:, None, None]
            b = b * scale + shift
        return w, b

    def banded(w, b, l_in, stride, out_pos):
        """Conv1d as one matmul on the (position-major, channel-minor) flattened layout."""
        c_out, c_in, k = w.shape
        wb = np.zeros((l_in * c_in, len(out_pos) * c_out), f32)
        for oi, lo in enumerate(out_pos):
            for kk in range(k):
                li = lo * stride + kk
                wb[li * c_in:(li + 1) * c_in, oi * c_out:(oi + 1) * c_out] = w[:, :, kk].T
        bias = np.tile(b, len(out_pos)).reshape(1, -1)
        return jnp.asarray(wb), jnp.asarray(bias)

    # conv-chain lengths
    l1 = (L - 5) // 2 + 1            # conv1 (k5,s2); conv2 is 1x1
    l1p = (l1 - 3) // 2 + 1          # maxpool (k3,s2)
    l3 = (l1p - 3) // 2 + 1          # conv3 (k3,s2); conv4 is 1x1
    l3p = (l3 - 3) // 1 + 1          # maxpool (k3,s1)
    l5 = (l3p - 4) // 1 + 1          # conv5 (k4,s1)
    l6 = (l5 - 4) // 1 + 1           # conv6 (k4,s1) == LSTM seq len T

    w, b = fold_bn("c1_w", "c1_b")
    kp["w1"], kp["b1"] = banded(w, b, L, 2, list(range(l1)))

    # conv2 + BN1 (+ReLU) with the following maxpool(k3,s2) folded: one column-subsampled
    # banded matrix per pool tap, shared bias.
    w, b = fold_bn("c2_w", "c2_b", p["bn1_scale"], p["bn1_shift"])
    for j in range(3):
        kp["w2_%d" % j], kp["b2"] = banded(w, b, l1, 1, [2 * q + j for q in range(l1p)])

    w, b = fold_bn("c3_w", "c3_b")
    kp["w3"], kp["b3"] = banded(w, b, l1p, 2, list(range(l3)))

    # conv4 + BN2 (+ReLU) with maxpool(k3,s1) folded.
    w, b = fold_bn("c4_w", "c4_b", p["bn2_scale"], p["bn2_shift"])
    for j in range(3):
        kp["w4_%d" % j], kp["b4"] = banded(w, b, l3, 1, [q + j for q in range(l3p)])

    w, b = fold_bn("c5_w", "c5_b")
    kp["w5"], kp["b5"] = banded(w, b, l3p, 1, list(range(l5)))
    w, b = fold_bn("c6_w", "c6_b")
    kp["w6"], kp["b6"] = banded(w, b, l5, 1, list(range(l6)))

    # ---- LSTM: fused gate layout, columns [i_f i_b f_f f_b o_f o_b g_f g_b] (each H wide)
    gate_row = {"i": 0, "f": H, "g": 2 * H, "o": 3 * H}      # PyTorch row order i,f,g,o
    gate_col = {"i": 0, "f": 2 * H, "o": 4 * H, "g": 6 * H}  # fused kernel column order
    assert np.asarray(p["lstm"][0]["fwd"]["w_ih"]).shape[1] == 1, \
        "conv stack feeds exactly 1 feature per timestep into the LSTM"

    lstm = []
    for li, layer in enumerate(p["lstm"]):
        in_size = 1 if li == 0 else 2 * H
        whh = np.zeros((2 * H, 8 * H), f32)
        bias = np.zeros((1, 8 * H), f32)
        wih_d = [np.zeros((in_size, 8 * H), f32), np.zeros((in_size, 8 * H), f32)]
        for d, dname in enumerate(("fwd", "bwd")):
            q = layer[dname]
            w_ih = np.asarray(q["w_ih"], f32)
            w_hh = np.asarray(q["w_hh"], f32)
            b_all = np.asarray(q["b_ih"], f32) + np.asarray(q["b_hh"], f32)
            for g in ("i", "f", "o", "g"):
                r0 = gate_row[g]
                c0 = gate_col[g] + d * H
                whh[d * H:(d + 1) * H, c0:c0 + H] = w_hh[r0:r0 + H, :].T
                bias[0, c0:c0 + H] = b_all[r0:r0 + H]
                wih_d[d][:, c0:c0 + H] = w_ih[r0:r0 + H, :].T
        entry = {"whh": jnp.asarray(whh), "b": jnp.asarray(bias)}
        if li == 0:
            entry["wih"] = jnp.asarray(np.concatenate(wih_d, axis=0))            # (2, 8H)
        else:
            # layer-l gates_t = h_prev[t] @ P + h_prev[T-1-t] @ Q (absorbs the fwd/bwd shuffle)
            entry["p"] = jnp.asarray(np.concatenate([wih_d[0][:H, :], wih_d[1][H:, :]], axis=0))
            entry["q"] = jnp.asarray(np.concatenate([wih_d[1][:H, :], wih_d[0][H:, :]], axis=0))
        lstm.append(entry)
    kp["lstm"] = lstm

    # fc head: feat = [h2[0][:, :H] | h2[T-1][:, H:] | h2[T-1][:, :H] | h2[0][:, H:]]
    wt = np.asarray(p["fc1_w"], f32).T                                            # (4H, 64)
    kp["fc1_first"] = jnp.asarray(np.concatenate([wt[0:H, :], wt[3 * H:4 * H, :]], axis=0))
    kp["fc1_last"] = jnp.asarray(np.concatenate([wt[2 * H:3 * H, :], wt[H:2 * H, :]], axis=0))
    kp["fc1_b"] = jnp.asarray(np.asarray(p["fc1_b"], f32).reshape(1, -1))
    kp["fc2_w"] = jnp.asarray(np.asarray(p["fc2_w"], f32).T)                      # (64, 3)
    kp["fc2_b"] = jnp.asarray(np.asarray(p["fc2_b"], f32).reshape(1, -1))
    return kp


# ---------------------------------------------------------------------------
# Forward (single pallas_call, batch-tiled grid)
# ---------------------------------------------------------------------------
def seis_forward(x, kp, *, hidden, b_tile=None):
    N, L = x.shape
    num_layers = len(kp["lstm"])
    T = kp["w6"].shape[1]                    # conv6 has Cout=1 -> columns == seq len

    if b_tile is None:
        # multiple of 8, capped at 128, and >= 2 grid blocks once N is large (v7x megacore).
        b_tile = min(128, max(8, 8 * pl.cdiv(pl.cdiv(N, 2), 8)))
    n_pad = b_tile * pl.cdiv(N, b_tile)

    x_p = x.astype(jnp.float32)
    if n_pad != N:
        x_p = jnp.pad(x_p, ((0, n_pad - N), (0, 0)))

    kernel = _make_kernel(T, hidden, num_layers)

    conv_names = ["w1", "b1", "w2_0", "w2_1", "w2_2", "b2", "w3", "b3",
                  "w4_0", "w4_1", "w4_2", "b4", "w5", "b5", "w6", "b6"]
    operands = [x_p] + [kp[n] for n in conv_names]
    for li, layer in enumerate(kp["lstm"]):
        if li == 0:
            operands += [layer["wih"], layer["whh"], layer["b"]]
        else:
            operands += [layer["p"], layer["q"], layer["whh"], layer["b"]]
    operands += [kp["fc1_first"], kp["fc1_last"], kp["fc1_b"], kp["fc2_w"], kp["fc2_b"]]

    in_specs = [pl.BlockSpec((b_tile, L), lambda i: (i, 0))]
    for op in operands[1:]:
        in_specs.append(pl.BlockSpec(op.shape, functools.partial(_zero_map, op.ndim)))

    out = pl.pallas_call(
        kernel,
        out_shape=jax.ShapeDtypeStruct((n_pad, 3), jnp.float32),
        grid=(n_pad // b_tile,),
        in_specs=in_specs,
        out_specs=pl.BlockSpec((b_tile, 3), lambda i: (i, 0)),
        compiler_params=pltpu.CompilerParams(
            dimension_semantics=("parallel",),          # batch-parallel -> both TCs on v7x
            vmem_limit_bytes=48 * 1024 * 1024),         # headroom for double-buffered weights
    )(*operands)
    return out[:N]


# ---------------------------------------------------------------------------
# Deterministic parameter init (PyTorch-style uniform bounds, synthetic)
# ---------------------------------------------------------------------------
def init_params(key, lstm_inputsize, lstm_hiddensize, lstm_numlayers):
    H = lstm_hiddensize
    keys = iter(jax.random.split(key, 64))

    def u(shape, fan_in):
        bound = 1.0 / math.sqrt(fan_in)
        return jax.random.uniform(next(keys), shape, jnp.float32, -bound, bound)

    p = {}
    conv_cfg = [("c1", 1, 8, 5), ("c2", 8, 16, 1), ("c3", 16, 32, 3),
                ("c4", 32, 32, 1), ("c5", 32, 8, 4), ("c6", 8, 1, 4)]
    for name, cin, cout, k in conv_cfg:
        p[name + "_w"] = u((cout, cin, k), cin * k)
        p[name + "_b"] = u((cout,), cin * k)

    # BatchNorm1d eval-mode: gamma=1, beta=0, running_mean=0, running_var=1, eps=1e-5
    eps = 1e-5
    for name, c in [("bn1", 16), ("bn2", 32)]:
        gamma = jnp.ones((c,), jnp.float32)
        beta = jnp.zeros((c,), jnp.float32)
        mean = jnp.zeros((c,), jnp.float32)
        var = jnp.ones((c,), jnp.float32)
        scale = gamma / jnp.sqrt(var + eps)
        p[name + "_scale"] = scale
        p[name + "_shift"] = beta - mean * scale

    lstm = []
    for layer_idx in range(lstm_numlayers):
        in_size = lstm_inputsize if layer_idx == 0 else 2 * H
        layer = {}
        for d in ("fwd", "bwd"):
            layer[d] = dict(
                w_ih=u((4 * H, in_size), H),
                w_hh=u((4 * H, H), H),
                b_ih=u((4 * H,), H),
                b_hh=u((4 * H,), H),
            )
        lstm.append(layer)
    p["lstm"] = lstm

    p["fc1_w"] = u((64, 4 * H), 4 * H)
    p["fc1_b"] = u((64,), 4 * H)
    p["fc2_w"] = u((3, 64), 64)
    p["fc2_b"] = u((3,), 64)
    return p


# ---------------------------------------------------------------------------
# Pure-JAX reference (for self-check only)
# ---------------------------------------------------------------------------
def _ref_lstm_dir(xs, q):
    H = q["w_hh"].shape[1]
    B = xs.shape[1]
    hp = jax.lax.Precision.HIGHEST

    def step(carry, x_t):
        h, c = carry
        g = (jnp.dot(x_t, q["w_ih"].T, precision=hp)
             + jnp.dot(h, q["w_hh"].T, precision=hp)
             + q["b_ih"] + q["b_hh"])
        i, f, gg, o = jnp.split(g, 4, axis=-1)
        c = _sigmoid(f) * c + _sigmoid(i) * jnp.tanh(gg)
        h = _sigmoid(o) * jnp.tanh(c)
        return (h, c), h

    _, hs = jax.lax.scan(step, (jnp.zeros((B, H)), jnp.zeros((B, H))), xs)
    return hs


def ref_forward(x, p):
    hp = jax.lax.Precision.HIGHEST

    def conv(x, w, b, s):
        y = jax.lax.conv_general_dilated(
            x, w, (s,), "VALID", dimension_numbers=("NCH", "OIH", "NCH"), precision=hp)
        return y + b[None, :, None]

    def mp(x, k, s):
        return jax.lax.reduce_window(x, -jnp.inf, jax.lax.max, (1, 1, k), (1, 1, s), "VALID")

    def bnr(x, sc, sh):
        return jnp.maximum(x * sc[None, :, None] + sh[None, :, None], 0.0)

    x = x[:, None, :]
    x = conv(x, p["c1_w"], p["c1_b"], 2)
    x = conv(x, p["c2_w"], p["c2_b"], 1)
    x = bnr(x, p["bn1_scale"], p["bn1_shift"])
    x = mp(x, 3, 2)
    x = conv(x, p["c3_w"], p["c3_b"], 2)
    x = conv(x, p["c4_w"], p["c4_b"], 1)
    x = bnr(x, p["bn2_scale"], p["bn2_shift"])
    x = mp(x, 3, 1)
    x = conv(x, p["c5_w"], p["c5_b"], 1)
    x = conv(x, p["c6_w"], p["c6_b"], 1)
    seq = jnp.transpose(x, (2, 0, 1))
    for layer in p["lstm"]:
        f = _ref_lstm_dir(seq, layer["fwd"])
        b = _ref_lstm_dir(seq[::-1], layer["bwd"])[::-1]
        seq = jnp.concatenate([f, b], axis=-1)
    feat = jnp.concatenate([seq[0], seq[-1]], axis=-1)
    out = jnp.dot(feat, p["fc1_w"].T, precision=hp) + p["fc1_b"]
    out = jnp.dot(out, p["fc2_w"].T, precision=hp) + p["fc2_b"]
    return out


if __name__ == "__main__":
    key = jax.random.PRNGKey(0)
    k_x, k_p = jax.random.split(key)

    N, L = 16, 128                      # conv stack maps L=128 -> LSTM seq_len T=6
    lstm_inputsize, lstm_hiddensize, lstm_numlayers = 1, 32, 2

    x = jax.random.normal(k_x, (N, L), dtype=jnp.float32)
    params = init_params(k_p, lstm_inputsize, lstm_hiddensize, lstm_numlayers)
    kparams = prep_params(params, lstm_hiddensize, L)   # one-time repack: BN fold + banded conv

    fwd = jax.jit(functools.partial(seis_forward, hidden=lstm_hiddensize))
    out = jax.block_until_ready(fwd(x, kparams))
    assert out.shape == (N, 3) and out.dtype == jnp.float32

    ref = ref_forward(x, params)
    max_err = float(jnp.max(jnp.abs(out - ref)))
    # kernel uses default MXU contraction precision vs. a Precision.HIGHEST reference
    assert max_err < 3e-3, f"mismatch vs pure-JAX reference: max abs err {max_err}"

    print("KERNEL_OK")
</pallas_src>

<mosaic_0001>
module attributes {stable_mosaic.version = 11 : i64} {
  func.func @kernel(%arg0: i32, %arg1: memref<8x128xf32, #tpu.memory_space<vmem>>, %arg2: memref<128x496xf32, #tpu.memory_space<vmem>>, %arg3: memref<1x496xf32, #tpu.memory_space<vmem>>, %arg4: memref<496x480xf32, #tpu.memory_space<vmem>>, %arg5: memref<496x480xf32, #tpu.memory_space<vmem>>, %arg6: memref<496x480xf32, #tpu.memory_space<vmem>>, %arg7: memref<1x480xf32, #tpu.memory_space<vmem>>, %arg8: memref<480x448xf32, #tpu.memory_space<vmem>>, %arg9: memref<1x448xf32, #tpu.memory_space<vmem>>, %arg10: memref<448x384xf32, #tpu.memory_space<vmem>>, %arg11: memref<448x384xf32, #tpu.memory_space<vmem>>, %arg12: memref<448x384xf32, #tpu.memory_space<vmem>>, %arg13: memref<1x384xf32, #tpu.memory_space<vmem>>, %arg14: memref<384x72xf32, #tpu.memory_space<vmem>>, %arg15: memref<1x72xf32, #tpu.memory_space<vmem>>, %arg16: memref<72x6xf32, #tpu.memory_space<vmem>>, %arg17: memref<1x6xf32, #tpu.memory_space<vmem>>, %arg18: memref<2x256xf32, #tpu.memory_space<vmem>>, %arg19: memref<64x256xf32, #tpu.memory_space<vmem>>, %arg20: memref<1x256xf32, #tpu.memory_space<vmem>>, %arg21: memref<64x256xf32, #tpu.memory_space<vmem>>, %arg22: memref<64x256xf32, #tpu.memory_space<vmem>>, %arg23: memref<64x256xf32, #tpu.memory_space<vmem>>, %arg24: memref<1x256xf32, #tpu.memory_space<vmem>>, %arg25: memref<64x64xf32, #tpu.memory_space<vmem>>, %arg26: memref<64x64xf32, #tpu.memory_space<vmem>>, %arg27: memref<1x64xf32, #tpu.memory_space<vmem>>, %arg28: memref<64x3xf32, #tpu.memory_space<vmem>>, %arg29: memref<1x3xf32, #tpu.memory_space<vmem>>, %arg30: memref<8x3xf32, #tpu.memory_space<vmem>>) attributes {dimension_semantics = [#tpu.dimension_semantics<parallel>], iteration_bounds = array<i64: 2>, scalar_prefetch = 0 : i64, scratch_operands = 0 : i64, tpu.core_type = #tpu.core_type<tc>, window_params = [{transform_indices = @transform_0, window_bounds = array<i64: 8, 128>}, {pipeline_mode = #tpu.pipeline_mode<synchronous>, transform_indices = @transform_1, window_bounds = array<i64: 128, 496>}, {pipeline_mode = #tpu.pipeline_mode<synchronous>, transform_indices = @transform_2, window_bounds = array<i64: 1, 496>}, {pipeline_mode = #tpu.pipeline_mode<synchronous>, transform_indices = @transform_3, window_bounds = array<i64: 496, 480>}, {pipeline_mode = #tpu.pipeline_mode<synchronous>, transform_indices = @transform_4, window_bounds = array<i64: 496, 480>}, {pipeline_mode = #tpu.pipeline_mode<synchronous>, transform_indices = @transform_5, window_bounds = array<i64: 496, 480>}, {pipeline_mode = #tpu.pipeline_mode<synchronous>, transform_indices = @transform_6, window_bounds = array<i64: 1, 480>}, {pipeline_mode = #tpu.pipeline_mode<synchronous>, transform_indices = @transform_7, window_bounds = array<i64: 480, 448>}, {pipeline_mode = #tpu.pipeline_mode<synchronous>, transform_indices = @transform_8, window_bounds = array<i64: 1, 448>}, {pipeline_mode = #tpu.pipeline_mode<synchronous>, transform_indices = @transform_9, window_bounds = array<i64: 448, 384>}, {pipeline_mode = #tpu.pipeline_mode<synchronous>, transform_indices = @transform_10, window_bounds = array<i64: 448, 384>}, {pipeline_mode = #tpu.pipeline_mode<synchronous>, transform_indices = @transform_11, window_bounds = array<i64: 448, 384>}, {pipeline_mode = #tpu.pipeline_mode<synchronous>, transform_indices = @transform_12, window_bounds = array<i64: 1, 384>}, {pipeline_mode = #tpu.pipeline_mode<synchronous>, transform_indices = @transform_13, window_bounds = array<i64: 384, 72>}, {pipeline_mode = #tpu.pipeline_mode<synchronous>, transform_indices = @transform_14, window_bounds = array<i64: 1, 72>}, {pipeline_mode = #tpu.pipeline_mode<synchronous>, transform_indices = @transform_15, window_bounds = array<i64: 72, 6>}, {pipeline_mode = #tpu.pipeline_mode<synchronous>, transform_indices = @transform_16, window_bounds = array<i64: 1, 6>}, {pipeline_mode = #tpu.pipeline_mode<synchronous>, transform_indices = @transform_17, window_bounds = array<i64: 2, 256>}, {pipeline_mode = #tpu.pipeline_mode<synchronous>, transform_indices = @transform_18, window_bounds = array<i64: 64, 256>}, {pipeline_mode = #tpu.pipeline_mode<synchronous>, transform_indices = @transform_19, window_bounds = array<i64: 1, 256>}, {pipeline_mode = #tpu.pipeline_mode<synchronous>, transform_indices = @transform_20, window_bounds = array<i64: 64, 256>}, {pipeline_mode = #tpu.pipeline_mode<synchronous>, transform_indices = @transform_21, window_bounds = array<i64: 64, 256>}, {pipeline_mode = #tpu.pipeline_mode<synchronous>, transform_indices = @transform_22, window_bounds = array<i64: 64, 256>}, {pipeline_mode = #tpu.pipeline_mode<synchronous>, transform_indices = @transform_23, window_bounds = array<i64: 1, 256>}, {pipeline_mode = #tpu.pipeline_mode<synchronous>, transform_indices = @transform_24, window_bounds = array<i64: 64, 64>}, {pipeline_mode = #tpu.pipeline_mode<synchronous>, transform_indices = @transform_25, window_bounds = array<i64: 64, 64>}, {pipeline_mode = #tpu.pipeline_mode<synchronous>, transform_indices = @transform_26, window_bounds = array<i64: 1, 64>}, {pipeline_mode = #tpu.pipeline_mode<synchronous>, transform_indices = @transform_27, window_bounds = array<i64: 64, 3>}, {pipeline_mode = #tpu.pipeline_mode<synchronous>, transform_indices = @transform_28, window_bounds = array<i64: 1, 3>}, {transform_indices = @transform_29, window_bounds = array<i64: 8, 3>}]} {
    %c0 = arith.constant 0 : index
    %c0_0 = arith.constant 0 : index
    %0 = vector.load %arg1[%c0, %c0_0] : memref<8x128xf32, #tpu.memory_space<vmem>>, vector<8x128xf32>
    %c0_1 = arith.constant 0 : index
    %c0_2 = arith.constant 0 : index
    %1 = vector.load %arg2[%c0_1, %c0_2] : memref<128x496xf32, #tpu.memory_space<vmem>>, vector<128x496xf32>
    %cst = arith.constant dense<0.000000e+00> : vector<8x496xf32>
    %2 = tpu.matmul %0, %1, %cst {dimension_numbers = #tpu.dot_dimension_numbers<[1], [0], [0], [1], [0, 0, 1, 1], [], []>} : vector<8x128xf32>, vector<128x496xf32>, vector<8x496xf32> -> vector<8x496xf32>
    %c0_3 = arith.constant 0 : index
    %c0_4 = arith.constant 0 : index
    %3 = vector.load %arg3[%c0_3, %c0_4] : memref<1x496xf32, #tpu.memory_space<vmem>>, vector<1x496xf32>
    %4 = vector.broadcast %3 : vector<1x496xf32> to vector<8x496xf32>
    %5 = arith.addf %2, %4 : vector<8x496xf32>
    %c0_5 = arith.constant 0 : index
    %c0_6 = arith.constant 0 : index
    %6 = vector.load %arg4[%c0_5, %c0_6] : memref<496x480xf32, #tpu.memory_space<vmem>>, vector<496x480xf32>
    %cst_7 = arith.constant dense<0.000000e+00> : vector<8x480xf32>
    %7 = tpu.matmul %5, %6, %cst_7 {dimension_numbers = #tpu.dot_dimension_numbers<[1], [0], [0], [1], [0, 0, 1, 1], [], []>} : vector<8x496xf32>, vector<496x480xf32>, vector<8x480xf32> -> vector<8x480xf32>
    %c0_8 = arith.constant 0 : index
    %c0_9 = arith.constant 0 : index
    %8 = vector.load %arg7[%c0_8, %c0_9] : memref<1x480xf32, #tpu.memory_space<vmem>>, vector<1x480xf32>
    %9 = vector.broadcast %8 : vector<1x480xf32> to vector<8x480xf32>
    %10 = arith.addf %7, %9 : vector<8x480xf32>
    %cst_10 = arith.constant 0.000000e+00 : f32
    %11 = vector.broadcast %cst_10 : f32 to vector<8x480xf32>
    %12 = arith.maximumf %10, %11 : vector<8x480xf32>
    %c0_11 = arith.constant 0 : index
    %c0_12 = arith.constant 0 : index
    %13 = vector.load %arg5[%c0_11, %c0_12] : memref<496x480xf32, #tpu.memory_space<vmem>>, vector<496x480xf32>
    %cst_13 = arith.constant dense<0.000000e+00> : vector<8x480xf32>
    %14 = tpu.matmul %5, %13, %cst_13 {dimension_numbers = #tpu.dot_dimension_numbers<[1], [0], [0], [1], [0, 0, 1, 1], [], []>} : vector<8x496xf32>, vector<496x480xf32>, vector<8x480xf32> -> vector<8x480xf32>
    %c0_14 = arith.constant 0 : index
    %c0_15 = arith.constant 0 : index
    %15 = vector.load %arg7[%c0_14, %c0_15] : memref<1x480xf32, #tpu.memory_space<vmem>>, vector<1x480xf32>
    %16 = vector.broadcast %15 : vector<1x480xf32> to vector<8x480xf32>
    %17 = arith.addf %14, %16 : vector<8x480xf32>
    %cst_16 = arith.constant 0.000000e+00 : f32
    %18 = vector.broadcast %cst_16 : f32 to vector<8x480xf32>
    %19 = arith.maximumf %17, %18 : vector<8x480xf32>
    %c0_17 = arith.constant 0 : index
    %c0_18 = arith.constant 0 : index
    %20 = vector.load %arg6[%c0_17, %c0_18] : memref<496x480xf32, #tpu.memory_space<vmem>>, vector<496x480xf32>
    %cst_19 = arith.constant dense<0.000000e+00> : vector<8x480xf32>
    %21 = tpu.matmul %5, %20, %cst_19 {dimension_numbers = #tpu.dot_dimension_numbers<[1], [0], [0], [1], [0, 0, 1, 1], [], []>} : vector<8x496xf32>, vector<496x480xf32>, vector<8x480xf32> -> vector<8x480xf32>
    %c0_20 = arith.constant 0 : index
    %c0_21 = arith.constant 0 : index
    %22 = vector.load %arg7[%c0_20, %c0_21] : memref<1x480xf32, #tpu.memory_space<vmem>>, vector<1x480xf32>
    %23 = vector.broadcast %22 : vector<1x480xf32> to vector<8x480xf32>
    %24 = arith.addf %21, %23 : vector<8x480xf32>
    %cst_22 = arith.constant 0.000000e+00 : f32
    %25 = vector.broadcast %cst_22 : f32 to vector<8x480xf32>
    %26 = arith.maximumf %24, %25 : vector<8x480xf32>
    %27 = arith.maximumf %12, %19 : vector<8x480xf32>
    %28 = arith.maximumf %27, %26 : vector<8x480xf32>
    %c0_23 = arith.constant 0 : index
    %c0_24 = arith.constant 0 : index
    %29 = vector.load %arg8[%c0_23, %c0_24] : memref<480x448xf32, #tpu.memory_space<vmem>>, vector<480x448xf32>
    %cst_25 = arith.constant dense<0.000000e+00> : vector<8x448xf32>
    %30 = tpu.matmul %28, %29, %cst_25 {dimension_numbers = #tpu.dot_dimension_numbers<[1], [0], [0], [1], [0, 0, 1, 1], [], []>} : vector<8x480xf32>, vector<480x448xf32>, vector<8x448xf32> -> vector<8x448xf32>
    %c0_26 = arith.constant 0 : index
    %c0_27 = arith.constant 0 : index
    %31 = vector.load %arg9[%c0_26, %c0_27] : memref<1x448xf32, #tpu.memory_space<vmem>>, vector<1x448xf32>
    %32 = vector.broadcast %31 : vector<1x448xf32> to vector<8x448xf32>
    %33 = arith.addf %30, %32 : vector<8x448xf32>
    %c0_28 = arith.constant 0 : index
    %c0_29 = arith.constant 0 : index
    %34 = vector.load %arg10[%c0_28, %c0_29] : memref<448x384xf32, #tpu.memory_space<vmem>>, vector<448x384xf32>
    %cst_30 = arith.constant dense<0.000000e+00> : vector<8x384xf32>
    %35 = tpu.matmul %33, %34, %cst_30 {dimension_numbers = #tpu.dot_dimension_numbers<[1], [0], [0], [1], [0, 0, 1, 1], [], []>} : vector<8x448xf32>, vector<448x384xf32>, vector<8x384xf32> -> vector<8x384xf32>
    %c0_31 = arith.constant 0 : index
    %c0_32 = arith.constant 0 : index
    %36 = vector.load %arg13[%c0_31, %c0_32] : memref<1x384xf32, #tpu.memory_space<vmem>>, vector<1x384xf32>
    %37 = vector.broadcast %36 : vector<1x384xf32> to vector<8x384xf32>
    %38 = arith.addf %35, %37 : vector<8x384xf32>
    %cst_33 = arith.constant 0.000000e+00 : f32
    %39 = vector.broadcast %cst_33 : f32 to vector<8x384xf32>
    %40 = arith.maximumf %38, %39 : vector<8x384xf32>
    %c0_34 = arith.constant 0 : index
    %c0_35 = arith.constant 0 : index
    %41 = vector.load %arg11[%c0_34, %c0_35] : memref<448x384xf32, #tpu.memory_space<vmem>>, vector<448x384xf32>
    %cst_36 = arith.constant dense<0.000000e+00> : vector<8x384xf32>
    %42 = tpu.matmul %33, %41, %cst_36 {dimension_numbers = #tpu.dot_dimension_numbers<[1], [0], [0], [1], [0, 0, 1, 1], [], []>} : vector<8x448xf32>, vector<448x384xf32>, vector<8x384xf32> -> vector<8x384xf32>
    %c0_37 = arith.constant 0 : index
    %c0_38 = arith.constant 0 : index
    %43 = vector.load %arg13[%c0_37, %c0_38] : memref<1x384xf32, #tpu.memory_space<vmem>>, vector<1x384xf32>
    %44 = vector.broadcast %43 : vector<1x384xf32> to vector<8x384xf32>
    %45 = arith.addf %42, %44 : vector<8x384xf32>
    %cst_39 = arith.constant 0.000000e+00 : f32
    %46 = vector.broadcast %cst_39 : f32 to vector<8x384xf32>
    %47 = arith.maximumf %45, %46 : vector<8x384xf32>
    %c0_40 = arith.constant 0 : index
    %c0_41 = arith.constant 0 : index
    %48 = vector.load %arg12[%c0_40, %c0_41] : memref<448x384xf32, #tpu.memory_space<vmem>>, vector<448x384xf32>
    %cst_42 = arith.constant dense<0.000000e+00> : vector<8x384xf32>
    %49 = tpu.matmul %33, %48, %cst_42 {dimension_numbers = #tpu.dot_dimension_numbers<[1], [0], [0], [1], [0, 0, 1, 1], [], []>} : vector<8x448xf32>, vector<448x384xf32>, vector<8x384xf32> -> vector<8x384xf32>
    %c0_43 = arith.constant 0 : index
    %c0_44 = arith.constant 0 : index
    %50 = vector.load %arg13[%c0_43, %c0_44] : memref<1x384xf32, #tpu.memory_space<vmem>>, vector<1x384xf32>
    %51 = vector.broadcast %50 : vector<1x384xf32> to vector<8x384xf32>
    %52 = arith.addf %49, %51 : vector<8x384xf32>
    %cst_45 = arith.constant 0.000000e+00 : f32
    %53 = vector.broadcast %cst_45 : f32 to vector<8x384xf32>
    %54 = arith.maximumf %52, %53 : vector<8x384xf32>
    %55 = arith.maximumf %40, %47 : vector<8x384xf32>
    %56 = arith.maximumf %55, %54 : vector<8x384xf32>
    %c0_46 = arith.constant 0 : index
    %c0_47 = arith.constant 0 : index
    %57 = vector.load %arg14[%c0_46, %c0_47] : memref<384x72xf32, #tpu.memory_space<vmem>>, vector<384x72xf32>
    %cst_48 = arith.constant dense<0.000000e+00> : vector<8x72xf32>
    %58 = tpu.matmul %56, %57, %cst_48 {dimension_numbers = #tpu.dot_dimension_numbers<[1], [0], [0], [1], [0, 0, 1, 1], [], []>} : vector<8x384xf32>, vector<384x72xf32>, vector<8x72xf32> -> vector<8x72xf32>
    %c0_49 = arith.constant 0 : index
    %c0_50 = arith.constant 0 : index
    %59 = vector.load %arg15[%c0_49, %c0_50] : memref<1x72xf32, #tpu.memory_space<vmem>>, vector<1x72xf32>
    %60 = vector.broadcast %59 : vector<1x72xf32> to vector<8x72xf32>
    %61 = arith.addf %58, %60 : vector<8x72xf32>
    %c0_51 = arith.constant 0 : index
    %c0_52 = arith.constant 0 : index
    %62 = vector.load %arg16[%c0_51, %c0_52] : memref<72x6xf32, #tpu.memory_space<vmem>>, vector<72x6xf32>
    %cst_53 = arith.constant dense<0.000000e+00> : vector<8x6xf32>
    %63 = tpu.matmul %61, %62, %cst_53 {dimension_numbers = #tpu.dot_dimension_numbers<[1], [0], [0], [1], [0, 0, 1, 1], [], []>} : vector<8x72xf32>, vector<72x6xf32>, vector<8x6xf32> -> vector<8x6xf32>
    %c0_54 = arith.constant 0 : index
    %c0_55 = arith.constant 0 : index
    %64 = vector.load %arg17[%c0_54, %c0_55] : memref<1x6xf32, #tpu.memory_space<vmem>>, vector<1x6xf32>
    %65 = vector.broadcast %64 : vector<1x6xf32> to vector<8x6xf32>
    %66 = arith.addf %63, %65 : vector<8x6xf32>
    %c0_56 = arith.constant 0 : index
    %c0_57 = arith.constant 0 : index
    %67 = vector.load %arg20[%c0_56, %c0_57] : memref<1x256xf32, #tpu.memory_space<vmem>>, vector<1x256xf32>
    %cst_58 = arith.constant 0.000000e+00 : f32
    %68 = vector.broadcast %cst_58 : f32 to vector<8x64xf32>
    %cst_59 = arith.constant 0.000000e+00 : f32
    %69 = vector.broadcast %cst_59 : f32 to vector<8x64xf32>
    %70 = vector.extract_strided_slice %66 {offsets = [0, 0], sizes = [8, 1], strides = [1, 1]} : vector<8x6xf32> to vector<8x1xf32>
    %c0_60 = arith.constant 0 : index
    %c0_61 = arith.constant 0 : index
    %71 = vector.load %arg18[%c0_60, %c0_61] : memref<2x256xf32, #tpu.memory_space<vmem>>, vector<1x256xf32>
    %72 = vector.broadcast %70 : vector<8x1xf32> to vector<8x256xf32>
    %73 = vector.broadcast %71 : vector<1x256xf32> to vector<8x256xf32>
    %74 = arith.mulf %72, %73 : vector<8x256xf32>
    %75 = vector.extract_strided_slice %66 {offsets = [0, 5], sizes = [8, 1], strides = [1, 1]} : vector<8x6xf32> to vector<8x1xf32>
    %c1 = arith.constant 1 : index
    %c0_62 = arith.constant 0 : index
    %76 = vector.load %arg18[%c1, %c0_62] : memref<2x256xf32, #tpu.memory_space<vmem>>, vector<1x256xf32>
    %77 = vector.broadcast %75 : vector<8x1xf32> to vector<8x256xf32>
    %78 = vector.broadcast %76 : vector<1x256xf32> to vector<8x256xf32>
    %79 = arith.mulf %77, %78 : vector<8x256xf32>
    %80 = arith.addf %74, %79 : vector<8x256xf32>
    %c0_63 = arith.constant 0 : index
    %c0_64 = arith.constant 0 : index
    %81 = vector.load %arg19[%c0_63, %c0_64] : memref<64x256xf32, #tpu.memory_space<vmem>>, vector<64x256xf32>
    %cst_65 = arith.constant dense<0.000000e+00> : vector<8x256xf32>
    %82 = tpu.matmul %68, %81, %cst_65 {dimension_numbers = #tpu.dot_dimension_numbers<[1], [0], [0], [1], [0, 0, 1, 1], [], []>} : vector<8x64xf32>, vector<64x256xf32>, vector<8x256xf32> -> vector<8x256xf32>
    %83 = arith.addf %80, %82 : vector<8x256xf32>
    %84 = vector.broadcast %67 : vector<1x256xf32> to vector<8x256xf32>
    %85 = arith.addf %83, %84 : vector<8x256xf32>
    %86 = vector.extract_strided_slice %85 {offsets = [0, 0], sizes = [8, 192], strides = [1, 1]} : vector<8x256xf32> to vector<8x192xf32>
    %cst_66 = arith.constant 0.000000e+00 : f32
    %87 = vector.broadcast %cst_66 : f32 to vector<8x192xf32>
    %88 = arith.subf %87, %86 : vector<8x192xf32>
    %89 = math.exp %88 : vector<8x192xf32>
    %cst_67 = arith.constant 1.000000e+00 : f32
    %90 = vector.broadcast %cst_67 : f32 to vector<8x192xf32>
    %91 = arith.addf %90, %89 : vector<8x192xf32>
    %cst_68 = arith.constant 1.000000e+00 : f32
    %92 = vector.broadcast %cst_68 : f32 to vector<8x192xf32>
    %93 = arith.divf %92, %91 : vector<8x192xf32>
    %94 = vector.extract_strided_slice %85 {offsets = [0, 192], sizes = [8, 64], strides = [1, 1]} : vector<8x256xf32> to vector<8x64xf32>
    %95 = math.tanh %94 : vector<8x64xf32>
    %96 = vector.extract_strided_slice %93 {offsets = [0, 64], sizes = [8, 64], strides = [1, 1]} : vector<8x192xf32> to vector<8x64xf32>
    %97 = arith.mulf %96, %69 : vector<8x64xf32>
    %98 = vector.extract_strided_slice %93 {offsets = [0, 0], sizes = [8, 64], strides = [1, 1]} : vector<8x192xf32> to vector<8x64xf32>
    %99 = arith.mulf %98, %95 : vector<8x64xf32>
    %100 = arith.addf %97, %99 : vector<8x64xf32>
    %101 = vector.extract_strided_slice %93 {offsets = [0, 128], sizes = [8, 64], strides = [1, 1]} : vector<8x192xf32> to vector<8x64xf32>
    %102 = math.tanh %100 : vector<8x64xf32>
    %103 = arith.mulf %101, %102 : vector<8x64xf32>
    %104 = vector.extract_strided_slice %66 {offsets = [0, 1], sizes = [8, 1], strides = [1, 1]} : vector<8x6xf32> to vector<8x1xf32>
    %c0_69 = arith.constant 0 : index
    %c0_70 = arith.constant 0 : index
    %105 = vector.load %arg18[%c0_69, %c0_70] : memref<2x256xf32, #tpu.memory_space<vmem>>, vector<1x256xf32>
    %106 = vector.broadcast %104 : vector<8x1xf32> to vector<8x256xf32>
    %107 = vector.broadcast %105 : vector<1x256xf32> to vector<8x256xf32>
    %108 = arith.mulf %106, %107 : vector<8x256xf32>
    %109 = vector.extract_strided_slice %66 {offsets = [0, 4], sizes = [8, 1], strides = [1, 1]} : vector<8x6xf32> to vector<8x1xf32>
    %c1_71 = arith.constant 1 : index
    %c0_72 = arith.constant 0 : index
    %110 = vector.load %arg18[%c1_71, %c0_72] : memref<2x256xf32, #tpu.memory_space<vmem>>, vector<1x256xf32>
    %111 = vector.broadcast %109 : vector<8x1xf32> to vector<8x256xf32>
    %112 = vector.broadcast %110 : vector<1x256xf32> to vector<8x256xf32>
    %113 = arith.mulf %111, %112 : vector<8x256xf32>
    %114 = arith.addf %108, %113 : vector<8x256xf32>
    %c0_73 = arith.constant 0 : index
    %c0_74 = arith.constant 0 : index
    %115 = vector.load %arg19[%c0_73, %c0_74] : memref<64x256xf32, #tpu.memory_space<vmem>>, vector<64x256xf32>
    %cst_75 = arith.constant dense<0.000000e+00> : vector<8x256xf32>
    %116 = tpu.matmul %103, %115, %cst_75 {dimension_numbers = #tpu.dot_dimension_numbers<[1], [0], [0], [1], [0, 0, 1, 1], [], []>} : vector<8x64xf32>, vector<64x256xf32>, vector<8x256xf32> -> vector<8x256xf32>
    %117 = arith.addf %114, %116 : vector<8x256xf32>
    %118 = vector.broadcast %67 : vector<1x256xf32> to vector<8x256xf32>
    %119 = arith.addf %117, %118 : vector<8x256xf32>
    %120 = vector.extract_strided_slice %119 {offsets = [0, 0], sizes = [8, 192], strides = [1, 1]} : vector<8x256xf32> to vector<8x192xf32>
    %cst_76 = arith.constant 0.000000e+00 : f32
    %121 = vector.broadcast %cst_76 : f32 to vector<8x192xf32>
    %122 = arith.subf %121, %120 : vector<8x192xf32>
    %123 = math.exp %122 : vector<8x192xf32>
    %cst_77 = arith.constant 1.000000e+00 : f32
    %124 = vector.broadcast %cst_77 : f32 to vector<8x192xf32>
    %125 = arith.addf %124, %123 : vector<8x192xf32>
    %cst_78 = arith.constant 1.000000e+00 : f32
    %126 = vector.broadcast %cst_78 : f32 to vector<8x192xf32>
    %127 = arith.divf %126, %125 : vector<8x192xf32>
    %128 = vector.extract_strided_slice %119 {offsets = [0, 192], sizes = [8, 64], strides = [1, 1]} : vector<8x256xf32> to vector<8x64xf32>
    %129 = math.tanh %128 : vector<8x64xf32>
    %130 = vector.extract_strided_slice %127 {offsets = [0, 64], sizes = [8, 64], strides = [1, 1]} : vector<8x192xf32> to vector<8x64xf32>
    %131 = arith.mulf %130, %100 : vector<8x64xf32>
    %132 = vector.extract_strided_slice %127 {offsets = [0, 0], sizes = [8, 64], strides = [1, 1]} : vector<8x192xf32> to vector<8x64xf32>
    %133 = arith.mulf %132, %129 : vector<8x64xf32>
    %134 = arith.addf %131, %133 : vector<8x64xf32>
    %135 = vector.extract_strided_slice %127 {offsets = [0, 128], sizes = [8, 64], strides = [1, 1]} : vector<8x192xf32> to vector<8x64xf32>
    %136 = math.tanh %134 : vector<8x64xf32>
    %137 = arith.mulf %135, %136 : vector<8x64xf32>
    %138 = vector.extract_strided_slice %66 {offsets = [0, 2], sizes = [8, 1], strides = [1, 1]} : vector<8x6xf32> to vector<8x1xf32>
    %c0_79 = arith.constant 0 : index
    %c0_80 = arith.constant 0 : index
    %139 = vector.load %arg18[%c0_79, %c0_80] : memref<2x256xf32, #tpu.memory_space<vmem>>, vector<1x256xf32>
    %140 = vector.broadcast %138 : vector<8x1xf32> to vector<8x256xf32>
    %141 = vector.broadcast %139 : vector<1x256xf32> to vector<8x256xf32>
    %142 = arith.mulf %140, %141 : vector<8x256xf32>
    %143 = vector.extract_strided_slice %66 {offsets = [0, 3], sizes = [8, 1], strides = [1, 1]} : vector<8x6xf32> to vector<8x1xf32>
    %c1_81 = arith.constant 1 : index
    %c0_82 = arith.constant 0 : index
    %144 = vector.load %arg18[%c1_81, %c0_82] : memref<2x256xf32, #tpu.memory_space<vmem>>, vector<1x256xf32>
    %145 = vector.broadcast %143 : vector<8x1xf32> to vector<8x256xf32>
    %146 = vector.broadcast %144 : vector<1x256xf32> to vector<8x256xf32>
    %147 = arith.mulf %145, %146 : vector<8x256xf32>
    %148 = arith.addf %142, %147 : vector<8x256xf32>
    %c0_83 = arith.constant 0 : index
    %c0_84 = arith.constant 0 : index
    %149 = vector.load %arg19[%c0_83, %c0_84] : memref<64x256xf32, #tpu.memory_space<vmem>>, vector<64x256xf32>
    %cst_85 = arith.constant dense<0.000000e+00> : vector<8x256xf32>
    %150 = tpu.matmul %137, %149, %cst_85 {dimension_numbers = #tpu.dot_dimension_numbers<[1], [0], [0], [1], [0, 0, 1, 1], [], []>} : vector<8x64xf32>, vector<64x256xf32>, vector<8x256xf32> -> vector<8x256xf32>
    %151 = arith.addf %148, %150 : vector<8x256xf32>
    %152 = vector.broadcast %67 : vector<1x256xf32> to vector<8x256xf32>
    %153 = arith.addf %151, %152 : vector<8x256xf32>
    %154 = vector.extract_strided_slice %153 {offsets = [0, 0], sizes = [8, 192], strides = [1, 1]} : vector<8x256xf32> to vector<8x192xf32>
    %cst_86 = arith.constant 0.000000e+00 : f32
    %155 = vector.broadcast %cst_86 : f32 to vector<8x192xf32>
    %156 = arith.subf %155, %154 : vector<8x192xf32>
    %157 = math.exp %156 : vector<8x192xf32>
    %cst_87 = arith.constant 1.000000e+00 : f32
    %158 = vector.broadcast %cst_87 : f32 to vector<8x192xf32>
    %159 = arith.addf %158, %157 : vector<8x192xf32>
    %cst_88 = arith.constant 1.000000e+00 : f32
    %160 = vector.broadcast %cst_88 : f32 to vector<8x192xf32>
    %161 = arith.divf %160, %159 : vector<8x192xf32>
    %162 = vector.extract_strided_slice %153 {offsets = [0, 192], sizes = [8, 64], strides = [1, 1]} : vector<8x256xf32> to vector<8x64xf32>
    %163 = math.tanh %162 : vector<8x64xf32>
    %164 = vector.extract_strided_slice %161 {offsets = [0, 64], sizes = [8, 64], strides = [1, 1]} : vector<8x192xf32> to vector<8x64xf32>
    %165 = arith.mulf %164, %134 : vector<8x64xf32>
    %166 = vector.extract_strided_slice %161 {offsets = [0, 0], sizes = [8, 64], strides = [1, 1]} : vector<8x192xf32> to vector<8x64xf32>
    %167 = arith.mulf %166, %163 : vector<8x64xf32>
    %168 = arith.addf %165, %167 : vector<8x64xf32>
    %169 = vector.extract_strided_slice %161 {offsets = [0, 128], sizes = [8, 64], strides = [1, 1]} : vector<8x192xf32> to vector<8x64xf32>
    %170 = math.tanh %168 : vector<8x64xf32>
    %171 = arith.mulf %169, %170 : vector<8x64xf32>
    %172 = vector.extract_strided_slice %66 {offsets = [0, 3], sizes = [8, 1], strides = [1, 1]} : vector<8x6xf32> to vector<8x1xf32>
    %c0_89 = arith.constant 0 : index
    %c0_90 = arith.constant 0 : index
    %173 = vector.load %arg18[%c0_89, %c0_90] : memref<2x256xf32, #tpu.memory_space<vmem>>, vector<1x256xf32>
    %174 = vector.broadcast %172 : vector<8x1xf32> to vector<8x256xf32>
    %175 = vector.broadcast %173 : vector<1x256xf32> to vector<8x256xf32>
    %176 = arith.mulf %174, %175 : vector<8x256xf32>
    %177 = vector.extract_strided_slice %66 {offsets = [0, 2], sizes = [8, 1], strides = [1, 1]} : vector<8x6xf32> to vector<8x1xf32>
    %c1_91 = arith.constant 1 : index
    %c0_92 = arith.constant 0 : index
    %178 = vector.load %arg18[%c1_91, %c0_92] : memref<2x256xf32, #tpu.memory_space<vmem>>, vector<1x256xf32>
    %179 = vector.broadcast %177 : vector<8x1xf32> to vector<8x256xf32>
    %180 = vector.broadcast %178 : vector<1x256xf32> to vector<8x256xf32>
    %181 = arith.mulf %179, %180 : vector<8x256xf32>
    %182 = arith.addf %176, %181 : vector<8x256xf32>
    %c0_93 = arith.constant 0 : index
    %c0_94 = arith.constant 0 : index
    %183 = vector.load %arg19[%c0_93, %c0_94] : memref<64x256xf32, #tpu.memory_space<vmem>>, vector<64x256xf32>
    %cst_95 = arith.constant dense<0.000000e+00> : vector<8x256xf32>
    %184 = tpu.matmul %171, %183, %cst_95 {dimension_numbers = #tpu.dot_dimension_numbers<[1], [0], [0], [1], [0, 0, 1, 1], [], []>} : vector<8x64xf32>, vector<64x256xf32>, vector<8x256xf32> -> vector<8x256xf32>
    %185 = arith.addf %182, %184 : vector<8x256xf32>
    %186 = vector.broadcast %67 : vector<1x256xf32> to vector<8x256xf32>
    %187 = arith.addf %185, %186 : vector<8x256xf32>
    %188 = vector.extract_strided_slice %187 {offsets = [0, 0], sizes = [8, 192], strides = [1, 1]} : vector<8x256xf32> to vector<8x192xf32>
    %cst_96 = arith.constant 0.000000e+00 : f32
    %189 = vector.broadcast %cst_96 : f32 to vector<8x192xf32>
    %190 = arith.subf %189, %188 : vector<8x192xf32>
    %191 = math.exp %190 : vector<8x192xf32>
    %cst_97 = arith.constant 1.000000e+00 : f32
    %192 = vector.broadcast %cst_97 : f32 to vector<8x192xf32>
    %193 = arith.addf %192, %191 : vector<8x192xf32>
    %cst_98 = arith.constant 1.000000e+00 : f32
    %194 = vector.broadcast %cst_98 : f32 to vector<8x192xf32>
    %195 = arith.divf %194, %193 : vector<8x192xf32>
    %196 = vector.extract_strided_slice %187 {offsets = [0, 192], sizes = [8, 64], strides = [1, 1]} : vector<8x256xf32> to vector<8x64xf32>
    %197 = math.tanh %196 : vector<8x64xf32>
    %198 = vector.extract_strided_slice %195 {offsets = [0, 64], sizes = [8, 64], strides = [1, 1]} : vector<8x192xf32> to vector<8x64xf32>
    %199 = arith.mulf %198, %168 : vector<8x64xf32>
    %200 = vector.extract_strided_slice %195 {offsets = [0, 0], sizes = [8, 64], strides = [1, 1]} : vector<8x192xf32> to vector<8x64xf32>
    %201 = arith.mulf %200, %197 : vector<8x64xf32>
    %202 = arith.addf %199, %201 : vector<8x64xf32>
    %203 = vector.extract_strided_slice %195 {offsets = [0, 128], sizes = [8, 64], strides = [1, 1]} : vector<8x192xf32> to vector<8x64xf32>
    %204 = math.tanh %202 : vector<8x64xf32>
    %205 = arith.mulf %203, %204 : vector<8x64xf32>
    %206 = vector.extract_strided_slice %66 {offsets = [0, 4], sizes = [8, 1], strides = [1, 1]} : vector<8x6xf32> to vector<8x1xf32>
    %c0_99 = arith.constant 0 : index
    %c0_100 = arith.constant 0 : index
    %207 = vector.load %arg18[%c0_99, %c0_100] : memref<2x256xf32, #tpu.memory_space<vmem>>, vector<1x256xf32>
    %208 = vector.broadcast %206 : vector<8x1xf32> to vector<8x256xf32>
    %209 = vector.broadcast %207 : vector<1x256xf32> to vector<8x256xf32>
    %210 = arith.mulf %208, %209 : vector<8x256xf32>
    %211 = vector.extract_strided_slice %66 {offsets = [0, 1], sizes = [8, 1], strides = [1, 1]} : vector<8x6xf32> to vector<8x1xf32>
    %c1_101 = arith.constant 1 : index
    %c0_102 = arith.constant 0 : index
    %212 = vector.load %arg18[%c1_101, %c0_102] : memref<2x256xf32, #tpu.memory_space<vmem>>, vector<1x256xf32>
    %213 = vector.broadcast %211 : vector<8x1xf32> to vector<8x256xf32>
    %214 = vector.broadcast %212 : vector<1x256xf32> to vector<8x256xf32>
    %215 = arith.mulf %213, %214 : vector<8x256xf32>
    %216 = arith.addf %210, %215 : vector<8x256xf32>
    %c0_103 = arith.constant 0 : index
    %c0_104 = arith.constant 0 : index
    %217 = vector.load %arg19[%c0_103, %c0_104] : memref<64x256xf32, #tpu.memory_space<vmem>>, vector<64x256xf32>
    %cst_105 = arith.constant dense<0.000000e+00> : vector<8x256xf32>
    %218 = tpu.matmul %205, %217, %cst_105 {dimension_numbers = #tpu.dot_dimension_numbers<[1], [0], [0], [1], [0, 0, 1, 1], [], []>} : vector<8x64xf32>, vector<64x256xf32>, vector<8x256xf32> -> vector<8x256xf32>
    %219 = arith.addf %216, %218 : vector<8x256xf32>
    %220 = vector.broadcast %67 : vector<1x256xf32> to vector<8x256xf32>
    %221 = arith.addf %219, %220 : vector<8x256xf32>
    %222 = vector.extract_strided_slice %221 {offsets = [0, 0], sizes = [8, 192], strides = [1, 1]} : vector<8x256xf32> to vector<8x192xf32>
    %cst_106 = arith.constant 0.000000e+00 : f32
    %223 = vector.broadcast %cst_106 : f32 to vector<8x192xf32>
    %224 = arith.subf %223, %222 : vector<8x192xf32>
    %225 = math.exp %224 : vector<8x192xf32>
    %cst_107 = arith.constant 1.000000e+00 : f32
    %226 = vector.broadcast %cst_107 : f32 to vector<8x192xf32>
    %227 = arith.addf %226, %225 : vector<8x192xf32>
    %cst_108 = arith.constant 1.000000e+00 : f32
    %228 = vector.broadcast %cst_108 : f32 to vector<8x192xf32>
    %229 = arith.divf %228, %227 : vector<8x192xf32>
    %230 = vector.extract_strided_slice %221 {offsets = [0, 192], sizes = [8, 64], strides = [1, 1]} : vector<8x256xf32> to vector<8x64xf32>
    %231 = math.tanh %230 : vector<8x64xf32>
    %232 = vector.extract_strided_slice %229 {offsets = [0, 64], sizes = [8, 64], strides = [1, 1]} : vector<8x192xf32> to vector<8x64xf32>
    %233 = arith.mulf %232, %202 : vector<8x64xf32>
    %234 = vector.extract_strided_slice %229 {offsets = [0, 0], sizes = [8, 64], strides = [1, 1]} : vector<8x192xf32> to vector<8x64xf32>
    %235 = arith.mulf %234, %231 : vector<8x64xf32>
    %236 = arith.addf %233, %235 : vector<8x64xf32>
    %237 = vector.extract_strided_slice %229 {offsets = [0, 128], sizes = [8, 64], strides = [1, 1]} : vector<8x192xf32> to vector<8x64xf32>
    %238 = math.tanh %236 : vector<8x64xf32>
    %239 = arith.mulf %237, %238 : vector<8x64xf32>
    %240 = vector.extract_strided_slice %66 {offsets = [0, 5], sizes = [8, 1], strides = [1, 1]} : vector<8x6xf32> to vector<8x1xf32>
    %c0_109 = arith.constant 0 : index
    %c0_110 = arith.constant 0 : index
    %241 = vector.load %arg18[%c0_109, %c0_110] : memref<2x256xf32, #tpu.memory_space<vmem>>, vector<1x256xf32>
    %242 = vector.broadcast %240 : vector<8x1xf32> to vector<8x256xf32>
    %243 = vector.broadcast %241 : vector<1x256xf32> to vector<8x256xf32>
    %244 = arith.mulf %242, %243 : vector<8x256xf32>
    %245 = vector.extract_strided_slice %66 {offsets = [0, 0], sizes = [8, 1], strides = [1, 1]} : vector<8x6xf32> to vector<8x1xf32>
    %c1_111 = arith.constant 1 : index
    %c0_112 = arith.constant 0 : index
    %246 = vector.load %arg18[%c1_111, %c0_112] : memref<2x256xf32, #tpu.memory_space<vmem>>, vector<1x256xf32>
    %247 = vector.broadcast %245 : vector<8x1xf32> to vector<8x256xf32>
    %248 = vector.broadcast %246 : vector<1x256xf32> to vector<8x256xf32>
    %249 = arith.mulf %247, %248 : vector<8x256xf32>
    %250 = arith.addf %244, %249 : vector<8x256xf32>
    %c0_113 = arith.constant 0 : index
    %c0_114 = arith.constant 0 : index
    %251 = vector.load %arg19[%c0_113, %c0_114] : memref<64x256xf32, #tpu.memory_space<vmem>>, vector<64x256xf32>
    %cst_115 = arith.constant dense<0.000000e+00> : vector<8x256xf32>
    %252 = tpu.matmul %239, %251, %cst_115 {dimension_numbers = #tpu.dot_dimension_numbers<[1], [0], [0], [1], [0, 0, 1, 1], [], []>} : vector<8x64xf32>, vector<64x256xf32>, vector<8x256xf32> -> vector<8x256xf32>
    %253 = arith.addf %250, %252 : vector<8x256xf32>
    %254 = vector.broadcast %67 : vector<1x256xf32> to vector<8x256xf32>
    %255 = arith.addf %253, %254 : vector<8x256xf32>
    %256 = vector.extract_strided_slice %255 {offsets = [0, 0], sizes = [8, 192], strides = [1, 1]} : vector<8x256xf32> to vector<8x192xf32>
    %cst_116 = arith.constant 0.000000e+00 : f32
    %257 = vector.broadcast %cst_116 : f32 to vector<8x192xf32>
    %258 = arith.subf %257, %256 : vector<8x192xf32>
    %259 = math.exp %258 : vector<8x192xf32>
    %cst_117 = arith.constant 1.000000e+00 : f32
    %260 = vector.broadcast %cst_117 : f32 to vector<8x192xf32>
    %261 = arith.addf %260, %259 : vector<8x192xf32>
    %cst_118 = arith.constant 1.000000e+00 : f32
    %262 = vector.broadcast %cst_118 : f32 to vector<8x192xf32>
    %263 = arith.divf %262, %261 : vector<8x192xf32>
    %264 = vector.extract_strided_slice %255 {offsets = [0, 192], sizes = [8, 64], strides = [1, 1]} : vector<8x256xf32> to vector<8x64xf32>
    %265 = math.tanh %264 : vector<8x64xf32>
    %266 = vector.extract_strided_slice %263 {offsets = [0, 64], sizes = [8, 64], strides = [1, 1]} : vector<8x192xf32> to vector<8x64xf32>
    %267 = arith.mulf %266, %236 : vector<8x64xf32>
    %268 = vector.extract_strided_slice %263 {offsets = [0, 0], sizes = [8, 64], strides = [1, 1]} : vector<8x192xf32> to vector<8x64xf32>
    %269 = arith.mulf %268, %265 : vector<8x64xf32>
    %270 = arith.addf %267, %269 : vector<8x64xf32>
    %271 = vector.extract_strided_slice %263 {offsets = [0, 128], sizes = [8, 64], strides = [1, 1]} : vector<8x192xf32> to vector<8x64xf32>
    %272 = math.tanh %270 : vector<8x64xf32>
    %273 = arith.mulf %271, %272 : vector<8x64xf32>
    %c0_119 = arith.constant 0 : index
    %c0_120 = arith.constant 0 : index
    %274 = vector.load %arg24[%c0_119, %c0_120] : memref<1x256xf32, #tpu.memory_space<vmem>>, vector<1x256xf32>
    %cst_121 = arith.constant 0.000000e+00 : f32
    %275 = vector.broadcast %cst_121 : f32 to vector<8x64xf32>
    %cst_122 = arith.constant 0.000000e+00 : f32
    %276 = vector.broadcast %cst_122 : f32 to vector<8x64xf32>
    %c0_123 = arith.constant 0 : index
    %c0_124 = arith.constant 0 : index
    %277 = vector.load %arg21[%c0_123, %c0_124] : memref<64x256xf32, #tpu.memory_space<vmem>>, vector<64x256xf32>
    %cst_125 = arith.constant dense<0.000000e+00> : vector<8x256xf32>
    %278 = tpu.matmul %103, %277, %cst_125 {dimension_numbers = #tpu.dot_dimension_numbers<[1], [0], [0], [1], [0, 0, 1, 1], [], []>} : vector<8x64xf32>, vector<64x256xf32>, vector<8x256xf32> -> vector<8x256xf32>
    %c0_126 = arith.constant 0 : index
    %c0_127 = arith.constant 0 : index
    %279 = vector.load %arg22[%c0_126, %c0_127] : memref<64x256xf32, #tpu.memory_space<vmem>>, vector<64x256xf32>
    %cst_128 = arith.constant dense<0.000000e+00> : vector<8x256xf32>
    %280 = tpu.matmul %273, %279, %cst_128 {dimension_numbers = #tpu.dot_dimension_numbers<[1], [0], [0], [1], [0, 0, 1, 1], [], []>} : vector<8x64xf32>, vector<64x256xf32>, vector<8x256xf32> -> vector<8x256xf32>
    %281 = arith.addf %278, %280 : vector<8x256xf32>
    %c0_129 = arith.constant 0 : index
    %c0_130 = arith.constant 0 : index
    %282 = vector.load %arg23[%c0_129, %c0_130] : memref<64x256xf32, #tpu.memory_space<vmem>>, vector<64x256xf32>
    %cst_131 = arith.constant dense<0.000000e+00> : vector<8x256xf32>
    %283 = tpu.matmul %275, %282, %cst_131 {dimension_numbers = #tpu.dot_dimension_numbers<[1], [0], [0], [1], [0, 0, 1, 1], [], []>} : vector<8x64xf32>, vector<64x256xf32>, vector<8x256xf32> -> vector<8x256xf32>
    %284 = arith.addf %281, %283 : vector<8x256xf32>
    %285 = vector.broadcast %274 : vector<1x256xf32> to vector<8x256xf32>
    %286 = arith.addf %284, %285 : vector<8x256xf32>
    %287 = vector.extract_strided_slice %286 {offsets = [0, 0], sizes = [8, 192], strides = [1, 1]} : vector<8x256xf32> to vector<8x192xf32>
    %cst_132 = arith.constant 0.000000e+00 : f32
    %288 = vector.broadcast %cst_132 : f32 to vector<8x192xf32>
    %289 = arith.subf %288, %287 : vector<8x192xf32>
    %290 = math.exp %289 : vector<8x192xf32>
    %cst_133 = arith.constant 1.000000e+00 : f32
    %291 = vector.broadcast %cst_133 : f32 to vector<8x192xf32>
    %292 = arith.addf %291, %290 : vector<8x192xf32>
    %cst_134 = arith.constant 1.000000e+00 : f32
    %293 = vector.broadcast %cst_134 : f32 to vector<8x192xf32>
    %294 = arith.divf %293, %292 : vector<8x192xf32>
    %295 = vector.extract_strided_slice %286 {offsets = [0, 192], sizes = [8, 64], strides = [1, 1]} : vector<8x256xf32> to vector<8x64xf32>
    %296 = math.tanh %295 : vector<8x64xf32>
    %297 = vector.extract_strided_slice %294 {offsets = [0, 64], sizes = [8, 64], strides = [1, 1]} : vector<8x192xf32> to vector<8x64xf32>
    %298 = arith.mulf %297, %276 : vector<8x64xf32>
    %299 = vector.extract_strided_slice %294 {offsets = [0, 0], sizes = [8, 64], strides = [1, 1]} : vector<8x192xf32> to vector<8x64xf32>
    %300 = arith.mulf %299, %296 : vector<8x64xf32>
    %301 = arith.addf %298, %300 : vector<8x64xf32>
    %302 = vector.extract_strided_slice %294 {offsets = [0, 128], sizes = [8, 64], strides = [1, 1]} : vector<8x192xf32> to vector<8x64xf32>
    %303 = math.tanh %301 : vector<8x64xf32>
    %304 = arith.mulf %302, %303 : vector<8x64xf32>
    %c0_135 = arith.constant 0 : index
    %c0_136 = arith.constant 0 : index
    %305 = vector.load %arg21[%c0_135, %c0_136] : memref<64x256xf32, #tpu.memory_space<vmem>>, vector<64x256xf32>
    %cst_137 = arith.constant dense<0.000000e+00> : vector<8x256xf32>
    %306 = tpu.matmul %137, %305, %cst_137 {dimension_numbers = #tpu.dot_dimension_numbers<[1], [0], [0], [1], [0, 0, 1, 1], [], []>} : vector<8x64xf32>, vector<64x256xf32>, vector<8x256xf32> -> vector<8x256xf32>
    %c0_138 = arith.constant 0 : index
    %c0_139 = arith.constant 0 : index
    %307 = vector.load %arg22[%c0_138, %c0_139] : memref<64x256xf32, #tpu.memory_space<vmem>>, vector<64x256xf32>
    %cst_140 = arith.constant dense<0.000000e+00> : vector<8x256xf32>
    %308 = tpu.matmul %239, %307, %cst_140 {dimension_numbers = #tpu.dot_dimension_numbers<[1], [0], [0], [1], [0, 0, 1, 1], [], []>} : vector<8x64xf32>, vector<64x256xf32>, vector<8x256xf32> -> vector<8x256xf32>
    %309 = arith.addf %306, %308 : vector<8x256xf32>
    %c0_141 = arith.constant 0 : index
    %c0_142 = arith.constant 0 : index
    %310 = vector.load %arg23[%c0_141, %c0_142] : memref<64x256xf32, #tpu.memory_space<vmem>>, vector<64x256xf32>
    %cst_143 = arith.constant dense<0.000000e+00> : vector<8x256xf32>
    %311 = tpu.matmul %304, %310, %cst_143 {dimension_numbers = #tpu.dot_dimension_numbers<[1], [0], [0], [1], [0, 0, 1, 1], [], []>} : vector<8x64xf32>, vector<64x256xf32>, vector<8x256xf32> -> vector<8x256xf32>
    %312 = arith.addf %309, %311 : vector<8x256xf32>
    %313 = vector.broadcast %274 : vector<1x256xf32> to vector<8x256xf32>
    %314 = arith.addf %312, %313 : vector<8x256xf32>
    %315 = vector.extract_strided_slice %314 {offsets = [0, 0], sizes = [8, 192], strides = [1, 1]} : vector<8x256xf32> to vector<8x192xf32>
    %cst_144 = arith.constant 0.000000e+00 : f32
    %316 = vector.broadcast %cst_144 : f32 to vector<8x192xf32>
    %317 = arith.subf %316, %315 : vector<8x192xf32>
    %318 = math.exp %317 : vector<8x192xf32>
    %cst_145 = arith.constant 1.000000e+00 : f32
    %319 = vector.broadcast %cst_145 : f32 to vector<8x192xf32>
    %320 = arith.addf %319, %318 : vector<8x192xf32>
    %cst_146 = arith.constant 1.000000e+00 : f32
    %321 = vector.broadcast %cst_146 : f32 to vector<8x192xf32>
    %322 = arith.divf %321, %320 : vector<8x192xf32>
    %323 = vector.extract_strided_slice %314 {offsets = [0, 192], sizes = [8, 64], strides = [1, 1]} : vector<8x256xf32> to vector<8x64xf32>
    %324 = math.tanh %323 : vector<8x64xf32>
    %325 = vector.extract_strided_slice %322 {offsets = [0, 64], sizes = [8, 64], strides = [1, 1]} : vector<8x192xf32> to vector<8x64xf32>
    %326 = arith.mulf %325, %301 : vector<8x64xf32>
    %327 = vector.extract_strided_slice %322 {offsets = [0, 0], sizes = [8, 64], strides = [1, 1]} : vector<8x192xf32> to vector<8x64xf32>
    %328 = arith.mulf %327, %324 : vector<8x64xf32>
    %329 = arith.addf %326, %328 : vector<8x64xf32>
    %330 = vector.extract_strided_slice %322 {offsets = [0, 128], sizes = [8, 64], strides = [1, 1]} : vector<8x192xf32> to vector<8x64xf32>
    %331 = math.tanh %329 : vector<8x64xf32>
    %332 = arith.mulf %330, %331 : vector<8x64xf32>
    %c0_147 = arith.constant 0 : index
    %c0_148 = arith.constant 0 : index
    %333 = vector.load %arg21[%c0_147, %c0_148] : memref<64x256xf32, #tpu.memory_space<vmem>>, vector<64x256xf32>
    %cst_149 = arith.constant dense<0.000000e+00> : vector<8x256xf32>
    %334 = tpu.matmul %171, %333, %cst_149 {dimension_numbers = #tpu.dot_dimension_numbers<[1], [0], [0], [1], [0, 0, 1, 1], [], []>} : vector<8x64xf32>, vector<64x256xf32>, vector<8x256xf32> -> vector<8x256xf32>
    %c0_150 = arith.constant 0 : index
    %c0_151 = arith.constant 0 : index
    %335 = vector.load %arg22[%c0_150, %c0_151] : memref<64x256xf32, #tpu.memory_space<vmem>>, vector<64x256xf32>
    %cst_152 = arith.constant dense<0.000000e+00> : vector<8x256xf32>
    %336 = tpu.matmul %205, %335, %cst_152 {dimension_numbers = #tpu.dot_dimension_numbers<[1], [0], [0], [1], [0, 0, 1, 1], [], []>} : vector<8x64xf32>, vector<64x256xf32>, vector<8x256xf32> -> vector<8x256xf32>
    %337 = arith.addf %334, %336 : vector<8x256xf32>
    %c0_153 = arith.constant 0 : index
    %c0_154 = arith.constant 0 : index
    %338 = vector.load %arg23[%c0_153, %c0_154] : memref<64x256xf32, #tpu.memory_space<vmem>>, vector<64x256xf32>
    %cst_155 = arith.constant dense<0.000000e+00> : vector<8x256xf32>
    %339 = tpu.matmul %332, %338, %cst_155 {dimension_numbers = #tpu.dot_dimension_numbers<[1], [0], [0], [1], [0, 0, 1, 1], [], []>} : vector<8x64xf32>, vector<64x256xf32>, vector<8x256xf32> -> vector<8x256xf32>
    %340 = arith.addf %337, %339 : vector<8x256xf32>
    %341 = vector.broadcast %274 : vector<1x256xf32> to vector<8x256xf32>
    %342 = arith.addf %340, %341 : vector<8x256xf32>
    %343 = vector.extract_strided_slice %342 {offsets = [0, 0], sizes = [8, 192], strides = [1, 1]} : vector<8x256xf32> to vector<8x192xf32>
    %cst_156 = arith.constant 0.000000e+00 : f32
    %344 = vector.broadcast %cst_156 : f32 to vector<8x192xf32>
    %345 = arith.subf %344, %343 : vector<8x192xf32>
    %346 = math.exp %345 : vector<8x192xf32>
    %cst_157 = arith.constant 1.000000e+00 : f32
    %347 = vector.broadcast %cst_157 : f32 to vector<8x192xf32>
    %348 = arith.addf %347, %346 : vector<8x192xf32>
    %cst_158 = arith.constant 1.000000e+00 : f32
    %349 = vector.broadcast %cst_158 : f32 to vector<8x192xf32>
    %350 = arith.divf %349, %348 : vector<8x192xf32>
    %351 = vector.extract_strided_slice %342 {offsets = [0, 192], sizes = [8, 64], strides = [1, 1]} : vector<8x256xf32> to vector<8x64xf32>
    %352 = math.tanh %351 : vector<8x64xf32>
    %353 = vector.extract_strided_slice %350 {offsets = [0, 64], sizes = [8, 64], strides = [1, 1]} : vector<8x192xf32> to vector<8x64xf32>
    %354 = arith.mulf %353, %329 : vector<8x64xf32>
    %355 = vector.extract_strided_slice %350 {offsets = [0, 0], sizes = [8, 64], strides = [1, 1]} : vector<8x192xf32> to vector<8x64xf32>
    %356 = arith.mulf %355, %352 : vector<8x64xf32>
    %357 = arith.addf %354, %356 : vector<8x64xf32>
    %358 = vector.extract_strided_slice %350 {offsets = [0, 128], sizes = [8, 64], strides = [1, 1]} : vector<8x192xf32> to vector<8x64xf32>
    %359 = math.tanh %357 : vector<8x64xf32>
    %360 = arith.mulf %358, %359 : vector<8x64xf32>
    %c0_159 = arith.constant 0 : index
    %c0_160 = arith.constant 0 : index
    %361 = vector.load %arg21[%c0_159, %c0_160] : memref<64x256xf32, #tpu.memory_space<vmem>>, vector<64x256xf32>
    %cst_161 = arith.constant dense<0.000000e+00> : vector<8x256xf32>
    %362 = tpu.matmul %205, %361, %cst_161 {dimension_numbers = #tpu.dot_dimension_numbers<[1], [0], [0], [1], [0, 0, 1, 1], [], []>} : vector<8x64xf32>, vector<64x256xf32>, vector<8x256xf32> -> vector<8x256xf32>
    %c0_162 = arith.constant 0 : index
    %c0_163 = arith.constant 0 : index
    %363 = vector.load %arg22[%c0_162, %c0_163] : memref<64x256xf32, #tpu.memory_space<vmem>>, vector<64x256xf32>
    %cst_164 = arith.constant dense<0.000000e+00> : vector<8x256xf32>
    %364 = tpu.matmul %171, %363, %cst_164 {dimension_numbers = #tpu.dot_dimension_numbers<[1], [0], [0], [1], [0, 0, 1, 1], [], []>} : vector<8x64xf32>, vector<64x256xf32>, vector<8x256xf32> -> vector<8x256xf32>
    %365 = arith.addf %362, %364 : vector<8x256xf32>
    %c0_165 = arith.constant 0 : index
    %c0_166 = arith.constant 0 : index
    %366 = vector.load %arg23[%c0_165, %c0_166] : memref<64x256xf32, #tpu.memory_space<vmem>>, vector<64x256xf32>
    %cst_167 = arith.constant dense<0.000000e+00> : vector<8x256xf32>
    %367 = tpu.matmul %360, %366, %cst_167 {dimension_numbers = #tpu.dot_dimension_numbers<[1], [0], [0], [1], [0, 0, 1, 1], [], []>} : vector<8x64xf32>, vector<64x256xf32>, vector<8x256xf32> -> vector<8x256xf32>
    %368 = arith.addf %365, %367 : vector<8x256xf32>
    %369 = vector.broadcast %274 : vector<1x256xf32> to vector<8x256xf32>
    %370 = arith.addf %368, %369 : vector<8x256xf32>
    %371 = vector.extract_strided_slice %370 {offsets = [0, 0], sizes = [8, 192], strides = [1, 1]} : vector<8x256xf32> to vector<8x192xf32>
    %cst_168 = arith.constant 0.000000e+00 : f32
    %372 = vector.broadcast %cst_168 : f32 to vector<8x192xf32>
    %373 = arith.subf %372, %371 : vector<8x192xf32>
    %374 = math.exp %373 : vector<8x192xf32>
    %cst_169 = arith.constant 1.000000e+00 : f32
    %375 = vector.broadcast %cst_169 : f32 to vector<8x192xf32>
    %376 = arith.addf %375, %374 : vector<8x192xf32>
    %cst_170 = arith.constant 1.000000e+00 : f32
    %377 = vector.broadcast %cst_170 : f32 to vector<8x192xf32>
    %378 = arith.divf %377, %376 : vector<8x192xf32>
    %379 = vector.extract_strided_slice %370 {offsets = [0, 192], sizes = [8, 64], strides = [1, 1]} : vector<8x256xf32> to vector<8x64xf32>
    %380 = math.tanh %379 : vector<8x64xf32>
    %381 = vector.extract_strided_slice %378 {offsets = [0, 64], sizes = [8, 64], strides = [1, 1]} : vector<8x192xf32> to vector<8x64xf32>
    %382 = arith.mulf %381, %357 : vector<8x64xf32>
    %383 = vector.extract_strided_slice %378 {offsets = [0, 0], sizes = [8, 64], strides = [1, 1]} : vector<8x192xf32> to vector<8x64xf32>
    %384 = arith.mulf %383, %380 : vector<8x64xf32>
    %385 = arith.addf %382, %384 : vector<8x64xf32>
    %386 = vector.extract_strided_slice %378 {offsets = [0, 128], sizes = [8, 64], strides = [1, 1]} : vector<8x192xf32> to vector<8x64xf32>
    %387 = math.tanh %385 : vector<8x64xf32>
    %388 = arith.mulf %386, %387 : vector<8x64xf32>
    %c0_171 = arith.constant 0 : index
    %c0_172 = arith.constant 0 : index
    %389 = vector.load %arg21[%c0_171, %c0_172] : memref<64x256xf32, #tpu.memory_space<vmem>>, vector<64x256xf32>
    %cst_173 = arith.constant dense<0.000000e+00> : vector<8x256xf32>
    %390 = tpu.matmul %239, %389, %cst_173 {dimension_numbers = #tpu.dot_dimension_numbers<[1], [0], [0], [1], [0, 0, 1, 1], [], []>} : vector<8x64xf32>, vector<64x256xf32>, vector<8x256xf32> -> vector<8x256xf32>
    %c0_174 = arith.constant 0 : index
    %c0_175 = arith.constant 0 : index
    %391 = vector.load %arg22[%c0_174, %c0_175] : memref<64x256xf32, #tpu.memory_space<vmem>>, vector<64x256xf32>
    %cst_176 = arith.constant dense<0.000000e+00> : vector<8x256xf32>
    %392 = tpu.matmul %137, %391, %cst_176 {dimension_numbers = #tpu.dot_dimension_numbers<[1], [0], [0], [1], [0, 0, 1, 1], [], []>} : vector<8x64xf32>, vector<64x256xf32>, vector<8x256xf32> -> vector<8x256xf32>
    %393 = arith.addf %390, %392 : vector<8x256xf32>
    %c0_177 = arith.constant 0 : index
    %c0_178 = arith.constant 0 : index
    %394 = vector.load %arg23[%c0_177, %c0_178] : memref<64x256xf32, #tpu.memory_space<vmem>>, vector<64x256xf32>
    %cst_179 = arith.constant dense<0.000000e+00> : vector<8x256xf32>
    %395 = tpu.matmul %388, %394, %cst_179 {dimension_numbers = #tpu.dot_dimension_numbers<[1], [0], [0], [1], [0, 0, 1, 1], [], []>} : vector<8x64xf32>, vector<64x256xf32>, vector<8x256xf32> -> vector<8x256xf32>
    %396 = arith.addf %393, %395 : vector<8x256xf32>
    %397 = vector.broadcast %274 : vector<1x256xf32> to vector<8x256xf32>
    %398 = arith.addf %396, %397 : vector<8x256xf32>
    %399 = vector.extract_strided_slice %398 {offsets = [0, 0], sizes = [8, 192], strides = [1, 1]} : vector<8x256xf32> to vector<8x192xf32>
    %cst_180 = arith.constant 0.000000e+00 : f32
    %400 = vector.broadcast %cst_180 : f32 to vector<8x192xf32>
    %401 = arith.subf %400, %399 : vector<8x192xf32>
    %402 = math.exp %401 : vector<8x192xf32>
    %cst_181 = arith.constant 1.000000e+00 : f32
    %403 = vector.broadcast %cst_181 : f32 to vector<8x192xf32>
    %404 = arith.addf %403, %402 : vector<8x192xf32>
    %cst_182 = arith.constant 1.000000e+00 : f32
    %405 = vector.broadcast %cst_182 : f32 to vector<8x192xf32>
    %406 = arith.divf %405, %404 : vector<8x192xf32>
    %407 = vector.extract_strided_slice %398 {offsets = [0, 192], sizes = [8, 64], strides = [1, 1]} : vector<8x256xf32> to vector<8x64xf32>
    %408 = math.tanh %407 : vector<8x64xf32>
    %409 = vector.extract_strided_slice %406 {offsets = [0, 64], sizes = [8, 64], strides = [1, 1]} : vector<8x192xf32> to vector<8x64xf32>
    %410 = arith.mulf %409, %385 : vector<8x64xf32>
    %411 = vector.extract_strided_slice %406 {offsets = [0, 0], sizes = [8, 64], strides = [1, 1]} : vector<8x192xf32> to vector<8x64xf32>
    %412 = arith.mulf %411, %408 : vector<8x64xf32>
    %413 = arith.addf %410, %412 : vector<8x64xf32>
    %414 = vector.extract_strided_slice %406 {offsets = [0, 128], sizes = [8, 64], strides = [1, 1]} : vector<8x192xf32> to vector<8x64xf32>
    %415 = math.tanh %413 : vector<8x64xf32>
    %416 = arith.mulf %414, %415 : vector<8x64xf32>
    %c0_183 = arith.constant 0 : index
    %c0_184 = arith.constant 0 : index
    %417 = vector.load %arg21[%c0_183, %c0_184] : memref<64x256xf32, #tpu.memory_space<vmem>>, vector<64x256xf32>
    %cst_185 = arith.constant dense<0.000000e+00> : vector<8x256xf32>
    %418 = tpu.matmul %273, %417, %cst_185 {dimension_numbers = #tpu.dot_dimension_numbers<[1], [0], [0], [1], [0, 0, 1, 1], [], []>} : vector<8x64xf32>, vector<64x256xf32>, vector<8x256xf32> -> vector<8x256xf32>
    %c0_186 = arith.constant 0 : index
    %c0_187 = arith.constant 0 : index
    %419 = vector.load %arg22[%c0_186, %c0_187] : memref<64x256xf32, #tpu.memory_space<vmem>>, vector<64x256xf32>
    %cst_188 = arith.constant dense<0.000000e+00> : vector<8x256xf32>
    %420 = tpu.matmul %103, %419, %cst_188 {dimension_numbers = #tpu.dot_dimension_numbers<[1], [0], [0], [1], [0, 0, 1, 1], [], []>} : vector<8x64xf32>, vector<64x256xf32>, vector<8x256xf32> -> vector<8x256xf32>
    %421 = arith.addf %418, %420 : vector<8x256xf32>
    %c0_189 = arith.constant 0 : index
    %c0_190 = arith.constant 0 : index
    %422 = vector.load %arg23[%c0_189, %c0_190] : memref<64x256xf32, #tpu.memory_space<vmem>>, vector<64x256xf32>
    %cst_191 = arith.constant dense<0.000000e+00> : vector<8x256xf32>
    %423 = tpu.matmul %416, %422, %cst_191 {dimension_numbers = #tpu.dot_dimension_numbers<[1], [0], [0], [1], [0, 0, 1, 1], [], []>} : vector<8x64xf32>, vector<64x256xf32>, vector<8x256xf32> -> vector<8x256xf32>
    %424 = arith.addf %421, %423 : vector<8x256xf32>
    %425 = vector.broadcast %274 : vector<1x256xf32> to vector<8x256xf32>
    %426 = arith.addf %424, %425 : vector<8x256xf32>
    %427 = vector.extract_strided_slice %426 {offsets = [0, 0], sizes = [8, 192], strides = [1, 1]} : vector<8x256xf32> to vector<8x192xf32>
    %cst_192 = arith.constant 0.000000e+00 : f32
    %428 = vector.broadcast %cst_192 : f32 to vector<8x192xf32>
    %429 = arith.subf %428, %427 : vector<8x192xf32>
    %430 = math.exp %429 : vector<8x192xf32>
    %cst_193 = arith.constant 1.000000e+00 : f32
    %431 = vector.broadcast %cst_193 : f32 to vector<8x192xf32>
    %432 = arith.addf %431, %430 : vector<8x192xf32>
    %cst_194 = arith.constant 1.000000e+00 : f32
    %433 = vector.broadcast %cst_194 : f32 to vector<8x192xf32>
    %434 = arith.divf %433, %432 : vector<8x192xf32>
    %435 = vector.extract_strided_slice %426 {offsets = [0, 192], sizes = [8, 64], strides = [1, 1]} : vector<8x256xf32> to vector<8x64xf32>
    %436 = math.tanh %435 : vector<8x64xf32>
    %437 = vector.extract_strided_slice %434 {offsets = [0, 64], sizes = [8, 64], strides = [1, 1]} : vector<8x192xf32> to vector<8x64xf32>
    %438 = arith.mulf %437, %413 : vector<8x64xf32>
    %439 = vector.extract_strided_slice %434 {offsets = [0, 0], sizes = [8, 64], strides = [1, 1]} : vector<8x192xf32> to vector<8x64xf32>
    %440 = arith.mulf %439, %436 : vector<8x64xf32>
    %441 = arith.addf %438, %440 : vector<8x64xf32>
    %442 = vector.extract_strided_slice %434 {offsets = [0, 128], sizes = [8, 64], strides = [1, 1]} : vector<8x192xf32> to vector<8x64xf32>
    %443 = math.tanh %441 : vector<8x64xf32>
    %444 = arith.mulf %442, %443 : vector<8x64xf32>
    %c0_195 = arith.constant 0 : index
    %c0_196 = arith.constant 0 : index
    %445 = vector.load %arg25[%c0_195, %c0_196] : memref<64x64xf32, #tpu.memory_space<vmem>>, vector<64x64xf32>
    %cst_197 = arith.constant dense<0.000000e+00> : vector<8x64xf32>
    %446 = tpu.matmul %304, %445, %cst_197 {dimension_numbers = #tpu.dot_dimension_numbers<[1], [0], [0], [1], [0, 0, 1, 1], [], []>} : vector<8x64xf32>, vector<64x64xf32>, vector<8x64xf32> -> vector<8x64xf32>
    %c0_198 = arith.constant 0 : index
    %c0_199 = arith.constant 0 : index
    %447 = vector.load %arg26[%c0_198, %c0_199] : memref<64x64xf32, #tpu.memory_space<vmem>>, vector<64x64xf32>
    %cst_200 = arith.constant dense<0.000000e+00> : vector<8x64xf32>
    %448 = tpu.matmul %444, %447, %cst_200 {dimension_numbers = #tpu.dot_dimension_numbers<[1], [0], [0], [1], [0, 0, 1, 1], [], []>} : vector<8x64xf32>, vector<64x64xf32>, vector<8x64xf32> -> vector<8x64xf32>
    %449 = arith.addf %446, %448 : vector<8x64xf32>
    %c0_201 = arith.constant 0 : index
    %c0_202 = arith.constant 0 : index
    %450 = vector.load %arg27[%c0_201, %c0_202] : memref<1x64xf32, #tpu.memory_space<vmem>>, vector<1x64xf32>
    %451 = vector.broadcast %450 : vector<1x64xf32> to vector<8x64xf32>
    %452 = arith.addf %449, %451 : vector<8x64xf32>
    %c0_203 = arith.constant 0 : index
    %c0_204 = arith.constant 0 : index
    %453 = vector.load %arg28[%c0_203, %c0_204] : memref<64x3xf32, #tpu.memory_space<vmem>>, vector<64x3xf32>
    %cst_205 = arith.constant dense<0.000000e+00> : vector<8x3xf32>
    %454 = tpu.matmul %452, %453, %cst_205 {dimension_numbers = #tpu.dot_dimension_numbers<[1], [0], [0], [1], [0, 0, 1, 1], [], []>} : vector<8x64xf32>, vector<64x3xf32>, vector<8x3xf32> -> vector<8x3xf32>
    %c0_206 = arith.constant 0 : index
    %c0_207 = arith.constant 0 : index
    %455 = vector.load %arg29[%c0_206, %c0_207] : memref<1x3xf32, #tpu.memory_space<vmem>>, vector<1x3xf32>
    %456 = vector.broadcast %455 : vector<1x3xf32> to vector<8x3xf32>
    %457 = arith.addf %454, %456 : vector<8x3xf32>
    %c0_208 = arith.constant 0 : index
    %c0_209 = arith.constant 0 : index
    %458 = vector.load %arg30[%c0_208, %c0_209] : memref<8x3xf32, #tpu.memory_space<vmem>>, vector<8x3xf32>
    tpu.vector_store %arg30[%c0_208, %c0_209], %457 {strides = array<i32>} : memref<8x3xf32, #tpu.memory_space<vmem>>, vector<8x3xf32>,
    return
  }
  func.func @transform_0(%arg0: i32) -> (i32, i32) {
    %c0_i32 = arith.constant 0 : i32
    %c0_i32_0 = arith.constant 0 : i32
    return %arg0, %c0_i32 : i32, i32
  }
  func.func @transform_1(%arg0: i32) -> (i32, i32) {
    %c0_i32 = arith.constant 0 : i32
    %c0_i32_0 = arith.constant 0 : i32
    %c0_i32_1 = arith.constant 0 : i32
    return %c0_i32, %c0_i32_0 : i32, i32
  }
  func.func @transform_2(%arg0: i32) -> (i32, i32) {
    %c0_i32 = arith.constant 0 : i32
    %c0_i32_0 = arith.constant 0 : i32
    %c0_i32_1 = arith.constant 0 : i32
    return %c0_i32, %c0_i32_0 : i32, i32
  }
  func.func @transform_3(%arg0: i32) -> (i32, i32) {
    %c0_i32 = arith.constant 0 : i32
    %c0_i32_0 = arith.constant 0 : i32
    %c0_i32_1 = arith.constant 0 : i32
    return %c0_i32, %c0_i32_0 : i32, i32
  }
  func.func @transform_4(%arg0: i32) -> (i32, i32) {
    %c0_i32 = arith.constant 0 : i32
    %c0_i32_0 = arith.constant 0 : i32
    %c0_i32_1 = arith.constant 0 : i32
    return %c0_i32, %c0_i32_0 : i32, i32
  }
  func.func @transform_5(%arg0: i32) -> (i32, i32) {
    %c0_i32 = arith.constant 0 : i32
    %c0_i32_0 = arith.constant 0 : i32
    %c0_i32_1 = arith.constant 0 : i32
    return %c0_i32, %c0_i32_0 : i32, i32
  }
  func.func @transform_6(%arg0: i32) -> (i32, i32) {
    %c0_i32 = arith.constant 0 : i32
    %c0_i32_0 = arith.constant 0 : i32
    %c0_i32_1 = arith.constant 0 : i32
    return %c0_i32, %c0_i32_0 : i32, i32
  }
  func.func @transform_7(%arg0: i32) -> (i32, i32) {
    %c0_i32 = arith.constant 0 : i32
    %c0_i32_0 = arith.constant 0 : i32
    %c0_i32_1 = arith.constant 0 : i32
    return %c0_i32, %c0_i32_0 : i32, i32
  }
  func.func @transform_8(%arg0: i32) -> (i32, i32) {
    %c0_i32 = arith.constant 0 : i32
    %c0_i32_0 = arith.constant 0 : i32
    %c0_i32_1 = arith.constant 0 : i32
    return %c0_i32, %c0_i32_0 : i32, i32
  }
  func.func @transform_9(%arg0: i32) -> (i32, i32) {
    %c0_i32 = arith.constant 0 : i32
    %c0_i32_0 = arith.constant 0 : i32
    %c0_i32_1 = arith.constant 0 : i32
    return %c0_i32, %c0_i32_0 : i32, i32
  }
  func.func @transform_10(%arg0: i32) -> (i32, i32) {
    %c0_i32 = arith.constant 0 : i32
    %c0_i32_0 = arith.constant 0 : i32
    %c0_i32_1 = arith.constant 0 : i32
    return %c0_i32, %c0_i32_0 : i32, i32
  }
  func.func @transform_11(%arg0: i32) -> (i32, i32) {
    %c0_i32 = arith.constant 0 : i32
    %c0_i32_0 = arith.constant 0 : i32
    %c0_i32_1 = arith.constant 0 : i32
    return %c0_i32, %c0_i32_0 : i32, i32
  }
  func.func @transform_12(%arg0: i32) -> (i32, i32) {
    %c0_i32 = arith.constant 0 : i32
    %c0_i32_0 = arith.constant 0 : i32
    %c0_i32_1 = arith.constant 0 : i32
    return %c0_i32, %c0_i32_0 : i32, i32
  }
  func.func @transform_13(%arg0: i32) -> (i32, i32) {
    %c0_i32 = arith.constant 0 : i32
    %c0_i32_0 = arith.constant 0 : i32
    %c0_i32_1 = arith.constant 0 : i32
    return %c0_i32, %c0_i32_0 : i32, i32
  }
  func.func @transform_14(%arg0: i32) -> (i32, i32) {
    %c0_i32 = arith.constant 0 : i32
    %c0_i32_0 = arith.constant 0 : i32
    %c0_i32_1 = arith.constant 0 : i32
    return %c0_i32, %c0_i32_0 : i32, i32
  }
  func.func @transform_15(%arg0: i32) -> (i32, i32) {
    %c0_i32 = arith.constant 0 : i32
    %c0_i32_0 = arith.constant 0 : i32
    %c0_i32_1 = arith.constant 0 : i32
    return %c0_i32, %c0_i32_0 : i32, i32
  }
  func.func @transform_16(%arg0: i32) -> (i32, i32) {
    %c0_i32 = arith.constant 0 : i32
    %c0_i32_0 = arith.constant 0 : i32
    %c0_i32_1 = arith.constant 0 : i32
    return %c0_i32, %c0_i32_0 : i32, i32
  }
  func.func @transform_17(%arg0: i32) -> (i32, i32) {
    %c0_i32 = arith.constant 0 : i32
    %c0_i32_0 = arith.constant 0 : i32
    %c0_i32_1 = arith.constant 0 : i32
    return %c0_i32, %c0_i32_0 : i32, i32
  }
  func.func @transform_18(%arg0: i32) -> (i32, i32) {
    %c0_i32 = arith.constant 0 : i32
    %c0_i32_0 = arith.constant 0 : i32
    %c0_i32_1 = arith.constant 0 : i32
    return %c0_i32, %c0_i32_0 : i32, i32
  }
  func.func @transform_19(%arg0: i32) -> (i32, i32) {
    %c0_i32 = arith.constant 0 : i32
    %c0_i32_0 = arith.constant 0 : i32
    %c0_i32_1 = arith.constant 0 : i32
    return %c0_i32, %c0_i32_0 : i32, i32
  }
  func.func @transform_20(%arg0: i32) -> (i32, i32) {
    %c0_i32 = arith.constant 0 : i32
    %c0_i32_0 = arith.constant 0 : i32
    %c0_i32_1 = arith.constant 0 : i32
    return %c0_i32, %c0_i32_0 : i32, i32
  }
  func.func @transform_21(%arg0: i32) -> (i32, i32) {
    %c0_i32 = arith.constant 0 : i32
    %c0_i32_0 = arith.constant 0 : i32
    %c0_i32_1 = arith.constant 0 : i32
    return %c0_i32, %c0_i32_0 : i32, i32
  }
  func.func @transform_22(%arg0: i32) -> (i32, i32) {
    %c0_i32 = arith.constant 0 : i32
    %c0_i32_0 = arith.constant 0 : i32
    %c0_i32_1 = arith.constant 0 : i32
    return %c0_i32, %c0_i32_0 : i32, i32
  }
  func.func @transform_23(%arg0: i32) -> (i32, i32) {
    %c0_i32 = arith.constant 0 : i32
    %c0_i32_0 = arith.constant 0 : i32
    %c0_i32_1 = arith.constant 0 : i32
    return %c0_i32, %c0_i32_0 : i32, i32
  }
  func.func @transform_24(%arg0: i32) -> (i32, i32) {
    %c0_i32 = arith.constant 0 : i32
    %c0_i32_0 = arith.constant 0 : i32
    %c0_i32_1 = arith.constant 0 : i32
    return %c0_i32, %c0_i32_0 : i32, i32
  }
  func.func @transform_25(%arg0: i32) -> (i32, i32) {
    %c0_i32 = arith.constant 0 : i32
    %c0_i32_0 = arith.constant 0 : i32
    %c0_i32_1 = arith.constant 0 : i32
    return %c0_i32, %c0_i32_0 : i32, i32
  }
  func.func @transform_26(%arg0: i32) -> (i32, i32) {
    %c0_i32 = arith.constant 0 : i32
    %c0_i32_0 = arith.constant 0 : i32
    %c0_i32_1 = arith.constant 0 : i32
    return %c0_i32, %c0_i32_0 : i32, i32
  }
  func.func @transform_27(%arg0: i32) -> (i32, i32) {
    %c0_i32 = arith.constant 0 : i32
    %c0_i32_0 = arith.constant 0 : i32
    %c0_i32_1 = arith.constant 0 : i32
    return %c0_i32, %c0_i32_0 : i32, i32
  }
  func.func @transform_28(%arg0: i32) -> (i32, i32) {
    %c0_i32 = arith.constant 0 : i32
    %c0_i32_0 = arith.constant 0 : i32
    %c0_i32_1 = arith.constant 0 : i32
    return %c0_i32, %c0_i32_0 : i32, i32
  }
  func.func @transform_29(%arg0: i32) -> (i32, i32) {
    %c0_i32 = arith.constant 0 : i32
    %c0_i32_0 = arith.constant 0 : i32
    return %arg0, %c0_i32 : i32, i32
  }
}

</mosaic_0001>

<llo_original>
// kernel: seis_forward.1
$region0: #{seis_forward.1}
  #allocation0 [shape = 'u32[]', space=smem, size = 0x4, offset = 0x4, fixed_abs, tag = 'smem constant byte address 0x4 - core index']
  #allocation1 [shape = 'u32[144,128]{1,0:T(1,128)}', space=vmem, size = 0x12000, scoped, tag = 'internal scratch']
  %s0 = inlined_call_operand.smem [shape: u32[30], index: -1, kind: input, shape index: {}]
  %s1 = sld [smem:[%s0]]
  %s2 = scalar_lea.smem %s0, 1
  %s3 = sld [smem:[%s2]]
  %s4 = scalar_lea.smem %s0, 2
  %s5 = sld [smem:[%s4]]
  %s6 = scalar_lea.smem %s0, 3
  %s7 = sld [smem:[%s6]]
  %s8 = scalar_lea.smem %s0, 4
  %s9 = sld [smem:[%s8]]
  %s10 = scalar_lea.smem %s0, 5
  %s11 = sld [smem:[%s10]]
  %s12 = scalar_lea.smem %s0, 6
  %s13 = sld [smem:[%s12]]
  %s14 = scalar_lea.smem %s0, 7
  %s15 = sld [smem:[%s14]]
  %s16 = scalar_lea.smem %s0, 8
  %s17 = sld [smem:[%s16]]
  %s18 = scalar_lea.smem %s0, 9
  %s19 = sld [smem:[%s18]]
  %s20 = scalar_lea.smem %s0, 10
  %s21 = sld [smem:[%s20]]
  %s22 = scalar_lea.smem %s0, 11
  %s23 = sld [smem:[%s22]]
  %s24 = scalar_lea.smem %s0, 12
  %s25 = sld [smem:[%s24]]
  %s26 = scalar_lea.smem %s0, 13
  %s27 = sld [smem:[%s26]]
  %s28 = scalar_lea.smem %s0, 14
  %s29 = sld [smem:[%s28]]
  %s30 = scalar_lea.smem %s0, 15
  %s31 = sld [smem:[%s30]]
  %s32 = scalar_lea.smem %s0, 16
  %s33 = sld [smem:[%s32]]
  %s34 = scalar_lea.smem %s0, 17
  %s35 = sld [smem:[%s34]]
  %s36 = scalar_lea.smem %s0, 18
  %s37 = sld [smem:[%s36]]
  %s38 = scalar_lea.smem %s0, 19
  %s39 = sld [smem:[%s38]]
  %s40 = scalar_lea.smem %s0, 20
  %s41 = sld [smem:[%s40]]
  %s42 = scalar_lea.smem %s0, 21
  %s43 = sld [smem:[%s42]]
  %s44 = scalar_lea.smem %s0, 22
  %s45 = sld [smem:[%s44]]
  %s46 = scalar_lea.smem %s0, 23
  %s47 = sld [smem:[%s46]]
  %s48 = scalar_lea.smem %s0, 24
  %s49 = sld [smem:[%s48]]
  %s50 = scalar_lea.smem %s0, 25
  %s51 = sld [smem:[%s50]]
  %s52 = scalar_lea.smem %s0, 26
  %s53 = sld [smem:[%s52]]
  %s54 = scalar_lea.smem %s0, 27
  %s55 = sld [smem:[%s54]]
  %s56 = scalar_lea.smem %s0, 28
  %s57 = sld [smem:[%s56]]
  %s58 = scalar_lea.smem %s0, 29
  %s59 = sld [smem:[%s58]]
  %s60 = sld [smem:[#allocation0]]
  $region149: #{seis_forward.1} parent=0
    _
  %s62 = ssub.s32 1, %s60
  %s63 = scalar_select 0, %s62, %s60
  loop: start=0, step=1, limit=4
  $region2: #{seis_forward.1} parent=0 // loop_pre_header
    _
  $region3: #{seis_forward.1} parent=0 // loop_header
    %s65 = sphi 0, %s69
    %p66 = scmp.ge.s32.totalorder %s65, 4
    %s75 = sphi 0, %s77
    %s78 = sphi 0, %s75
    %s79 = sphi 0, %s78
    %s95 = sphi 0, %s79
    %s99 = sphi 0, %s99
    %s101 = sphi 0, %s99
    %s102 = sphi 0, %s101
    %s116 = sphi 0, %s102
    %s120 = sphi 0, %s120
    %s122 = sphi 0, %s120
    %s123 = sphi 0, %s122
    %s137 = sphi 0, %s123
    %s141 = sphi 0, %s141
    %s143 = sphi 0, %s141
    %s144 = sphi 0, %s143
    %s158 = sphi 0, %s144
    %s162 = sphi 0, %s162
    %s164 = sphi 0, %s162
    %s165 = sphi 0, %s164
    %s179 = sphi 0, %s165
    %s183 = sphi 0, %s183
    %s185 = sphi 0, %s183
    %s186 = sphi 0, %s185
    %s200 = sphi 0, %s186
    %s204 = sphi 0, %s204
    %s206 = sphi 0, %s204
    %s207 = sphi 0, %s206
    %s221 = sphi 0, %s207
    %s225 = sphi 0, %s225
    %s227 = sphi 0, %s225
    %s228 = sphi 0, %s227
    %s242 = sphi 0, %s228
    %s246 = sphi 0, %s246
    %s248 = sphi 0, %s246
    %s249 = sphi 0, %s248
    %s263 = sphi 0, %s249
    %s267 = sphi 0, %s267
    %s269 = sphi 0, %s267
    %s270 = sphi 0, %s269
    %s284 = sphi 0, %s270
    %s288 = sphi 0, %s288
    %s290 = sphi 0, %s288
    %s291 = sphi 0, %s290
    %s305 = sphi 0, %s291
    %s309 = sphi 0, %s309
    %s311 = sphi 0, %s309
    %s312 = sphi 0, %s311
    %s326 = sphi 0, %s312
    %s330 = sphi 0, %s330
    %s332 = sphi 0, %s330
    %s333 = sphi 0, %s332
    %s347 = sphi 0, %s333
    %s351 = sphi 0, %s351
    %s353 = sphi 0, %s351
    %s354 = sphi 0, %s353
    %s368 = sphi 0, %s354
    %s372 = sphi 0, %s372
    %s374 = sphi 0, %s372
    %s375 = sphi 0, %s374
    %s389 = sphi 0, %s375
    %s393 = sphi 0, %s393
    %s395 = sphi 0, %s393
    %s396 = sphi 0, %s395
    %s410 = sphi 0, %s396
    %s414 = sphi 0, %s414
    %s416 = sphi 0, %s414
    %s417 = sphi 0, %s416
    %s431 = sphi 0, %s417
    %s435 = sphi 0, %s435
    %s437 = sphi 0, %s435
    %s438 = sphi 0, %s437
    %s452 = sphi 0, %s438
    %s456 = sphi 0, %s456
    %s458 = sphi 0, %s456
    %s459 = sphi 0, %s458
    %s473 = sphi 0, %s459
    %s477 = sphi 0, %s477
    %s479 = sphi 0, %s477
    %s480 = sphi 0, %s479
    %s494 = sphi 0, %s480
    %s498 = sphi 0, %s498
    %s500 = sphi 0, %s498
    %s501 = sphi 0, %s500
    %s515 = sphi 0, %s501
    %s519 = sphi 0, %s519
    %s521 = sphi 0, %s519
    %s522 = sphi 0, %s521
    %s536 = sphi 0, %s522
    %s540 = sphi 0, %s540
    %s542 = sphi 0, %s540
    %s543 = sphi 0, %s542
    %s557 = sphi 0, %s543
    %s561 = sphi 0, %s561
    %s563 = sphi 0, %s561
    %s564 = sphi 0, %s563
    %s578 = sphi 0, %s564
    %s582 = sphi 0, %s582
    %s584 = sphi 0, %s582
    %s585 = sphi 0, %s584
    %s599 = sphi 0, %s585
    %s603 = sphi 0, %s603
    %s605 = sphi 0, %s603
    %s606 = sphi 0, %s605
    %s620 = sphi 0, %s606
    %s624 = sphi 0, %s624
    %s626 = sphi 0, %s624
    %s627 = sphi 0, %s626
    %s641 = sphi 0, %s627
    %s645 = sphi 0, %s645
    %s647 = sphi 0, %s645
    %s648 = sphi 0, %s647
    %s662 = sphi 0, %s648
    %s666 = sphi 0, %s666
    %s668 = sphi 0, %s666
    %s669 = sphi 0, %s668
    %s683 = sphi 0, %s669
    %s689 = sphi 0, %s691
    %s692 = sphi 0, %s689
    %s693 = sphi 0, %s692
    %s709 = sphi 0, %s693
  $region4: #{seis_forward.1} parent=0 // loop_header_branch
    %68 = sbr.rel (%p66) target = $region8
  $region5: #{seis_forward.1} parent=0 // loop_body
    %s70 = ssub.s32 %s65, 1
    %s71 = ssub.s32 %s65, 2
    %s72 = sadd.s32 %s65, 1
    %s73 = ssub.s32 %s65, %s72
    %p74 = scmp.eq.s32.totalorder %s73, 0
    %s76 = sadd.s32 %s75, 1
    %s77 = scalar_select %p74, %s75, %s76
    %p80 = pneg %p74
    %p81 = scmp.eq.s32.totalorder %s65, 1
    %p82 = por %p80, %p81
    %p83 = scmp.ne.s32.totalorder %s75, %s78
    %p84 = scmp.eq.s32.totalorder %s65, 0
    %p85 = por %p83, %p84
    %p86 = scmp.ne.s32.totalorder %s75, %s78
    %p87 = scmp.eq.s32.totalorder %s70, 1
    %p88 = por %p86, %p87
    %p89 = scmp.ne.s32.totalorder %s78, %s79
    %p90 = scmp.eq.s32.totalorder %s70, 0
    %p91 = por %p89, %p90
    %p92 = scmp.ne.s32.totalorder %s78, %s79
    %p93 = scmp.eq.s32.totalorder %s71, 1
    %p94 = por %p92, %p93
    %p96 = scmp.ne.s32.totalorder %s79, %s95
    %p97 = scmp.eq.s32.totalorder %s71, 0
    %p98 = por %p96, %p97
    %s100 = sadd.s32 %s99, 1
    %p103 = scmp.eq.s32.totalorder %s65, 1
    %p104 = scmp.ne.s32.totalorder %s99, %s101
    %p105 = scmp.eq.s32.totalorder %s65, 0
    %p106 = por %p104, %p105
    %p107 = scmp.ne.s32.totalorder %s99, %s101
    %p108 = scmp.eq.s32.totalorder %s70, 1
    %p109 = por %p107, %p108
    %p110 = scmp.ne.s32.totalorder %s101, %s102
    %p111 = scmp.eq.s32.totalorder %s70, 0
    %p112 = por %p110, %p111
    %p113 = scmp.ne.s32.totalorder %s101, %s102
    %p114 = scmp.eq.s32.totalorder %s71, 1
    %p115 = por %p113, %p114
    %p117 = scmp.ne.s32.totalorder %s102, %s116
    %p118 = scmp.eq.s32.totalorder %s71, 0
    %p119 = por %p117, %p118
    %s121 = sadd.s32 %s120, 1
    %p124 = scmp.eq.s32.totalorder %s65, 1
    %p125 = scmp.ne.s32.totalorder %s120, %s122
    %p126 = scmp.eq.s32.totalorder %s65, 0
    %p127 = por %p125, %p126
    %p128 = scmp.ne.s32.totalorder %s120, %s122
    %p129 = scmp.eq.s32.totalorder %s70, 1
    %p130 = por %p128, %p129
    %p131 = scmp.ne.s32.totalorder %s122, %s123
    %p132 = scmp.eq.s32.totalorder %s70, 0
    %p133 = por %p131, %p132
    %p134 = scmp.ne.s32.totalorder %s122, %s123
    %p135 = scmp.eq.s32.totalorder %s71, 1
    %p136 = por %p134, %p135
    %p138 = scmp.ne.s32.totalorder %s123, %s137
    %p139 = scmp.eq.s32.totalorder %s71, 0
    %p140 = por %p138, %p139
    %s142 = sadd.s32 %s141, 1
    %p145 = scmp.eq.s32.totalorder %s65, 1
    %p146 = scmp.ne.s32.totalorder %s141, %s143
    %p147 = scmp.eq.s32.totalorder %s65, 0
    %p148 = por %p146, %p147
    %p149 = scmp.ne.s32.totalorder %s141, %s143
    %p150 = scmp.eq.s32.totalorder %s70, 1
    %p151 = por %p149, %p150
    %p152 = scmp.ne.s32.totalorder %s143, %s144
    %p153 = scmp.eq.s32.totalorder %s70, 0
    %p154 = por %p152, %p153
    %p155 = scmp.ne.s32.totalorder %s143, %s144
    %p156 = scmp.eq.s32.totalorder %s71, 1
    %p157 = por %p155, %p156
    %p159 = scmp.ne.s32.totalorder %s144, %s158
    %p160 = scmp.eq.s32.totalorder %s71, 0
    %p161 = por %p159, %p160
    %s163 = sadd.s32 %s162, 1
    %p166 = scmp.eq.s32.totalorder %s65, 1
    %p167 = scmp.ne.s32.totalorder %s162, %s164
    %p168 = scmp.eq.s32.totalorder %s65, 0
    %p169 = por %p167, %p168
    %p170 = scmp.ne.s32.totalorder %s162, %s164
    %p171 = scmp.eq.s32.totalorder %s70, 1
    %p172 = por %p170, %p171
    %p173 = scmp.ne.s32.totalorder %s164, %s165
    %p174 = scmp.eq.s32.totalorder %s70, 0
    %p175 = por %p173, %p174
    %p176 = scmp.ne.s32.totalorder %s164, %s165
    %p177 = scmp.eq.s32.totalorder %s71, 1
    %p178 = por %p176, %p177
    %p180 = scmp.ne.s32.totalorder %s165, %s179
    %p181 = scmp.eq.s32.totalorder %s71, 0
    %p182 = por %p180, %p181
    %s184 = sadd.s32 %s183, 1
    %p187 = scmp.eq.s32.totalorder %s65, 1
    %p188 = scmp.ne.s32.totalorder %s183, %s185
    %p189 = scmp.eq.s32.totalorder %s65, 0
    %p190 = por %p188, %p189
    %p191 = scmp.ne.s32.totalorder %s183, %s185
    %p192 = scmp.eq.s32.totalorder %s70, 1
    %p193 = por %p191, %p192
    %p194 = scmp.ne.s32.totalorder %s185, %s186
    %p195 = scmp.eq.s32.totalorder %s70, 0
    %p196 = por %p194, %p195
    %p197 = scmp.ne.s32.totalorder %s185, %s186
    %p198 = scmp.eq.s32.totalorder %s71, 1
    %p199 = por %p197, %p198
    %p201 = scmp.ne.s32.totalorder %s186, %s200
    %p202 = scmp.eq.s32.totalorder %s71, 0
    %p203 = por %p201, %p202
    %s205 = sadd.s32 %s204, 1
    %p208 = scmp.eq.s32.totalorder %s65, 1
    %p209 = scmp.ne.s32.totalorder %s204, %s206
    %p210 = scmp.eq.s32.totalorder %s65, 0
    %p211 = por %p209, %p210
    %p212 = scmp.ne.s32.totalorder %s204, %s206
    %p213 = scmp.eq.s32.totalorder %s70, 1
    %p214 = por %p212, %p213
    %p215 = scmp.ne.s32.totalorder %s206, %s207
    %p216 = scmp.eq.s32.totalorder %s70, 0
    %p217 = por %p215, %p216
    %p218 = scmp.ne.s32.totalorder %s206, %s207
    %p219 = scmp.eq.s32.totalorder %s71, 1
    %p220 = por %p218, %p219
    %p222 = scmp.ne.s32.totalorder %s207, %s221
    %p223 = scmp.eq.s32.totalorder %s71, 0
    %p224 = por %p222, %p223
    %s226 = sadd.s32 %s225, 1
    %p229 = scmp.eq.s32.totalorder %s65, 1
    %p230 = scmp.ne.s32.totalorder %s225, %s227
    %p231 = scmp.eq.s32.totalorder %s65, 0
    %p232 = por %p230, %p231
    %p233 = scmp.ne.s32.totalorder %s225, %s227
    %p234 = scmp.eq.s32.totalorder %s70, 1
    %p235 = por %p233, %p234
    %p236 = scmp.ne.s32.totalorder %s227, %s228
    %p237 = scmp.eq.s32.totalorder %s70, 0
    %p238 = por %p236, %p237
    %p239 = scmp.ne.s32.totalorder %s227, %s228
    %p240 = scmp.eq.s32.totalorder %s71, 1
    %p241 = por %p239, %p240
    %p243 = scmp.ne.s32.totalorder %s228, %s242
    %p244 = scmp.eq.s32.totalorder %s71, 0
    %p245 = por %p243, %p244
    %s247 = sadd.s32 %s246, 1
    %p250 = scmp.eq.s32.totalorder %s65, 1
    %p251 = scmp.ne.s32.totalorder %s246, %s248
    %p252 = scmp.eq.s32.totalorder %s65, 0
    %p253 = por %p251, %p252
    %p254 = scmp.ne.s32.totalorder %s246, %s248
    %p255 = scmp.eq.s32.totalorder %s70, 1
    %p256 = por %p254, %p255
    %p257 = scmp.ne.s32.totalorder %s248, %s249
    %p258 = scmp.eq.s32.totalorder %s70, 0
    %p259 = por %p257, %p258
    %p260 = scmp.ne.s32.totalorder %s248, %s249
    %p261 = scmp.eq.s32.totalorder %s71, 1
    %p262 = por %p260, %p261
    %p264 = scmp.ne.s32.totalorder %s249, %s263
    %p265 = scmp.eq.s32.totalorder %s71, 0
    %p266 = por %p264, %p265
    %s268 = sadd.s32 %s267, 1
    %p271 = scmp.eq.s32.totalorder %s65, 1
    %p272 = scmp.ne.s32.totalorder %s267, %s269
    %p273 = scmp.eq.s32.totalorder %s65, 0
    %p274 = por %p272, %p273
    %p275 = scmp.ne.s32.totalorder %s267, %s269
    %p276 = scmp.eq.s32.totalorder %s70, 1
    %p277 = por %p275, %p276
    %p278 = scmp.ne.s32.totalorder %s269, %s270
    %p279 = scmp.eq.s32.totalorder %s70, 0
    %p280 = por %p278, %p279
    %p281 = scmp.ne.s32.totalorder %s269, %s270
    %p282 = scmp.eq.s32.totalorder %s71, 1
    %p283 = por %p281, %p282
    %p285 = scmp.ne.s32.totalorder %s270, %s284
    %p286 = scmp.eq.s32.totalorder %s71, 0
    %p287 = por %p285, %p286
    %s289 = sadd.s32 %s288, 1
    %p292 = scmp.eq.s32.totalorder %s65, 1
    %p293 = scmp.ne.s32.totalorder %s288, %s290
    %p294 = scmp.eq.s32.totalorder %s65, 0
    %p295 = por %p293, %p294
    %p296 = scmp.ne.s32.totalorder %s288, %s290
    %p297 = scmp.eq.s32.totalorder %s70, 1
    %p298 = por %p296, %p297
    %p299 = scmp.ne.s32.totalorder %s290, %s291
    %p300 = scmp.eq.s32.totalorder %s70, 0
    %p301 = por %p299, %p300
    %p302 = scmp.ne.s32.totalorder %s290, %s291
    %p303 = scmp.eq.s32.totalorder %s71, 1
    %p304 = por %p302, %p303
    %p306 = scmp.ne.s32.totalorder %s291, %s305
    %p307 = scmp.eq.s32.totalorder %s71, 0
    %p308 = por %p306, %p307
    %s310 = sadd.s32 %s309, 1
    %p313 = scmp.eq.s32.totalorder %s65, 1
    %p314 = scmp.ne.s32.totalorder %s309, %s311
    %p315 = scmp.eq.s32.totalorder %s65, 0
    %p316 = por %p314, %p315
    %p317 = scmp.ne.s32.totalorder %s309, %s311
    %p318 = scmp.eq.s32.totalorder %s70, 1
    %p319 = por %p317, %p318
    %p320 = scmp.ne.s32.totalorder %s311, %s312
    %p321 = scmp.eq.s32.totalorder %s70, 0
    %p322 = por %p320, %p321
    %p323 = scmp.ne.s32.totalorder %s311, %s312
    %p324 = scmp.eq.s32.totalorder %s71, 1
    %p325 = por %p323, %p324
    %p327 = scmp.ne.s32.totalorder %s312, %s326
    %p328 = scmp.eq.s32.totalorder %s71, 0
    %p329 = por %p327, %p328
    %s331 = sadd.s32 %s330, 1
    %p334 = scmp.eq.s32.totalorder %s65, 1
    %p335 = scmp.ne.s32.totalorder %s330, %s332
    %p336 = scmp.eq.s32.totalorder %s65, 0
    %p337 = por %p335, %p336
    %p338 = scmp.ne.s32.totalorder %s330, %s332
    %p339 = scmp.eq.s32.totalorder %s70, 1
    %p340 = por %p338, %p339
    %p341 = scmp.ne.s32.totalorder %s332, %s333
    %p342 = scmp.eq.s32.totalorder %s70, 0
    %p343 = por %p341, %p342
    %p344 = scmp.ne.s32.totalorder %s332, %s333
    %p345 = scmp.eq.s32.totalorder %s71, 1
    %p346 = por %p344, %p345
    %p348 = scmp.ne.s32.totalorder %s333, %s347
    %p349 = scmp.eq.s32.totalorder %s71, 0
    %p350 = por %p348, %p349
    %s352 = sadd.s32 %s351, 1
    %p355 = scmp.eq.s32.totalorder %s65, 1
    %p356 = scmp.ne.s32.totalorder %s351, %s353
    %p357 = scmp.eq.s32.totalorder %s65, 0
    %p358 = por %p356, %p357
    %p359 = scmp.ne.s32.totalorder %s351, %s353
    %p360 = scmp.eq.s32.totalorder %s70, 1
    %p361 = por %p359, %p360
    %p362 = scmp.ne.s32.totalorder %s353, %s354
    %p363 = scmp.eq.s32.totalorder %s70, 0
    %p364 = por %p362, %p363
    %p365 = scmp.ne.s32.totalorder %s353, %s354
    %p366 = scmp.eq.s32.totalorder %s71, 1
    %p367 = por %p365, %p366
    %p369 = scmp.ne.s32.totalorder %s354, %s368
    %p370 = scmp.eq.s32.totalorder %s71, 0
    %p371 = por %p369, %p370
    %s373 = sadd.s32 %s372, 1
    %p376 = scmp.eq.s32.totalorder %s65, 1
    %p377 = scmp.ne.s32.totalorder %s372, %s374
    %p378 = scmp.eq.s32.totalorder %s65, 0
    %p379 = por %p377, %p378
    %p380 = scmp.ne.s32.totalorder %s372, %s374
    %p381 = scmp.eq.s32.totalorder %s70, 1
    %p382 = por %p380, %p381
    %p383 = scmp.ne.s32.totalorder %s374, %s375
    %p384 = scmp.eq.s32.totalorder %s70, 0
    %p385 = por %p383, %p384
    %p386 = scmp.ne.s32.totalorder %s374, %s375
    %p387 = scmp.eq.s32.totalorder %s71, 1
    %p388 = por %p386, %p387
    %p390 = scmp.ne.s32.totalorder %s375, %s389
    %p391 = scmp.eq.s32.totalorder %s71, 0
    %p392 = por %p390, %p391
    %s394 = sadd.s32 %s393, 1
    %p397 = scmp.eq.s32.totalorder %s65, 1
    %p398 = scmp.ne.s32.totalorder %s393, %s395
    %p399 = scmp.eq.s32.totalorder %s65, 0
    %p400 = por %p398, %p399
    %p401 = scmp.ne.s32.totalorder %s393, %s395
    %p402 = scmp.eq.s32.totalorder %s70, 1
    %p403 = por %p401, %p402
    %p404 = scmp.ne.s32.totalorder %s395, %s396
    %p405 = scmp.eq.s32.totalorder %s70, 0
    %p406 = por %p404, %p405
    %p407 = scmp.ne.s32.totalorder %s395, %s396
    %p408 = scmp.eq.s32.totalorder %s71, 1
    %p409 = por %p407, %p408
    %p411 = scmp.ne.s32.totalorder %s396, %s410
    %p412 = scmp.eq.s32.totalorder %s71, 0
    %p413 = por %p411, %p412
    %s415 = sadd.s32 %s414, 1
    %p418 = scmp.eq.s32.totalorder %s65, 1
    %p419 = scmp.ne.s32.totalorder %s414, %s416
    %p420 = scmp.eq.s32.totalorder %s65, 0
    %p421 = por %p419, %p420
    %p422 = scmp.ne.s32.totalorder %s414, %s416
    %p423 = scmp.eq.s32.totalorder %s70, 1
    %p424 = por %p422, %p423
    %p425 = scmp.ne.s32.totalorder %s416, %s417
    %p426 = scmp.eq.s32.totalorder %s70, 0
    %p427 = por %p425, %p426
    %p428 = scmp.ne.s32.totalorder %s416, %s417
    %p429 = scmp.eq.s32.totalorder %s71, 1
    %p430 = por %p428, %p429
    %p432 = scmp.ne.s32.totalorder %s417, %s431
    %p433 = scmp.eq.s32.totalorder %s71, 0
    %p434 = por %p432, %p433
    %s436 = sadd.s32 %s435, 1
    %p439 = scmp.eq.s32.totalorder %s65, 1
    %p440 = scmp.ne.s32.totalorder %s435, %s437
    %p441 = scmp.eq.s32.totalorder %s65, 0
    %p442 = por %p440, %p441
    %p443 = scmp.ne.s32.totalorder %s435, %s437
    %p444 = scmp.eq.s32.totalorder %s70, 1
    %p445 = por %p443, %p444
    %p446 = scmp.ne.s32.totalorder %s437, %s438
    %p447 = scmp.eq.s32.totalorder %s70, 0
    %p448 = por %p446, %p447
    %p449 = scmp.ne.s32.totalorder %s437, %s438
    %p450 = scmp.eq.s32.totalorder %s71, 1
    %p451 = por %p449, %p450
    %p453 = scmp.ne.s32.totalorder %s438, %s452
    %p454 = scmp.eq.s32.totalorder %s71, 0
    %p455 = por %p453, %p454
    %s457 = sadd.s32 %s456, 1
    %p460 = scmp.eq.s32.totalorder %s65, 1
    %p461 = scmp.ne.s32.totalorder %s456, %s458
    %p462 = scmp.eq.s32.totalorder %s65, 0
    %p463 = por %p461, %p462
    %p464 = scmp.ne.s32.totalorder %s456, %s458
    %p465 = scmp.eq.s32.totalorder %s70, 1
    %p466 = por %p464, %p465
    %p467 = scmp.ne.s32.totalorder %s458, %s459
    %p468 = scmp.eq.s32.totalorder %s70, 0
    %p469 = por %p467, %p468
    %p470 = scmp.ne.s32.totalorder %s458, %s459
    %p471 = scmp.eq.s32.totalorder %s71, 1
    %p472 = por %p470, %p471
    %p474 = scmp.ne.s32.totalorder %s459, %s473
    %p475 = scmp.eq.s32.totalorder %s71, 0
    %p476 = por %p474, %p475
    %s478 = sadd.s32 %s477, 1
    %p481 = scmp.eq.s32.totalorder %s65, 1
    %p482 = scmp.ne.s32.totalorder %s477, %s479
    %p483 = scmp.eq.s32.totalorder %s65, 0
    %p484 = por %p482, %p483
    %p485 = scmp.ne.s32.totalorder %s477, %s479
    %p486 = scmp.eq.s32.totalorder %s70, 1
    %p487 = por %p485, %p486
    %p488 = scmp.ne.s32.totalorder %s479, %s480
    %p489 = scmp.eq.s32.totalorder %s70, 0
    %p490 = por %p488, %p489
    %p491 = scmp.ne.s32.totalorder %s479, %s480
    %p492 = scmp.eq.s32.totalorder %s71, 1
    %p493 = por %p491, %p492
    %p495 = scmp.ne.s32.totalorder %s480, %s494
    %p496 = scmp.eq.s32.totalorder %s71, 0
    %p497 = por %p495, %p496
    %s499 = sadd.s32 %s498, 1
    %p502 = scmp.eq.s32.totalorder %s65, 1
    %p503 = scmp.ne.s32.totalorder %s498, %s500
    %p504 = scmp.eq.s32.totalorder %s65, 0
    %p505 = por %p503, %p504
    %p506 = scmp.ne.s32.totalorder %s498, %s500
    %p507 = scmp.eq.s32.totalorder %s70, 1
    %p508 = por %p506, %p507
    %p509 = scmp.ne.s32.totalorder %s500, %s501
    %p510 = scmp.eq.s32.totalorder %s70, 0
    %p511 = por %p509, %p510
    %p512 = scmp.ne.s32.totalorder %s500, %s501
    %p513 = scmp.eq.s32.totalorder %s71, 1
    %p514 = por %p512, %p513
    %p516 = scmp.ne.s32.totalorder %s501, %s515
    %p517 = scmp.eq.s32.totalorder %s71, 0
    %p518 = por %p516, %p517
    %s520 = sadd.s32 %s519, 1
    %p523 = scmp.eq.s32.totalorder %s65, 1
    %p524 = scmp.ne.s32.totalorder %s519, %s521
    %p525 = scmp.eq.s32.totalorder %s65, 0
    %p526 = por %p524, %p525
    %p527 = scmp.ne.s32.totalorder %s519, %s521
    %p528 = scmp.eq.s32.totalorder %s70, 1
    %p529 = por %p527, %p528
    %p530 = scmp.ne.s32.totalorder %s521, %s522
    %p531 = scmp.eq.s32.totalorder %s70, 0
    %p532 = por %p530, %p531
    %p533 = scmp.ne.s32.totalorder %s521, %s522
    %p534 = scmp.eq.s32.totalorder %s71, 1
    %p535 = por %p533, %p534
    %p537 = scmp.ne.s32.totalorder %s522, %s536
    %p538 = scmp.eq.s32.totalorder %s71, 0
    %p539 = por %p537, %p538
    %s541 = sadd.s32 %s540, 1
    %p544 = scmp.eq.s32.totalorder %s65, 1
    %p545 = scmp.ne.s32.totalorder %s540, %s542
    %p546 = scmp.eq.s32.totalorder %s65, 0
    %p547 = por %p545, %p546
    %p548 = scmp.ne.s32.totalorder %s540, %s542
    %p549 = scmp.eq.s32.totalorder %s70, 1
    %p550 = por %p548, %p549
    %p551 = scmp.ne.s32.totalorder %s542, %s543
    %p552 = scmp.eq.s32.totalorder %s70, 0
    %p553 = por %p551, %p552
    %p554 = scmp.ne.s32.totalorder %s542, %s543
    %p555 = scmp.eq.s32.totalorder %s71, 1
    %p556 = por %p554, %p555
    %p558 = scmp.ne.s32.totalorder %s543, %s557
    %p559 = scmp.eq.s32.totalorder %s71, 0
    %p560 = por %p558, %p559
    %s562 = sadd.s32 %s561, 1
    %p565 = scmp.eq.s32.totalorder %s65, 1
    %p566 = scmp.ne.s32.totalorder %s561, %s563
    %p567 = scmp.eq.s32.totalorder %s65, 0
    %p568 = por %p566, %p567
    %p569 = scmp.ne.s32.totalorder %s561, %s563
    %p570 = scmp.eq.s32.totalorder %s70, 1
    %p571 = por %p569, %p570
    %p572 = scmp.ne.s32.totalorder %s563, %s564
    %p573 = scmp.eq.s32.totalorder %s70, 0
    %p574 = por %p572, %p573
    %p575 = scmp.ne.s32.totalorder %s563, %s564
    %p576 = scmp.eq.s32.totalorder %s71, 1
    %p577 = por %p575, %p576
    %p579 = scmp.ne.s32.totalorder %s564, %s578
    %p580 = scmp.eq.s32.totalorder %s71, 0
    %p581 = por %p579, %p580
    %s583 = sadd.s32 %s582, 1
    %p586 = scmp.eq.s32.totalorder %s65, 1
    %p587 = scmp.ne.s32.totalorder %s582, %s584
    %p588 = scmp.eq.s32.totalorder %s65, 0
    %p589 = por %p587, %p588
    %p590 = scmp.ne.s32.totalorder %s582, %s584
    %p591 = scmp.eq.s32.totalorder %s70, 1
    %p592 = por %p590, %p591
    %p593 = scmp.ne.s32.totalorder %s584, %s585
    %p594 = scmp.eq.s32.totalorder %s70, 0
    %p595 = por %p593, %p594
    %p596 = scmp.ne.s32.totalorder %s584, %s585
    %p597 = scmp.eq.s32.totalorder %s71, 1
    %p598 = por %p596, %p597
    %p600 = scmp.ne.s32.totalorder %s585, %s599
    %p601 = scmp.eq.s32.totalorder %s71, 0
    %p602 = por %p600, %p601
    %s604 = sadd.s32 %s603, 1
    %p607 = scmp.eq.s32.totalorder %s65, 1
    %p608 = scmp.ne.s32.totalorder %s603, %s605
    %p609 = scmp.eq.s32.totalorder %s65, 0
    %p610 = por %p608, %p609
    %p611 = scmp.ne.s32.totalorder %s603, %s605
    %p612 = scmp.eq.s32.totalorder %s70, 1
    %p613 = por %p611, %p612
    %p614 = scmp.ne.s32.totalorder %s605, %s606
    %p615 = scmp.eq.s32.totalorder %s70, 0
    %p616 = por %p614, %p615
    %p617 = scmp.ne.s32.totalorder %s605, %s606
    %p618 = scmp.eq.s32.totalorder %s71, 1
    %p619 = por %p617, %p618
    %p621 = scmp.ne.s32.totalorder %s606, %s620
    %p622 = scmp.eq.s32.totalorder %s71, 0
    %p623 = por %p621, %p622
    %s625 = sadd.s32 %s624, 1
    %p628 = scmp.eq.s32.totalorder %s65, 1
    %p629 = scmp.ne.s32.totalorder %s624, %s626
    %p630 = scmp.eq.s32.totalorder %s65, 0
    %p631 = por %p629, %p630
    %p632 = scmp.ne.s32.totalorder %s624, %s626
    %p633 = scmp.eq.s32.totalorder %s70, 1
    %p634 = por %p632, %p633
    %p635 = scmp.ne.s32.totalorder %s626, %s627
    %p636 = scmp.eq.s32.totalorder %s70, 0
    %p637 = por %p635, %p636
    %p638 = scmp.ne.s32.totalorder %s626, %s627
    %p639 = scmp.eq.s32.totalorder %s71, 1
    %p640 = por %p638, %p639
    %p642 = scmp.ne.s32.totalorder %s627, %s641
    %p643 = scmp.eq.s32.totalorder %s71, 0
    %p644 = por %p642, %p643
    %s646 = sadd.s32 %s645, 1
    %p649 = scmp.eq.s32.totalorder %s65, 1
    %p650 = scmp.ne.s32.totalorder %s645, %s647
    %p651 = scmp.eq.s32.totalorder %s65, 0
    %p652 = por %p650, %p651
    %p653 = scmp.ne.s32.totalorder %s645, %s647
    %p654 = scmp.eq.s32.totalorder %s70, 1
    %p655 = por %p653, %p654
    %p656 = scmp.ne.s32.totalorder %s647, %s648
    %p657 = scmp.eq.s32.totalorder %s70, 0
    %p658 = por %p656, %p657
    %p659 = scmp.ne.s32.totalorder %s647, %s648
    %p660 = scmp.eq.s32.totalorder %s71, 1
    %p661 = por %p659, %p660
    %p663 = scmp.ne.s32.totalorder %s648, %s662
    %p664 = scmp.eq.s32.totalorder %s71, 0
    %p665 = por %p663, %p664
    %s667 = sadd.s32 %s666, 1
    %p670 = scmp.eq.s32.totalorder %s65, 1
    %p671 = scmp.ne.s32.totalorder %s666, %s668
    %p672 = scmp.eq.s32.totalorder %s65, 0
    %p673 = por %p671, %p672
    %p674 = scmp.ne.s32.totalorder %s666, %s668
    %p675 = scmp.eq.s32.totalorder %s70, 1
    %p676 = por %p674, %p675
    %p677 = scmp.ne.s32.totalorder %s668, %s669
    %p678 = scmp.eq.s32.totalorder %s70, 0
    %p679 = por %p677, %p678
    %p680 = scmp.ne.s32.totalorder %s668, %s669
    %p681 = scmp.eq.s32.totalorder %s71, 1
    %p682 = por %p680, %p681
    %p684 = scmp.ne.s32.totalorder %s669, %s683
    %p685 = scmp.eq.s32.totalorder %s71, 0
    %p686 = por %p684, %p685
    %s687 = ssub.s32 %s65, %s72
    %p688 = scmp.eq.s32.totalorder %s687, 0
    %s690 = sadd.s32 %s689, 1
    %s691 = scalar_select %p688, %s689, %s690
    %p694 = pneg %p688
    %p695 = scmp.eq.s32.totalorder %s65, 1
    %p696 = por %p694, %p695
    %p697 = scmp.ne.s32.totalorder %s689, %s692
    %p698 = scmp.eq.s32.totalorder %s65, 0
    %p699 = por %p697, %p698
    %p700 = scmp.ne.s32.totalorder %s689, %s692
    %p701 = scmp.eq.s32.totalorder %s70, 1
    %p702 = por %p700, %p701
    %p703 = scmp.ne.s32.totalorder %s692, %s693
    %p704 = scmp.eq.s32.totalorder %s70, 0
    %p705 = por %p703, %p704
    %p706 = scmp.ne.s32.totalorder %s692, %s693
    %p707 = scmp.eq.s32.totalorder %s71, 1
    %p708 = por %p706, %p707
    %p710 = scmp.ne.s32.totalorder %s693, %s709
    %p711 = scmp.eq.s32.totalorder %s71, 0
    %p712 = por %p710, %p711
    %p713 = scmp.le.s32.totalorder 1, %s65
    %p714 = scmp.lt.s32.totalorder %s65, 3
    %p715 = pnand %p713, %p714
    %p716 = pneg %p715
    // Predicated region
    $region9: #{seis_forward.1} parent=5 // pred_check
      _
    $region10: #{seis_forward.1} parent=5 // pred_check_branch
      %718 = sbr.rel (%p715) target = $region12
    $region11: #{seis_forward.1} parent=5 // pred_region
      %s719 = ssub.s32 %s65, 1
      // Predicated region
      $region13: #{seis_forward.1} parent=11 // pred_check
        %p720 = pneg %p112
      $region14: #{seis_forward.1} parent=11 // pred_check_branch
        %722 = sbr.rel (%p720) target = $region16
      $region15: #{seis_forward.1} parent=11 // pred_region
        _
      $region16: #{seis_forward.1} parent=11 // pred_fallthru
        _
      // Predicated region
      $region17: #{seis_forward.1} parent=11 // pred_check
        %p723 = pneg %p133
      $region18: #{seis_forward.1} parent=11 // pred_check_branch
        %725 = sbr.rel (%p723) target = $region20
      $region19: #{seis_forward.1} parent=11 // pred_region
        _
      $region20: #{seis_forward.1} parent=11 // pred_fallthru
        _
      // Predicated region
      $region21: #{seis_forward.1} parent=11 // pred_check
        %p726 = pneg %p154
      $region22: #{seis_forward.1} parent=11 // pred_check_branch
        %728 = sbr.rel (%p726) target = $region24
      $region23: #{seis_forward.1} parent=11 // pred_region
        _
      $region24: #{seis_forward.1} parent=11 // pred_fallthru
        _
      // Predicated region
      $region25: #{seis_forward.1} parent=11 // pred_check
        %p729 = pneg %p175
      $region26: #{seis_forward.1} parent=11 // pred_check_branch
        %731 = sbr.rel (%p729) target = $region28
      $region27: #{seis_forward.1} parent=11 // pred_region
        _
      $region28: #{seis_forward.1} parent=11 // pred_fallthru
        _
      // Predicated region
      $region29: #{seis_forward.1} parent=11 // pred_check
        %p732 = pneg %p196
      $region30: #{seis_forward.1} parent=11 // pred_check_branch
        %734 = sbr.rel (%p732) target = $region32
      $region31: #{seis_forward.1} parent=11 // pred_region
        _
      $region32: #{seis_forward.1} parent=11 // pred_fallthru
        _
      // Predicated region
      $region33: #{seis_forward.1} parent=11 // pred_check
        %p735 = pneg %p217
      $region34: #{seis_forward.1} parent=11 // pred_check_branch
        %737 = sbr.rel (%p735) target = $region36
      $region35: #{seis_forward.1} parent=11 // pred_region
        _
      $region36: #{seis_forward.1} parent=11 // pred_fallthru
        _
      // Predicated region
      $region37: #{seis_forward.1} parent=11 // pred_check
        %p738 = pneg %p238
      $region38: #{seis_forward.1} parent=11 // pred_check_branch
        %740 = sbr.rel (%p738) target = $region40
      $region39: #{seis_forward.1} parent=11 // pred_region
        _
      $region40: #{seis_forward.1} parent=11 // pred_fallthru
        _
      // Predicated region
      $region41: #{seis_forward.1} parent=11 // pred_check
        %p741 = pneg %p259
      $region42: #{seis_forward.1} parent=11 // pred_check_branch
        %743 = sbr.rel (%p741) target = $region44
      $region43: #{seis_forward.1} parent=11 // pred_region
        _
      $region44: #{seis_forward.1} parent=11 // pred_fallthru
        _
      // Predicated region
      $region45: #{seis_forward.1} parent=11 // pred_check
        %p744 = pneg %p280
      $region46: #{seis_forward.1} parent=11 // pred_check_branch
        %746 = sbr.rel (%p744) target = $region48
      $region47: #{seis_forward.1} parent=11 // pred_region
        _
      $region48: #{seis_forward.1} parent=11 // pred_fallthru
        _
      // Predicated region
      $region49: #{seis_forward.1} parent=11 // pred_check
        %p747 = pneg %p301
      $region50: #{seis_forward.1} parent=11 // pred_check_branch
        %749 = sbr.rel (%p747) target = $region52
      $region51: #{seis_forward.1} parent=11 // pred_region
        _
      $region52: #{seis_forward.1} parent=11 // pred_fallthru
        _
      // Predicated region
      $region53: #{seis_forward.1} parent=11 // pred_check
        %p750 = pneg %p322
      $region54: #{seis_forward.1} parent=11 // pred_check_branch
        %752 = sbr.rel (%p750) target = $region56
      $region55: #{seis_forward.1} parent=11 // pred_region
        _
      $region56: #{seis_forward.1} parent=11 // pred_fallthru
        _
      // Predicated region
      $region57: #{seis_forward.1} parent=11 // pred_check
        %p753 = pneg %p343
      $region58: #{seis_forward.1} parent=11 // pred_check_branch
        %755 = sbr.rel (%p753) target = $region60
      $region59: #{seis_forward.1} parent=11 // pred_region
        _
      $region60: #{seis_forward.1} parent=11 // pred_fallthru
        _
      // Predicated region
      $region61: #{seis_forward.1} parent=11 // pred_check
        %p756 = pneg %p364
      $region62: #{seis_forward.1} parent=11 // pred_check_branch
        %758 = sbr.rel (%p756) target = $region64
      $region63: #{seis_forward.1} parent=11 // pred_region
        _
      $region64: #{seis_forward.1} parent=11 // pred_fallthru
        _
      // Predicated region
      $region65: #{seis_forward.1} parent=11 // pred_check
        %p759 = pneg %p385
      $region66: #{seis_forward.1} parent=11 // pred_check_branch
        %761 = sbr.rel (%p759) target = $region68
      $region67: #{seis_forward.1} parent=11 // pred_region
        _
      $region68: #{seis_forward.1} parent=11 // pred_fallthru
        _
      // Predicated region
      $region69: #{seis_forward.1} parent=11 // pred_check
        %p762 = pneg %p406
      $region70: #{seis_forward.1} parent=11 // pred_check_branch
        %764 = sbr.rel (%p762) target = $region72
      $region71: #{seis_forward.1} parent=11 // pred_region
        _
      $region72: #{seis_forward.1} parent=11 // pred_fallthru
        _
      // Predicated region
      $region73: #{seis_forward.1} parent=11 // pred_check
        %p765 = pneg %p427
      $region74: #{seis_forward.1} parent=11 // pred_check_branch
        %767 = sbr.rel (%p765) target = $region76
      $region75: #{seis_forward.1} parent=11 // pred_region
        _
      $region76: #{seis_forward.1} parent=11 // pred_fallthru
        _
      // Predicated region
      $region77: #{seis_forward.1} parent=11 // pred_check
        %p768 = pneg %p448
      $region78: #{seis_forward.1} parent=11 // pred_check_branch
        %770 = sbr.rel (%p768) target = $region80
      $region79: #{seis_forward.1} parent=11 // pred_region
        _
      $region80: #{seis_forward.1} parent=11 // pred_fallthru
        _
      // Predicated region
      $region81: #{seis_forward.1} parent=11 // pred_check
        %p771 = pneg %p469
      $region82: #{seis_forward.1} parent=11 // pred_check_branch
        %773 = sbr.rel (%p771) target = $region84
      $region83: #{seis_forward.1} parent=11 // pred_region
        _
      $region84: #{seis_forward.1} parent=11 // pred_fallthru
        _
      // Predicated region
      $region85: #{seis_forward.1} parent=11 // pred_check
        %p774 = pneg %p490
      $region86: #{seis_forward.1} parent=11 // pred_check_branch
        %776 = sbr.rel (%p774) target = $region88
      $region87: #{seis_forward.1} parent=11 // pred_region
        _
      $region88: #{seis_forward.1} parent=11 // pred_fallthru
        _
      // Predicated region
      $region89: #{seis_forward.1} parent=11 // pred_check
        %p777 = pneg %p511
      $region90: #{seis_forward.1} parent=11 // pred_check_branch
        %779 = sbr.rel (%p777) target = $region92
      $region91: #{seis_forward.1} parent=11 // pred_region
        _
      $region92: #{seis_forward.1} parent=11 // pred_fallthru
        _
      // Predicated region
      $region93: #{seis_forward.1} parent=11 // pred_check
        %p780 = pneg %p532
      $region94: #{seis_forward.1} parent=11 // pred_check_branch
        %782 = sbr.rel (%p780) target = $region96
      $region95: #{seis_forward.1} parent=11 // pred_region
        _
      $region96: #{seis_forward.1} parent=11 // pred_fallthru
        _
      // Predicated region
      $region97: #{seis_forward.1} parent=11 // pred_check
        %p783 = pneg %p553
      $region98: #{seis_forward.1} parent=11 // pred_check_branch
        %785 = sbr.rel (%p783) target = $region100
      $region99: #{seis_forward.1} parent=11 // pred_region
        _
      $region100: #{seis_forward.1} parent=11 // pred_fallthru
        _
      // Predicated region
      $region101: #{seis_forward.1} parent=11 // pred_check
        %p786 = pneg %p574
      $region102: #{seis_forward.1} parent=11 // pred_check_branch
        %788 = sbr.rel (%p786) target = $region104
      $region103: #{seis_forward.1} parent=11 // pred_region
        _
      $region104: #{seis_forward.1} parent=11 // pred_fallthru
        _
      // Predicated region
      $region105: #{seis_forward.1} parent=11 // pred_check
        %p789 = pneg %p595
      $region106: #{seis_forward.1} parent=11 // pred_check_branch
        %791 = sbr.rel (%p789) target = $region108
      $region107: #{seis_forward.1} parent=11 // pred_region
        _
      $region108: #{seis_forward.1} parent=11 // pred_fallthru
        _
      // Predicated region
      $region109: #{seis_forward.1} parent=11 // pred_check
        %p792 = pneg %p616
      $region110: #{seis_forward.1} parent=11 // pred_check_branch
        %794 = sbr.rel (%p792) target = $region112
      $region111: #{seis_forward.1} parent=11 // pred_region
        _
      $region112: #{seis_forward.1} parent=11 // pred_fallthru
        _
      // Predicated region
      $region113: #{seis_forward.1} parent=11 // pred_check
        %p795 = pneg %p637
      $region114: #{seis_forward.1} parent=11 // pred_check_branch
        %797 = sbr.rel (%p795) target = $region116
      $region115: #{seis_forward.1} parent=11 // pred_region
        _
      $region116: #{seis_forward.1} parent=11 // pred_fallthru
        _
      // Predicated region
      $region117: #{seis_forward.1} parent=11 // pred_check
        %p798 = pneg %p658
      $region118: #{seis_forward.1} parent=11 // pred_check_branch
        %800 = sbr.rel (%p798) target = $region120
      $region119: #{seis_forward.1} parent=11 // pred_region
        _
      $region120: #{seis_forward.1} parent=11 // pred_fallthru
        _
      // Predicated region
      $region121: #{seis_forward.1} parent=11 // pred_check
        %p801 = pneg %p679
      $region122: #{seis_forward.1} parent=11 // pred_check_branch
        %803 = sbr.rel (%p801) target = $region124
      $region123: #{seis_forward.1} parent=11 // pred_region
        _
      $region124: #{seis_forward.1} parent=11 // pred_fallthru
        _
    $region12: #{seis_forward.1} parent=5 // pred_fallthru
      _
    %p804 = scmp.lt.s32.totalorder %s65, 2
    // Predicated region
    $region125: #{seis_forward.1} parent=5 // pred_check
      %p805 = pneg %p804
    $region126: #{seis_forward.1} parent=5 // pred_check_branch
      %807 = sbr.rel (%p805) target = $region128
    $region127: #{seis_forward.1} parent=5 // pred_region
      // Predicated region
      $region129: #{seis_forward.1} parent=127 // pred_check
        %p808 = pneg %p85
      $region130: #{seis_forward.1} parent=127 // pred_check_branch
        %810 = sbr.rel (%p808) target = $region132
      $region131: #{seis_forward.1} parent=127 // pred_region
        %p811 = scmp.lt.s32.totalorder %s65, 1
        %s812 = scalar_select %p811, %s65, 1
        %s813 = smul.addr %s812, 8
        %s814 = scalar_lea.vmem %s1, %s813
      $region132: #{seis_forward.1} parent=127 // pred_fallthru
        _
    $region128: #{seis_forward.1} parent=5 // pred_fallthru
      _
    %p815 = scmp.le.s32.totalorder 1, %s65
    %p816 = scmp.lt.s32.totalorder %s65, 3
    %p817 = pnand %p815, %p816
    %p818 = pneg %p817
    // Predicated region
    $region133: #{seis_forward.1} parent=5 // pred_check
      _
    $region134: #{seis_forward.1} parent=5 // pred_check_branch
      %820 = sbr.rel (%p817) target = $region136
    $region135: #{seis_forward.1} parent=5 // pred_region
      %s821 = ssub.s32 %s65, 1
      %p822 = scmp.lt.s32.totalorder %s70, 1
      %s823 = scalar_select %p822, %s70, 1
      %s824 = smul.addr %s823, 8
      %s825 = scalar_lea.vmem %s1, %s824
      %p826 = pneg %p91
      %p827 = pneg %p88
      %p828 = pneg %p112
      %p829 = pneg %p109
      %p830 = pneg %p133
      %p831 = pneg %p130
      %p832 = pneg %p154
      %p833 = pneg %p151
      %p834 = pneg %p175
      %p835 = pneg %p172
      %p836 = pneg %p196
      %p837 = pneg %p193
      %p838 = pneg %p217
      %p839 = pneg %p214
      %p840 = pneg %p238
      %p841 = pneg %p235
      %p842 = pneg %p259
      %p843 = pneg %p256
      %p844 = pneg %p280
      %p845 = pneg %p277
      %p846 = pneg %p301
      %p847 = pneg %p298
      %p848 = pneg %p322
      %p849 = pneg %p319
      %p850 = pneg %p343
      %p851 = pneg %p340
      %p852 = pneg %p364
      %p853 = pneg %p361
      %p854 = pneg %p385
      %p855 = pneg %p382
      %p856 = pneg %p406
      %p857 = pneg %p403
      %p858 = pneg %p427
      %p859 = pneg %p424
      %p860 = pneg %p448
      %p861 = pneg %p445
      %p862 = pneg %p469
      %p863 = pneg %p466
      %p864 = pneg %p490
      %p865 = pneg %p487
      %p866 = pneg %p511
      %p867 = pneg %p508
      %p868 = pneg %p532
      %p869 = pneg %p529
      %p870 = pneg %p553
      %p871 = pneg %p550
      %p872 = pneg %p574
      %p873 = pneg %p571
      %p874 = pneg %p595
      %p875 = pneg %p592
      %p876 = pneg %p616
      %p877 = pneg %p613
      %p878 = pneg %p637
      %p879 = pneg %p634
      %p880 = pneg %p658
      %p881 = pneg %p655
      %p882 = pneg %p679
      %p883 = pneg %p676
      %p884 = pneg %p705
      %p885 = pneg %p702
      %p886 = scmp.lt.s32.totalorder %s70, 1
      %s887 = scalar_select %p886, %s70, 1
      %s888 = smul.addr %s887, 8
      %s889 = scalar_lea.vmem %s59, %s888
      %p890 = scmp.lt.s32.totalorder %s70, 1
      %s891 = scalar_select %p890, %s70, 1
      %s892 = smul.addr %s891, 8
      %s893 = scalar_lea.vmem %s1, %s892
      %p894 = scmp.lt.s32.totalorder %s70, 1
      %s895 = scalar_select %p894, %s70, 1
      %s896 = smul.addr %s895, 8
      %s897 = scalar_lea.vmem %s59, %s896
      %v898 = vld [vmem:[%s893] sm:$0xff]
      %v899 = vld [vmem:[%s3] sm:$0xff]
      %v900 = vld [vmem:[%s3 + $0x8] sm:$0xff]
      %v901 = vld [vmem:[%s3 + $0x10] sm:$0xff]
      %v902 = vld [vmem:[%s3 + $0x18] sm:$0xff]
      %v903 = vld [vmem:[%s3 + $0x20] sm:$0xff]
      %v904 = vld [vmem:[%s3 + $0x28] sm:$0xff]
      %v905 = vld [vmem:[%s3 + $0x30] sm:$0xff]
      %v906 = vld [vmem:[%s3 + $0x38] sm:$0xff]
      %v907 = vld [vmem:[%s3 + $0x40] sm:$0xff]
      %v908 = vld [vmem:[%s3 + $0x48] sm:$0xff]
      %v909 = vld [vmem:[%s3 + $0x50] sm:$0xff]
      %v910 = vld [vmem:[%s3 + $0x58] sm:$0xff]
      %v911 = vld [vmem:[%s3 + $0x60] sm:$0xff]
      %v912 = vld [vmem:[%s3 + $0x68] sm:$0xff]
      %v913 = vld [vmem:[%s3 + $0x70] sm:$0xff]
      %v914 = vld [vmem:[%s3 + $0x78] sm:$0xff]
      %v915 = vld [vmem:[%s3 + $0x80] sm:$0xff]
      %v916 = vld [vmem:[%s3 + $0x88] sm:$0xff]
      %v917 = vld [vmem:[%s3 + $0x90] sm:$0xff]
      %v918 = vld [vmem:[%s3 + $0x98] sm:$0xff]
      %v919 = vld [vmem:[%s3 + $0xa0] sm:$0xff]
      %v920 = vld [vmem:[%s3 + $0xa8] sm:$0xff]
      %v921 = vld [vmem:[%s3 + $0xb0] sm:$0xff]
      %v922 = vld [vmem:[%s3 + $0xb8] sm:$0xff]
      %v923 = vld [vmem:[%s3 + $0xc0] sm:$0xff]
      %v924 = vld [vmem:[%s3 + $0xc8] sm:$0xff]
      %v925 = vld [vmem:[%s3 + $0xd0] sm:$0xff]
      %v926 = vld [vmem:[%s3 + $0xd8] sm:$0xff]
      %v927 = vld [vmem:[%s3 + $0xe0] sm:$0xff]
      %v928 = vld [vmem:[%s3 + $0xe8] sm:$0xff]
      %v929 = vld [vmem:[%s3 + $0xf0] sm:$0xff]
      %v930 = vld [vmem:[%s3 + $0xf8] sm:$0xff]
      %v931 = vld [vmem:[%s3 + $0x100] sm:$0xff]
      %v932 = vld [vmem:[%s3 + $0x108] sm:$0xff]
      %v933 = vld [vmem:[%s3 + $0x110] sm:$0xff]
      %v934 = vld [vmem:[%s3 + $0x118] sm:$0xff]
      %v935 = vld [vmem:[%s3 + $0x120] sm:$0xff]
      %v936 = vld [vmem:[%s3 + $0x128] sm:$0xff]
      %v937 = vld [vmem:[%s3 + $0x130] sm:$0xff]
      %v938 = vld [vmem:[%s3 + $0x138] sm:$0xff]
      %v939 = vld [vmem:[%s3 + $0x140] sm:$0xff]
      %v940 = vld [vmem:[%s3 + $0x148] sm:$0xff]
      %v941 = vld [vmem:[%s3 + $0x150] sm:$0xff]
      %v942 = vld [vmem:[%s3 + $0x158] sm:$0xff]
      %v943 = vld [vmem:[%s3 + $0x160] sm:$0xff]
      %v944 = vld [vmem:[%s3 + $0x168] sm:$0xff]
      %v945 = vld [vmem:[%s3 + $0x170] sm:$0xff]
      %v946 = vld [vmem:[%s3 + $0x178] sm:$0xff]
      %v947 = vld [vmem:[%s3 + $0x180] sm:$0xff]
      %v948 = vld [vmem:[%s3 + $0x188] sm:$0xff]
      %v949 = vld [vmem:[%s3 + $0x190] sm:$0xff]
      %v950 = vld [vmem:[%s3 + $0x198] sm:$0xff]
      %v951 = vld [vmem:[%s3 + $0x1a0] sm:$0xff]
      %v952 = vld [vmem:[%s3 + $0x1a8] sm:$0xff]
      %v953 = vld [vmem:[%s3 + $0x1b0] sm:$0xff]
      %v954 = vld [vmem:[%s3 + $0x1b8] sm:$0xff]
      %v955 = vld [vmem:[%s3 + $0x1c0] sm:$0xff]
      %v956 = vld [vmem:[%s3 + $0x1c8] sm:$0xff]
      %v957 = vld [vmem:[%s3 + $0x1d0] sm:$0xff]
      %v958 = vld [vmem:[%s3 + $0x1d8] sm:$0xff]
      %v959 = vld [vmem:[%s3 + $0x1e0] sm:$0xff]
      %v960 = vld [vmem:[%s3 + $0x1e8] sm:$0xff]
      %v961 = vld [vmem:[%s3 + $0x1f0] sm:$0xff]
      %v962 = vld [vmem:[%s3 + $0x1f8] sm:$0xff]
      %v963 = vld [vmem:[%s5] sm:$0xf]
      %v965 = vlaneseq
      %v966 = vshrl.u32 %v965, 7
      %v967 = vsub.s32 0, %v966
      %v968 = vrot.slane %v963, %v967
      %v969 = vlaneseq
      %v970 = vshrl.u32 %v969, 7
      %v971 = vsub.s32 1, %v970
      %v972 = vrot.slane %v963, %v971
      %v973 = vlaneseq
      %v974 = vshrl.u32 %v973, 7
      %v975 = vsub.s32 2, %v974
      %v976 = vrot.slane %v963, %v975
      %v977 = vlaneseq
      %v978 = vshrl.u32 %v977, 7
      %v979 = vsub.s32 3, %v978
      %v980 = vrot.slane %v963, %v979
      %985 = vmatprep.subr.mxu0 %v900
      %986 = vmatpush1.msra.mxu0 %v899
      %987 = vmatprep.subr.mxu0 %v904
      %988 = vmatpush1.msra.mxu0 %v903
      %989 = vmatprep.subr.mxu0 %v908
      %990 = vmatpush1.msra.mxu0 %v907
      %991 = vmatprep.subr.mxu0 %v912
      %992 = vmatpush1.msra.mxu0 %v911
      %993 = vmatprep.subr.mxu0 %v916
      %994 = vmatpush1.msra.mxu0 %v915
      %995 = vmatprep.subr.mxu0 %v920
      %996 = vmatpush1.msra.mxu0 %v919
      %997 = vmatprep.subr.mxu0 %v924
      %998 = vmatpush1.msra.mxu0 %v923
      %999 = vmatprep.subr.mxu0 %v928
      %1000 = vmatpush1.msra.mxu0 %v927
      %1001 = vmatprep.subr.mxu0 %v932
      %1002 = vmatpush1.msra.mxu0 %v931
      %1003 = vmatprep.subr.mxu0 %v936
      %1004 = vmatpush1.msra.mxu0 %v935
      %1005 = vmatprep.subr.mxu0 %v940
      %1006 = vmatpush1.msra.mxu0 %v939
      %1007 = vmatprep.subr.mxu0 %v944
      %1008 = vmatpush1.msra.mxu0 %v943
      %1009 = vmatprep.subr.mxu0 %v948
      %1010 = vmatpush1.msra.mxu0 %v947
      %1011 = vmatprep.subr.mxu0 %v952
      %1012 = vmatpush1.msra.mxu0 %v951
      %1013 = vmatprep.subr.mxu0 %v956
      %1014 = vmatpush1.msra.mxu0 %v955
      %1015 = vmatprep.subr.mxu0 %v960
      %1016 = vmatpush1.msra.mxu0 %v959
      %1017 = vmatprep.subr.mxu0 0.0
      %1018 = vmatpush1.msra.mxu0 0.0
      %1019 = vmatprep.subr.mxu0 0.0
      %1020 = vmatpush1.msra.mxu0 0.0
      %1021 = vmatprep.subr.mxu0 0.0
      %1022 = vmatpush1.msra.mxu0 0.0
      %1023 = vmatprep.subr.mxu0 0.0
      %1024 = vmatpush1.msra.mxu0 0.0
      %1025 = vmatprep.subr.mxu0 0.0
      %1026 = vmatpush1.msra.mxu0 0.0
      %1027 = vmatprep.subr.mxu0 0.0
      %1028 = vmatpush1.msra.mxu0 0.0
      %1029 = vmatprep.subr.mxu0 0.0
      %1030 = vmatpush1.msra.mxu0 0.0
      %1031 = vmatprep.subr.mxu0 0.0
      %1032 = vmatpush1.msra.mxu0 0.0
      %1033 = vmatprep.subr.mxu0 0.0
      %1034 = vmatpush1.msra.mxu0 0.0
      %1035 = vmatprep.subr.mxu0 0.0
      %1036 = vmatpush1.msra.mxu0 0.0
      %1037 = vmatprep.subr.mxu0 0.0
      %1038 = vmatpush1.msra.mxu0 0.0
      %1039 = vmatprep.subr.mxu0 0.0
      %1040 = vmatpush1.msra.mxu0 0.0
      %1041 = vmatprep.subr.mxu0 0.0
      %1042 = vmatpush1.msra.mxu0 0.0
      %1043 = vmatprep.subr.mxu0 0.0
      %1044 = vmatpush1.msra.mxu0 0.0
      %1045 = vmatprep.subr.mxu0 0.0
      %1046 = vmatpush1.msra.mxu0 0.0
      %1047 = vmatprep.subr.mxu0 0.0
      %1048 = vmatpush1.msra.mxu0 0.0
      %1049 = vmatprep.mubr.f32.mxu0 0.0
      %1050 = vmatmul.mubr.f32.gmra.mrb[0].mxu0 %v898
      %v1051 = vpop.f32.mrb[0].mxu0
      %v1052 = vadd.f32 %v968, %v1051
      %v1053 = vpop.f32.mrb[0].mxu0
      %v1054 = vadd.f32 %v972, %v1053
      %1055 = vdwg.mxu0
      %1056 = vmatprep.subr.mxu0 %v902
      %1057 = vmatpush1.msra.mxu0 %v901
      %1058 = vmatprep.subr.mxu0 %v906
      %1059 = vmatpush1.msra.mxu0 %v905
      %1060 = vmatprep.subr.mxu0 %v910
      %1061 = vmatpush1.msra.mxu0 %v909
      %1062 = vmatprep.subr.mxu0 %v914
      %1063 = vmatpush1.msra.mxu0 %v913
      %1064 = vmatprep.subr.mxu0 %v918
      %1065 = vmatpush1.msra.mxu0 %v917
      %1066 = vmatprep.subr.mxu0 %v922
      %1067 = vmatpush1.msra.mxu0 %v921
      %1068 = vmatprep.subr.mxu0 %v926
      %1069 = vmatpush1.msra.mxu0 %v925
      %1070 = vmatprep.subr.mxu0 %v930
      %1071 = vmatpush1.msra.mxu0 %v929
      %1072 = vmatprep.subr.mxu0 %v934
      %1073 = vmatpush1.msra.mxu0 %v933
      %1074 = vmatprep.subr.mxu0 %v938
      %1075 = vmatpush1.msra.mxu0 %v937
      %1076 = vmatprep.subr.mxu0 %v942
      %1077 = vmatpush1.msra.mxu0 %v941
      %1078 = vmatprep.subr.mxu0 %v946
      %1079 = vmatpush1.msra.mxu0 %v945
      %1080 = vmatprep.subr.mxu0 %v950
      %1081 = vmatpush1.msra.mxu0 %v949
      %1082 = vmatprep.subr.mxu0 %v954
      %1083 = vmatpush1.msra.mxu0 %v953
      %1084 = vmatprep.subr.mxu0 %v958
      %1085 = vmatpush1.msra.mxu0 %v957
      %1086 = vmatprep.subr.mxu0 %v962
      %1087 = vmatpush1.msra.mxu0 %v961
      %1088 = vmatprep.subr.mxu0 0.0
      %1089 = vmatpush1.msra.mxu0 0.0
      %1090 = vmatprep.subr.mxu0 0.0
      %1091 = vmatpush1.msra.mxu0 0.0
      %1092 = vmatprep.subr.mxu0 0.0
      %1093 = vmatpush1.msra.mxu0 0.0
      %1094 = vmatprep.subr.mxu0 0.0
      %1095 = vmatpush1.msra.mxu0 0.0
      %1096 = vmatprep.subr.mxu0 0.0
      %1097 = vmatpush1.msra.mxu0 0.0
      %1098 = vmatprep.subr.mxu0 0.0
      %1099 = vmatpush1.msra.mxu0 0.0
      %1100 = vmatprep.subr.mxu0 0.0
      %1101 = vmatpush1.msra.mxu0 0.0
      %1102 = vmatprep.subr.mxu0 0.0
      %1103 = vmatpush1.msra.mxu0 0.0
      %1104 = vmatprep.subr.mxu0 0.0
      %1105 = vmatpush1.msra.mxu0 0.0
      %1106 = vmatprep.subr.mxu0 0.0
      %1107 = vmatpush1.msra.mxu0 0.0
      %1108 = vmatprep.subr.mxu0 0.0
      %1109 = vmatpush1.msra.mxu0 0.0
      %1110 = vmatprep.subr.mxu0 0.0
      %1111 = vmatpush1.msra.mxu0 0.0
      %1112 = vmatprep.subr.mxu0 0.0
      %1113 = vmatpush1.msra.mxu0 0.0
      %1114 = vmatprep.subr.mxu0 0.0
      %1115 = vmatpush1.msra.mxu0 0.0
      %1116 = vmatprep.subr.mxu0 0.0
      %1117 = vmatpush1.msra.mxu0 0.0
      %1118 = vmatprep.subr.mxu0 0.0
      %1119 = vmatpush1.msra.mxu0 0.0
      %1120 = vmatprep.mubr.f32.mxu0 0.0
      %1121 = vmatmul.mubr.f32.gmra.mrb[0].mxu0 %v898
      %v1122 = vpop.f32.mrb[0].mxu0
      %v1123 = vadd.f32 %v976, %v1122
      %v1124 = vpop.f32.mrb[0].mxu0
      %v1125 = vadd.f32 %v980, %v1124
      %1126 = vdwg.mxu0
      %v1127 = vld [vmem:[%s7] sm:$0xff]
      %v1128 = vld [vmem:[%s7 + $0x8] sm:$0xff]
      %v1129 = vld [vmem:[%s7 + $0x10] sm:$0xff]
      %v1130 = vld [vmem:[%s7 + $0x18] sm:$0xff]
      %v1131 = vld [vmem:[%s7 + $0x20] sm:$0xff]
      %v1132 = vld [vmem:[%s7 + $0x28] sm:$0xff]
      %v1133 = vld [vmem:[%s7 + $0x30] sm:$0xff]
      %v1134 = vld [vmem:[%s7 + $0x38] sm:$0xff]
      %v1135 = vld [vmem:[%s7 + $0x40] sm:$0xff]
      %v1136 = vld [vmem:[%s7 + $0x48] sm:$0xff]
      %v1137 = vld [vmem:[%s7 + $0x50] sm:$0xff]
      %v1138 = vld [vmem:[%s7 + $0x58] sm:$0xff]
      %v1139 = vld [vmem:[%s7 + $0x60] sm:$0xff]
      %v1140 = vld [vmem:[%s7 + $0x68] sm:$0xff]
      %v1141 = vld [vmem:[%s7 + $0x70] sm:$0xff]
      %v1142 = vld [vmem:[%s7 + $0x78] sm:$0xff]
      %v1143 = vld [vmem:[%s7 + $0x80] sm:$0xff]
      %v1144 = vld [vmem:[%s7 + $0x88] sm:$0xff]
      %v1145 = vld [vmem:[%s7 + $0x90] sm:$0xff]
      %v1146 = vld [vmem:[%s7 + $0x98] sm:$0xff]
      %v1147 = vld [vmem:[%s7 + $0xa0] sm:$0xff]
      %v1148 = vld [vmem:[%s7 + $0xa8] sm:$0xff]
      %v1149 = vld [vmem:[%s7 + $0xb0] sm:$0xff]
      %v1150 = vld [vmem:[%s7 + $0xb8] sm:$0xff]
      %v1151 = vld [vmem:[%s7 + $0xc0] sm:$0xff]
      %v1152 = vld [vmem:[%s7 + $0xc8] sm:$0xff]
      %v1153 = vld [vmem:[%s7 + $0xd0] sm:$0xff]
      %v1154 = vld [vmem:[%s7 + $0xd8] sm:$0xff]
      %v1155 = vld [vmem:[%s7 + $0xe0] sm:$0xff]
      %v1156 = vld [vmem:[%s7 + $0xe8] sm:$0xff]
      %v1157 = vld [vmem:[%s7 + $0xf0] sm:$0xff]
      %v1158 = vld [vmem:[%s7 + $0xf8] sm:$0xff]
      %v1159 = vld [vmem:[%s7 + $0x100] sm:$0xff]
      %v1160 = vld [vmem:[%s7 + $0x108] sm:$0xff]
      %v1161 = vld [vmem:[%s7 + $0x110] sm:$0xff]
      %v1162 = vld [vmem:[%s7 + $0x118] sm:$0xff]
      %v1163 = vld [vmem:[%s7 + $0x120] sm:$0xff]
      %v1164 = vld [vmem:[%s7 + $0x128] sm:$0xff]
      %v1165 = vld [vmem:[%s7 + $0x130] sm:$0xff]
      %v1166 = vld [vmem:[%s7 + $0x138] sm:$0xff]
      %v1167 = vld [vmem:[%s7 + $0x140] sm:$0xff]
      %v1168 = vld [vmem:[%s7 + $0x148] sm:$0xff]
      %v1169 = vld [vmem:[%s7 + $0x150] sm:$0xff]
      %v1170 = vld [vmem:[%s7 + $0x158] sm:$0xff]
      %v1171 = vld [vmem:[%s7 + $0x160] sm:$0xff]
      %v1172 = vld [vmem:[%s7 + $0x168] sm:$0xff]
      %v1173 = vld [vmem:[%s7 + $0x170] sm:$0xff]
      %v1174 = vld [vmem:[%s7 + $0x178] sm:$0xff]
      %v1175 = vld [vmem:[%s7 + $0x180] sm:$0xff]
      %v1176 = vld [vmem:[%s7 + $0x188] sm:$0xff]
      %v1177 = vld [vmem:[%s7 + $0x190] sm:$0xff]
      %v1178 = vld [vmem:[%s7 + $0x198] sm:$0xff]
      %v1179 = vld [vmem:[%s7 + $0x1a0] sm:$0xff]
      %v1180 = vld [vmem:[%s7 + $0x1a8] sm:$0xff]
      %v1181 = vld [vmem:[%s7 + $0x1b0] sm:$0xff]
      %v1182 = vld [vmem:[%s7 + $0x1b8] sm:$0xff]
      %v1183 = vld [vmem:[%s7 + $0x1c0] sm:$0xff]
      %v1184 = vld [vmem:[%s7 + $0x1c8] sm:$0xff]
      %v1185 = vld [vmem:[%s7 + $0x1d0] sm:$0xff]
      %v1186 = vld [vmem:[%s7 + $0x1d8] sm:$0xff]
      %v1187 = vld [vmem:[%s7 + $0x1e0] sm:$0xff]
      %v1188 = vld [vmem:[%s7 + $0x1e8] sm:$0xff]
      %v1189 = vld [vmem:[%s7 + $0x1f0] sm:$0xff]
      %v1190 = vld [vmem:[%s7 + $0x1f8] sm:$0xff]
      %v1191 = vld [vmem:[%s7 + $0x200] sm:$0xff]
      %v1192 = vld [vmem:[%s7 + $0x208] sm:$0xff]
      %v1193 = vld [vmem:[%s7 + $0x210] sm:$0xff]
      %v1194 = vld [vmem:[%s7 + $0x218] sm:$0xff]
      %v1195 = vld [vmem:[%s7 + $0x220] sm:$0xff]
      %v1196 = vld [vmem:[%s7 + $0x228] sm:$0xff]
      %v1197 = vld [vmem:[%s7 + $0x230] sm:$0xff]
      %v1198 = vld [vmem:[%s7 + $0x238] sm:$0xff]
      %v1199 = vld [vmem:[%s7 + $0x240] sm:$0xff]
      %v1200 = vld [vmem:[%s7 + $0x248] sm:$0xff]
      %v1201 = vld [vmem:[%s7 + $0x250] sm:$0xff]
      %v1202 = vld [vmem:[%s7 + $0x258] sm:$0xff]
      %v1203 = vld [vmem:[%s7 + $0x260] sm:$0xff]
      %v1204 = vld [vmem:[%s7 + $0x268] sm:$0xff]
      %v1205 = vld [vmem:[%s7 + $0x270] sm:$0xff]
      %v1206 = vld [vmem:[%s7 + $0x278] sm:$0xff]
      %v1207 = vld [vmem:[%s7 + $0x280] sm:$0xff]
      %v1208 = vld [vmem:[%s7 + $0x288] sm:$0xff]
      %v1209 = vld [vmem:[%s7 + $0x290] sm:$0xff]
      %v1210 = vld [vmem:[%s7 + $0x298] sm:$0xff]
      %v1211 = vld [vmem:[%s7 + $0x2a0] sm:$0xff]
      %v1212 = vld [vmem:[%s7 + $0x2a8] sm:$0xff]
      %v1213 = vld [vmem:[%s7 + $0x2b0] sm:$0xff]
      %v1214 = vld [vmem:[%s7 + $0x2b8] sm:$0xff]
      %v1215 = vld [vmem:[%s7 + $0x2c0] sm:$0xff]
      %v1216 = vld [vmem:[%s7 + $0x2c8] sm:$0xff]
      %v1217 = vld [vmem:[%s7 + $0x2d0] sm:$0xff]
      %v1218 = vld [vmem:[%s7 + $0x2d8] sm:$0xff]
      %v1219 = vld [vmem:[%s7 + $0x2e0] sm:$0xff]
      %v1220 = vld [vmem:[%s7 + $0x2e8] sm:$0xff]
      %v1221 = vld [vmem:[%s7 + $0x2f0] sm:$0xff]
      %v1222 = vld [vmem:[%s7 + $0x2f8] sm:$0xff]
      %v1223 = vld [vmem:[%s7 + $0x300] sm:$0xff]
      %v1224 = vld [vmem:[%s7 + $0x308] sm:$0xff]
      %v1225 = vld [vmem:[%s7 + $0x310] sm:$0xff]
      %v1226 = vld [vmem:[%s7 + $0x318] sm:$0xff]
      %v1227 = vld [vmem:[%s7 + $0x320] sm:$0xff]
      %v1228 = vld [vmem:[%s7 + $0x328] sm:$0xff]
      %v1229 = vld [vmem:[%s7 + $0x330] sm:$0xff]
      %v1230 = vld [vmem:[%s7 + $0x338] sm:$0xff]
      %v1231 = vld [vmem:[%s7 + $0x340] sm:$0xff]
      %v1232 = vld [vmem:[%s7 + $0x348] sm:$0xff]
      %v1233 = vld [vmem:[%s7 + $0x350] sm:$0xff]
      %v1234 = vld [vmem:[%s7 + $0x358] sm:$0xff]
      %v1235 = vld [vmem:[%s7 + $0x360] sm:$0xff]
      %v1236 = vld [vmem:[%s7 + $0x368] sm:$0xff]
      %v1237 = vld [vmem:[%s7 + $0x370] sm:$0xff]
      %v1238 = vld [vmem:[%s7 + $0x378] sm:$0xff]
      %v1239 = vld [vmem:[%s7 + $0x380] sm:$0xff]
      %v1240 = vld [vmem:[%s7 + $0x388] sm:$0xff]
      %v1241 = vld [vmem:[%s7 + $0x390] sm:$0xff]
      %v1242 = vld [vmem:[%s7 + $0x398] sm:$0xff]
      %v1243 = vld [vmem:[%s7 + $0x3a0] sm:$0xff]
      %v1244 = vld [vmem:[%s7 + $0x3a8] sm:$0xff]
      %v1245 = vld [vmem:[%s7 + $0x3b0] sm:$0xff]
      %v1246 = vld [vmem:[%s7 + $0x3b8] sm:$0xff]
      %v1247 = vld [vmem:[%s7 + $0x3c0] sm:$0xff]
      %v1248 = vld [vmem:[%s7 + $0x3c8] sm:$0xff]
      %v1249 = vld [vmem:[%s7 + $0x3d0] sm:$0xff]
      %v1250 = vld [vmem:[%s7 + $0x3d8] sm:$0xff]
      %v1251 = vld [vmem:[%s7 + $0x3e0] sm:$0xff]
      %v1252 = vld [vmem:[%s7 + $0x3e8] sm:$0xff]
      %v1253 = vld [vmem:[%s7 + $0x3f0] sm:$0xff]
      %v1254 = vld [vmem:[%s7 + $0x3f8] sm:$0xff]
      %v1255 = vld [vmem:[%s7 + $0x400] sm:$0xff]
      %v1256 = vld [vmem:[%s7 + $0x408] sm:$0xff]
      %v1257 = vld [vmem:[%s7 + $0x410] sm:$0xff]
      %v1258 = vld [vmem:[%s7 + $0x418] sm:$0xff]
      %v1259 = vld [vmem:[%s7 + $0x420] sm:$0xff]
      %v1260 = vld [vmem:[%s7 + $0x428] sm:$0xff]
      %v1261 = vld [vmem:[%s7 + $0x430] sm:$0xff]
      %v1262 = vld [vmem:[%s7 + $0x438] sm:$0xff]
      %v1263 = vld [vmem:[%s7 + $0x440] sm:$0xff]
      %v1264 = vld [vmem:[%s7 + $0x448] sm:$0xff]
      %v1265 = vld [vmem:[%s7 + $0x450] sm:$0xff]
      %v1266 = vld [vmem:[%s7 + $0x458] sm:$0xff]
      %v1267 = vld [vmem:[%s7 + $0x460] sm:$0xff]
      %v1268 = vld [vmem:[%s7 + $0x468] sm:$0xff]
      %v1269 = vld [vmem:[%s7 + $0x470] sm:$0xff]
      %v1270 = vld [vmem:[%s7 + $0x478] sm:$0xff]
      %v1271 = vld [vmem:[%s7 + $0x480] sm:$0xff]
      %v1272 = vld [vmem:[%s7 + $0x488] sm:$0xff]
      %v1273 = vld [vmem:[%s7 + $0x490] sm:$0xff]
      %v1274 = vld [vmem:[%s7 + $0x498] sm:$0xff]
      %v1275 = vld [vmem:[%s7 + $0x4a0] sm:$0xff]
      %v1276 = vld [vmem:[%s7 + $0x4a8] sm:$0xff]
      %v1277 = vld [vmem:[%s7 + $0x4b0] sm:$0xff]
      %v1278 = vld [vmem:[%s7 + $0x4b8] sm:$0xff]
      %v1279 = vld [vmem:[%s7 + $0x4c0] sm:$0xff]
      %v1280 = vld [vmem:[%s7 + $0x4c8] sm:$0xff]
      %v1281 = vld [vmem:[%s7 + $0x4d0] sm:$0xff]
      %v1282 = vld [vmem:[%s7 + $0x4d8] sm:$0xff]
      %v1283 = vld [vmem:[%s7 + $0x4e0] sm:$0xff]
      %v1284 = vld [vmem:[%s7 + $0x4e8] sm:$0xff]
      %v1285 = vld [vmem:[%s7 + $0x4f0] sm:$0xff]
      %v1286 = vld [vmem:[%s7 + $0x4f8] sm:$0xff]
      %v1287 = vld [vmem:[%s7 + $0x500] sm:$0xff]
      %v1288 = vld [vmem:[%s7 + $0x508] sm:$0xff]
      %v1289 = vld [vmem:[%s7 + $0x510] sm:$0xff]
      %v1290 = vld [vmem:[%s7 + $0x518] sm:$0xff]
      %v1291 = vld [vmem:[%s7 + $0x520] sm:$0xff]
      %v1292 = vld [vmem:[%s7 + $0x528] sm:$0xff]
      %v1293 = vld [vmem:[%s7 + $0x530] sm:$0xff]
      %v1294 = vld [vmem:[%s7 + $0x538] sm:$0xff]
      %v1295 = vld [vmem:[%s7 + $0x540] sm:$0xff]
      %v1296 = vld [vmem:[%s7 + $0x548] sm:$0xff]
      %v1297 = vld [vmem:[%s7 + $0x550] sm:$0xff]
      %v1298 = vld [vmem:[%s7 + $0x558] sm:$0xff]
      %v1299 = vld [vmem:[%s7 + $0x560] sm:$0xff]
      %v1300 = vld [vmem:[%s7 + $0x568] sm:$0xff]
      %v1301 = vld [vmem:[%s7 + $0x570] sm:$0xff]
      %v1302 = vld [vmem:[%s7 + $0x578] sm:$0xff]
      %v1303 = vld [vmem:[%s7 + $0x580] sm:$0xff]
      %v1304 = vld [vmem:[%s7 + $0x588] sm:$0xff]
      %v1305 = vld [vmem:[%s7 + $0x590] sm:$0xff]
      %v1306 = vld [vmem:[%s7 + $0x598] sm:$0xff]
      %v1307 = vld [vmem:[%s7 + $0x5a0] sm:$0xff]
      %v1308 = vld [vmem:[%s7 + $0x5a8] sm:$0xff]
      %v1309 = vld [vmem:[%s7 + $0x5b0] sm:$0xff]
      %v1310 = vld [vmem:[%s7 + $0x5b8] sm:$0xff]
      %v1311 = vld [vmem:[%s7 + $0x5c0] sm:$0xff]
      %v1312 = vld [vmem:[%s7 + $0x5c8] sm:$0xff]
      %v1313 = vld [vmem:[%s7 + $0x5d0] sm:$0xff]
      %v1314 = vld [vmem:[%s7 + $0x5d8] sm:$0xff]
      %v1315 = vld [vmem:[%s7 + $0x5e0] sm:$0xff]
      %v1316 = vld [vmem:[%s7 + $0x5e8] sm:$0xff]
      %v1317 = vld [vmem:[%s7 + $0x5f0] sm:$0xff]
      %v1318 = vld [vmem:[%s7 + $0x5f8] sm:$0xff]
      %v1319 = vld [vmem:[%s7 + $0x600] sm:$0xff]
      %v1320 = vld [vmem:[%s7 + $0x608] sm:$0xff]
      %v1321 = vld [vmem:[%s7 + $0x610] sm:$0xff]
      %v1322 = vld [vmem:[%s7 + $0x618] sm:$0xff]
      %v1323 = vld [vmem:[%s7 + $0x620] sm:$0xff]
      %v1324 = vld [vmem:[%s7 + $0x628] sm:$0xff]
      %v1325 = vld [vmem:[%s7 + $0x630] sm:$0xff]
      %v1326 = vld [vmem:[%s7 + $0x638] sm:$0xff]
      %v1327 = vld [vmem:[%s7 + $0x640] sm:$0xff]
      %v1328 = vld [vmem:[%s7 + $0x648] sm:$0xff]
      %v1329 = vld [vmem:[%s7 + $0x650] sm:$0xff]
      %v1330 = vld [vmem:[%s7 + $0x658] sm:$0xff]
      %v1331 = vld [vmem:[%s7 + $0x660] sm:$0xff]
      %v1332 = vld [vmem:[%s7 + $0x668] sm:$0xff]
      %v1333 = vld [vmem:[%s7 + $0x670] sm:$0xff]
      %v1334 = vld [vmem:[%s7 + $0x678] sm:$0xff]
      %v1335 = vld [vmem:[%s7 + $0x680] sm:$0xff]
      %v1336 = vld [vmem:[%s7 + $0x688] sm:$0xff]
      %v1337 = vld [vmem:[%s7 + $0x690] sm:$0xff]
      %v1338 = vld [vmem:[%s7 + $0x698] sm:$0xff]
      %v1339 = vld [vmem:[%s7 + $0x6a0] sm:$0xff]
      %v1340 = vld [vmem:[%s7 + $0x6a8] sm:$0xff]
      %v1341 = vld [vmem:[%s7 + $0x6b0] sm:$0xff]
      %v1342 = vld [vmem:[%s7 + $0x6b8] sm:$0xff]
      %v1343 = vld [vmem:[%s7 + $0x6c0] sm:$0xff]
      %v1344 = vld [vmem:[%s7 + $0x6c8] sm:$0xff]
      %v1345 = vld [vmem:[%s7 + $0x6d0] sm:$0xff]
      %v1346 = vld [vmem:[%s7 + $0x6d8] sm:$0xff]
      %v1347 = vld [vmem:[%s7 + $0x6e0] sm:$0xff]
      %v1348 = vld [vmem:[%s7 + $0x6e8] sm:$0xff]
      %v1349 = vld [vmem:[%s7 + $0x6f0] sm:$0xff]
      %v1350 = vld [vmem:[%s7 + $0x6f8] sm:$0xff]
      %v1351 = vld [vmem:[%s7 + $0x700] sm:$0xff]
      %v1352 = vld [vmem:[%s7 + $0x708] sm:$0xff]
      %v1353 = vld [vmem:[%s7 + $0x710] sm:$0xff]
      %v1354 = vld [vmem:[%s7 + $0x718] sm:$0xff]
      %v1355 = vld [vmem:[%s7 + $0x720] sm:$0xff]
      %v1356 = vld [vmem:[%s7 + $0x728] sm:$0xff]
      %v1357 = vld [vmem:[%s7 + $0x730] sm:$0xff]
      %v1358 = vld [vmem:[%s7 + $0x738] sm:$0xff]
      %v1359 = vld [vmem:[%s7 + $0x740] sm:$0xff]
      %v1360 = vld [vmem:[%s7 + $0x748] sm:$0xff]
      %v1361 = vld [vmem:[%s7 + $0x750] sm:$0xff]
      %v1362 = vld [vmem:[%s7 + $0x758] sm:$0xff]
      %v1363 = vld [vmem:[%s7 + $0x760] sm:$0xff]
      %v1364 = vld [vmem:[%s7 + $0x768] sm:$0xff]
      %v1365 = vld [vmem:[%s7 + $0x770] sm:$0xff]
      %v1366 = vld [vmem:[%s7 + $0x778] sm:$0xff]
      %v1367 = vld [vmem:[%s7 + $0x780] sm:$0xff]
      %v1368 = vld [vmem:[%s7 + $0x788] sm:$0xff]
      %v1369 = vld [vmem:[%s7 + $0x790] sm:$0xff]
      %v1370 = vld [vmem:[%s7 + $0x798] sm:$0xff]
      %v1371 = vld [vmem:[%s7 + $0x7a0] sm:$0xff]
      %v1372 = vld [vmem:[%s7 + $0x7a8] sm:$0xff]
      %v1373 = vld [vmem:[%s7 + $0x7b0] sm:$0xff]
      %v1374 = vld [vmem:[%s7 + $0x7b8] sm:$0xff]
      %v1375 = vld [vmem:[%s13] sm:$0xf]
      %v1377 = vlaneseq
      %v1378 = vshrl.u32 %v1377, 7
      %v1379 = vsub.s32 0, %v1378
      %v1380 = vrot.slane %v1375, %v1379
      %v1381 = vlaneseq
      %v1382 = vshrl.u32 %v1381, 7
      %v1383 = vsub.s32 1, %v1382
      %v1384 = vrot.slane %v1375, %v1383
      %v1385 = vlaneseq
      %v1386 = vshrl.u32 %v1385, 7
      %v1387 = vsub.s32 2, %v1386
      %v1388 = vrot.slane %v1375, %v1387
      %v1389 = vlaneseq
      %v1390 = vshrl.u32 %v1389, 7
      %v1391 = vsub.s32 3, %v1390
      %v1392 = vrot.slane %v1375, %v1391
      %vm1397 = vcmask 916480
      %v1399 = vsel %vm1397, %v1125, 0
      %1401 = vmatprep.subr.mxu0 %v1128
      %1402 = vmatpush1.msra.mxu0 %v1127
      %1403 = vmatprep.subr.mxu0 %v1132
      %1404 = vmatpush1.msra.mxu0 %v1131
      %1405 = vmatprep.subr.mxu0 %v1136
      %1406 = vmatpush1.msra.mxu0 %v1135
      %1407 = vmatprep.subr.mxu0 %v1140
      %1408 = vmatpush1.msra.mxu0 %v1139
      %1409 = vmatprep.subr.mxu0 %v1144
      %1410 = vmatpush1.msra.mxu0 %v1143
      %1411 = vmatprep.subr.mxu0 %v1148
      %1412 = vmatpush1.msra.mxu0 %v1147
      %1413 = vmatprep.subr.mxu0 %v1152
      %1414 = vmatpush1.msra.mxu0 %v1151
      %1415 = vmatprep.subr.mxu0 %v1156
      %1416 = vmatpush1.msra.mxu0 %v1155
      %1417 = vmatprep.subr.mxu0 %v1160
      %1418 = vmatpush1.msra.mxu0 %v1159
      %1419 = vmatprep.subr.mxu0 %v1164
      %1420 = vmatpush1.msra.mxu0 %v1163
      %1421 = vmatprep.subr.mxu0 %v1168
      %1422 = vmatpush1.msra.mxu0 %v1167
      %1423 = vmatprep.subr.mxu0 %v1172
      %1424 = vmatpush1.msra.mxu0 %v1171
      %1425 = vmatprep.subr.mxu0 %v1176
      %1426 = vmatpush1.msra.mxu0 %v1175
      %1427 = vmatprep.subr.mxu0 %v1180
      %1428 = vmatpush1.msra.mxu0 %v1179
      %1429 = vmatprep.subr.mxu0 %v1184
      %1430 = vmatpush1.msra.mxu0 %v1183
      %1431 = vmatprep.subr.mxu0 %v1188
      %1432 = vmatpush1.msra.mxu0 %v1187
      %1433 = vmatprep.subr.mxu0 %v1192
      %1434 = vmatpush1.msra.mxu0 %v1191
      %1435 = vmatprep.subr.mxu0 %v1196
      %1436 = vmatpush1.msra.mxu0 %v1195
      %1437 = vmatprep.subr.mxu0 %v1200
      %1438 = vmatpush1.msra.mxu0 %v1199
      %1439 = vmatprep.subr.mxu0 %v1204
      %1440 = vmatpush1.msra.mxu0 %v1203
      %1441 = vmatprep.subr.mxu0 %v1208
      %1442 = vmatpush1.msra.mxu0 %v1207
      %1443 = vmatprep.subr.mxu0 %v1212
      %1444 = vmatpush1.msra.mxu0 %v1211
      %1445 = vmatprep.subr.mxu0 %v1216
      %1446 = vmatpush1.msra.mxu0 %v1215
      %1447 = vmatprep.subr.mxu0 %v1220
      %1448 = vmatpush1.msra.mxu0 %v1219
      %1449 = vmatprep.subr.mxu0 %v1224
      %1450 = vmatpush1.msra.mxu0 %v1223
      %1451 = vmatprep.subr.mxu0 %v1228
      %1452 = vmatpush1.msra.mxu0 %v1227
      %1453 = vmatprep.subr.mxu0 %v1232
      %1454 = vmatpush1.msra.mxu0 %v1231
      %1455 = vmatprep.subr.mxu0 %v1236
      %1456 = vmatpush1.msra.mxu0 %v1235
      %1457 = vmatprep.subr.mxu0 %v1240
      %1458 = vmatpush1.msra.mxu0 %v1239
      %1459 = vmatprep.subr.mxu0 %v1244
      %1460 = vmatpush1.msra.mxu0 %v1243
      %1461 = vmatprep.subr.mxu0 %v1248
      %1462 = vmatpush1.msra.mxu0 %v1247
      %1463 = vmatprep.subr.mxu0 %v1252
      %1464 = vmatpush1.msra.mxu0 %v1251
      %1465 = vmatprep.mubr.f32.mxu0 %v1054
      %1466 = vmatmul.mubr.f32.gmra.mrb[0].mxu0 %v1052
      %v1467 = vpop.f32.mrb[0].mxu0
      %v1468 = vadd.f32 %v1380, %v1467
      %v1469 = vpop.f32.mrb[0].mxu0
      %v1470 = vadd.f32 %v1384, %v1469
      %1471 = vdwg.mxu0
      %1472 = vmatprep.subr.mxu0 %v1256
      %1473 = vmatpush1.msra.mxu0 %v1255
      %1474 = vmatprep.subr.mxu0 %v1260
      %1475 = vmatpush1.msra.mxu0 %v1259
      %1476 = vmatprep.subr.mxu0 %v1264
      %1477 = vmatpush1.msra.mxu0 %v1263
      %1478 = vmatprep.subr.mxu0 %v1268
      %1479 = vmatpush1.msra.mxu0 %v1267
      %1480 = vmatprep.subr.mxu0 %v1272
      %1481 = vmatpush1.msra.mxu0 %v1271
      %1482 = vmatprep.subr.mxu0 %v1276
      %1483 = vmatpush1.msra.mxu0 %v1275
      %1484 = vmatprep.subr.mxu0 %v1280
      %1485 = vmatpush1.msra.mxu0 %v1279
      %1486 = vmatprep.subr.mxu0 %v1284
      %1487 = vmatpush1.msra.mxu0 %v1283
      %1488 = vmatprep.subr.mxu0 %v1288
      %1489 = vmatpush1.msra.mxu0 %v1287
      %1490 = vmatprep.subr.mxu0 %v1292
      %1491 = vmatpush1.msra.mxu0 %v1291
      %1492 = vmatprep.subr.mxu0 %v1296
      %1493 = vmatpush1.msra.mxu0 %v1295
      %1494 = vmatprep.subr.mxu0 %v1300
      %1495 = vmatpush1.msra.mxu0 %v1299
      %1496 = vmatprep.subr.mxu0 %v1304
      %1497 = vmatpush1.msra.mxu0 %v1303
      %1498 = vmatprep.subr.mxu0 %v1308
      %1499 = vmatpush1.msra.mxu0 %v1307
      %1500 = vmatprep.subr.mxu0 %v1312
      %1501 = vmatpush1.msra.mxu0 %v1311
      %1502 = vmatprep.subr.mxu0 %v1316
      %1503 = vmatpush1.msra.mxu0 %v1315
      %1504 = vmatprep.subr.mxu0 %v1320
      %1505 = vmatpush1.msra.mxu0 %v1319
      %1506 = vmatprep.subr.mxu0 %v1324
      %1507 = vmatpush1.msra.mxu0 %v1323
      %1508 = vmatprep.subr.mxu0 %v1328
      %1509 = vmatpush1.msra.mxu0 %v1327
      %1510 = vmatprep.subr.mxu0 %v1332
      %1511 = vmatpush1.msra.mxu0 %v1331
      %1512 = vmatprep.subr.mxu0 %v1336
      %1513 = vmatpush1.msra.mxu0 %v1335
      %1514 = vmatprep.subr.mxu0 %v1340
      %1515 = vmatpush1.msra.mxu0 %v1339
      %1516 = vmatprep.subr.mxu0 %v1344
      %1517 = vmatpush1.msra.mxu0 %v1343
      %1518 = vmatprep.subr.mxu0 %v1348
      %1519 = vmatpush1.msra.mxu0 %v1347
      %1520 = vmatprep.subr.mxu0 %v1352
      %1521 = vmatpush1.msra.mxu0 %v1351
      %1522 = vmatprep.subr.mxu0 %v1356
      %1523 = vmatpush1.msra.mxu0 %v1355
      %1524 = vmatprep.subr.mxu0 %v1360
      %1525 = vmatpush1.msra.mxu0 %v1359
      %1526 = vmatprep.subr.mxu0 %v1364
      %1527 = vmatpush1.msra.mxu0 %v1363
      %1528 = vmatprep.subr.mxu0 %v1368
      %1529 = vmatpush1.msra.mxu0 %v1367
      %1530 = vmatprep.subr.mxu0 %v1372
      %1531 = vmatpush1.msra.mxu0 %v1371
      %1532 = vmatprep.subr.mxu0 0.0
      %1533 = vmatpush1.msra.mxu0 0.0
      %1534 = vmatprep.subr.mxu0 0.0
      %1535 = vmatpush1.msra.mxu0 0.0
      %1536 = vmatprep.mubr.f32.mxu0 %v1399
      %1537 = vmatmul.mubr.f32.gmra.mrb[0].mxu0 %v1123
      %v1538 = vpop.f32.mrb[0].mxu0
      %v1539 = vadd.f32 %v1468, %v1538
      %v1540 = vpop.f32.mrb[0].mxu0
      %v1541 = vadd.f32 %v1470, %v1540
      %1542 = vdwg.mxu0
      %1543 = vmatprep.subr.mxu0 %v1130
      %1544 = vmatpush1.msra.mxu0 %v1129
      %1545 = vmatprep.subr.mxu0 %v1134
      %1546 = vmatpush1.msra.mxu0 %v1133
      %1547 = vmatprep.subr.mxu0 %v1138
      %1548 = vmatpush1.msra.mxu0 %v1137
      %1549 = vmatprep.subr.mxu0 %v1142
      %1550 = vmatpush1.msra.mxu0 %v1141
      %1551 = vmatprep.subr.mxu0 %v1146
      %1552 = vmatpush1.msra.mxu0 %v1145
      %1553 = vmatprep.subr.mxu0 %v1150
      %1554 = vmatpush1.msra.mxu0 %v1149
      %1555 = vmatprep.subr.mxu0 %v1154
      %1556 = vmatpush1.msra.mxu0 %v1153
      %1557 = vmatprep.subr.mxu0 %v1158
      %1558 = vmatpush1.msra.mxu0 %v1157
      %1559 = vmatprep.subr.mxu0 %v1162
      %1560 = vmatpush1.msra.mxu0 %v1161
      %1561 = vmatprep.subr.mxu0 %v1166
      %1562 = vmatpush1.msra.mxu0 %v1165
      %1563 = vmatprep.subr.mxu0 %v1170
      %1564 = vmatpush1.msra.mxu0 %v1169
      %1565 = vmatprep.subr.mxu0 %v1174
      %1566 = vmatpush1.msra.mxu0 %v1173
      %1567 = vmatprep.subr.mxu0 %v1178
      %1568 = vmatpush1.msra.mxu0 %v1177
      %1569 = vmatprep.subr.mxu0 %v1182
      %1570 = vmatpush1.msra.mxu0 %v1181
      %1571 = vmatprep.subr.mxu0 %v1186
      %1572 = vmatpush1.msra.mxu0 %v1185
      %1573 = vmatprep.subr.mxu0 %v1190
      %1574 = vmatpush1.msra.mxu0 %v1189
      %1575 = vmatprep.subr.mxu0 %v1194
      %1576 = vmatpush1.msra.mxu0 %v1193
      %1577 = vmatprep.subr.mxu0 %v1198
      %1578 = vmatpush1.msra.mxu0 %v1197
      %1579 = vmatprep.subr.mxu0 %v1202
      %1580 = vmatpush1.msra.mxu0 %v1201
      %1581 = vmatprep.subr.mxu0 %v1206
      %1582 = vmatpush1.msra.mxu0 %v1205
      %1583 = vmatprep.subr.mxu0 %v1210
      %1584 = vmatpush1.msra.mxu0 %v1209
      %1585 = vmatprep.subr.mxu0 %v1214
      %1586 = vmatpush1.msra.mxu0 %v1213
      %1587 = vmatprep.subr.mxu0 %v1218
      %1588 = vmatpush1.msra.mxu0 %v1217
      %1589 = vmatprep.subr.mxu0 %v1222
      %1590 = vmatpush1.msra.mxu0 %v1221
      %1591 = vmatprep.subr.mxu0 %v1226
      %1592 = vmatpush1.msra.mxu0 %v1225
      %1593 = vmatprep.subr.mxu0 %v1230
      %1594 = vmatpush1.msra.mxu0 %v1229
      %1595 = vmatprep.subr.mxu0 %v1234
      %1596 = vmatpush1.msra.mxu0 %v1233
      %1597 = vmatprep.subr.mxu0 %v1238
      %1598 = vmatpush1.msra.mxu0 %v1237
      %1599 = vmatprep.subr.mxu0 %v1242
      %1600 = vmatpush1.msra.mxu0 %v1241
      %1601 = vmatprep.subr.mxu0 %v1246
      %1602 = vmatpush1.msra.mxu0 %v1245
      %1603 = vmatprep.subr.mxu0 %v1250
      %1604 = vmatpush1.msra.mxu0 %v1249
      %1605 = vmatprep.subr.mxu0 %v1254
      %1606 = vmatpush1.msra.mxu0 %v1253
      %1607 = vmatprep.mubr.f32.mxu0 %v1054
      %1608 = vmatmul.mubr.f32.gmra.mrb[0].mxu0 %v1052
      %v1609 = vpop.f32.mrb[0].mxu0
      %v1610 = vadd.f32 %v1388, %v1609
      %v1611 = vpop.f32.mrb[0].mxu0
      %v1612 = vadd.f32 %v1392, %v1611
      %1613 = vdwg.mxu0
      %1614 = vmatprep.subr.mxu0 %v1258
      %1615 = vmatpush1.msra.mxu0 %v1257
      %1616 = vmatprep.subr.mxu0 %v1262
      %1617 = vmatpush1.msra.mxu0 %v1261
      %1618 = vmatprep.subr.mxu0 %v1266
      %1619 = vmatpush1.msra.mxu0 %v1265
      %1620 = vmatprep.subr.mxu0 %v1270
      %1621 = vmatpush1.msra.mxu0 %v1269
      %1622 = vmatprep.subr.mxu0 %v1274
      %1623 = vmatpush1.msra.mxu0 %v1273
      %1624 = vmatprep.subr.mxu0 %v1278
      %1625 = vmatpush1.msra.mxu0 %v1277
      %1626 = vmatprep.subr.mxu0 %v1282
      %1627 = vmatpush1.msra.mxu0 %v1281
      %1628 = vmatprep.subr.mxu0 %v1286
      %1629 = vmatpush1.msra.mxu0 %v1285
      %1630 = vmatprep.subr.mxu0 %v1290
      %1631 = vmatpush1.msra.mxu0 %v1289
      %1632 = vmatprep.subr.mxu0 %v1294
      %1633 = vmatpush1.msra.mxu0 %v1293
      %1634 = vmatprep.subr.mxu0 %v1298
      %1635 = vmatpush1.msra.mxu0 %v1297
      %1636 = vmatprep.subr.mxu0 %v1302
      %1637 = vmatpush1.msra.mxu0 %v1301
      %1638 = vmatprep.subr.mxu0 %v1306
      %1639 = vmatpush1.msra.mxu0 %v1305
      %1640 = vmatprep.subr.mxu0 %v1310
      %1641 = vmatpush1.msra.mxu0 %v1309
      %1642 = vmatprep.subr.mxu0 %v1314
      %1643 = vmatpush1.msra.mxu0 %v1313
      %1644 = vmatprep.subr.mxu0 %v1318
      %1645 = vmatpush1.msra.mxu0 %v1317
      %1646 = vmatprep.subr.mxu0 %v1322
      %1647 = vmatpush1.msra.mxu0 %v1321
      %1648 = vmatprep.subr.mxu0 %v1326
      %1649 = vmatpush1.msra.mxu0 %v1325
      %1650 = vmatprep.subr.mxu0 %v1330
      %1651 = vmatpush1.msra.mxu0 %v1329
      %1652 = vmatprep.subr.mxu0 %v1334
      %1653 = vmatpush1.msra.mxu0 %v1333
      %1654 = vmatprep.subr.mxu0 %v1338
      %1655 = vmatpush1.msra.mxu0 %v1337
      %1656 = vmatprep.subr.mxu0 %v1342
      %1657 = vmatpush1.msra.mxu0 %v1341
      %1658 = vmatprep.subr.mxu0 %v1346
      %1659 = vmatpush1.msra.mxu0 %v1345
      %1660 = vmatprep.subr.mxu0 %v1350
      %1661 = vmatpush1.msra.mxu0 %v1349
      %1662 = vmatprep.subr.mxu0 %v1354
      %1663 = vmatpush1.msra.mxu0 %v1353
      %1664 = vmatprep.subr.mxu0 %v1358
      %1665 = vmatpush1.msra.mxu0 %v1357
      %1666 = vmatprep.subr.mxu0 %v1362
      %1667 = vmatpush1.msra.mxu0 %v1361
      %1668 = vmatprep.subr.mxu0 %v1366
      %1669 = vmatpush1.msra.mxu0 %v1365
      %1670 = vmatprep.subr.mxu0 %v1370
      %1671 = vmatpush1.msra.mxu0 %v1369
      %1672 = vmatprep.subr.mxu0 %v1374
      %1673 = vmatpush1.msra.mxu0 %v1373
      %1674 = vmatprep.subr.mxu0 0.0
      %1675 = vmatpush1.msra.mxu0 0.0
      %1676 = vmatprep.subr.mxu0 0.0
      %1677 = vmatpush1.msra.mxu0 0.0
      %1678 = vmatprep.mubr.f32.mxu0 %v1399
      %1679 = vmatmul.mubr.f32.gmra.mrb[0].mxu0 %v1123
      %v1680 = vpop.f32.mrb[0].mxu0
      %v1681 = vadd.f32 %v1610, %v1680
      %v1682 = vpop.f32.mrb[0].mxu0
      %v1683 = vadd.f32 %v1612, %v1682
      %1684 = vdwg.mxu0
      %v1685 = vmax.f32 %v1539, 0.0
      %v1686 = vmax.f32 %v1541, 0.0
      %v1687 = vmax.f32 %v1681, 0.0
      %v1688 = vmax.f32 %v1683, 0.0
      %v1689 = vld [vmem:[%s9] sm:$0xff]
      %v1690 = vld [vmem:[%s9 + $0x8] sm:$0xff]
      %v1691 = vld [vmem:[%s9 + $0x10] sm:$0xff]
      %v1692 = vld [vmem:[%s9 + $0x18] sm:$0xff]
      %v1693 = vld [vmem:[%s9 + $0x20] sm:$0xff]
      %v1694 = vld [vmem:[%s9 + $0x28] sm:$0xff]
      %v1695 = vld [vmem:[%s9 + $0x30] sm:$0xff]
      %v1696 = vld [vmem:[%s9 + $0x38] sm:$0xff]
      %v1697 = vld [vmem:[%s9 + $0x40] sm:$0xff]
      %v1698 = vld [vmem:[%s9 + $0x48] sm:$0xff]
      %v1699 = vld [vmem:[%s9 + $0x50] sm:$0xff]
      %v1700 = vld [vmem:[%s9 + $0x58] sm:$0xff]
      %v1701 = vld [vmem:[%s9 + $0x60] sm:$0xff]
      %v1702 = vld [vmem:[%s9 + $0x68] sm:$0xff]
      %v1703 = vld [vmem:[%s9 + $0x70] sm:$0xff]
      %v1704 = vld [vmem:[%s9 + $0x78] sm:$0xff]
      %v1705 = vld [vmem:[%s9 + $0x80] sm:$0xff]
      %v1706 = vld [vmem:[%s9 + $0x88] sm:$0xff]
      %v1707 = vld [vmem:[%s9 + $0x90] sm:$0xff]
      %v1708 = vld [vmem:[%s9 + $0x98] sm:$0xff]
      %v1709 = vld [vmem:[%s9 + $0xa0] sm:$0xff]
      %v1710 = vld [vmem:[%s9 + $0xa8] sm:$0xff]
      %v1711 = vld [vmem:[%s9 + $0xb0] sm:$0xff]
      %v1712 = vld [vmem:[%s9 + $0xb8] sm:$0xff]
      %v1713 = vld [vmem:[%s9 + $0xc0] sm:$0xff]
      %v1714 = vld [vmem:[%s9 + $0xc8] sm:$0xff]
      %v1715 = vld [vmem:[%s9 + $0xd0] sm:$0xff]
      %v1716 = vld [vmem:[%s9 + $0xd8] sm:$0xff]
      %v1717 = vld [vmem:[%s9 + $0xe0] sm:$0xff]
      %v1718 = vld [vmem:[%s9 + $0xe8] sm:$0xff]
      %v1719 = vld [vmem:[%s9 + $0xf0] sm:$0xff]
      %v1720 = vld [vmem:[%s9 + $0xf8] sm:$0xff]
      %v1721 = vld [vmem:[%s9 + $0x100] sm:$0xff]
      %v1722 = vld [vmem:[%s9 + $0x108] sm:$0xff]
      %v1723 = vld [vmem:[%s9 + $0x110] sm:$0xff]
      %v1724 = vld [vmem:[%s9 + $0x118] sm:$0xff]
      %v1725 = vld [vmem:[%s9 + $0x120] sm:$0xff]
      %v1726 = vld [vmem:[%s9 + $0x128] sm:$0xff]
      %v1727 = vld [vmem:[%s9 + $0x130] sm:$0xff]
      %v1728 = vld [vmem:[%s9 + $0x138] sm:$0xff]
      %v1729 = vld [vmem:[%s9 + $0x140] sm:$0xff]
      %v1730 = vld [vmem:[%s9 + $0x148] sm:$0xff]
      %v1731 = vld [vmem:[%s9 + $0x150] sm:$0xff]
      %v1732 = vld [vmem:[%s9 + $0x158] sm:$0xff]
      %v1733 = vld [vmem:[%s9 + $0x160] sm:$0xff]
      %v1734 = vld [vmem:[%s9 + $0x168] sm:$0xff]
      %v1735 = vld [vmem:[%s9 + $0x170] sm:$0xff]
      %v1736 = vld [vmem:[%s9 + $0x178] sm:$0xff]
      %v1737 = vld [vmem:[%s9 + $0x180] sm:$0xff]
      %v1738 = vld [vmem:[%s9 + $0x188] sm:$0xff]
      %v1739 = vld [vmem:[%s9 + $0x190] sm:$0xff]
      %v1740 = vld [vmem:[%s9 + $0x198] sm:$0xff]
      %v1741 = vld [vmem:[%s9 + $0x1a0] sm:$0xff]
      %v1742 = vld [vmem:[%s9 + $0x1a8] sm:$0xff]
      %v1743 = vld [vmem:[%s9 + $0x1b0] sm:$0xff]
      %v1744 = vld [vmem:[%s9 + $0x1b8] sm:$0xff]
      %v1745 = vld [vmem:[%s9 + $0x1c0] sm:$0xff]
      %v1746 = vld [vmem:[%s9 + $0x1c8] sm:$0xff]
      %v1747 = vld [vmem:[%s9 + $0x1d0] sm:$0xff]
      %v1748 = vld [vmem:[%s9 + $0x1d8] sm:$0xff]
      %v1749 = vld [vmem:[%s9 + $0x1e0] sm:$0xff]
      %v1750 = vld [vmem:[%s9 + $0x1e8] sm:$0xff]
      %v1751 = vld [vmem:[%s9 + $0x1f0] sm:$0xff]
      %v1752 = vld [vmem:[%s9 + $0x1f8] sm:$0xff]
      %v1753 = vld [vmem:[%s9 + $0x200] sm:$0xff]
      %v1754 = vld [vmem:[%s9 + $0x208] sm:$0xff]
      %v1755 = vld [vmem:[%s9 + $0x210] sm:$0xff]
      %v1756 = vld [vmem:[%s9 + $0x218] sm:$0xff]
      %v1757 = vld [vmem:[%s9 + $0x220] sm:$0xff]
      %v1758 = vld [vmem:[%s9 + $0x228] sm:$0xff]
      %v1759 = vld [vmem:[%s9 + $0x230] sm:$0xff]
      %v1760 = vld [vmem:[%s9 + $0x238] sm:$0xff]
      %v1761 = vld [vmem:[%s9 + $0x240] sm:$0xff]
      %v1762 = vld [vmem:[%s9 + $0x248] sm:$0xff]
      %v1763 = vld [vmem:[%s9 + $0x250] sm:$0xff]
      %v1764 = vld [vmem:[%s9 + $0x258] sm:$0xff]
      %v1765 = vld [vmem:[%s9 + $0x260] sm:$0xff]
      %v1766 = vld [vmem:[%s9 + $0x268] sm:$0xff]
      %v1767 = vld [vmem:[%s9 + $0x270] sm:$0xff]
      %v1768 = vld [vmem:[%s9 + $0x278] sm:$0xff]
      %v1769 = vld [vmem:[%s9 + $0x280] sm:$0xff]
      %v1770 = vld [vmem:[%s9 + $0x288] sm:$0xff]
      %v1771 = vld [vmem:[%s9 + $0x290] sm:$0xff]
      %v1772 = vld [vmem:[%s9 + $0x298] sm:$0xff]
      %v1773 = vld [vmem:[%s9 + $0x2a0] sm:$0xff]
      %v1774 = vld [vmem:[%s9 + $0x2a8] sm:$0xff]
      %v1775 = vld [vmem:[%s9 + $0x2b0] sm:$0xff]
      %v1776 = vld [vmem:[%s9 + $0x2b8] sm:$0xff]
      %v1777 = vld [vmem:[%s9 + $0x2c0] sm:$0xff]
      %v1778 = vld [vmem:[%s9 + $0x2c8] sm:$0xff]
      %v1779 = vld [vmem:[%s9 + $0x2d0] sm:$0xff]
      %v1780 = vld [vmem:[%s9 + $0x2d8] sm:$0xff]
      %v1781 = vld [vmem:[%s9 + $0x2e0] sm:$0xff]
      %v1782 = vld [vmem:[%s9 + $0x2e8] sm:$0xff]
      %v1783 = vld [vmem:[%s9 + $0x2f0] sm:$0xff]
      %v1784 = vld [vmem:[%s9 + $0x2f8] sm:$0xff]
      %v1785 = vld [vmem:[%s9 + $0x300] sm:$0xff]
      %v1786 = vld [vmem:[%s9 + $0x308] sm:$0xff]
      %v1787 = vld [vmem:[%s9 + $0x310] sm:$0xff]
      %v1788 = vld [vmem:[%s9 + $0x318] sm:$0xff]
      %v1789 = vld [vmem:[%s9 + $0x320] sm:$0xff]
      %v1790 = vld [vmem:[%s9 + $0x328] sm:$0xff]
      %v1791 = vld [vmem:[%s9 + $0x330] sm:$0xff]
      %v1792 = vld [vmem:[%s9 + $0x338] sm:$0xff]
      %v1793 = vld [vmem:[%s9 + $0x340] sm:$0xff]
      %v1794 = vld [vmem:[%s9 + $0x348] sm:$0xff]
      %v1795 = vld [vmem:[%s9 + $0x350] sm:$0xff]
      %v1796 = vld [vmem:[%s9 + $0x358] sm:$0xff]
      %v1797 = vld [vmem:[%s9 + $0x360] sm:$0xff]
      %v1798 = vld [vmem:[%s9 + $0x368] sm:$0xff]
      %v1799 = vld [vmem:[%s9 + $0x370] sm:$0xff]
      %v1800 = vld [vmem:[%s9 + $0x378] sm:$0xff]
      %v1801 = vld [vmem:[%s9 + $0x380] sm:$0xff]
      %v1802 = vld [vmem:[%s9 + $0x388] sm:$0xff]
      %v1803 = vld [vmem:[%s9 + $0x390] sm:$0xff]
      %v1804 = vld [vmem:[%s9 + $0x398] sm:$0xff]
      %v1805 = vld [vmem:[%s9 + $0x3a0] sm:$0xff]
      %v1806 = vld [vmem:[%s9 + $0x3a8] sm:$0xff]
      %v1807 = vld [vmem:[%s9 + $0x3b0] sm:$0xff]
      %v1808 = vld [vmem:[%s9 + $0x3b8] sm:$0xff]
      %v1809 = vld [vmem:[%s9 + $0x3c0] sm:$0xff]
      %v1810 = vld [vmem:[%s9 + $0x3c8] sm:$0xff]
      %v1811 = vld [vmem:[%s9 + $0x3d0] sm:$0xff]
      %v1812 = vld [vmem:[%s9 + $0x3d8] sm:$0xff]
      %v1813 = vld [vmem:[%s9 + $0x3e0] sm:$0xff]
      %v1814 = vld [vmem:[%s9 + $0x3e8] sm:$0xff]
      %v1815 = vld [vmem:[%s9 + $0x3f0] sm:$0xff]
      %v1816 = vld [vmem:[%s9 + $0x3f8] sm:$0xff]
      %v1817 = vld [vmem:[%s9 + $0x400] sm:$0xff]
      %v1818 = vld [vmem:[%s9 + $0x408] sm:$0xff]
      %v1819 = vld [vmem:[%s9 + $0x410] sm:$0xff]
      %v1820 = vld [vmem:[%s9 + $0x418] sm:$0xff]
      %v1821 = vld [vmem:[%s9 + $0x420] sm:$0xff]
      %v1822 = vld [vmem:[%s9 + $0x428] sm:$0xff]
      %v1823 = vld [vmem:[%s9 + $0x430] sm:$0xff]
      %v1824 = vld [vmem:[%s9 + $0x438] sm:$0xff]
      %v1825 = vld [vmem:[%s9 + $0x440] sm:$0xff]
      %v1826 = vld [vmem:[%s9 + $0x448] sm:$0xff]
      %v1827 = vld [vmem:[%s9 + $0x450] sm:$0xff]
      %v1828 = vld [vmem:[%s9 + $0x458] sm:$0xff]
      %v1829 = vld [vmem:[%s9 + $0x460] sm:$0xff]
      %v1830 = vld [vmem:[%s9 + $0x468] sm:$0xff]
      %v1831 = vld [vmem:[%s9 + $0x470] sm:$0xff]
      %v1832 = vld [vmem:[%s9 + $0x478] sm:$0xff]
      %v1833 = vld [vmem:[%s9 + $0x480] sm:$0xff]
      %v1834 = vld [vmem:[%s9 + $0x488] sm:$0xff]
      %v1835 = vld [vmem:[%s9 + $0x490] sm:$0xff]
      %v1836 = vld [vmem:[%s9 + $0x498] sm:$0xff]
      %v1837 = vld [vmem:[%s9 + $0x4a0] sm:$0xff]
      %v1838 = vld [vmem:[%s9 + $0x4a8] sm:$0xff]
      %v1839 = vld [vmem:[%s9 + $0x4b0] sm:$0xff]
      %v1840 = vld [vmem:[%s9 + $0x4b8] sm:$0xff]
      %v1841 = vld [vmem:[%s9 + $0x4c0] sm:$0xff]
      %v1842 = vld [vmem:[%s9 + $0x4c8] sm:$0xff]
      %v1843 = vld [vmem:[%s9 + $0x4d0] sm:$0xff]
      %v1844 = vld [vmem:[%s9 + $0x4d8] sm:$0xff]
      %v1845 = vld [vmem:[%s9 + $0x4e0] sm:$0xff]
      %v1846 = vld [vmem:[%s9 + $0x4e8] sm:$0xff]
      %v1847 = vld [vmem:[%s9 + $0x4f0] sm:$0xff]
      %v1848 = vld [vmem:[%s9 + $0x4f8] sm:$0xff]
      %v1849 = vld [vmem:[%s9 + $0x500] sm:$0xff]
      %v1850 = vld [vmem:[%s9 + $0x508] sm:$0xff]
      %v1851 = vld [vmem:[%s9 + $0x510] sm:$0xff]
      %v1852 = vld [vmem:[%s9 + $0x518] sm:$0xff]
      %v1853 = vld [vmem:[%s9 + $0x520] sm:$0xff]
      %v1854 = vld [vmem:[%s9 + $0x528] sm:$0xff]
      %v1855 = vld [vmem:[%s9 + $0x530] sm:$0xff]
      %v1856 = vld [vmem:[%s9 + $0x538] sm:$0xff]
      %v1857 = vld [vmem:[%s9 + $0x540] sm:$0xff]
      %v1858 = vld [vmem:[%s9 + $0x548] sm:$0xff]
      %v1859 = vld [vmem:[%s9 + $0x550] sm:$0xff]
      %v1860 = vld [vmem:[%s9 + $0x558] sm:$0xff]
      %v1861 = vld [vmem:[%s9 + $0x560] sm:$0xff]
      %v1862 = vld [vmem:[%s9 + $0x568] sm:$0xff]
      %v1863 = vld [vmem:[%s9 + $0x570] sm:$0xff]
      %v1864 = vld [vmem:[%s9 + $0x578] sm:$0xff]
      %v1865 = vld [vmem:[%s9 + $0x580] sm:$0xff]
      %v1866 = vld [vmem:[%s9 + $0x588] sm:$0xff]
      %v1867 = vld [vmem:[%s9 + $0x590] sm:$0xff]
      %v1868 = vld [vmem:[%s9 + $0x598] sm:$0xff]
      %v1869 = vld [vmem:[%s9 + $0x5a0] sm:$0xff]
      %v1870 = vld [vmem:[%s9 + $0x5a8] sm:$0xff]
      %v1871 = vld [vmem:[%s9 + $0x5b0] sm:$0xff]
      %v1872 = vld [vmem:[%s9 + $0x5b8] sm:$0xff]
      %v1873 = vld [vmem:[%s9 + $0x5c0] sm:$0xff]
      %v1874 = vld [vmem:[%s9 + $0x5c8] sm:$0xff]
      %v1875 = vld [vmem:[%s9 + $0x5d0] sm:$0xff]
      %v1876 = vld [vmem:[%s9 + $0x5d8] sm:$0xff]
      %v1877 = vld [vmem:[%s9 + $0x5e0] sm:$0xff]
      %v1878 = vld [vmem:[%s9 + $0x5e8] sm:$0xff]
      %v1879 = vld [vmem:[%s9 + $0x5f0] sm:$0xff]
      %v1880 = vld [vmem:[%s9 + $0x5f8] sm:$0xff]
      %v1881 = vld [vmem:[%s9 + $0x600] sm:$0xff]
      %v1882 = vld [vmem:[%s9 + $0x608] sm:$0xff]
      %v1883 = vld [vmem:[%s9 + $0x610] sm:$0xff]
      %v1884 = vld [vmem:[%s9 + $0x618] sm:$0xff]
      %v1885 = vld [vmem:[%s9 + $0x620] sm:$0xff]
      %v1886 = vld [vmem:[%s9 + $0x628] sm:$0xff]
      %v1887 = vld [vmem:[%s9 + $0x630] sm:$0xff]
      %v1888 = vld [vmem:[%s9 + $0x638] sm:$0xff]
      %v1889 = vld [vmem:[%s9 + $0x640] sm:$0xff]
      %v1890 = vld [vmem:[%s9 + $0x648] sm:$0xff]
      %v1891 = vld [vmem:[%s9 + $0x650] sm:$0xff]
      %v1892 = vld [vmem:[%s9 + $0x658] sm:$0xff]
      %v1893 = vld [vmem:[%s9 + $0x660] sm:$0xff]
      %v1894 = vld [vmem:[%s9 + $0x668] sm:$0xff]
      %v1895 = vld [vmem:[%s9 + $0x670] sm:$0xff]
      %v1896 = vld [vmem:[%s9 + $0x678] sm:$0xff]
      %v1897 = vld [vmem:[%s9 + $0x680] sm:$0xff]
      %v1898 = vld [vmem:[%s9 + $0x688] sm:$0xff]
      %v1899 = vld [vmem:[%s9 + $0x690] sm:$0xff]
      %v1900 = vld [vmem:[%s9 + $0x698] sm:$0xff]
      %v1901 = vld [vmem:[%s9 + $0x6a0] sm:$0xff]
      %v1902 = vld [vmem:[%s9 + $0x6a8] sm:$0xff]
      %v1903 = vld [vmem:[%s9 + $0x6b0] sm:$0xff]
      %v1904 = vld [vmem:[%s9 + $0x6b8] sm:$0xff]
      %v1905 = vld [vmem:[%s9 + $0x6c0] sm:$0xff]
      %v1906 = vld [vmem:[%s9 + $0x6c8] sm:$0xff]
      %v1907 = vld [vmem:[%s9 + $0x6d0] sm:$0xff]
      %v1908 = vld [vmem:[%s9 + $0x6d8] sm:$0xff]
      %v1909 = vld [vmem:[%s9 + $0x6e0] sm:$0xff]
      %v1910 = vld [vmem:[%s9 + $0x6e8] sm:$0xff]
      %v1911 = vld [vmem:[%s9 + $0x6f0] sm:$0xff]
      %v1912 = vld [vmem:[%s9 + $0x6f8] sm:$0xff]
      %v1913 = vld [vmem:[%s9 + $0x700] sm:$0xff]
      %v1914 = vld [vmem:[%s9 + $0x708] sm:$0xff]
      %v1915 = vld [vmem:[%s9 + $0x710] sm:$0xff]
      %v1916 = vld [vmem:[%s9 + $0x718] sm:$0xff]
      %v1917 = vld [vmem:[%s9 + $0x720] sm:$0xff]
      %v1918 = vld [vmem:[%s9 + $0x728] sm:$0xff]
      %v1919 = vld [vmem:[%s9 + $0x730] sm:$0xff]
      %v1920 = vld [vmem:[%s9 + $0x738] sm:$0xff]
      %v1921 = vld [vmem:[%s9 + $0x740] sm:$0xff]
      %v1922 = vld [vmem:[%s9 + $0x748] sm:$0xff]
      %v1923 = vld [vmem:[%s9 + $0x750] sm:$0xff]
      %v1924 = vld [vmem:[%s9 + $0x758] sm:$0xff]
      %v1925 = vld [vmem:[%s9 + $0x760] sm:$0xff]
      %v1926 = vld [vmem:[%s9 + $0x768] sm:$0xff]
      %v1927 = vld [vmem:[%s9 + $0x770] sm:$0xff]
      %v1928 = vld [vmem:[%s9 + $0x778] sm:$0xff]
      %v1929 = vld [vmem:[%s9 + $0x780] sm:$0xff]
      %v1930 = vld [vmem:[%s9 + $0x788] sm:$0xff]
      %v1931 = vld [vmem:[%s9 + $0x790] sm:$0xff]
      %v1932 = vld [vmem:[%s9 + $0x798] sm:$0xff]
      %v1933 = vld [vmem:[%s9 + $0x7a0] sm:$0xff]
      %v1934 = vld [vmem:[%s9 + $0x7a8] sm:$0xff]
      %v1935 = vld [vmem:[%s9 + $0x7b0] sm:$0xff]
      %v1936 = vld [vmem:[%s9 + $0x7b8] sm:$0xff]
      %1937 = vmatprep.subr.mxu0 %v1690
      %1938 = vmatpush1.msra.mxu0 %v1689
      %1939 = vmatprep.subr.mxu0 %v1694
      %1940 = vmatpush1.msra.mxu0 %v1693
      %1941 = vmatprep.subr.mxu0 %v1698
      %1942 = vmatpush1.msra.mxu0 %v1697
      %1943 = vmatprep.subr.mxu0 %v1702
      %1944 = vmatpush1.msra.mxu0 %v1701
      %1945 = vmatprep.subr.mxu0 %v1706
      %1946 = vmatpush1.msra.mxu0 %v1705
      %1947 = vmatprep.subr.mxu0 %v1710
      %1948 = vmatpush1.msra.mxu0 %v1709
      %1949 = vmatprep.subr.mxu0 %v1714
      %1950 = vmatpush1.msra.mxu0 %v1713
      %1951 = vmatprep.subr.mxu0 %v1718
      %1952 = vmatpush1.msra.mxu0 %v1717
      %1953 = vmatprep.subr.mxu0 %v1722
      %1954 = vmatpush1.msra.mxu0 %v1721
      %1955 = vmatprep.subr.mxu0 %v1726
      %1956 = vmatpush1.msra.mxu0 %v1725
      %1957 = vmatprep.subr.mxu0 %v1730
      %1958 = vmatpush1.msra.mxu0 %v1729
      %1959 = vmatprep.subr.mxu0 %v1734
      %1960 = vmatpush1.msra.mxu0 %v1733
      %1961 = vmatprep.subr.mxu0 %v1738
      %1962 = vmatpush1.msra.mxu0 %v1737
      %1963 = vmatprep.subr.mxu0 %v1742
      %1964 = vmatpush1.msra.mxu0 %v1741
      %1965 = vmatprep.subr.mxu0 %v1746
      %1966 = vmatpush1.msra.mxu0 %v1745
      %1967 = vmatprep.subr.mxu0 %v1750
      %1968 = vmatpush1.msra.mxu0 %v1749
      %1969 = vmatprep.subr.mxu0 %v1754
      %1970 = vmatpush1.msra.mxu0 %v1753
      %1971 = vmatprep.subr.mxu0 %v1758
      %1972 = vmatpush1.msra.mxu0 %v1757
      %1973 = vmatprep.subr.mxu0 %v1762
      %1974 = vmatpush1.msra.mxu0 %v1761
      %1975 = vmatprep.subr.mxu0 %v1766
      %1976 = vmatpush1.msra.mxu0 %v1765
      %1977 = vmatprep.subr.mxu0 %v1770
      %1978 = vmatpush1.msra.mxu0 %v1769
      %1979 = vmatprep.subr.mxu0 %v1774
      %1980 = vmatpush1.msra.mxu0 %v1773
      %1981 = vmatprep.subr.mxu0 %v1778
      %1982 = vmatpush1.msra.mxu0 %v1777
      %1983 = vmatprep.subr.mxu0 %v1782
      %1984 = vmatpush1.msra.mxu0 %v1781
      %1985 = vmatprep.subr.mxu0 %v1786
      %1986 = vmatpush1.msra.mxu0 %v1785
      %1987 = vmatprep.subr.mxu0 %v1790
      %1988 = vmatpush1.msra.mxu0 %v1789
      %1989 = vmatprep.subr.mxu0 %v1794
      %1990 = vmatpush1.msra.mxu0 %v1793
      %1991 = vmatprep.subr.mxu0 %v1798
      %1992 = vmatpush1.msra.mxu0 %v1797
      %1993 = vmatprep.subr.mxu0 %v1802
      %1994 = vmatpush1.msra.mxu0 %v1801
      %1995 = vmatprep.subr.mxu0 %v1806
      %1996 = vmatpush1.msra.mxu0 %v1805
      %1997 = vmatprep.subr.mxu0 %v1810
      %1998 = vmatpush1.msra.mxu0 %v1809
      %1999 = vmatprep.subr.mxu0 %v1814
      %2000 = vmatpush1.msra.mxu0 %v1813
      %2001 = vmatprep.mubr.f32.mxu0 %v1054
      %2002 = vmatmul.mubr.f32.gmra.mrb[0].mxu0 %v1052
      %v2003 = vpop.f32.mrb[0].mxu0
      %v2004 = vadd.f32 %v1380, %v2003
      %v2005 = vpop.f32.mrb[0].mxu0
      %v2006 = vadd.f32 %v1384, %v2005
      %2007 = vdwg.mxu0
      %2008 = vmatprep.subr.mxu0 %v1818
      %2009 = vmatpush1.msra.mxu0 %v1817
      %2010 = vmatprep.subr.mxu0 %v1822
      %2011 = vmatpush1.msra.mxu0 %v1821
      %2012 = vmatprep.subr.mxu0 %v1826
      %2013 = vmatpush1.msra.mxu0 %v1825
      %2014 = vmatprep.subr.mxu0 %v1830
      %2015 = vmatpush1.msra.mxu0 %v1829
      %2016 = vmatprep.subr.mxu0 %v1834
      %2017 = vmatpush1.msra.mxu0 %v1833
      %2018 = vmatprep.subr.mxu0 %v1838
      %2019 = vmatpush1.msra.mxu0 %v1837
      %2020 = vmatprep.subr.mxu0 %v1842
      %2021 = vmatpush1.msra.mxu0 %v1841
      %2022 = vmatprep.subr.mxu0 %v1846
      %2023 = vmatpush1.msra.mxu0 %v1845
      %2024 = vmatprep.subr.mxu0 %v1850
      %2025 = vmatpush1.msra.mxu0 %v1849
      %2026 = vmatprep.subr.mxu0 %v1854
      %2027 = vmatpush1.msra.mxu0 %v1853
      %2028 = vmatprep.subr.mxu0 %v1858
      %2029 = vmatpush1.msra.mxu0 %v1857
      %2030 = vmatprep.subr.mxu0 %v1862
      %2031 = vmatpush1.msra.mxu0 %v1861
      %2032 = vmatprep.subr.mxu0 %v1866
      %2033 = vmatpush1.msra.mxu0 %v1865
      %2034 = vmatprep.subr.mxu0 %v1870
      %2035 = vmatpush1.msra.mxu0 %v1869
      %2036 = vmatprep.subr.mxu0 %v1874
      %2037 = vmatpush1.msra.mxu0 %v1873
      %2038 = vmatprep.subr.mxu0 %v1878
      %2039 = vmatpush1.msra.mxu0 %v1877
      %2040 = vmatprep.subr.mxu0 %v1882
      %2041 = vmatpush1.msra.mxu0 %v1881
      %2042 = vmatprep.subr.mxu0 %v1886
      %2043 = vmatpush1.msra.mxu0 %v1885
      %2044 = vmatprep.subr.mxu0 %v1890
      %2045 = vmatpush1.msra.mxu0 %v1889
      %2046 = vmatprep.subr.mxu0 %v1894
      %2047 = vmatpush1.msra.mxu0 %v1893
      %2048 = vmatprep.subr.mxu0 %v1898
      %2049 = vmatpush1.msra.mxu0 %v1897
      %2050 = vmatprep.subr.mxu0 %v1902
      %2051 = vmatpush1.msra.mxu0 %v1901
      %2052 = vmatprep.subr.mxu0 %v1906
      %2053 = vmatpush1.msra.mxu0 %v1905
      %2054 = vmatprep.subr.mxu0 %v1910
      %2055 = vmatpush1.msra.mxu0 %v1909
      %2056 = vmatprep.subr.mxu0 %v1914
      %2057 = vmatpush1.msra.mxu0 %v1913
      %2058 = vmatprep.subr.mxu0 %v1918
      %2059 = vmatpush1.msra.mxu0 %v1917
      %2060 = vmatprep.subr.mxu0 %v1922
      %2061 = vmatpush1.msra.mxu0 %v1921
      %2062 = vmatprep.subr.mxu0 %v1926
      %2063 = vmatpush1.msra.mxu0 %v1925
      %2064 = vmatprep.subr.mxu0 %v1930
      %2065 = vmatpush1.msra.mxu0 %v1929
      %2066 = vmatprep.subr.mxu0 %v1934
      %2067 = vmatpush1.msra.mxu0 %v1933
      %2068 = vmatprep.subr.mxu0 0.0
      %2069 = vmatpush1.msra.mxu0 0.0
      %2070 = vmatprep.subr.mxu0 0.0
      %2071 = vmatpush1.msra.mxu0 0.0
      %2072 = vmatprep.mubr.f32.mxu0 %v1399
      %2073 = vmatmul.mubr.f32.gmra.mrb[0].mxu0 %v1123
      %v2074 = vpop.f32.mrb[0].mxu0
      %v2075 = vadd.f32 %v2004, %v2074
      %v2076 = vpop.f32.mrb[0].mxu0
      %v2077 = vadd.f32 %v2006, %v2076
      %2078 = vdwg.mxu0
      %2079 = vmatprep.subr.mxu0 %v1692
      %2080 = vmatpush1.msra.mxu0 %v1691
      %2081 = vmatprep.subr.mxu0 %v1696
      %2082 = vmatpush1.msra.mxu0 %v1695
      %2083 = vmatprep.subr.mxu0 %v1700
      %2084 = vmatpush1.msra.mxu0 %v1699
      %2085 = vmatprep.subr.mxu0 %v1704
      %2086 = vmatpush1.msra.mxu0 %v1703
      %2087 = vmatprep.subr.mxu0 %v1708
      %2088 = vmatpush1.msra.mxu0 %v1707
      %2089 = vmatprep.subr.mxu0 %v1712
      %2090 = vmatpush1.msra.mxu0 %v1711
      %2091 = vmatprep.subr.mxu0 %v1716
      %2092 = vmatpush1.msra.mxu0 %v1715
      %2093 = vmatprep.subr.mxu0 %v1720
      %2094 = vmatpush1.msra.mxu0 %v1719
      %2095 = vmatprep.subr.mxu0 %v1724
      %2096 = vmatpush1.msra.mxu0 %v1723
      %2097 = vmatprep.subr.mxu0 %v1728
      %2098 = vmatpush1.msra.mxu0 %v1727
      %2099 = vmatprep.subr.mxu0 %v1732
      %2100 = vmatpush1.msra.mxu0 %v1731
      %2101 = vmatprep.subr.mxu0 %v1736
      %2102 = vmatpush1.msra.mxu0 %v1735
      %2103 = vmatprep.subr.mxu0 %v1740
      %2104 = vmatpush1.msra.mxu0 %v1739
      %2105 = vmatprep.subr.mxu0 %v1744
      %2106 = vmatpush1.msra.mxu0 %v1743
      %2107 = vmatprep.subr.mxu0 %v1748
      %2108 = vmatpush1.msra.mxu0 %v1747
      %2109 = vmatprep.subr.mxu0 %v1752
      %2110 = vmatpush1.msra.mxu0 %v1751
      %2111 = vmatprep.subr.mxu0 %v1756
      %2112 = vmatpush1.msra.mxu0 %v1755
      %2113 = vmatprep.subr.mxu0 %v1760
      %2114 = vmatpush1.msra.mxu0 %v1759
      %2115 = vmatprep.subr.mxu0 %v1764
      %2116 = vmatpush1.msra.mxu0 %v1763
      %2117 = vmatprep.subr.mxu0 %v1768
      %2118 = vmatpush1.msra.mxu0 %v1767
      %2119 = vmatprep.subr.mxu0 %v1772
      %2120 = vmatpush1.msra.mxu0 %v1771
      %2121 = vmatprep.subr.mxu0 %v1776
      %2122 = vmatpush1.msra.mxu0 %v1775
      %2123 = vmatprep.subr.mxu0 %v1780
      %2124 = vmatpush1.msra.mxu0 %v1779
      %2125 = vmatprep.subr.mxu0 %v1784
      %2126 = vmatpush1.msra.mxu0 %v1783
      %2127 = vmatprep.subr.mxu0 %v1788
      %2128 = vmatpush1.msra.mxu0 %v1787
      %2129 = vmatprep.subr.mxu0 %v1792
      %2130 = vmatpush1.msra.mxu0 %v1791
      %2131 = vmatprep.subr.mxu0 %v1796
      %2132 = vmatpush1.msra.mxu0 %v1795
      %2133 = vmatprep.subr.mxu0 %v1800
      %2134 = vmatpush1.msra.mxu0 %v1799
      %2135 = vmatprep.subr.mxu0 %v1804
      %2136 = vmatpush1.msra.mxu0 %v1803
      %2137 = vmatprep.subr.mxu0 %v1808
      %2138 = vmatpush1.msra.mxu0 %v1807
      %2139 = vmatprep.subr.mxu0 %v1812
      %2140 = vmatpush1.msra.mxu0 %v1811
      %2141 = vmatprep.subr.mxu0 %v1816
      %2142 = vmatpush1.msra.mxu0 %v1815
      %2143 = vmatprep.mubr.f32.mxu0 %v1054
      %2144 = vmatmul.mubr.f32.gmra.mrb[0].mxu0 %v1052
      %v2145 = vpop.f32.mrb[0].mxu0
      %v2146 = vadd.f32 %v1388, %v2145
      %v2147 = vpop.f32.mrb[0].mxu0
      %v2148 = vadd.f32 %v1392, %v2147
      %2149 = vdwg.mxu0
      %2150 = vmatprep.subr.mxu0 %v1820
      %2151 = vmatpush1.msra.mxu0 %v1819
      %2152 = vmatprep.subr.mxu0 %v1824
      %2153 = vmatpush1.msra.mxu0 %v1823
      %2154 = vmatprep.subr.mxu0 %v1828
      %2155 = vmatpush1.msra.mxu0 %v1827
      %2156 = vmatprep.subr.mxu0 %v1832
      %2157 = vmatpush1.msra.mxu0 %v1831
      %2158 = vmatprep.subr.mxu0 %v1836
      %2159 = vmatpush1.msra.mxu0 %v1835
      %2160 = vmatprep.subr.mxu0 %v1840
      %2161 = vmatpush1.msra.mxu0 %v1839
      %2162 = vmatprep.subr.mxu0 %v1844
      %2163 = vmatpush1.msra.mxu0 %v1843
      %2164 = vmatprep.subr.mxu0 %v1848
      %2165 = vmatpush1.msra.mxu0 %v1847
      %2166 = vmatprep.subr.mxu0 %v1852
      %2167 = vmatpush1.msra.mxu0 %v1851
      %2168 = vmatprep.subr.mxu0 %v1856
      %2169 = vmatpush1.msra.mxu0 %v1855
      %2170 = vmatprep.subr.mxu0 %v1860
      %2171 = vmatpush1.msra.mxu0 %v1859
      %2172 = vmatprep.subr.mxu0 %v1864
      %2173 = vmatpush1.msra.mxu0 %v1863
      %2174 = vmatprep.subr.mxu0 %v1868
      %2175 = vmatpush1.msra.mxu0 %v1867
      %2176 = vmatprep.subr.mxu0 %v1872
      %2177 = vmatpush1.msra.mxu0 %v1871
      %2178 = vmatprep.subr.mxu0 %v1876
      %2179 = vmatpush1.msra.mxu0 %v1875
      %2180 = vmatprep.subr.mxu0 %v1880
      %2181 = vmatpush1.msra.mxu0 %v1879
      %2182 = vmatprep.subr.mxu0 %v1884
      %2183 = vmatpush1.msra.mxu0 %v1883
      %2184 = vmatprep.subr.mxu0 %v1888
      %2185 = vmatpush1.msra.mxu0 %v1887
      %2186 = vmatprep.subr.mxu0 %v1892
      %2187 = vmatpush1.msra.mxu0 %v1891
      %2188 = vmatprep.subr.mxu0 %v1896
      %2189 = vmatpush1.msra.mxu0 %v1895
      %2190 = vmatprep.subr.mxu0 %v1900
      %2191 = vmatpush1.msra.mxu0 %v1899
      %2192 = vmatprep.subr.mxu0 %v1904
      %2193 = vmatpush1.msra.mxu0 %v1903
      %2194 = vmatprep.subr.mxu0 %v1908
      %2195 = vmatpush1.msra.mxu0 %v1907
      %2196 = vmatprep.subr.mxu0 %v1912
      %2197 = vmatpush1.msra.mxu0 %v1911
      %2198 = vmatprep.subr.mxu0 %v1916
      %2199 = vmatpush1.msra.mxu0 %v1915
      %2200 = vmatprep.subr.mxu0 %v1920
      %2201 = vmatpush1.msra.mxu0 %v1919
      %2202 = vmatprep.subr.mxu0 %v1924
      %2203 = vmatpush1.msra.mxu0 %v1923
      %2204 = vmatprep.subr.mxu0 %v1928
      %2205 = vmatpush1.msra.mxu0 %v1927
      %2206 = vmatprep.subr.mxu0 %v1932
      %2207 = vmatpush1.msra.mxu0 %v1931
      %2208 = vmatprep.subr.mxu0 %v1936
      %2209 = vmatpush1.msra.mxu0 %v1935
      %2210 = vmatprep.subr.mxu0 0.0
      %2211 = vmatpush1.msra.mxu0 0.0
      %2212 = vmatprep.subr.mxu0 0.0
      %2213 = vmatpush1.msra.mxu0 0.0
      %2214 = vmatprep.mubr.f32.mxu0 %v1399
      %2215 = vmatmul.mubr.f32.gmra.mrb[0].mxu0 %v1123
      %v2216 = vpop.f32.mrb[0].mxu0
      %v2217 = vadd.f32 %v2146, %v2216
      %v2218 = vpop.f32.mrb[0].mxu0
      %v2219 = vadd.f32 %v2148, %v2218
      %2220 = vdwg.mxu0
      %v2221 = vmax.f32 %v2075, 0.0
      %v2222 = vmax.f32 %v2077, 0.0
      %v2223 = vmax.f32 %v2217, 0.0
      %v2224 = vmax.f32 %v2219, 0.0
      %v2225 = vld [vmem:[%s11] sm:$0xff]
      %v2226 = vld [vmem:[%s11 + $0x8] sm:$0xff]
      %v2227 = vld [vmem:[%s11 + $0x10] sm:$0xff]
      %v2228 = vld [vmem:[%s11 + $0x18] sm:$0xff]
      %v2229 = vld [vmem:[%s11 + $0x20] sm:$0xff]
      %v2230 = vld [vmem:[%s11 + $0x28] sm:$0xff]
      %v2231 = vld [vmem:[%s11 + $0x30] sm:$0xff]
      %v2232 = vld [vmem:[%s11 + $0x38] sm:$0xff]
      %v2233 = vld [vmem:[%s11 + $0x40] sm:$0xff]
      %v2234 = vld [vmem:[%s11 + $0x48] sm:$0xff]
      %v2235 = vld [vmem:[%s11 + $0x50] sm:$0xff]
      %v2236 = vld [vmem:[%s11 + $0x58] sm:$0xff]
      %v2237 = vld [vmem:[%s11 + $0x60] sm:$0xff]
      %v2238 = vld [vmem:[%s11 + $0x68] sm:$0xff]
      %v2239 = vld [vmem:[%s11 + $0x70] sm:$0xff]
      %v2240 = vld [vmem:[%s11 + $0x78] sm:$0xff]
      %v2241 = vld [vmem:[%s11 + $0x80] sm:$0xff]
      %v2242 = vld [vmem:[%s11 + $0x88] sm:$0xff]
      %v2243 = vld [vmem:[%s11 + $0x90] sm:$0xff]
      %v2244 = vld [vmem:[%s11 + $0x98] sm:$0xff]
      %v2245 = vld [vmem:[%s11 + $0xa0] sm:$0xff]
      %v2246 = vld [vmem:[%s11 + $0xa8] sm:$0xff]
      %v2247 = vld [vmem:[%s11 + $0xb0] sm:$0xff]
      %v2248 = vld [vmem:[%s11 + $0xb8] sm:$0xff]
      %v2249 = vld [vmem:[%s11 + $0xc0] sm:$0xff]
      %v2250 = vld [vmem:[%s11 + $0xc8] sm:$0xff]
      %v2251 = vld [vmem:[%s11 + $0xd0] sm:$0xff]
      %v2252 = vld [vmem:[%s11 + $0xd8] sm:$0xff]
      %v2253 = vld [vmem:[%s11 + $0xe0] sm:$0xff]
      %v2254 = vld [vmem:[%s11 + $0xe8] sm:$0xff]
      %v2255 = vld [vmem:[%s11 + $0xf0] sm:$0xff]
      %v2256 = vld [vmem:[%s11 + $0xf8] sm:$0xff]
      %v2257 = vld [vmem:[%s11 + $0x100] sm:$0xff]
      %v2258 = vld [vmem:[%s11 + $0x108] sm:$0xff]
      %v2259 = vld [vmem:[%s11 + $0x110] sm:$0xff]
      %v2260 = vld [vmem:[%s11 + $0x118] sm:$0xff]
      %v2261 = vld [vmem:[%s11 + $0x120] sm:$0xff]
      %v2262 = vld [vmem:[%s11 + $0x128] sm:$0xff]
      %v2263 = vld [vmem:[%s11 + $0x130] sm:$0xff]
      %v2264 = vld [vmem:[%s11 + $0x138] sm:$0xff]
      %v2265 = vld [vmem:[%s11 + $0x140] sm:$0xff]
      %v2266 = vld [vmem:[%s11 + $0x148] sm:$0xff]
      %v2267 = vld [vmem:[%s11 + $0x150] sm:$0xff]
      %v2268 = vld [vmem:[%s11 + $0x158] sm:$0xff]
      %v2269 = vld [vmem:[%s11 + $0x160] sm:$0xff]
      %v2270 = vld [vmem:[%s11 + $0x168] sm:$0xff]
      %v2271 = vld [vmem:[%s11 + $0x170] sm:$0xff]
      %v2272 = vld [vmem:[%s11 + $0x178] sm:$0xff]
      %v2273 = vld [vmem:[%s11 + $0x180] sm:$0xff]
      %v2274 = vld [vmem:[%s11 + $0x188] sm:$0xff]
      %v2275 = vld [vmem:[%s11 + $0x190] sm:$0xff]
      %v2276 = vld [vmem:[%s11 + $0x198] sm:$0xff]
      %v2277 = vld [vmem:[%s11 + $0x1a0] sm:$0xff]
      %v2278 = vld [vmem:[%s11 + $0x1a8] sm:$0xff]
      %v2279 = vld [vmem:[%s11 + $0x1b0] sm:$0xff]
      %v2280 = vld [vmem:[%s11 + $0x1b8] sm:$0xff]
      %v2281 = vld [vmem:[%s11 + $0x1c0] sm:$0xff]
      %v2282 = vld [vmem:[%s11 + $0x1c8] sm:$0xff]
      %v2283 = vld [vmem:[%s11 + $0x1d0] sm:$0xff]
      %v2284 = vld [vmem:[%s11 + $0x1d8] sm:$0xff]
      %v2285 = vld [vmem:[%s11 + $0x1e0] sm:$0xff]
      %v2286 = vld [vmem:[%s11 + $0x1e8] sm:$0xff]
      %v2287 = vld [vmem:[%s11 + $0x1f0] sm:$0xff]
      %v2288 = vld [vmem:[%s11 + $0x1f8] sm:$0xff]
      %v2289 = vld [vmem:[%s11 + $0x200] sm:$0xff]
      %v2290 = vld [vmem:[%s11 + $0x208] sm:$0xff]
      %v2291 = vld [vmem:[%s11 + $0x210] sm:$0xff]
      %v2292 = vld [vmem:[%s11 + $0x218] sm:$0xff]
      %v2293 = vld [vmem:[%s11 + $0x220] sm:$0xff]
      %v2294 = vld [vmem:[%s11 + $0x228] sm:$0xff]
      %v2295 = vld [vmem:[%s11 + $0x230] sm:$0xff]
      %v2296 = vld [vmem:[%s11 + $0x238] sm:$0xff]
      %v2297 = vld [vmem:[%s11 + $0x240] sm:$0xff]
      %v2298 = vld [vmem:[%s11 + $0x248] sm:$0xff]
      %v2299 = vld [vmem:[%s11 + $0x250] sm:$0xff]
      %v2300 = vld [vmem:[%s11 + $0x258] sm:$0xff]
      %v2301 = vld [vmem:[%s11 + $0x260] sm:$0xff]
      %v2302 = vld [vmem:[%s11 + $0x268] sm:$0xff]
      %v2303 = vld [vmem:[%s11 + $0x270] sm:$0xff]
      %v2304 = vld [vmem:[%s11 + $0x278] sm:$0xff]
      %v2305 = vld [vmem:[%s11 + $0x280] sm:$0xff]
      %v2306 = vld [vmem:[%s11 + $0x288] sm:$0xff]
      %v2307 = vld [vmem:[%s11 + $0x290] sm:$0xff]
      %v2308 = vld [vmem:[%s11 + $0x298] sm:$0xff]
      %v2309 = vld [vmem:[%s11 + $0x2a0] sm:$0xff]
      %v2310 = vld [vmem:[%s11 + $0x2a8] sm:$0xff]
      %v2311 = vld [vmem:[%s11 + $0x2b0] sm:$0xff]
      %v2312 = vld [vmem:[%s11 + $0x2b8] sm:$0xff]
      %v2313 = vld [vmem:[%s11 + $0x2c0] sm:$0xff]
      %v2314 = vld [vmem:[%s11 + $0x2c8] sm:$0xff]
      %v2315 = vld [vmem:[%s11 + $0x2d0] sm:$0xff]
      %v2316 = vld [vmem:[%s11 + $0x2d8] sm:$0xff]
      %v2317 = vld [vmem:[%s11 + $0x2e0] sm:$0xff]
      %v2318 = vld [vmem:[%s11 + $0x2e8] sm:$0xff]
      %v2319 = vld [vmem:[%s11 + $0x2f0] sm:$0xff]
      %v2320 = vld [vmem:[%s11 + $0x2f8] sm:$0xff]
      %v2321 = vld [vmem:[%s11 + $0x300] sm:$0xff]
      %v2322 = vld [vmem:[%s11 + $0x308] sm:$0xff]
      %v2323 = vld [vmem:[%s11 + $0x310] sm:$0xff]
      %v2324 = vld [vmem:[%s11 + $0x318] sm:$0xff]
      %v2325 = vld [vmem:[%s11 + $0x320] sm:$0xff]
      %v2326 = vld [vmem:[%s11 + $0x328] sm:$0xff]
      %v2327 = vld [vmem:[%s11 + $0x330] sm:$0xff]
      %v2328 = vld [vmem:[%s11 + $0x338] sm:$0xff]
      %v2329 = vld [vmem:[%s11 + $0x340] sm:$0xff]
      %v2330 = vld [vmem:[%s11 + $0x348] sm:$0xff]
      %v2331 = vld [vmem:[%s11 + $0x350] sm:$0xff]
      %v2332 = vld [vmem:[%s11 + $0x358] sm:$0xff]
      %v2333 = vld [vmem:[%s11 + $0x360] sm:$0xff]
      %v2334 = vld [vmem:[%s11 + $0x368] sm:$0xff]
      %v2335 = vld [vmem:[%s11 + $0x370] sm:$0xff]
      %v2336 = vld [vmem:[%s11 + $0x378] sm:$0xff]
      %v2337 = vld [vmem:[%s11 + $0x380] sm:$0xff]
      %v2338 = vld [vmem:[%s11 + $0x388] sm:$0xff]
      %v2339 = vld [vmem:[%s11 + $0x390] sm:$0xff]
      %v2340 = vld [vmem:[%s11 + $0x398] sm:$0xff]
      %v2341 = vld [vmem:[%s11 + $0x3a0] sm:$0xff]
      %v2342 = vld [vmem:[%s11 + $0x3a8] sm:$0xff]
      %v2343 = vld [vmem:[%s11 + $0x3b0] sm:$0xff]
      %v2344 = vld [vmem:[%s11 + $0x3b8] sm:$0xff]
      %v2345 = vld [vmem:[%s11 + $0x3c0] sm:$0xff]
      %v2346 = vld [vmem:[%s11 + $0x3c8] sm:$0xff]
      %v2347 = vld [vmem:[%s11 + $0x3d0] sm:$0xff]
      %v2348 = vld [vmem:[%s11 + $0x3d8] sm:$0xff]
      %v2349 = vld [vmem:[%s11 + $0x3e0] sm:$0xff]
      %v2350 = vld [vmem:[%s11 + $0x3e8] sm:$0xff]
      %v2351 = vld [vmem:[%s11 + $0x3f0] sm:$0xff]
      %v2352 = vld [vmem:[%s11 + $0x3f8] sm:$0xff]
      %v2353 = vld [vmem:[%s11 + $0x400] sm:$0xff]
      %v2354 = vld [vmem:[%s11 + $0x408] sm:$0xff]
      %v2355 = vld [vmem:[%s11 + $0x410] sm:$0xff]
      %v2356 = vld [vmem:[%s11 + $0x418] sm:$0xff]
      %v2357 = vld [vmem:[%s11 + $0x420] sm:$0xff]
      %v2358 = vld [vmem:[%s11 + $0x428] sm:$0xff]
      %v2359 = vld [vmem:[%s11 + $0x430] sm:$0xff]
      %v2360 = vld [vmem:[%s11 + $0x438] sm:$0xff]
      %v2361 = vld [vmem:[%s11 + $0x440] sm:$0xff]
      %v2362 = vld [vmem:[%s11 + $0x448] sm:$0xff]
      %v2363 = vld [vmem:[%s11 + $0x450] sm:$0xff]
      %v2364 = vld [vmem:[%s11 + $0x458] sm:$0xff]
      %v2365 = vld [vmem:[%s11 + $0x460] sm:$0xff]
      %v2366 = vld [vmem:[%s11 + $0x468] sm:$0xff]
      %v2367 = vld [vmem:[%s11 + $0x470] sm:$0xff]
      %v2368 = vld [vmem:[%s11 + $0x478] sm:$0xff]
      %v2369 = vld [vmem:[%s11 + $0x480] sm:$0xff]
      %v2370 = vld [vmem:[%s11 + $0x488] sm:$0xff]
      %v2371 = vld [vmem:[%s11 + $0x490] sm:$0xff]
      %v2372 = vld [vmem:[%s11 + $0x498] sm:$0xff]
      %v2373 = vld [vmem:[%s11 + $0x4a0] sm:$0xff]
      %v2374 = vld [vmem:[%s11 + $0x4a8] sm:$0xff]
      %v2375 = vld [vmem:[%s11 + $0x4b0] sm:$0xff]
      %v2376 = vld [vmem:[%s11 + $0x4b8] sm:$0xff]
      %v2377 = vld [vmem:[%s11 + $0x4c0] sm:$0xff]
      %v2378 = vld [vmem:[%s11 + $0x4c8] sm:$0xff]
      %v2379 = vld [vmem:[%s11 + $0x4d0] sm:$0xff]
      %v2380 = vld [vmem:[%s11 + $0x4d8] sm:$0xff]
      %v2381 = vld [vmem:[%s11 + $0x4e0] sm:$0xff]
      %v2382 = vld [vmem:[%s11 + $0x4e8] sm:$0xff]
      %v2383 = vld [vmem:[%s11 + $0x4f0] sm:$0xff]
      %v2384 = vld [vmem:[%s11 + $0x4f8] sm:$0xff]
      %v2385 = vld [vmem:[%s11 + $0x500] sm:$0xff]
      %v2386 = vld [vmem:[%s11 + $0x508] sm:$0xff]
      %v2387 = vld [vmem:[%s11 + $0x510] sm:$0xff]
      %v2388 = vld [vmem:[%s11 + $0x518] sm:$0xff]
      %v2389 = vld [vmem:[%s11 + $0x520] sm:$0xff]
      %v2390 = vld [vmem:[%s11 + $0x528] sm:$0xff]
      %v2391 = vld [vmem:[%s11 + $0x530] sm:$0xff]
      %v2392 = vld [vmem:[%s11 + $0x538] sm:$0xff]
      %v2393 = vld [vmem:[%s11 + $0x540] sm:$0xff]
      %v2394 = vld [vmem:[%s11 + $0x548] sm:$0xff]
      %v2395 = vld [vmem:[%s11 + $0x550] sm:$0xff]
      %v2396 = vld [vmem:[%s11 + $0x558] sm:$0xff]
      %v2397 = vld [vmem:[%s11 + $0x560] sm:$0xff]
      %v2398 = vld [vmem:[%s11 + $0x568] sm:$0xff]
      %v2399 = vld [vmem:[%s11 + $0x570] sm:$0xff]
      %v2400 = vld [vmem:[%s11 + $0x578] sm:$0xff]
      %v2401 = vld [vmem:[%s11 + $0x580] sm:$0xff]
      %v2402 = vld [vmem:[%s11 + $0x588] sm:$0xff]
      %v2403 = vld [vmem:[%s11 + $0x590] sm:$0xff]
      %v2404 = vld [vmem:[%s11 + $0x598] sm:$0xff]
      %v2405 = vld [vmem:[%s11 + $0x5a0] sm:$0xff]
      %v2406 = vld [vmem:[%s11 + $0x5a8] sm:$0xff]
      %v2407 = vld [vmem:[%s11 + $0x5b0] sm:$0xff]
      %v2408 = vld [vmem:[%s11 + $0x5b8] sm:$0xff]
      %v2409 = vld [vmem:[%s11 + $0x5c0] sm:$0xff]
      %v2410 = vld [vmem:[%s11 + $0x5c8] sm:$0xff]
      %v2411 = vld [vmem:[%s11 + $0x5d0] sm:$0xff]
      %v2412 = vld [vmem:[%s11 + $0x5d8] sm:$0xff]
      %v2413 = vld [vmem:[%s11 + $0x5e0] sm:$0xff]
      %v2414 = vld [vmem:[%s11 + $0x5e8] sm:$0xff]
      %v2415 = vld [vmem:[%s11 + $0x5f0] sm:$0xff]
      %v2416 = vld [vmem:[%s11 + $0x5f8] sm:$0xff]
      %v2417 = vld [vmem:[%s11 + $0x600] sm:$0xff]
      %v2418 = vld [vmem:[%s11 + $0x608] sm:$0xff]
      %v2419 = vld [vmem:[%s11 + $0x610] sm:$0xff]
      %v2420 = vld [vmem:[%s11 + $0x618] sm:$0xff]
      %v2421 = vld [vmem:[%s11 + $0x620] sm:$0xff]
      %v2422 = vld [vmem:[%s11 + $0x628] sm:$0xff]
      %v2423 = vld [vmem:[%s11 + $0x630] sm:$0xff]
      %v2424 = vld [vmem:[%s11 + $0x638] sm:$0xff]
      %v2425 = vld [vmem:[%s11 + $0x640] sm:$0xff]
      %v2426 = vld [vmem:[%s11 + $0x648] sm:$0xff]
      %v2427 = vld [vmem:[%s11 + $0x650] sm:$0xff]
      %v2428 = vld [vmem:[%s11 + $0x658] sm:$0xff]
      %v2429 = vld [vmem:[%s11 + $0x660] sm:$0xff]
      %v2430 = vld [vmem:[%s11 + $0x668] sm:$0xff]
      %v2431 = vld [vmem:[%s11 + $0x670] sm:$0xff]
      %v2432 = vld [vmem:[%s11 + $0x678] sm:$0xff]
      %v2433 = vld [vmem:[%s11 + $0x680] sm:$0xff]
      %v2434 = vld [vmem:[%s11 + $0x688] sm:$0xff]
      %v2435 = vld [vmem:[%s11 + $0x690] sm:$0xff]
      %v2436 = vld [vmem:[%s11 + $0x698] sm:$0xff]
      %v2437 = vld [vmem:[%s11 + $0x6a0] sm:$0xff]
      %v2438 = vld [vmem:[%s11 + $0x6a8] sm:$0xff]
      %v2439 = vld [vmem:[%s11 + $0x6b0] sm:$0xff]
      %v2440 = vld [vmem:[%s11 + $0x6b8] sm:$0xff]
      %v2441 = vld [vmem:[%s11 + $0x6c0] sm:$0xff]
      %v2442 = vld [vmem:[%s11 + $0x6c8] sm:$0xff]
      %v2443 = vld [vmem:[%s11 + $0x6d0] sm:$0xff]
      %v2444 = vld [vmem:[%s11 + $0x6d8] sm:$0xff]
      %v2445 = vld [vmem:[%s11 + $0x6e0] sm:$0xff]
      %v2446 = vld [vmem:[%s11 + $0x6e8] sm:$0xff]
      %v2447 = vld [vmem:[%s11 + $0x6f0] sm:$0xff]
      %v2448 = vld [vmem:[%s11 + $0x6f8] sm:$0xff]
      %v2449 = vld [vmem:[%s11 + $0x700] sm:$0xff]
      %v2450 = vld [vmem:[%s11 + $0x708] sm:$0xff]
      %v2451 = vld [vmem:[%s11 + $0x710] sm:$0xff]
      %v2452 = vld [vmem:[%s11 + $0x718] sm:$0xff]
      %v2453 = vld [vmem:[%s11 + $0x720] sm:$0xff]
      %v2454 = vld [vmem:[%s11 + $0x728] sm:$0xff]
      %v2455 = vld [vmem:[%s11 + $0x730] sm:$0xff]
      %v2456 = vld [vmem:[%s11 + $0x738] sm:$0xff]
      %v2457 = vld [vmem:[%s11 + $0x740] sm:$0xff]
      %v2458 = vld [vmem:[%s11 + $0x748] sm:$0xff]
      %v2459 = vld [vmem:[%s11 + $0x750] sm:$0xff]
      %v2460 = vld [vmem:[%s11 + $0x758] sm:$0xff]
      %v2461 = vld [vmem:[%s11 + $0x760] sm:$0xff]
      %v2462 = vld [vmem:[%s11 + $0x768] sm:$0xff]
      %v2463 = vld [vmem:[%s11 + $0x770] sm:$0xff]
      %v2464 = vld [vmem:[%s11 + $0x778] sm:$0xff]
      %v2465 = vld [vmem:[%s11 + $0x780] sm:$0xff]
      %v2466 = vld [vmem:[%s11 + $0x788] sm:$0xff]
      %v2467 = vld [vmem:[%s11 + $0x790] sm:$0xff]
      %v2468 = vld [vmem:[%s11 + $0x798] sm:$0xff]
      %v2469 = vld [vmem:[%s11 + $0x7a0] sm:$0xff]
      %v2470 = vld [vmem:[%s11 + $0x7a8] sm:$0xff]
      %v2471 = vld [vmem:[%s11 + $0x7b0] sm:$0xff]
      %v2472 = vld [vmem:[%s11 + $0x7b8] sm:$0xff]
      %2473 = vmatprep.subr.mxu0 %v2226
      %2474 = vmatpush1.msra.mxu0 %v2225
      %2475 = vmatprep.subr.mxu0 %v2230
      %2476 = vmatpush1.msra.mxu0 %v2229
      %2477 = vmatprep.subr.mxu0 %v2234
      %2478 = vmatpush1.msra.mxu0 %v2233
      %2479 = vmatprep.subr.mxu0 %v2238
      %2480 = vmatpush1.msra.mxu0 %v2237
      %2481 = vmatprep.subr.mxu0 %v2242
      %2482 = vmatpush1.msra.mxu0 %v2241
      %2483 = vmatprep.subr.mxu0 %v2246
      %2484 = vmatpush1.msra.mxu0 %v2245
      %2485 = vmatprep.subr.mxu0 %v2250
      %2486 = vmatpush1.msra.mxu0 %v2249
      %2487 = vmatprep.subr.mxu0 %v2254
      %2488 = vmatpush1.msra.mxu0 %v2253
      %2489 = vmatprep.subr.mxu0 %v2258
      %2490 = vmatpush1.msra.mxu0 %v2257
      %2491 = vmatprep.subr.mxu0 %v2262
      %2492 = vmatpush1.msra.mxu0 %v2261
      %2493 = vmatprep.subr.mxu0 %v2266
      %2494 = vmatpush1.msra.mxu0 %v2265
      %2495 = vmatprep.subr.mxu0 %v2270
      %2496 = vmatpush1.msra.mxu0 %v2269
      %2497 = vmatprep.subr.mxu0 %v2274
      %2498 = vmatpush1.msra.mxu0 %v2273
      %2499 = vmatprep.subr.mxu0 %v2278
      %2500 = vmatpush1.msra.mxu0 %v2277
      %2501 = vmatprep.subr.mxu0 %v2282
      %2502 = vmatpush1.msra.mxu0 %v2281
      %2503 = vmatprep.subr.mxu0 %v2286
      %2504 = vmatpush1.msra.mxu0 %v2285
      %2505 = vmatprep.subr.mxu0 %v2290
      %2506 = vmatpush1.msra.mxu0 %v2289
      %2507 = vmatprep.subr.mxu0 %v2294
      %2508 = vmatpush1.msra.mxu0 %v2293
      %2509 = vmatprep.subr.mxu0 %v2298
      %2510 = vmatpush1.msra.mxu0 %v2297
      %2511 = vmatprep.subr.mxu0 %v2302
      %2512 = vmatpush1.msra.mxu0 %v2301
      %2513 = vmatprep.subr.mxu0 %v2306
      %2514 = vmatpush1.msra.mxu0 %v2305
      %2515 = vmatprep.subr.mxu0 %v2310
      %2516 = vmatpush1.msra.mxu0 %v2309
      %2517 = vmatprep.subr.mxu0 %v2314
      %2518 = vmatpush1.msra.mxu0 %v2313
      %2519 = vmatprep.subr.mxu0 %v2318
      %2520 = vmatpush1.msra.mxu0 %v2317
      %2521 = vmatprep.subr.mxu0 %v2322
      %2522 = vmatpush1.msra.mxu0 %v2321
      %2523 = vmatprep.subr.mxu0 %v2326
      %2524 = vmatpush1.msra.mxu0 %v2325
      %2525 = vmatprep.subr.mxu0 %v2330
      %2526 = vmatpush1.msra.mxu0 %v2329
      %2527 = vmatprep.subr.mxu0 %v2334
      %2528 = vmatpush1.msra.mxu0 %v2333
      %2529 = vmatprep.subr.mxu0 %v2338
      %2530 = vmatpush1.msra.mxu0 %v2337
      %2531 = vmatprep.subr.mxu0 %v2342
      %2532 = vmatpush1.msra.mxu0 %v2341
      %2533 = vmatprep.subr.mxu0 %v2346
      %2534 = vmatpush1.msra.mxu0 %v2345
      %2535 = vmatprep.subr.mxu0 %v2350
      %2536 = vmatpush1.msra.mxu0 %v2349
      %2537 = vmatprep.mubr.f32.mxu0 %v1054
      %2538 = vmatmul.mubr.f32.gmra.mrb[0].mxu0 %v1052
      %v2539 = vpop.f32.mrb[0].mxu0
      %v2540 = vadd.f32 %v1380, %v2539
      %v2541 = vpop.f32.mrb[0].mxu0
      %v2542 = vadd.f32 %v1384, %v2541
      %2543 = vdwg.mxu0
      %2544 = vmatprep.subr.mxu0 %v2354
      %2545 = vmatpush1.msra.mxu0 %v2353
      %2546 = vmatprep.subr.mxu0 %v2358
      %2547 = vmatpush1.msra.mxu0 %v2357
      %2548 = vmatprep.subr.mxu0 %v2362
      %2549 = vmatpush1.msra.mxu0 %v2361
      %2550 = vmatprep.subr.mxu0 %v2366
      %2551 = vmatpush1.msra.mxu0 %v2365
      %2552 = vmatprep.subr.mxu0 %v2370
      %2553 = vmatpush1.msra.mxu0 %v2369
      %2554 = vmatprep.subr.mxu0 %v2374
      %2555 = vmatpush1.msra.mxu0 %v2373
      %2556 = vmatprep.subr.mxu0 %v2378
      %2557 = vmatpush1.msra.mxu0 %v2377
      %2558 = vmatprep.subr.mxu0 %v2382
      %2559 = vmatpush1.msra.mxu0 %v2381
      %2560 = vmatprep.subr.mxu0 %v2386
      %2561 = vmatpush1.msra.mxu0 %v2385
      %2562 = vmatprep.subr.mxu0 %v2390
      %2563 = vmatpush1.msra.mxu0 %v2389
      %2564 = vmatprep.subr.mxu0 %v2394
      %2565 = vmatpush1.msra.mxu0 %v2393
      %2566 = vmatprep.subr.mxu0 %v2398
      %2567 = vmatpush1.msra.mxu0 %v2397
      %2568 = vmatprep.subr.mxu0 %v2402
      %2569 = vmatpush1.msra.mxu0 %v2401
      %2570 = vmatprep.subr.mxu0 %v2406
      %2571 = vmatpush1.msra.mxu0 %v2405
      %2572 = vmatprep.subr.mxu0 %v2410
      %2573 = vmatpush1.msra.mxu0 %v2409
      %2574 = vmatprep.subr.mxu0 %v2414
      %2575 = vmatpush1.msra.mxu0 %v2413
      %2576 = vmatprep.subr.mxu0 %v2418
      %2577 = vmatpush1.msra.mxu0 %v2417
      %2578 = vmatprep.subr.mxu0 %v2422
      %2579 = vmatpush1.msra.mxu0 %v2421
      %2580 = vmatprep.subr.mxu0 %v2426
      %2581 = vmatpush1.msra.mxu0 %v2425
      %2582 = vmatprep.subr.mxu0 %v2430
      %2583 = vmatpush1.msra.mxu0 %v2429
      %2584 = vmatprep.subr.mxu0 %v2434
      %2585 = vmatpush1.msra.mxu0 %v2433
      %2586 = vmatprep.subr.mxu0 %v2438
      %2587 = vmatpush1.msra.mxu0 %v2437
      %2588 = vmatprep.subr.mxu0 %v2442
      %2589 = vmatpush1.msra.mxu0 %v2441
      %2590 = vmatprep.subr.mxu0 %v2446
      %2591 = vmatpush1.msra.mxu0 %v2445
      %2592 = vmatprep.subr.mxu0 %v2450
      %2593 = vmatpush1.msra.mxu0 %v2449
      %2594 = vmatprep.subr.mxu0 %v2454
      %2595 = vmatpush1.msra.mxu0 %v2453
      %2596 = vmatprep.subr.mxu0 %v2458
      %2597 = vmatpush1.msra.mxu0 %v2457
      %2598 = vmatprep.subr.mxu0 %v2462
      %2599 = vmatpush1.msra.mxu0 %v2461
      %2600 = vmatprep.subr.mxu0 %v2466
      %2601 = vmatpush1.msra.mxu0 %v2465
      %2602 = vmatprep.subr.mxu0 %v2470
      %2603 = vmatpush1.msra.mxu0 %v2469
      %2604 = vmatprep.subr.mxu0 0.0
      %2605 = vmatpush1.msra.mxu0 0.0
      %2606 = vmatprep.subr.mxu0 0.0
      %2607 = vmatpush1.msra.mxu0 0.0
      %2608 = vmatprep.mubr.f32.mxu0 %v1399
      %2609 = vmatmul.mubr.f32.gmra.mrb[0].mxu0 %v1123
      %v2610 = vpop.f32.mrb[0].mxu0
      %v2611 = vadd.f32 %v2540, %v2610
      %v2612 = vpop.f32.mrb[0].mxu0
      %v2613 = vadd.f32 %v2542, %v2612
      %2614 = vdwg.mxu0
      %2615 = vmatprep.subr.mxu0 %v2228
      %2616 = vmatpush1.msra.mxu0 %v2227
      %2617 = vmatprep.subr.mxu0 %v2232
      %2618 = vmatpush1.msra.mxu0 %v2231
      %2619 = vmatprep.subr.mxu0 %v2236
      %2620 = vmatpush1.msra.mxu0 %v2235
      %2621 = vmatprep.subr.mxu0 %v2240
      %2622 = vmatpush1.msra.mxu0 %v2239
      %2623 = vmatprep.subr.mxu0 %v2244
      %2624 = vmatpush1.msra.mxu0 %v2243
      %2625 = vmatprep.subr.mxu0 %v2248
      %2626 = vmatpush1.msra.mxu0 %v2247
      %2627 = vmatprep.subr.mxu0 %v2252
      %2628 = vmatpush1.msra.mxu0 %v2251
      %2629 = vmatprep.subr.mxu0 %v2256
      %2630 = vmatpush1.msra.mxu0 %v2255
      %2631 = vmatprep.subr.mxu0 %v2260
      %2632 = vmatpush1.msra.mxu0 %v2259
      %2633 = vmatprep.subr.mxu0 %v2264
      %2634 = vmatpush1.msra.mxu0 %v2263
      %2635 = vmatprep.subr.mxu0 %v2268
      %2636 = vmatpush1.msra.mxu0 %v2267
      %2637 = vmatprep.subr.mxu0 %v2272
      %2638 = vmatpush1.msra.mxu0 %v2271
      %2639 = vmatprep.subr.mxu0 %v2276
      %2640 = vmatpush1.msra.mxu0 %v2275
      %2641 = vmatprep.subr.mxu0 %v2280
      %2642 = vmatpush1.msra.mxu0 %v2279
      %2643 = vmatprep.subr.mxu0 %v2284
      %2644 = vmatpush1.msra.mxu0 %v2283
      %2645 = vmatprep.subr.mxu0 %v2288
      %2646 = vmatpush1.msra.mxu0 %v2287
      %2647 = vmatprep.subr.mxu0 %v2292
      %2648 = vmatpush1.msra.mxu0 %v2291
      %2649 = vmatprep.subr.mxu0 %v2296
      %2650 = vmatpush1.msra.mxu0 %v2295
      %2651 = vmatprep.subr.mxu0 %v2300
      %2652 = vmatpush1.msra.mxu0 %v2299
      %2653 = vmatprep.subr.mxu0 %v2304
      %2654 = vmatpush1.msra.mxu0 %v2303
      %2655 = vmatprep.subr.mxu0 %v2308
      %2656 = vmatpush1.msra.mxu0 %v2307
      %2657 = vmatprep.subr.mxu0 %v2312
      %2658 = vmatpush1.msra.mxu0 %v2311
      %2659 = vmatprep.subr.mxu0 %v2316
      %2660 = vmatpush1.msra.mxu0 %v2315
      %2661 = vmatprep.subr.mxu0 %v2320
      %2662 = vmatpush1.msra.mxu0 %v2319
      %2663 = vmatprep.subr.mxu0 %v2324
      %2664 = vmatpush1.msra.mxu0 %v2323
      %2665 = vmatprep.subr.mxu0 %v2328
      %2666 = vmatpush1.msra.mxu0 %v2327
      %2667 = vmatprep.subr.mxu0 %v2332
      %2668 = vmatpush1.msra.mxu0 %v2331
      %2669 = vmatprep.subr.mxu0 %v2336
      %2670 = vmatpush1.msra.mxu0 %v2335
      %2671 = vmatprep.subr.mxu0 %v2340
      %2672 = vmatpush1.msra.mxu0 %v2339
      %2673 = vmatprep.subr.mxu0 %v2344
      %2674 = vmatpush1.msra.mxu0 %v2343
      %2675 = vmatprep.subr.mxu0 %v2348
      %2676 = vmatpush1.msra.mxu0 %v2347
      %2677 = vmatprep.subr.mxu0 %v2352
      %2678 = vmatpush1.msra.mxu0 %v2351
      %2679 = vmatprep.mubr.f32.mxu0 %v1054
      %2680 = vmatmul.mubr.f32.gmra.mrb[0].mxu0 %v1052
      %v2681 = vpop.f32.mrb[0].mxu0
      %v2682 = vadd.f32 %v1388, %v2681
      %v2683 = vpop.f32.mrb[0].mxu0
      %v2684 = vadd.f32 %v1392, %v2683
      %2685 = vdwg.mxu0
      %2686 = vmatprep.subr.mxu0 %v2356
      %2687 = vmatpush1.msra.mxu0 %v2355
      %2688 = vmatprep.subr.mxu0 %v2360
      %2689 = vmatpush1.msra.mxu0 %v2359
      %2690 = vmatprep.subr.mxu0 %v2364
      %2691 = vmatpush1.msra.mxu0 %v2363
      %2692 = vmatprep.subr.mxu0 %v2368
      %2693 = vmatpush1.msra.mxu0 %v2367
      %2694 = vmatprep.subr.mxu0 %v2372
      %2695 = vmatpush1.msra.mxu0 %v2371
      %2696 = vmatprep.subr.mxu0 %v2376
      %2697 = vmatpush1.msra.mxu0 %v2375
      %2698 = vmatprep.subr.mxu0 %v2380
      %2699 = vmatpush1.msra.mxu0 %v2379
      %2700 = vmatprep.subr.mxu0 %v2384
      %2701 = vmatpush1.msra.mxu0 %v2383
      %2702 = vmatprep.subr.mxu0 %v2388
      %2703 = vmatpush1.msra.mxu0 %v2387
      %2704 = vmatprep.subr.mxu0 %v2392
      %2705 = vmatpush1.msra.mxu0 %v2391
      %2706 = vmatprep.subr.mxu0 %v2396
      %2707 = vmatpush1.msra.mxu0 %v2395
      %2708 = vmatprep.subr.mxu0 %v2400
      %2709 = vmatpush1.msra.mxu0 %v2399
      %2710 = vmatprep.subr.mxu0 %v2404
      %2711 = vmatpush1.msra.mxu0 %v2403
      %2712 = vmatprep.subr.mxu0 %v2408
      %2713 = vmatpush1.msra.mxu0 %v2407
      %2714 = vmatprep.subr.mxu0 %v2412
      %2715 = vmatpush1.msra.mxu0 %v2411
      %2716 = vmatprep.subr.mxu0 %v2416
      %2717 = vmatpush1.msra.mxu0 %v2415
      %2718 = vmatprep.subr.mxu0 %v2420
      %2719 = vmatpush1.msra.mxu0 %v2419
      %2720 = vmatprep.subr.mxu0 %v2424
      %2721 = vmatpush1.msra.mxu0 %v2423
      %2722 = vmatprep.subr.mxu0 %v2428
      %2723 = vmatpush1.msra.mxu0 %v2427
      %2724 = vmatprep.subr.mxu0 %v2432
      %2725 = vmatpush1.msra.mxu0 %v2431
      %2726 = vmatprep.subr.mxu0 %v2436
      %2727 = vmatpush1.msra.mxu0 %v2435
      %2728 = vmatprep.subr.mxu0 %v2440
      %2729 = vmatpush1.msra.mxu0 %v2439
      %2730 = vmatprep.subr.mxu0 %v2444
      %2731 = vmatpush1.msra.mxu0 %v2443
      %2732 = vmatprep.subr.mxu0 %v2448
      %2733 = vmatpush1.msra.mxu0 %v2447
      %2734 = vmatprep.subr.mxu0 %v2452
      %2735 = vmatpush1.msra.mxu0 %v2451
      %2736 = vmatprep.subr.mxu0 %v2456
      %2737 = vmatpush1.msra.mxu0 %v2455
      %2738 = vmatprep.subr.mxu0 %v2460
      %2739 = vmatpush1.msra.mxu0 %v2459
      %2740 = vmatprep.subr.mxu0 %v2464
      %2741 = vmatpush1.msra.mxu0 %v2463
      %2742 = vmatprep.subr.mxu0 %v2468
      %2743 = vmatpush1.msra.mxu0 %v2467
      %2744 = vmatprep.subr.mxu0 %v2472
      %2745 = vmatpush1.msra.mxu0 %v2471
      %2746 = vmatprep.subr.mxu0 0.0
      %2747 = vmatpush1.msra.mxu0 0.0
      %2748 = vmatprep.subr.mxu0 0.0
      %2749 = vmatpush1.msra.mxu0 0.0
      %2750 = vmatprep.mubr.f32.mxu0 %v1399
      %2751 = vmatmul.mubr.f32.gmra.mrb[0].mxu0 %v1123
      %v2752 = vpop.f32.mrb[0].mxu0
      %v2753 = vadd.f32 %v2682, %v2752
      %v2754 = vpop.f32.mrb[0].mxu0
      %v2755 = vadd.f32 %v2684, %v2754
      %2756 = vdwg.mxu0
      %v2757 = vmax.f32 %v2611, 0.0
      %v2758 = vmax.f32 %v2613, 0.0
      %v2759 = vmax.f32 %v2753, 0.0
      %v2760 = vmax.f32 %v2755, 0.0
      %v2761 = vmax.f32 %v1685, %v2221
      %v2762 = vmax.f32 %v1686, %v2222
      %v2763 = vmax.f32 %v1687, %v2223
      %v2764 = vmax.f32 %v1688, %v2224
      %v2765 = vmax.f32 %v2761, %v2757
      %v2766 = vmax.f32 %v2762, %v2758
      %v2767 = vmax.f32 %v2763, %v2759
      %v2768 = vmax.f32 %v2764, %v2760
      %v2769 = vld [vmem:[%s15] sm:$0xff]
      %v2770 = vld [vmem:[%s15 + $0x8] sm:$0xff]
      %v2771 = vld [vmem:[%s15 + $0x10] sm:$0xff]
      %v2772 = vld [vmem:[%s15 + $0x18] sm:$0xff]
      %v2773 = vld [vmem:[%s15 + $0x20] sm:$0xff]
      %v2774 = vld [vmem:[%s15 + $0x28] sm:$0xff]
      %v2775 = vld [vmem:[%s15 + $0x30] sm:$0xff]
      %v2776 = vld [vmem:[%s15 + $0x38] sm:$0xff]
      %v2777 = vld [vmem:[%s15 + $0x40] sm:$0xff]
      %v2778 = vld [vmem:[%s15 + $0x48] sm:$0xff]
      %v2779 = vld [vmem:[%s15 + $0x50] sm:$0xff]
      %v2780 = vld [vmem:[%s15 + $0x58] sm:$0xff]
      %v2781 = vld [vmem:[%s15 + $0x60] sm:$0xff]
      %v2782 = vld [vmem:[%s15 + $0x68] sm:$0xff]
      %v2783 = vld [vmem:[%s15 + $0x70] sm:$0xff]
      %v2784 = vld [vmem:[%s15 + $0x78] sm:$0xff]
      %v2785 = vld [vmem:[%s15 + $0x80] sm:$0xff]
      %v2786 = vld [vmem:[%s15 + $0x88] sm:$0xff]
      %v2787 = vld [vmem:[%s15 + $0x90] sm:$0xff]
      %v2788 = vld [vmem:[%s15 + $0x98] sm:$0xff]
      %v2789 = vld [vmem:[%s15 + $0xa0] sm:$0xff]
      %v2790 = vld [vmem:[%s15 + $0xa8] sm:$0xff]
      %v2791 = vld [vmem:[%s15 + $0xb0] sm:$0xff]
      %v2792 = vld [vmem:[%s15 + $0xb8] sm:$0xff]
      %v2793 = vld [vmem:[%s15 + $0xc0] sm:$0xff]
      %v2794 = vld [vmem:[%s15 + $0xc8] sm:$0xff]
      %v2795 = vld [vmem:[%s15 + $0xd0] sm:$0xff]
      %v2796 = vld [vmem:[%s15 + $0xd8] sm:$0xff]
      %v2797 = vld [vmem:[%s15 + $0xe0] sm:$0xff]
      %v2798 = vld [vmem:[%s15 + $0xe8] sm:$0xff]
      %v2799 = vld [vmem:[%s15 + $0xf0] sm:$0xff]
      %v2800 = vld [vmem:[%s15 + $0xf8] sm:$0xff]
      %v2801 = vld [vmem:[%s15 + $0x100] sm:$0xff]
      %v2802 = vld [vmem:[%s15 + $0x108] sm:$0xff]
      %v2803 = vld [vmem:[%s15 + $0x110] sm:$0xff]
      %v2804 = vld [vmem:[%s15 + $0x118] sm:$0xff]
      %v2805 = vld [vmem:[%s15 + $0x120] sm:$0xff]
      %v2806 = vld [vmem:[%s15 + $0x128] sm:$0xff]
      %v2807 = vld [vmem:[%s15 + $0x130] sm:$0xff]
      %v2808 = vld [vmem:[%s15 + $0x138] sm:$0xff]
      %v2809 = vld [vmem:[%s15 + $0x140] sm:$0xff]
      %v2810 = vld [vmem:[%s15 + $0x148] sm:$0xff]
      %v2811 = vld [vmem:[%s15 + $0x150] sm:$0xff]
      %v2812 = vld [vmem:[%s15 + $0x158] sm:$0xff]
      %v2813 = vld [vmem:[%s15 + $0x160] sm:$0xff]
      %v2814 = vld [vmem:[%s15 + $0x168] sm:$0xff]
      %v2815 = vld [vmem:[%s15 + $0x170] sm:$0xff]
      %v2816 = vld [vmem:[%s15 + $0x178] sm:$0xff]
      %v2817 = vld [vmem:[%s15 + $0x180] sm:$0xff]
      %v2818 = vld [vmem:[%s15 + $0x188] sm:$0xff]
      %v2819 = vld [vmem:[%s15 + $0x190] sm:$0xff]
      %v2820 = vld [vmem:[%s15 + $0x198] sm:$0xff]
      %v2821 = vld [vmem:[%s15 + $0x1a0] sm:$0xff]
      %v2822 = vld [vmem:[%s15 + $0x1a8] sm:$0xff]
      %v2823 = vld [vmem:[%s15 + $0x1b0] sm:$0xff]
      %v2824 = vld [vmem:[%s15 + $0x1b8] sm:$0xff]
      %v2825 = vld [vmem:[%s15 + $0x1c0] sm:$0xff]
      %v2826 = vld [vmem:[%s15 + $0x1c8] sm:$0xff]
      %v2827 = vld [vmem:[%s15 + $0x1d0] sm:$0xff]
      %v2828 = vld [vmem:[%s15 + $0x1d8] sm:$0xff]
      %v2829 = vld [vmem:[%s15 + $0x1e0] sm:$0xff]
      %v2830 = vld [vmem:[%s15 + $0x1e8] sm:$0xff]
      %v2831 = vld [vmem:[%s15 + $0x1f0] sm:$0xff]
      %v2832 = vld [vmem:[%s15 + $0x1f8] sm:$0xff]
      %v2833 = vld [vmem:[%s15 + $0x200] sm:$0xff]
      %v2834 = vld [vmem:[%s15 + $0x208] sm:$0xff]
      %v2835 = vld [vmem:[%s15 + $0x210] sm:$0xff]
      %v2836 = vld [vmem:[%s15 + $0x218] sm:$0xff]
      %v2837 = vld [vmem:[%s15 + $0x220] sm:$0xff]
      %v2838 = vld [vmem:[%s15 + $0x228] sm:$0xff]
      %v2839 = vld [vmem:[%s15 + $0x230] sm:$0xff]
      %v2840 = vld [vmem:[%s15 + $0x238] sm:$0xff]
      %v2841 = vld [vmem:[%s15 + $0x240] sm:$0xff]
      %v2842 = vld [vmem:[%s15 + $0x248] sm:$0xff]
      %v2843 = vld [vmem:[%s15 + $0x250] sm:$0xff]
      %v2844 = vld [vmem:[%s15 + $0x258] sm:$0xff]
      %v2845 = vld [vmem:[%s15 + $0x260] sm:$0xff]
      %v2846 = vld [vmem:[%s15 + $0x268] sm:$0xff]
      %v2847 = vld [vmem:[%s15 + $0x270] sm:$0xff]
      %v2848 = vld [vmem:[%s15 + $0x278] sm:$0xff]
      %v2849 = vld [vmem:[%s15 + $0x280] sm:$0xff]
      %v2850 = vld [vmem:[%s15 + $0x288] sm:$0xff]
      %v2851 = vld [vmem:[%s15 + $0x290] sm:$0xff]
      %v2852 = vld [vmem:[%s15 + $0x298] sm:$0xff]
      %v2853 = vld [vmem:[%s15 + $0x2a0] sm:$0xff]
      %v2854 = vld [vmem:[%s15 + $0x2a8] sm:$0xff]
      %v2855 = vld [vmem:[%s15 + $0x2b0] sm:$0xff]
      %v2856 = vld [vmem:[%s15 + $0x2b8] sm:$0xff]
      %v2857 = vld [vmem:[%s15 + $0x2c0] sm:$0xff]
      %v2858 = vld [vmem:[%s15 + $0x2c8] sm:$0xff]
      %v2859 = vld [vmem:[%s15 + $0x2d0] sm:$0xff]
      %v2860 = vld [vmem:[%s15 + $0x2d8] sm:$0xff]
      %v2861 = vld [vmem:[%s15 + $0x2e0] sm:$0xff]
      %v2862 = vld [vmem:[%s15 + $0x2e8] sm:$0xff]
      %v2863 = vld [vmem:[%s15 + $0x2f0] sm:$0xff]
      %v2864 = vld [vmem:[%s15 + $0x2f8] sm:$0xff]
      %v2865 = vld [vmem:[%s15 + $0x300] sm:$0xff]
      %v2866 = vld [vmem:[%s15 + $0x308] sm:$0xff]
      %v2867 = vld [vmem:[%s15 + $0x310] sm:$0xff]
      %v2868 = vld [vmem:[%s15 + $0x318] sm:$0xff]
      %v2869 = vld [vmem:[%s15 + $0x320] sm:$0xff]
      %v2870 = vld [vmem:[%s15 + $0x328] sm:$0xff]
      %v2871 = vld [vmem:[%s15 + $0x330] sm:$0xff]
      %v2872 = vld [vmem:[%s15 + $0x338] sm:$0xff]
      %v2873 = vld [vmem:[%s15 + $0x340] sm:$0xff]
      %v2874 = vld [vmem:[%s15 + $0x348] sm:$0xff]
      %v2875 = vld [vmem:[%s15 + $0x350] sm:$0xff]
      %v2876 = vld [vmem:[%s15 + $0x358] sm:$0xff]
      %v2877 = vld [vmem:[%s15 + $0x360] sm:$0xff]
      %v2878 = vld [vmem:[%s15 + $0x368] sm:$0xff]
      %v2879 = vld [vmem:[%s15 + $0x370] sm:$0xff]
      %v2880 = vld [vmem:[%s15 + $0x378] sm:$0xff]
      %v2881 = vld [vmem:[%s15 + $0x380] sm:$0xff]
      %v2882 = vld [vmem:[%s15 + $0x388] sm:$0xff]
      %v2883 = vld [vmem:[%s15 + $0x390] sm:$0xff]
      %v2884 = vld [vmem:[%s15 + $0x398] sm:$0xff]
      %v2885 = vld [vmem:[%s15 + $0x3a0] sm:$0xff]
      %v2886 = vld [vmem:[%s15 + $0x3a8] sm:$0xff]
      %v2887 = vld [vmem:[%s15 + $0x3b0] sm:$0xff]
      %v2888 = vld [vmem:[%s15 + $0x3b8] sm:$0xff]
      %v2889 = vld [vmem:[%s15 + $0x3c0] sm:$0xff]
      %v2890 = vld [vmem:[%s15 + $0x3c8] sm:$0xff]
      %v2891 = vld [vmem:[%s15 + $0x3d0] sm:$0xff]
      %v2892 = vld [vmem:[%s15 + $0x3d8] sm:$0xff]
      %v2893 = vld [vmem:[%s15 + $0x3e0] sm:$0xff]
      %v2894 = vld [vmem:[%s15 + $0x3e8] sm:$0xff]
      %v2895 = vld [vmem:[%s15 + $0x3f0] sm:$0xff]
      %v2896 = vld [vmem:[%s15 + $0x3f8] sm:$0xff]
      %v2897 = vld [vmem:[%s15 + $0x400] sm:$0xff]
      %v2898 = vld [vmem:[%s15 + $0x408] sm:$0xff]
      %v2899 = vld [vmem:[%s15 + $0x410] sm:$0xff]
      %v2900 = vld [vmem:[%s15 + $0x418] sm:$0xff]
      %v2901 = vld [vmem:[%s15 + $0x420] sm:$0xff]
      %v2902 = vld [vmem:[%s15 + $0x428] sm:$0xff]
      %v2903 = vld [vmem:[%s15 + $0x430] sm:$0xff]
      %v2904 = vld [vmem:[%s15 + $0x438] sm:$0xff]
      %v2905 = vld [vmem:[%s15 + $0x440] sm:$0xff]
      %v2906 = vld [vmem:[%s15 + $0x448] sm:$0xff]
      %v2907 = vld [vmem:[%s15 + $0x450] sm:$0xff]
      %v2908 = vld [vmem:[%s15 + $0x458] sm:$0xff]
      %v2909 = vld [vmem:[%s15 + $0x460] sm:$0xff]
      %v2910 = vld [vmem:[%s15 + $0x468] sm:$0xff]
      %v2911 = vld [vmem:[%s15 + $0x470] sm:$0xff]
      %v2912 = vld [vmem:[%s15 + $0x478] sm:$0xff]
      %v2913 = vld [vmem:[%s15 + $0x480] sm:$0xff]
      %v2914 = vld [vmem:[%s15 + $0x488] sm:$0xff]
      %v2915 = vld [vmem:[%s15 + $0x490] sm:$0xff]
      %v2916 = vld [vmem:[%s15 + $0x498] sm:$0xff]
      %v2917 = vld [vmem:[%s15 + $0x4a0] sm:$0xff]
      %v2918 = vld [vmem:[%s15 + $0x4a8] sm:$0xff]
      %v2919 = vld [vmem:[%s15 + $0x4b0] sm:$0xff]
      %v2920 = vld [vmem:[%s15 + $0x4b8] sm:$0xff]
      %v2921 = vld [vmem:[%s15 + $0x4c0] sm:$0xff]
      %v2922 = vld [vmem:[%s15 + $0x4c8] sm:$0xff]
      %v2923 = vld [vmem:[%s15 + $0x4d0] sm:$0xff]
      %v2924 = vld [vmem:[%s15 + $0x4d8] sm:$0xff]
      %v2925 = vld [vmem:[%s15 + $0x4e0] sm:$0xff]
      %v2926 = vld [vmem:[%s15 + $0x4e8] sm:$0xff]
      %v2927 = vld [vmem:[%s15 + $0x4f0] sm:$0xff]
      %v2928 = vld [vmem:[%s15 + $0x4f8] sm:$0xff]
      %v2929 = vld [vmem:[%s15 + $0x500] sm:$0xff]
      %v2930 = vld [vmem:[%s15 + $0x508] sm:$0xff]
      %v2931 = vld [vmem:[%s15 + $0x510] sm:$0xff]
      %v2932 = vld [vmem:[%s15 + $0x518] sm:$0xff]
      %v2933 = vld [vmem:[%s15 + $0x520] sm:$0xff]
      %v2934 = vld [vmem:[%s15 + $0x528] sm:$0xff]
      %v2935 = vld [vmem:[%s15 + $0x530] sm:$0xff]
      %v2936 = vld [vmem:[%s15 + $0x538] sm:$0xff]
      %v2937 = vld [vmem:[%s15 + $0x540] sm:$0xff]
      %v2938 = vld [vmem:[%s15 + $0x548] sm:$0xff]
      %v2939 = vld [vmem:[%s15 + $0x550] sm:$0xff]
      %v2940 = vld [vmem:[%s15 + $0x558] sm:$0xff]
      %v2941 = vld [vmem:[%s15 + $0x560] sm:$0xff]
      %v2942 = vld [vmem:[%s15 + $0x568] sm:$0xff]
      %v2943 = vld [vmem:[%s15 + $0x570] sm:$0xff]
      %v2944 = vld [vmem:[%s15 + $0x578] sm:$0xff]
      %v2945 = vld [vmem:[%s15 + $0x580] sm:$0xff]
      %v2946 = vld [vmem:[%s15 + $0x588] sm:$0xff]
      %v2947 = vld [vmem:[%s15 + $0x590] sm:$0xff]
      %v2948 = vld [vmem:[%s15 + $0x598] sm:$0xff]
      %v2949 = vld [vmem:[%s15 + $0x5a0] sm:$0xff]
      %v2950 = vld [vmem:[%s15 + $0x5a8] sm:$0xff]
      %v2951 = vld [vmem:[%s15 + $0x5b0] sm:$0xff]
      %v2952 = vld [vmem:[%s15 + $0x5b8] sm:$0xff]
      %v2953 = vld [vmem:[%s15 + $0x5c0] sm:$0xff]
      %v2954 = vld [vmem:[%s15 + $0x5c8] sm:$0xff]
      %v2955 = vld [vmem:[%s15 + $0x5d0] sm:$0xff]
      %v2956 = vld [vmem:[%s15 + $0x5d8] sm:$0xff]
      %v2957 = vld [vmem:[%s15 + $0x5e0] sm:$0xff]
      %v2958 = vld [vmem:[%s15 + $0x5e8] sm:$0xff]
      %v2959 = vld [vmem:[%s15 + $0x5f0] sm:$0xff]
      %v2960 = vld [vmem:[%s15 + $0x5f8] sm:$0xff]
      %v2961 = vld [vmem:[%s15 + $0x600] sm:$0xff]
      %v2962 = vld [vmem:[%s15 + $0x608] sm:$0xff]
      %v2963 = vld [vmem:[%s15 + $0x610] sm:$0xff]
      %v2964 = vld [vmem:[%s15 + $0x618] sm:$0xff]
      %v2965 = vld [vmem:[%s15 + $0x620] sm:$0xff]
      %v2966 = vld [vmem:[%s15 + $0x628] sm:$0xff]
      %v2967 = vld [vmem:[%s15 + $0x630] sm:$0xff]
      %v2968 = vld [vmem:[%s15 + $0x638] sm:$0xff]
      %v2969 = vld [vmem:[%s15 + $0x640] sm:$0xff]
      %v2970 = vld [vmem:[%s15 + $0x648] sm:$0xff]
      %v2971 = vld [vmem:[%s15 + $0x650] sm:$0xff]
      %v2972 = vld [vmem:[%s15 + $0x658] sm:$0xff]
      %v2973 = vld [vmem:[%s15 + $0x660] sm:$0xff]
      %v2974 = vld [vmem:[%s15 + $0x668] sm:$0xff]
      %v2975 = vld [vmem:[%s15 + $0x670] sm:$0xff]
      %v2976 = vld [vmem:[%s15 + $0x678] sm:$0xff]
      %v2977 = vld [vmem:[%s15 + $0x680] sm:$0xff]
      %v2978 = vld [vmem:[%s15 + $0x688] sm:$0xff]
      %v2979 = vld [vmem:[%s15 + $0x690] sm:$0xff]
      %v2980 = vld [vmem:[%s15 + $0x698] sm:$0xff]
      %v2981 = vld [vmem:[%s15 + $0x6a0] sm:$0xff]
      %v2982 = vld [vmem:[%s15 + $0x6a8] sm:$0xff]
      %v2983 = vld [vmem:[%s15 + $0x6b0] sm:$0xff]
      %v2984 = vld [vmem:[%s15 + $0x6b8] sm:$0xff]
      %v2985 = vld [vmem:[%s15 + $0x6c0] sm:$0xff]
      %v2986 = vld [vmem:[%s15 + $0x6c8] sm:$0xff]
      %v2987 = vld [vmem:[%s15 + $0x6d0] sm:$0xff]
      %v2988 = vld [vmem:[%s15 + $0x6d8] sm:$0xff]
      %v2989 = vld [vmem:[%s15 + $0x6e0] sm:$0xff]
      %v2990 = vld [vmem:[%s15 + $0x6e8] sm:$0xff]
      %v2991 = vld [vmem:[%s15 + $0x6f0] sm:$0xff]
      %v2992 = vld [vmem:[%s15 + $0x6f8] sm:$0xff]
      %v2993 = vld [vmem:[%s15 + $0x700] sm:$0xff]
      %v2994 = vld [vmem:[%s15 + $0x708] sm:$0xff]
      %v2995 = vld [vmem:[%s15 + $0x710] sm:$0xff]
      %v2996 = vld [vmem:[%s15 + $0x718] sm:$0xff]
      %v2997 = vld [vmem:[%s15 + $0x720] sm:$0xff]
      %v2998 = vld [vmem:[%s15 + $0x728] sm:$0xff]
      %v2999 = vld [vmem:[%s15 + $0x730] sm:$0xff]
      %v3000 = vld [vmem:[%s15 + $0x738] sm:$0xff]
      %v3001 = vld [vmem:[%s15 + $0x740] sm:$0xff]
      %v3002 = vld [vmem:[%s15 + $0x748] sm:$0xff]
      %v3003 = vld [vmem:[%s15 + $0x750] sm:$0xff]
      %v3004 = vld [vmem:[%s15 + $0x758] sm:$0xff]
      %v3005 = vld [vmem:[%s15 + $0x760] sm:$0xff]
      %v3006 = vld [vmem:[%s15 + $0x768] sm:$0xff]
      %v3007 = vld [vmem:[%s15 + $0x770] sm:$0xff]
      %v3008 = vld [vmem:[%s15 + $0x778] sm:$0xff]
      %v3009 = vld [vmem:[%s17] sm:$0xf]
      %v3011 = vlaneseq
      %v3012 = vshrl.u32 %v3011, 7
      %v3013 = vsub.s32 0, %v3012
      %v3014 = vrot.slane %v3009, %v3013
      %v3015 = vlaneseq
      %v3016 = vshrl.u32 %v3015, 7
      %v3017 = vsub.s32 1, %v3016
      %v3018 = vrot.slane %v3009, %v3017
      %v3019 = vlaneseq
      %v3020 = vshrl.u32 %v3019, 7
      %v3021 = vsub.s32 2, %v3020
      %v3022 = vrot.slane %v3009, %v3021
      %v3023 = vlaneseq
      %v3024 = vshrl.u32 %v3023, 7
      %v3025 = vsub.s32 3, %v3024
      %v3026 = vrot.slane %v3009, %v3025
      %vm3031 = vcmask 785408
      %v3033 = vsel %vm3031, %v2768, 0
      %3035 = vmatprep.subr.mxu0 %v2770
      %3036 = vmatpush1.msra.mxu0 %v2769
      %3037 = vmatprep.subr.mxu0 %v2774
      %3038 = vmatpush1.msra.mxu0 %v2773
      %3039 = vmatprep.subr.mxu0 %v2778
      %3040 = vmatpush1.msra.mxu0 %v2777
      %3041 = vmatprep.subr.mxu0 %v2782
      %3042 = vmatpush1.msra.mxu0 %v2781
      %3043 = vmatprep.subr.mxu0 %v2786
      %3044 = vmatpush1.msra.mxu0 %v2785
      %3045 = vmatprep.subr.mxu0 %v2790
      %3046 = vmatpush1.msra.mxu0 %v2789
      %3047 = vmatprep.subr.mxu0 %v2794
      %3048 = vmatpush1.msra.mxu0 %v2793
      %3049 = vmatprep.subr.mxu0 %v2798
      %3050 = vmatpush1.msra.mxu0 %v2797
      %3051 = vmatprep.subr.mxu0 %v2802
      %3052 = vmatpush1.msra.mxu0 %v2801
      %3053 = vmatprep.subr.mxu0 %v2806
      %3054 = vmatpush1.msra.mxu0 %v2805
      %3055 = vmatprep.subr.mxu0 %v2810
      %3056 = vmatpush1.msra.mxu0 %v2809
      %3057 = vmatprep.subr.mxu0 %v2814
      %3058 = vmatpush1.msra.mxu0 %v2813
      %3059 = vmatprep.subr.mxu0 %v2818
      %3060 = vmatpush1.msra.mxu0 %v2817
      %3061 = vmatprep.subr.mxu0 %v2822
      %3062 = vmatpush1.msra.mxu0 %v2821
      %3063 = vmatprep.subr.mxu0 %v2826
      %3064 = vmatpush1.msra.mxu0 %v2825
      %3065 = vmatprep.subr.mxu0 %v2830
      %3066 = vmatpush1.msra.mxu0 %v2829
      %3067 = vmatprep.subr.mxu0 %v2834
      %3068 = vmatpush1.msra.mxu0 %v2833
      %3069 = vmatprep.subr.mxu0 %v2838
      %3070 = vmatpush1.msra.mxu0 %v2837
      %3071 = vmatprep.subr.mxu0 %v2842
      %3072 = vmatpush1.msra.mxu0 %v2841
      %3073 = vmatprep.subr.mxu0 %v2846
      %3074 = vmatpush1.msra.mxu0 %v2845
      %3075 = vmatprep.subr.mxu0 %v2850
      %3076 = vmatpush1.msra.mxu0 %v2849
      %3077 = vmatprep.subr.mxu0 %v2854
      %3078 = vmatpush1.msra.mxu0 %v2853
      %3079 = vmatprep.subr.mxu0 %v2858
      %3080 = vmatpush1.msra.mxu0 %v2857
      %3081 = vmatprep.subr.mxu0 %v2862
      %3082 = vmatpush1.msra.mxu0 %v2861
      %3083 = vmatprep.subr.mxu0 %v2866
      %3084 = vmatpush1.msra.mxu0 %v2865
      %3085 = vmatprep.subr.mxu0 %v2870
      %3086 = vmatpush1.msra.mxu0 %v2869
      %3087 = vmatprep.subr.mxu0 %v2874
      %3088 = vmatpush1.msra.mxu0 %v2873
      %3089 = vmatprep.subr.mxu0 %v2878
      %3090 = vmatpush1.msra.mxu0 %v2877
      %3091 = vmatprep.subr.mxu0 %v2882
      %3092 = vmatpush1.msra.mxu0 %v2881
      %3093 = vmatprep.subr.mxu0 %v2886
      %3094 = vmatpush1.msra.mxu0 %v2885
      %3095 = vmatprep.subr.mxu0 %v2890
      %3096 = vmatpush1.msra.mxu0 %v2889
      %3097 = vmatprep.subr.mxu0 %v2894
      %3098 = vmatpush1.msra.mxu0 %v2893
      %3099 = vmatprep.mubr.f32.mxu0 %v2766
      %3100 = vmatmul.mubr.f32.gmra.mrb[0].mxu0 %v2765
      %v3101 = vpop.f32.mrb[0].mxu0
      %v3102 = vadd.f32 %v3014, %v3101
      %v3103 = vpop.f32.mrb[0].mxu0
      %v3104 = vadd.f32 %v3018, %v3103
      %3105 = vdwg.mxu0
      %3106 = vmatprep.subr.mxu0 %v2898
      %3107 = vmatpush1.msra.mxu0 %v2897
      %3108 = vmatprep.subr.mxu0 %v2902
      %3109 = vmatpush1.msra.mxu0 %v2901
      %3110 = vmatprep.subr.mxu0 %v2906
      %3111 = vmatpush1.msra.mxu0 %v2905
      %3112 = vmatprep.subr.mxu0 %v2910
      %3113 = vmatpush1.msra.mxu0 %v2909
      %3114 = vmatprep.subr.mxu0 %v2914
      %3115 = vmatpush1.msra.mxu0 %v2913
      %3116 = vmatprep.subr.mxu0 %v2918
      %3117 = vmatpush1.msra.mxu0 %v2917
      %3118 = vmatprep.subr.mxu0 %v2922
      %3119 = vmatpush1.msra.mxu0 %v2921
      %3120 = vmatprep.subr.mxu0 %v2926
      %3121 = vmatpush1.msra.mxu0 %v2925
      %3122 = vmatprep.subr.mxu0 %v2930
      %3123 = vmatpush1.msra.mxu0 %v2929
      %3124 = vmatprep.subr.mxu0 %v2934
      %3125 = vmatpush1.msra.mxu0 %v2933
      %3126 = vmatprep.subr.mxu0 %v2938
      %3127 = vmatpush1.msra.mxu0 %v2937
      %3128 = vmatprep.subr.mxu0 %v2942
      %3129 = vmatpush1.msra.mxu0 %v2941
      %3130 = vmatprep.subr.mxu0 %v2946
      %3131 = vmatpush1.msra.mxu0 %v2945
      %3132 = vmatprep.subr.mxu0 %v2950
      %3133 = vmatpush1.msra.mxu0 %v2949
      %3134 = vmatprep.subr.mxu0 %v2954
      %3135 = vmatpush1.msra.mxu0 %v2953
      %3136 = vmatprep.subr.mxu0 %v2958
      %3137 = vmatpush1.msra.mxu0 %v2957
      %3138 = vmatprep.subr.mxu0 %v2962
      %3139 = vmatpush1.msra.mxu0 %v2961
      %3140 = vmatprep.subr.mxu0 %v2966
      %3141 = vmatpush1.msra.mxu0 %v2965
      %3142 = vmatprep.subr.mxu0 %v2970
      %3143 = vmatpush1.msra.mxu0 %v2969
      %3144 = vmatprep.subr.mxu0 %v2974
      %3145 = vmatpush1.msra.mxu0 %v2973
      %3146 = vmatprep.subr.mxu0 %v2978
      %3147 = vmatpush1.msra.mxu0 %v2977
      %3148 = vmatprep.subr.mxu0 %v2982
      %3149 = vmatpush1.msra.mxu0 %v2981
      %3150 = vmatprep.subr.mxu0 %v2986
      %3151 = vmatpush1.msra.mxu0 %v2985
      %3152 = vmatprep.subr.mxu0 %v2990
      %3153 = vmatpush1.msra.mxu0 %v2989
      %3154 = vmatprep.subr.mxu0 %v2994
      %3155 = vmatpush1.msra.mxu0 %v2993
      %3156 = vmatprep.subr.mxu0 %v2998
      %3157 = vmatpush1.msra.mxu0 %v2997
      %3158 = vmatprep.subr.mxu0 %v3002
      %3159 = vmatpush1.msra.mxu0 %v3001
      %3160 = vmatprep.subr.mxu0 %v3006
      %3161 = vmatpush1.msra.mxu0 %v3005
      %3162 = vmatprep.subr.mxu0 0.0
      %3163 = vmatpush1.msra.mxu0 0.0
      %3164 = vmatprep.subr.mxu0 0.0
      %3165 = vmatpush1.msra.mxu0 0.0
      %3166 = vmatprep.subr.mxu0 0.0
      %3167 = vmatpush1.msra.mxu0 0.0
      %3168 = vmatprep.subr.mxu0 0.0
      %3169 = vmatpush1.msra.mxu0 0.0
      %3170 = vmatprep.mubr.f32.mxu0 %v3033
      %3171 = vmatmul.mubr.f32.gmra.mrb[0].mxu0 %v2767
      %v3172 = vpop.f32.mrb[0].mxu0
      %v3173 = vadd.f32 %v3102, %v3172
      %v3174 = vpop.f32.mrb[0].mxu0
      %v3175 = vadd.f32 %v3104, %v3174
      %3176 = vdwg.mxu0
      %3177 = vmatprep.subr.mxu0 %v2772
      %3178 = vmatpush1.msra.mxu0 %v2771
      %3179 = vmatprep.subr.mxu0 %v2776
      %3180 = vmatpush1.msra.mxu0 %v2775
      %3181 = vmatprep.subr.mxu0 %v2780
      %3182 = vmatpush1.msra.mxu0 %v2779
      %3183 = vmatprep.subr.mxu0 %v2784
      %3184 = vmatpush1.msra.mxu0 %v2783
      %3185 = vmatprep.subr.mxu0 %v2788
      %3186 = vmatpush1.msra.mxu0 %v2787
      %3187 = vmatprep.subr.mxu0 %v2792
      %3188 = vmatpush1.msra.mxu0 %v2791
      %3189 = vmatprep.subr.mxu0 %v2796
      %3190 = vmatpush1.msra.mxu0 %v2795
      %3191 = vmatprep.subr.mxu0 %v2800
      %3192 = vmatpush1.msra.mxu0 %v2799
      %3193 = vmatprep.subr.mxu0 %v2804
      %3194 = vmatpush1.msra.mxu0 %v2803
      %3195 = vmatprep.subr.mxu0 %v2808
      %3196 = vmatpush1.msra.mxu0 %v2807
      %3197 = vmatprep.subr.mxu0 %v2812
      %3198 = vmatpush1.msra.mxu0 %v2811
      %3199 = vmatprep.subr.mxu0 %v2816
      %3200 = vmatpush1.msra.mxu0 %v2815
      %3201 = vmatprep.subr.mxu0 %v2820
      %3202 = vmatpush1.msra.mxu0 %v2819
      %3203 = vmatprep.subr.mxu0 %v2824
      %3204 = vmatpush1.msra.mxu0 %v2823
      %3205 = vmatprep.subr.mxu0 %v2828
      %3206 = vmatpush1.msra.mxu0 %v2827
      %3207 = vmatprep.subr.mxu0 %v2832
      %3208 = vmatpush1.msra.mxu0 %v2831
      %3209 = vmatprep.subr.mxu0 %v2836
      %3210 = vmatpush1.msra.mxu0 %v2835
      %3211 = vmatprep.subr.mxu0 %v2840
      %3212 = vmatpush1.msra.mxu0 %v2839
      %3213 = vmatprep.subr.mxu0 %v2844
      %3214 = vmatpush1.msra.mxu0 %v2843
      %3215 = vmatprep.subr.mxu0 %v2848
      %3216 = vmatpush1.msra.mxu0 %v2847
      %3217 = vmatprep.subr.mxu0 %v2852
      %3218 = vmatpush1.msra.mxu0 %v2851
      %3219 = vmatprep.subr.mxu0 %v2856
      %3220 = vmatpush1.msra.mxu0 %v2855
      %3221 = vmatprep.subr.mxu0 %v2860
      %3222 = vmatpush1.msra.mxu0 %v2859
      %3223 = vmatprep.subr.mxu0 %v2864
      %3224 = vmatpush1.msra.mxu0 %v2863
      %3225 = vmatprep.subr.mxu0 %v2868
      %3226 = vmatpush1.msra.mxu0 %v2867
      %3227 = vmatprep.subr.mxu0 %v2872
      %3228 = vmatpush1.msra.mxu0 %v2871
      %3229 = vmatprep.subr.mxu0 %v2876
      %3230 = vmatpush1.msra.mxu0 %v2875
      %3231 = vmatprep.subr.mxu0 %v2880
      %3232 = vmatpush1.msra.mxu0 %v2879
      %3233 = vmatprep.subr.mxu0 %v2884
      %3234 = vmatpush1.msra.mxu0 %v2883
      %3235 = vmatprep.subr.mxu0 %v2888
      %3236 = vmatpush1.msra.mxu0 %v2887
      %3237 = vmatprep.subr.mxu0 %v2892
      %3238 = vmatpush1.msra.mxu0 %v2891
      %3239 = vmatprep.subr.mxu0 %v2896
      %3240 = vmatpush1.msra.mxu0 %v2895
      %3241 = vmatprep.mubr.f32.mxu0 %v2766
      %3242 = vmatmul.mubr.f32.gmra.mrb[0].mxu0 %v2765
      %v3243 = vpop.f32.mrb[0].mxu0
      %v3244 = vadd.f32 %v3022, %v3243
      %v3245 = vpop.f32.mrb[0].mxu0
      %v3246 = vadd.f32 %v3026, %v3245
      %3247 = vdwg.mxu0
      %3248 = vmatprep.subr.mxu0 %v2900
      %3249 = vmatpush1.msra.mxu0 %v2899
      %3250 = vmatprep.subr.mxu0 %v2904
      %3251 = vmatpush1.msra.mxu0 %v2903
      %3252 = vmatprep.subr.mxu0 %v2908
      %3253 = vmatpush1.msra.mxu0 %v2907
      %3254 = vmatprep.subr.mxu0 %v2912
      %3255 = vmatpush1.msra.mxu0 %v2911
      %3256 = vmatprep.subr.mxu0 %v2916
      %3257 = vmatpush1.msra.mxu0 %v2915
      %3258 = vmatprep.subr.mxu0 %v2920
      %3259 = vmatpush1.msra.mxu0 %v2919
      %3260 = vmatprep.subr.mxu0 %v2924
      %3261 = vmatpush1.msra.mxu0 %v2923
      %3262 = vmatprep.subr.mxu0 %v2928
      %3263 = vmatpush1.msra.mxu0 %v2927
      %3264 = vmatprep.subr.mxu0 %v2932
      %3265 = vmatpush1.msra.mxu0 %v2931
      %3266 = vmatprep.subr.mxu0 %v2936
      %3267 = vmatpush1.msra.mxu0 %v2935
      %3268 = vmatprep.subr.mxu0 %v2940
      %3269 = vmatpush1.msra.mxu0 %v2939
      %3270 = vmatprep.subr.mxu0 %v2944
      %3271 = vmatpush1.msra.mxu0 %v2943
      %3272 = vmatprep.subr.mxu0 %v2948
      %3273 = vmatpush1.msra.mxu0 %v2947
      %3274 = vmatprep.subr.mxu0 %v2952
      %3275 = vmatpush1.msra.mxu0 %v2951
      %3276 = vmatprep.subr.mxu0 %v2956
      %3277 = vmatpush1.msra.mxu0 %v2955
      %3278 = vmatprep.subr.mxu0 %v2960
      %3279 = vmatpush1.msra.mxu0 %v2959
      %3280 = vmatprep.subr.mxu0 %v2964
      %3281 = vmatpush1.msra.mxu0 %v2963
      %3282 = vmatprep.subr.mxu0 %v2968
      %3283 = vmatpush1.msra.mxu0 %v2967
      %3284 = vmatprep.subr.mxu0 %v2972
      %3285 = vmatpush1.msra.mxu0 %v2971
      %3286 = vmatprep.subr.mxu0 %v2976
      %3287 = vmatpush1.msra.mxu0 %v2975
      %3288 = vmatprep.subr.mxu0 %v2980
      %3289 = vmatpush1.msra.mxu0 %v2979
      %3290 = vmatprep.subr.mxu0 %v2984
      %3291 = vmatpush1.msra.mxu0 %v2983
      %3292 = vmatprep.subr.mxu0 %v2988
      %3293 = vmatpush1.msra.mxu0 %v2987
      %3294 = vmatprep.subr.mxu0 %v2992
      %3295 = vmatpush1.msra.mxu0 %v2991
      %3296 = vmatprep.subr.mxu0 %v2996
      %3297 = vmatpush1.msra.mxu0 %v2995
      %3298 = vmatprep.subr.mxu0 %v3000
      %3299 = vmatpush1.msra.mxu0 %v2999
      %3300 = vmatprep.subr.mxu0 %v3004
      %3301 = vmatpush1.msra.mxu0 %v3003
      %3302 = vmatprep.subr.mxu0 %v3008
      %3303 = vmatpush1.msra.mxu0 %v3007
      %3304 = vmatprep.subr.mxu0 0.0
      %3305 = vmatpush1.msra.mxu0 0.0
      %3306 = vmatprep.subr.mxu0 0.0
      %3307 = vmatpush1.msra.mxu0 0.0
      %3308 = vmatprep.subr.mxu0 0.0
      %3309 = vmatpush1.msra.mxu0 0.0
      %3310 = vmatprep.subr.mxu0 0.0
      %3311 = vmatpush1.msra.mxu0 0.0
      %3312 = vmatprep.mubr.f32.mxu0 %v3033
      %3313 = vmatmul.mubr.f32.gmra.mrb[0].mxu0 %v2767
      %v3314 = vpop.f32.mrb[0].mxu0
      %v3315 = vadd.f32 %v3244, %v3314
      %v3316 = vpop.f32.mrb[0].mxu0
      %v3317 = vadd.f32 %v3246, %v3316
      %3318 = vdwg.mxu0
      %v3319 = vld [vmem:[%s19] sm:$0xff]
      %v3320 = vld [vmem:[%s19 + $0x8] sm:$0xff]
      %v3321 = vld [vmem:[%s19 + $0x10] sm:$0xff]
      %v3322 = vld [vmem:[%s19 + $0x18] sm:$0xff]
      %v3323 = vld [vmem:[%s19 + $0x20] sm:$0xff]
      %v3324 = vld [vmem:[%s19 + $0x28] sm:$0xff]
      %v3325 = vld [vmem:[%s19 + $0x30] sm:$0xff]
      %v3326 = vld [vmem:[%s19 + $0x38] sm:$0xff]
      %v3327 = vld [vmem:[%s19 + $0x40] sm:$0xff]
      %v3328 = vld [vmem:[%s19 + $0x48] sm:$0xff]
      %v3329 = vld [vmem:[%s19 + $0x50] sm:$0xff]
      %v3330 = vld [vmem:[%s19 + $0x58] sm:$0xff]
      %v3331 = vld [vmem:[%s19 + $0x60] sm:$0xff]
      %v3332 = vld [vmem:[%s19 + $0x68] sm:$0xff]
      %v3333 = vld [vmem:[%s19 + $0x70] sm:$0xff]
      %v3334 = vld [vmem:[%s19 + $0x78] sm:$0xff]
      %v3335 = vld [vmem:[%s19 + $0x80] sm:$0xff]
      %v3336 = vld [vmem:[%s19 + $0x88] sm:$0xff]
      %v3337 = vld [vmem:[%s19 + $0x90] sm:$0xff]
      %v3338 = vld [vmem:[%s19 + $0x98] sm:$0xff]
      %v3339 = vld [vmem:[%s19 + $0xa0] sm:$0xff]
      %v3340 = vld [vmem:[%s19 + $0xa8] sm:$0xff]
      %v3341 = vld [vmem:[%s19 + $0xb0] sm:$0xff]
      %v3342 = vld [vmem:[%s19 + $0xb8] sm:$0xff]
      %v3343 = vld [vmem:[%s19 + $0xc0] sm:$0xff]
      %v3344 = vld [vmem:[%s19 + $0xc8] sm:$0xff]
      %v3345 = vld [vmem:[%s19 + $0xd0] sm:$0xff]
      %v3346 = vld [vmem:[%s19 + $0xd8] sm:$0xff]
      %v3347 = vld [vmem:[%s19 + $0xe0] sm:$0xff]
      %v3348 = vld [vmem:[%s19 + $0xe8] sm:$0xff]
      %v3349 = vld [vmem:[%s19 + $0xf0] sm:$0xff]
      %v3350 = vld [vmem:[%s19 + $0xf8] sm:$0xff]
      %v3351 = vld [vmem:[%s19 + $0x100] sm:$0xff]
      %v3352 = vld [vmem:[%s19 + $0x108] sm:$0xff]
      %v3353 = vld [vmem:[%s19 + $0x110] sm:$0xff]
      %v3354 = vld [vmem:[%s19 + $0x118] sm:$0xff]
      %v3355 = vld [vmem:[%s19 + $0x120] sm:$0xff]
      %v3356 = vld [vmem:[%s19 + $0x128] sm:$0xff]
      %v3357 = vld [vmem:[%s19 + $0x130] sm:$0xff]
      %v3358 = vld [vmem:[%s19 + $0x138] sm:$0xff]
      %v3359 = vld [vmem:[%s19 + $0x140] sm:$0xff]
      %v3360 = vld [vmem:[%s19 + $0x148] sm:$0xff]
      %v3361 = vld [vmem:[%s19 + $0x150] sm:$0xff]
      %v3362 = vld [vmem:[%s19 + $0x158] sm:$0xff]
      %v3363 = vld [vmem:[%s19 + $0x160] sm:$0xff]
      %v3364 = vld [vmem:[%s19 + $0x168] sm:$0xff]
      %v3365 = vld [vmem:[%s19 + $0x170] sm:$0xff]
      %v3366 = vld [vmem:[%s19 + $0x178] sm:$0xff]
      %v3367 = vld [vmem:[%s19 + $0x180] sm:$0xff]
      %v3368 = vld [vmem:[%s19 + $0x188] sm:$0xff]
      %v3369 = vld [vmem:[%s19 + $0x190] sm:$0xff]
      %v3370 = vld [vmem:[%s19 + $0x198] sm:$0xff]
      %v3371 = vld [vmem:[%s19 + $0x1a0] sm:$0xff]
      %v3372 = vld [vmem:[%s19 + $0x1a8] sm:$0xff]
      %v3373 = vld [vmem:[%s19 + $0x1b0] sm:$0xff]
      %v3374 = vld [vmem:[%s19 + $0x1b8] sm:$0xff]
      %v3375 = vld [vmem:[%s19 + $0x1c0] sm:$0xff]
      %v3376 = vld [vmem:[%s19 + $0x1c8] sm:$0xff]
      %v3377 = vld [vmem:[%s19 + $0x1d0] sm:$0xff]
      %v3378 = vld [vmem:[%s19 + $0x1d8] sm:$0xff]
      %v3379 = vld [vmem:[%s19 + $0x1e0] sm:$0xff]
      %v3380 = vld [vmem:[%s19 + $0x1e8] sm:$0xff]
      %v3381 = vld [vmem:[%s19 + $0x1f0] sm:$0xff]
      %v3382 = vld [vmem:[%s19 + $0x1f8] sm:$0xff]
      %v3383 = vld [vmem:[%s19 + $0x200] sm:$0xff]
      %v3384 = vld [vmem:[%s19 + $0x208] sm:$0xff]
      %v3385 = vld [vmem:[%s19 + $0x210] sm:$0xff]
      %v3386 = vld [vmem:[%s19 + $0x218] sm:$0xff]
      %v3387 = vld [vmem:[%s19 + $0x220] sm:$0xff]
      %v3388 = vld [vmem:[%s19 + $0x228] sm:$0xff]
      %v3389 = vld [vmem:[%s19 + $0x230] sm:$0xff]
      %v3390 = vld [vmem:[%s19 + $0x238] sm:$0xff]
      %v3391 = vld [vmem:[%s19 + $0x240] sm:$0xff]
      %v3392 = vld [vmem:[%s19 + $0x248] sm:$0xff]
      %v3393 = vld [vmem:[%s19 + $0x250] sm:$0xff]
      %v3394 = vld [vmem:[%s19 + $0x258] sm:$0xff]
      %v3395 = vld [vmem:[%s19 + $0x260] sm:$0xff]
      %v3396 = vld [vmem:[%s19 + $0x268] sm:$0xff]
      %v3397 = vld [vmem:[%s19 + $0x270] sm:$0xff]
      %v3398 = vld [vmem:[%s19 + $0x278] sm:$0xff]
      %v3399 = vld [vmem:[%s19 + $0x280] sm:$0xff]
      %v3400 = vld [vmem:[%s19 + $0x288] sm:$0xff]
      %v3401 = vld [vmem:[%s19 + $0x290] sm:$0xff]
      %v3402 = vld [vmem:[%s19 + $0x298] sm:$0xff]
      %v3403 = vld [vmem:[%s19 + $0x2a0] sm:$0xff]
      %v3404 = vld [vmem:[%s19 + $0x2a8] sm:$0xff]
      %v3405 = vld [vmem:[%s19 + $0x2b0] sm:$0xff]
      %v3406 = vld [vmem:[%s19 + $0x2b8] sm:$0xff]
      %v3407 = vld [vmem:[%s19 + $0x2c0] sm:$0xff]
      %v3408 = vld [vmem:[%s19 + $0x2c8] sm:$0xff]
      %v3409 = vld [vmem:[%s19 + $0x2d0] sm:$0xff]
      %v3410 = vld [vmem:[%s19 + $0x2d8] sm:$0xff]
      %v3411 = vld [vmem:[%s19 + $0x2e0] sm:$0xff]
      %v3412 = vld [vmem:[%s19 + $0x2e8] sm:$0xff]
      %v3413 = vld [vmem:[%s19 + $0x2f0] sm:$0xff]
      %v3414 = vld [vmem:[%s19 + $0x2f8] sm:$0xff]
      %v3415 = vld [vmem:[%s19 + $0x300] sm:$0xff]
      %v3416 = vld [vmem:[%s19 + $0x308] sm:$0xff]
      %v3417 = vld [vmem:[%s19 + $0x310] sm:$0xff]
      %v3418 = vld [vmem:[%s19 + $0x318] sm:$0xff]
      %v3419 = vld [vmem:[%s19 + $0x320] sm:$0xff]
      %v3420 = vld [vmem:[%s19 + $0x328] sm:$0xff]
      %v3421 = vld [vmem:[%s19 + $0x330] sm:$0xff]
      %v3422 = vld [vmem:[%s19 + $0x338] sm:$0xff]
      %v3423 = vld [vmem:[%s19 + $0x340] sm:$0xff]
      %v3424 = vld [vmem:[%s19 + $0x348] sm:$0xff]
      %v3425 = vld [vmem:[%s19 + $0x350] sm:$0xff]
      %v3426 = vld [vmem:[%s19 + $0x358] sm:$0xff]
      %v3427 = vld [vmem:[%s19 + $0x360] sm:$0xff]
      %v3428 = vld [vmem:[%s19 + $0x368] sm:$0xff]
      %v3429 = vld [vmem:[%s19 + $0x370] sm:$0xff]
      %v3430 = vld [vmem:[%s19 + $0x378] sm:$0xff]
      %v3431 = vld [vmem:[%s19 + $0x380] sm:$0xff]
      %v3432 = vld [vmem:[%s19 + $0x388] sm:$0xff]
      %v3433 = vld [vmem:[%s19 + $0x390] sm:$0xff]
      %v3434 = vld [vmem:[%s19 + $0x398] sm:$0xff]
      %v3435 = vld [vmem:[%s19 + $0x3a0] sm:$0xff]
      %v3436 = vld [vmem:[%s19 + $0x3a8] sm:$0xff]
      %v3437 = vld [vmem:[%s19 + $0x3b0] sm:$0xff]
      %v3438 = vld [vmem:[%s19 + $0x3b8] sm:$0xff]
      %v3439 = vld [vmem:[%s19 + $0x3c0] sm:$0xff]
      %v3440 = vld [vmem:[%s19 + $0x3c8] sm:$0xff]
      %v3441 = vld [vmem:[%s19 + $0x3d0] sm:$0xff]
      %v3442 = vld [vmem:[%s19 + $0x3d8] sm:$0xff]
      %v3443 = vld [vmem:[%s19 + $0x3e0] sm:$0xff]
      %v3444 = vld [vmem:[%s19 + $0x3e8] sm:$0xff]
      %v3445 = vld [vmem:[%s19 + $0x3f0] sm:$0xff]
      %v3446 = vld [vmem:[%s19 + $0x3f8] sm:$0xff]
      %v3447 = vld [vmem:[%s19 + $0x400] sm:$0xff]
      %v3448 = vld [vmem:[%s19 + $0x408] sm:$0xff]
      %v3449 = vld [vmem:[%s19 + $0x410] sm:$0xff]
      %v3450 = vld [vmem:[%s19 + $0x418] sm:$0xff]
      %v3451 = vld [vmem:[%s19 + $0x420] sm:$0xff]
      %v3452 = vld [vmem:[%s19 + $0x428] sm:$0xff]
      %v3453 = vld [vmem:[%s19 + $0x430] sm:$0xff]
      %v3454 = vld [vmem:[%s19 + $0x438] sm:$0xff]
      %v3455 = vld [vmem:[%s19 + $0x440] sm:$0xff]
      %v3456 = vld [vmem:[%s19 + $0x448] sm:$0xff]
      %v3457 = vld [vmem:[%s19 + $0x450] sm:$0xff]
      %v3458 = vld [vmem:[%s19 + $0x458] sm:$0xff]
      %v3459 = vld [vmem:[%s19 + $0x460] sm:$0xff]
      %v3460 = vld [vmem:[%s19 + $0x468] sm:$0xff]
      %v3461 = vld [vmem:[%s19 + $0x470] sm:$0xff]
      %v3462 = vld [vmem:[%s19 + $0x478] sm:$0xff]
      %v3463 = vld [vmem:[%s19 + $0x480] sm:$0xff]
      %v3464 = vld [vmem:[%s19 + $0x488] sm:$0xff]
      %v3465 = vld [vmem:[%s19 + $0x490] sm:$0xff]
      %v3466 = vld [vmem:[%s19 + $0x498] sm:$0xff]
      %v3467 = vld [vmem:[%s19 + $0x4a0] sm:$0xff]
      %v3468 = vld [vmem:[%s19 + $0x4a8] sm:$0xff]
      %v3469 = vld [vmem:[%s19 + $0x4b0] sm:$0xff]
      %v3470 = vld [vmem:[%s19 + $0x4b8] sm:$0xff]
      %v3471 = vld [vmem:[%s19 + $0x4c0] sm:$0xff]
      %v3472 = vld [vmem:[%s19 + $0x4c8] sm:$0xff]
      %v3473 = vld [vmem:[%s19 + $0x4d0] sm:$0xff]
      %v3474 = vld [vmem:[%s19 + $0x4d8] sm:$0xff]
      %v3475 = vld [vmem:[%s19 + $0x4e0] sm:$0xff]
      %v3476 = vld [vmem:[%s19 + $0x4e8] sm:$0xff]
      %v3477 = vld [vmem:[%s19 + $0x4f0] sm:$0xff]
      %v3478 = vld [vmem:[%s19 + $0x4f8] sm:$0xff]
      %v3479 = vld [vmem:[%s19 + $0x500] sm:$0xff]
      %v3480 = vld [vmem:[%s19 + $0x508] sm:$0xff]
      %v3481 = vld [vmem:[%s19 + $0x510] sm:$0xff]
      %v3482 = vld [vmem:[%s19 + $0x518] sm:$0xff]
      %v3483 = vld [vmem:[%s19 + $0x520] sm:$0xff]
      %v3484 = vld [vmem:[%s19 + $0x528] sm:$0xff]
      %v3485 = vld [vmem:[%s19 + $0x530] sm:$0xff]
      %v3486 = vld [vmem:[%s19 + $0x538] sm:$0xff]
      %v3487 = vld [vmem:[%s25] sm:$0x7]
      %v3489 = vlaneseq
      %v3490 = vshrl.u32 %v3489, 7
      %v3491 = vsub.s32 0, %v3490
      %v3492 = vrot.slane %v3487, %v3491
      %v3493 = vlaneseq
      %v3494 = vshrl.u32 %v3493, 7
      %v3495 = vsub.s32 1, %v3494
      %v3496 = vrot.slane %v3487, %v3495
      %v3497 = vlaneseq
      %v3498 = vshrl.u32 %v3497, 7
      %v3499 = vsub.s32 2, %v3498
      %v3500 = vrot.slane %v3487, %v3499
      %vm3504 = vcmask 523264
      %v3506 = vsel %vm3504, %v3317, 0
      %3508 = vmatprep.subr.mxu0 %v3320
      %3509 = vmatpush1.msra.mxu0 %v3319
      %3510 = vmatprep.subr.mxu0 %v3323
      %3511 = vmatpush1.msra.mxu0 %v3322
      %3512 = vmatprep.subr.mxu0 %v3326
      %3513 = vmatpush1.msra.mxu0 %v3325
      %3514 = vmatprep.subr.mxu0 %v3329
      %3515 = vmatpush1.msra.mxu0 %v3328
      %3516 = vmatprep.subr.mxu0 %v3332
      %3517 = vmatpush1.msra.mxu0 %v3331
      %3518 = vmatprep.subr.mxu0 %v3335
      %3519 = vmatpush1.msra.mxu0 %v3334
      %3520 = vmatprep.subr.mxu0 %v3338
      %3521 = vmatpush1.msra.mxu0 %v3337
      %3522 = vmatprep.subr.mxu0 %v3341
      %3523 = vmatpush1.msra.mxu0 %v3340
      %3524 = vmatprep.subr.mxu0 %v3344
      %3525 = vmatpush1.msra.mxu0 %v3343
      %3526 = vmatprep.subr.mxu0 %v3347
      %3527 = vmatpush1.msra.mxu0 %v3346
      %3528 = vmatprep.subr.mxu0 %v3350
      %3529 = vmatpush1.msra.mxu0 %v3349
      %3530 = vmatprep.subr.mxu0 %v3353
      %3531 = vmatpush1.msra.mxu0 %v3352
      %3532 = vmatprep.subr.mxu0 %v3356
      %3533 = vmatpush1.msra.mxu0 %v3355
      %3534 = vmatprep.subr.mxu0 %v3359
      %3535 = vmatpush1.msra.mxu0 %v3358
      %3536 = vmatprep.subr.mxu0 %v3362
      %3537 = vmatpush1.msra.mxu0 %v3361
      %3538 = vmatprep.subr.mxu0 %v3365
      %3539 = vmatpush1.msra.mxu0 %v3364
      %3540 = vmatprep.subr.mxu0 %v3368
      %3541 = vmatpush1.msra.mxu0 %v3367
      %3542 = vmatprep.subr.mxu0 %v3371
      %3543 = vmatpush1.msra.mxu0 %v3370
      %3544 = vmatprep.subr.mxu0 %v3374
      %3545 = vmatpush1.msra.mxu0 %v3373
      %3546 = vmatprep.subr.mxu0 %v3377
      %3547 = vmatpush1.msra.mxu0 %v3376
      %3548 = vmatprep.subr.mxu0 %v3380
      %3549 = vmatpush1.msra.mxu0 %v3379
      %3550 = vmatprep.subr.mxu0 %v3383
      %3551 = vmatpush1.msra.mxu0 %v3382
      %3552 = vmatprep.subr.mxu0 %v3386
      %3553 = vmatpush1.msra.mxu0 %v3385
      %3554 = vmatprep.subr.mxu0 %v3389
      %3555 = vmatpush1.msra.mxu0 %v3388
      %3556 = vmatprep.subr.mxu0 %v3392
      %3557 = vmatpush1.msra.mxu0 %v3391
      %3558 = vmatprep.subr.mxu0 %v3395
      %3559 = vmatpush1.msra.mxu0 %v3394
      %3560 = vmatprep.subr.mxu0 %v3398
      %3561 = vmatpush1.msra.mxu0 %v3397
      %3562 = vmatprep.subr.mxu0 %v3401
      %3563 = vmatpush1.msra.mxu0 %v3400
      %3564 = vmatprep.subr.mxu0 %v3404
      %3565 = vmatpush1.msra.mxu0 %v3403
      %3566 = vmatprep.subr.mxu0 %v3407
      %3567 = vmatpush1.msra.mxu0 %v3406
      %3568 = vmatprep.subr.mxu0 %v3410
      %3569 = vmatpush1.msra.mxu0 %v3409
      %3570 = vmatprep.subr.mxu0 %v3413
      %3571 = vmatpush1.msra.mxu0 %v3412
      %3572 = vmatprep.mubr.f32.mxu0 %v3175
      %3573 = vmatmul.mubr.f32.gmra.mrb[0].mxu0 %v3173
      %v3574 = vpop.f32.mrb[0].mxu0
      %v3575 = vadd.f32 %v3492, %v3574
      %v3576 = vpop.f32.mrb[0].mxu0
      %v3577 = vadd.f32 %v3496, %v3576
      %3578 = vdwg.mxu0
      %3579 = vmatprep.subr.mxu0 %v3416
      %3580 = vmatpush1.msra.mxu0 %v3415
      %3581 = vmatprep.subr.mxu0 %v3419
      %3582 = vmatpush1.msra.mxu0 %v3418
      %3583 = vmatprep.subr.mxu0 %v3422
      %3584 = vmatpush1.msra.mxu0 %v3421
      %3585 = vmatprep.subr.mxu0 %v3425
      %3586 = vmatpush1.msra.mxu0 %v3424
      %3587 = vmatprep.subr.mxu0 %v3428
      %3588 = vmatpush1.msra.mxu0 %v3427
      %3589 = vmatprep.subr.mxu0 %v3431
      %3590 = vmatpush1.msra.mxu0 %v3430
      %3591 = vmatprep.subr.mxu0 %v3434
      %3592 = vmatpush1.msra.mxu0 %v3433
      %3593 = vmatprep.subr.mxu0 %v3437
      %3594 = vmatpush1.msra.mxu0 %v3436
      %3595 = vmatprep.subr.mxu0 %v3440
      %3596 = vmatpush1.msra.mxu0 %v3439
      %3597 = vmatprep.subr.mxu0 %v3443
      %3598 = vmatpush1.msra.mxu0 %v3442
      %3599 = vmatprep.subr.mxu0 %v3446
      %3600 = vmatpush1.msra.mxu0 %v3445
      %3601 = vmatprep.subr.mxu0 %v3449
      %3602 = vmatpush1.msra.mxu0 %v3448
      %3603 = vmatprep.subr.mxu0 %v3452
      %3604 = vmatpush1.msra.mxu0 %v3451
      %3605 = vmatprep.subr.mxu0 %v3455
      %3606 = vmatpush1.msra.mxu0 %v3454
      %3607 = vmatprep.subr.mxu0 %v3458
      %3608 = vmatpush1.msra.mxu0 %v3457
      %3609 = vmatprep.subr.mxu0 %v3461
      %3610 = vmatpush1.msra.mxu0 %v3460
      %3611 = vmatprep.subr.mxu0 %v3464
      %3612 = vmatpush1.msra.mxu0 %v3463
      %3613 = vmatprep.subr.mxu0 %v3467
      %3614 = vmatpush1.msra.mxu0 %v3466
      %3615 = vmatprep.subr.mxu0 %v3470
      %3616 = vmatpush1.msra.mxu0 %v3469
      %3617 = vmatprep.subr.mxu0 %v3473
      %3618 = vmatpush1.msra.mxu0 %v3472
      %3619 = vmatprep.subr.mxu0 %v3476
      %3620 = vmatpush1.msra.mxu0 %v3475
      %3621 = vmatprep.subr.mxu0 %v3479
      %3622 = vmatpush1.msra.mxu0 %v3478
      %3623 = vmatprep.subr.mxu0 %v3482
      %3624 = vmatpush1.msra.mxu0 %v3481
      %3625 = vmatprep.subr.mxu0 %v3485
      %3626 = vmatpush1.msra.mxu0 %v3484
      %3627 = vmatprep.subr.mxu0 0.0
      %3628 = vmatpush1.msra.mxu0 0.0
      %3629 = vmatprep.subr.mxu0 0.0
      %3630 = vmatpush1.msra.mxu0 0.0
      %3631 = vmatprep.subr.mxu0 0.0
      %3632 = vmatpush1.msra.mxu0 0.0
      %3633 = vmatprep.subr.mxu0 0.0
      %3634 = vmatpush1.msra.mxu0 0.0
      %3635 = vmatprep.subr.mxu0 0.0
      %3636 = vmatpush1.msra.mxu0 0.0
      %3637 = vmatprep.subr.mxu0 0.0
      %3638 = vmatpush1.msra.mxu0 0.0
      %3639 = vmatprep.subr.mxu0 0.0
      %3640 = vmatpush1.msra.mxu0 0.0
      %3641 = vmatprep.subr.mxu0 0.0
      %3642 = vmatpush1.msra.mxu0 0.0
      %3643 = vmatprep.mubr.f32.mxu0 %v3506
      %3644 = vmatmul.mubr.f32.gmra.mrb[0].mxu0 %v3315
      %v3645 = vpop.f32.mrb[0].mxu0
      %v3646 = vadd.f32 %v3575, %v3645
      %v3647 = vpop.f32.mrb[0].mxu0
      %v3648 = vadd.f32 %v3577, %v3647
      %3649 = vdwg.mxu0
      %3650 = vmatprep.subr.mxu0 0.0
      %3651 = vmatpush1.msra.mxu0 %v3321
      %3652 = vmatprep.subr.mxu0 0.0
      %3653 = vmatpush1.msra.mxu0 %v3324
      %3654 = vmatprep.subr.mxu0 0.0
      %3655 = vmatpush1.msra.mxu0 %v3327
      %3656 = vmatprep.subr.mxu0 0.0
      %3657 = vmatpush1.msra.mxu0 %v3330
      %3658 = vmatprep.subr.mxu0 0.0
      %3659 = vmatpush1.msra.mxu0 %v3333
      %3660 = vmatprep.subr.mxu0 0.0
      %3661 = vmatpush1.msra.mxu0 %v3336
      %3662 = vmatprep.subr.mxu0 0.0
      %3663 = vmatpush1.msra.mxu0 %v3339
      %3664 = vmatprep.subr.mxu0 0.0
      %3665 = vmatpush1.msra.mxu0 %v3342
      %3666 = vmatprep.subr.mxu0 0.0
      %3667 = vmatpush1.msra.mxu0 %v3345
      %3668 = vmatprep.subr.mxu0 0.0
      %3669 = vmatpush1.msra.mxu0 %v3348
      %3670 = vmatprep.subr.mxu0 0.0
      %3671 = vmatpush1.msra.mxu0 %v3351
      %3672 = vmatprep.subr.mxu0 0.0
      %3673 = vmatpush1.msra.mxu0 %v3354
      %3674 = vmatprep.subr.mxu0 0.0
      %3675 = vmatpush1.msra.mxu0 %v3357
      %3676 = vmatprep.subr.mxu0 0.0
      %3677 = vmatpush1.msra.mxu0 %v3360
      %3678 = vmatprep.subr.mxu0 0.0
      %3679 = vmatpush1.msra.mxu0 %v3363
      %3680 = vmatprep.subr.mxu0 0.0
      %3681 = vmatpush1.msra.mxu0 %v3366
      %3682 = vmatprep.subr.mxu0 0.0
      %3683 = vmatpush1.msra.mxu0 %v3369
      %3684 = vmatprep.subr.mxu0 0.0
      %3685 = vmatpush1.msra.mxu0 %v3372
      %3686 = vmatprep.subr.mxu0 0.0
      %3687 = vmatpush1.msra.mxu0 %v3375
      %3688 = vmatprep.subr.mxu0 0.0
      %3689 = vmatpush1.msra.mxu0 %v3378
      %3690 = vmatprep.subr.mxu0 0.0
      %3691 = vmatpush1.msra.mxu0 %v3381
      %3692 = vmatprep.subr.mxu0 0.0
      %3693 = vmatpush1.msra.mxu0 %v3384
      %3694 = vmatprep.subr.mxu0 0.0
      %3695 = vmatpush1.msra.mxu0 %v3387
      %3696 = vmatprep.subr.mxu0 0.0
      %3697 = vmatpush1.msra.mxu0 %v3390
      %3698 = vmatprep.subr.mxu0 0.0
      %3699 = vmatpush1.msra.mxu0 %v3393
      %3700 = vmatprep.subr.mxu0 0.0
      %3701 = vmatpush1.msra.mxu0 %v3396
      %3702 = vmatprep.subr.mxu0 0.0
      %3703 = vmatpush1.msra.mxu0 %v3399
      %3704 = vmatprep.subr.mxu0 0.0
      %3705 = vmatpush1.msra.mxu0 %v3402
      %3706 = vmatprep.subr.mxu0 0.0
      %3707 = vmatpush1.msra.mxu0 %v3405
      %3708 = vmatprep.subr.mxu0 0.0
      %3709 = vmatpush1.msra.mxu0 %v3408
      %3710 = vmatprep.subr.mxu0 0.0
      %3711 = vmatpush1.msra.mxu0 %v3411
      %3712 = vmatprep.subr.mxu0 0.0
      %3713 = vmatpush1.msra.mxu0 %v3414
      %3714 = vmatprep.mubr.f32.mxu0 %v3175
      %3715 = vmatmul.mubr.f32.gmra.mrb[0].mxu0 %v3173
      %v3716 = vpop.f32.mrb[0].mxu0
      %v3717 = vadd.f32 %v3500, %v3716
      %v3718 = vpop.f32.mrb[0].mxu0
      %3719 = vdwg.mxu0
      %3720 = vmatprep.subr.mxu0 0.0
      %3721 = vmatpush1.msra.mxu0 %v3417
      %3722 = vmatprep.subr.mxu0 0.0
      %3723 = vmatpush1.msra.mxu0 %v3420
      %3724 = vmatprep.subr.mxu0 0.0
      %3725 = vmatpush1.msra.mxu0 %v3423
      %3726 = vmatprep.subr.mxu0 0.0
      %3727 = vmatpush1.msra.mxu0 %v3426
      %3728 = vmatprep.subr.mxu0 0.0
      %3729 = vmatpush1.msra.mxu0 %v3429
      %3730 = vmatprep.subr.mxu0 0.0
      %3731 = vmatpush1.msra.mxu0 %v3432
      %3732 = vmatprep.subr.mxu0 0.0
      %3733 = vmatpush1.msra.mxu0 %v3435
      %3734 = vmatprep.subr.mxu0 0.0
      %3735 = vmatpush1.msra.mxu0 %v3438
      %3736 = vmatprep.subr.mxu0 0.0
      %3737 = vmatpush1.msra.mxu0 %v3441
      %3738 = vmatprep.subr.mxu0 0.0
      %3739 = vmatpush1.msra.mxu0 %v3444
      %3740 = vmatprep.subr.mxu0 0.0
      %3741 = vmatpush1.msra.mxu0 %v3447
      %3742 = vmatprep.subr.mxu0 0.0
      %3743 = vmatpush1.msra.mxu0 %v3450
      %3744 = vmatprep.subr.mxu0 0.0
      %3745 = vmatpush1.msra.mxu0 %v3453
      %3746 = vmatprep.subr.mxu0 0.0
      %3747 = vmatpush1.msra.mxu0 %v3456
      %3748 = vmatprep.subr.mxu0 0.0
      %3749 = vmatpush1.msra.mxu0 %v3459
      %3750 = vmatprep.subr.mxu0 0.0
      %3751 = vmatpush1.msra.mxu0 %v3462
      %3752 = vmatprep.subr.mxu0 0.0
      %3753 = vmatpush1.msra.mxu0 %v3465
      %3754 = vmatprep.subr.mxu0 0.0
      %3755 = vmatpush1.msra.mxu0 %v3468
      %3756 = vmatprep.subr.mxu0 0.0
      %3757 = vmatpush1.msra.mxu0 %v3471
      %3758 = vmatprep.subr.mxu0 0.0
      %3759 = vmatpush1.msra.mxu0 %v3474
      %3760 = vmatprep.subr.mxu0 0.0
      %3761 = vmatpush1.msra.mxu0 %v3477
      %3762 = vmatprep.subr.mxu0 0.0
      %3763 = vmatpush1.msra.mxu0 %v3480
      %3764 = vmatprep.subr.mxu0 0.0
      %3765 = vmatpush1.msra.mxu0 %v3483
      %3766 = vmatprep.subr.mxu0 0.0
      %3767 = vmatpush1.msra.mxu0 %v3486
      %3768 = vmatprep.subr.mxu0 0.0
      %3769 = vmatpush1.msra.mxu0 0.0
      %3770 = vmatprep.subr.mxu0 0.0
      %3771 = vmatpush1.msra.mxu0 0.0
      %3772 = vmatprep.subr.mxu0 0.0
      %3773 = vmatpush1.msra.mxu0 0.0
      %3774 = vmatprep.subr.mxu0 0.0
      %3775 = vmatpush1.msra.mxu0 0.0
      %3776 = vmatprep.subr.mxu0 0.0
      %3777 = vmatpush1.msra.mxu0 0.0
      %3778 = vmatprep.subr.mxu0 0.0
      %3779 = vmatpush1.msra.mxu0 0.0
      %3780 = vmatprep.subr.mxu0 0.0
      %3781 = vmatpush1.msra.mxu0 0.0
      %3782 = vmatprep.subr.mxu0 0.0
      %3783 = vmatpush1.msra.mxu0 0.0
      %3784 = vmatprep.mubr.f32.mxu0 %v3506
      %3785 = vmatmul.mubr.f32.gmra.mrb[0].mxu0 %v3315
      %v3786 = vpop.f32.mrb[0].mxu0
      %v3787 = vadd.f32 %v3717, %v3786
      %v3788 = vpop.f32.mrb[0].mxu0
      %3789 = vdwg.mxu0
      %v3790 = vmax.f32 %v3646, 0.0
      %v3791 = vmax.f32 %v3648, 0.0
      %v3792 = vmax.f32 %v3787, 0.0
      %v3793 = vld [vmem:[%s21] sm:$0xff]
      %v3794 = vld [vmem:[%s21 + $0x8] sm:$0xff]
      %v3795 = vld [vmem:[%s21 + $0x10] sm:$0xff]
      %v3796 = vld [vmem:[%s21 + $0x18] sm:$0xff]
      %v3797 = vld [vmem:[%s21 + $0x20] sm:$0xff]
      %v3798 = vld [vmem:[%s21 + $0x28] sm:$0xff]
      %v3799 = vld [vmem:[%s21 + $0x30] sm:$0xff]
      %v3800 = vld [vmem:[%s21 + $0x38] sm:$0xff]
      %v3801 = vld [vmem:[%s21 + $0x40] sm:$0xff]
      %v3802 = vld [vmem:[%s21 + $0x48] sm:$0xff]
      %v3803 = vld [vmem:[%s21 + $0x50] sm:$0xff]
      %v3804 = vld [vmem:[%s21 + $0x58] sm:$0xff]
      %v3805 = vld [vmem:[%s21 + $0x60] sm:$0xff]
      %v3806 = vld [vmem:[%s21 + $0x68] sm:$0xff]
      %v3807 = vld [vmem:[%s21 + $0x70] sm:$0xff]
      %v3808 = vld [vmem:[%s21 + $0x78] sm:$0xff]
      %v3809 = vld [vmem:[%s21 + $0x80] sm:$0xff]
      %v3810 = vld [vmem:[%s21 + $0x88] sm:$0xff]
      %v3811 = vld [vmem:[%s21 + $0x90] sm:$0xff]
      %v3812 = vld [vmem:[%s21 + $0x98] sm:$0xff]
      %v3813 = vld [vmem:[%s21 + $0xa0] sm:$0xff]
      %v3814 = vld [vmem:[%s21 + $0xa8] sm:$0xff]
      %v3815 = vld [vmem:[%s21 + $0xb0] sm:$0xff]
      %v3816 = vld [vmem:[%s21 + $0xb8] sm:$0xff]
      %v3817 = vld [vmem:[%s21 + $0xc0] sm:$0xff]
      %v3818 = vld [vmem:[%s21 + $0xc8] sm:$0xff]
      %v3819 = vld [vmem:[%s21 + $0xd0] sm:$0xff]
      %v3820 = vld [vmem:[%s21 + $0xd8] sm:$0xff]
      %v3821 = vld [vmem:[%s21 + $0xe0] sm:$0xff]
      %v3822 = vld [vmem:[%s21 + $0xe8] sm:$0xff]
      %v3823 = vld [vmem:[%s21 + $0xf0] sm:$0xff]
      %v3824 = vld [vmem:[%s21 + $0xf8] sm:$0xff]
      %v3825 = vld [vmem:[%s21 + $0x100] sm:$0xff]
      %v3826 = vld [vmem:[%s21 + $0x108] sm:$0xff]
      %v3827 = vld [vmem:[%s21 + $0x110] sm:$0xff]
      %v3828 = vld [vmem:[%s21 + $0x118] sm:$0xff]
      %v3829 = vld [vmem:[%s21 + $0x120] sm:$0xff]
      %v3830 = vld [vmem:[%s21 + $0x128] sm:$0xff]
      %v3831 = vld [vmem:[%s21 + $0x130] sm:$0xff]
      %v3832 = vld [vmem:[%s21 + $0x138] sm:$0xff]
      %v3833 = vld [vmem:[%s21 + $0x140] sm:$0xff]
      %v3834 = vld [vmem:[%s21 + $0x148] sm:$0xff]
      %v3835 = vld [vmem:[%s21 + $0x150] sm:$0xff]
      %v3836 = vld [vmem:[%s21 + $0x158] sm:$0xff]
      %v3837 = vld [vmem:[%s21 + $0x160] sm:$0xff]
      %v3838 = vld [vmem:[%s21 + $0x168] sm:$0xff]
      %v3839 = vld [vmem:[%s21 + $0x170] sm:$0xff]
      %v3840 = vld [vmem:[%s21 + $0x178] sm:$0xff]
      %v3841 = vld [vmem:[%s21 + $0x180] sm:$0xff]
      %v3842 = vld [vmem:[%s21 + $0x188] sm:$0xff]
      %v3843 = vld [vmem:[%s21 + $0x190] sm:$0xff]
      %v3844 = vld [vmem:[%s21 + $0x198] sm:$0xff]
      %v3845 = vld [vmem:[%s21 + $0x1a0] sm:$0xff]
      %v3846 = vld [vmem:[%s21 + $0x1a8] sm:$0xff]
      %v3847 = vld [vmem:[%s21 + $0x1b0] sm:$0xff]
      %v3848 = vld [vmem:[%s21 + $0x1b8] sm:$0xff]
      %v3849 = vld [vmem:[%s21 + $0x1c0] sm:$0xff]
      %v3850 = vld [vmem:[%s21 + $0x1c8] sm:$0xff]
      %v3851 = vld [vmem:[%s21 + $0x1d0] sm:$0xff]
      %v3852 = vld [vmem:[%s21 + $0x1d8] sm:$0xff]
      %v3853 = vld [vmem:[%s21 + $0x1e0] sm:$0xff]
      %v3854 = vld [vmem:[%s21 + $0x1e8] sm:$0xff]
      %v3855 = vld [vmem:[%s21 + $0x1f0] sm:$0xff]
      %v3856 = vld [vmem:[%s21 + $0x1f8] sm:$0xff]
      %v3857 = vld [vmem:[%s21 + $0x200] sm:$0xff]
      %v3858 = vld [vmem:[%s21 + $0x208] sm:$0xff]
      %v3859 = vld [vmem:[%s21 + $0x210] sm:$0xff]
      %v3860 = vld [vmem:[%s21 + $0x218] sm:$0xff]
      %v3861 = vld [vmem:[%s21 + $0x220] sm:$0xff]
      %v3862 = vld [vmem:[%s21 + $0x228] sm:$0xff]
      %v3863 = vld [vmem:[%s21 + $0x230] sm:$0xff]
      %v3864 = vld [vmem:[%s21 + $0x238] sm:$0xff]
      %v3865 = vld [vmem:[%s21 + $0x240] sm:$0xff]
      %v3866 = vld [vmem:[%s21 + $0x248] sm:$0xff]
      %v3867 = vld [vmem:[%s21 + $0x250] sm:$0xff]
      %v3868 = vld [vmem:[%s21 + $0x258] sm:$0xff]
      %v3869 = vld [vmem:[%s21 + $0x260] sm:$0xff]
      %v3870 = vld [vmem:[%s21 + $0x268] sm:$0xff]
      %v3871 = vld [vmem:[%s21 + $0x270] sm:$0xff]
      %v3872 = vld [vmem:[%s21 + $0x278] sm:$0xff]
      %v3873 = vld [vmem:[%s21 + $0x280] sm:$0xff]
      %v3874 = vld [vmem:[%s21 + $0x288] sm:$0xff]
      %v3875 = vld [vmem:[%s21 + $0x290] sm:$0xff]
      %v3876 = vld [vmem:[%s21 + $0x298] sm:$0xff]
      %v3877 = vld [vmem:[%s21 + $0x2a0] sm:$0xff]
      %v3878 = vld [vmem:[%s21 + $0x2a8] sm:$0xff]
      %v3879 = vld [vmem:[%s21 + $0x2b0] sm:$0xff]
      %v3880 = vld [vmem:[%s21 + $0x2b8] sm:$0xff]
      %v3881 = vld [vmem:[%s21 + $0x2c0] sm:$0xff]
      %v3882 = vld [vmem:[%s21 + $0x2c8] sm:$0xff]
      %v3883 = vld [vmem:[%s21 + $0x2d0] sm:$0xff]
      %v3884 = vld [vmem:[%s21 + $0x2d8] sm:$0xff]
      %v3885 = vld [vmem:[%s21 + $0x2e0] sm:$0xff]
      %v3886 = vld [vmem:[%s21 + $0x2e8] sm:$0xff]
      %v3887 = vld [vmem:[%s21 + $0x2f0] sm:$0xff]
      %v3888 = vld [vmem:[%s21 + $0x2f8] sm:$0xff]
      %v3889 = vld [vmem:[%s21 + $0x300] sm:$0xff]
      %v3890 = vld [vmem:[%s21 + $0x308] sm:$0xff]
      %v3891 = vld [vmem:[%s21 + $0x310] sm:$0xff]
      %v3892 = vld [vmem:[%s21 + $0x318] sm:$0xff]
      %v3893 = vld [vmem:[%s21 + $0x320] sm:$0xff]
      %v3894 = vld [vmem:[%s21 + $0x328] sm:$0xff]
      %v3895 = vld [vmem:[%s21 + $0x330] sm:$0xff]
      %v3896 = vld [vmem:[%s21 + $0x338] sm:$0xff]
      %v3897 = vld [vmem:[%s21 + $0x340] sm:$0xff]
      %v3898 = vld [vmem:[%s21 + $0x348] sm:$0xff]
      %v3899 = vld [vmem:[%s21 + $0x350] sm:$0xff]
      %v3900 = vld [vmem:[%s21 + $0x358] sm:$0xff]
      %v3901 = vld [vmem:[%s21 + $0x360] sm:$0xff]
      %v3902 = vld [vmem:[%s21 + $0x368] sm:$0xff]
      %v3903 = vld [vmem:[%s21 + $0x370] sm:$0xff]
      %v3904 = vld [vmem:[%s21 + $0x378] sm:$0xff]
      %v3905 = vld [vmem:[%s21 + $0x380] sm:$0xff]
      %v3906 = vld [vmem:[%s21 + $0x388] sm:$0xff]
      %v3907 = vld [vmem:[%s21 + $0x390] sm:$0xff]
      %v3908 = vld [vmem:[%s21 + $0x398] sm:$0xff]
      %v3909 = vld [vmem:[%s21 + $0x3a0] sm:$0xff]
      %v3910 = vld [vmem:[%s21 + $0x3a8] sm:$0xff]
      %v3911 = vld [vmem:[%s21 + $0x3b0] sm:$0xff]
      %v3912 = vld [vmem:[%s21 + $0x3b8] sm:$0xff]
      %v3913 = vld [vmem:[%s21 + $0x3c0] sm:$0xff]
      %v3914 = vld [vmem:[%s21 + $0x3c8] sm:$0xff]
      %v3915 = vld [vmem:[%s21 + $0x3d0] sm:$0xff]
      %v3916 = vld [vmem:[%s21 + $0x3d8] sm:$0xff]
      %v3917 = vld [vmem:[%s21 + $0x3e0] sm:$0xff]
      %v3918 = vld [vmem:[%s21 + $0x3e8] sm:$0xff]
      %v3919 = vld [vmem:[%s21 + $0x3f0] sm:$0xff]
      %v3920 = vld [vmem:[%s21 + $0x3f8] sm:$0xff]
      %v3921 = vld [vmem:[%s21 + $0x400] sm:$0xff]
      %v3922 = vld [vmem:[%s21 + $0x408] sm:$0xff]
      %v3923 = vld [vmem:[%s21 + $0x410] sm:$0xff]
      %v3924 = vld [vmem:[%s21 + $0x418] sm:$0xff]
      %v3925 = vld [vmem:[%s21 + $0x420] sm:$0xff]
      %v3926 = vld [vmem:[%s21 + $0x428] sm:$0xff]
      %v3927 = vld [vmem:[%s21 + $0x430] sm:$0xff]
      %v3928 = vld [vmem:[%s21 + $0x438] sm:$0xff]
      %v3929 = vld [vmem:[%s21 + $0x440] sm:$0xff]
      %v3930 = vld [vmem:[%s21 + $0x448] sm:$0xff]
      %v3931 = vld [vmem:[%s21 + $0x450] sm:$0xff]
      %v3932 = vld [vmem:[%s21 + $0x458] sm:$0xff]
      %v3933 = vld [vmem:[%s21 + $0x460] sm:$0xff]
      %v3934 = vld [vmem:[%s21 + $0x468] sm:$0xff]
      %v3935 = vld [vmem:[%s21 + $0x470] sm:$0xff]
      %v3936 = vld [vmem:[%s21 + $0x478] sm:$0xff]
      %v3937 = vld [vmem:[%s21 + $0x480] sm:$0xff]
      %v3938 = vld [vmem:[%s21 + $0x488] sm:$0xff]
      %v3939 = vld [vmem:[%s21 + $0x490] sm:$0xff]
      %v3940 = vld [vmem:[%s21 + $0x498] sm:$0xff]
      %v3941 = vld [vmem:[%s21 + $0x4a0] sm:$0xff]
      %v3942 = vld [vmem:[%s21 + $0x4a8] sm:$0xff]
      %v3943 = vld [vmem:[%s21 + $0x4b0] sm:$0xff]
      %v3944 = vld [vmem:[%s21 + $0x4b8] sm:$0xff]
      %v3945 = vld [vmem:[%s21 + $0x4c0] sm:$0xff]
      %v3946 = vld [vmem:[%s21 + $0x4c8] sm:$0xff]
      %v3947 = vld [vmem:[%s21 + $0x4d0] sm:$0xff]
      %v3948 = vld [vmem:[%s21 + $0x4d8] sm:$0xff]
      %v3949 = vld [vmem:[%s21 + $0x4e0] sm:$0xff]
      %v3950 = vld [vmem:[%s21 + $0x4e8] sm:$0xff]
      %v3951 = vld [vmem:[%s21 + $0x4f0] sm:$0xff]
      %v3952 = vld [vmem:[%s21 + $0x4f8] sm:$0xff]
      %v3953 = vld [vmem:[%s21 + $0x500] sm:$0xff]
      %v3954 = vld [vmem:[%s21 + $0x508] sm:$0xff]
      %v3955 = vld [vmem:[%s21 + $0x510] sm:$0xff]
      %v3956 = vld [vmem:[%s21 + $0x518] sm:$0xff]
      %v3957 = vld [vmem:[%s21 + $0x520] sm:$0xff]
      %v3958 = vld [vmem:[%s21 + $0x528] sm:$0xff]
      %v3959 = vld [vmem:[%s21 + $0x530] sm:$0xff]
      %v3960 = vld [vmem:[%s21 + $0x538] sm:$0xff]
      %3961 = vmatprep.subr.mxu0 %v3794
      %3962 = vmatpush1.msra.mxu0 %v3793
      %3963 = vmatprep.subr.mxu0 %v3797
      %3964 = vmatpush1.msra.mxu0 %v3796
      %3965 = vmatprep.subr.mxu0 %v3800
      %3966 = vmatpush1.msra.mxu0 %v3799
      %3967 = vmatprep.subr.mxu0 %v3803
      %3968 = vmatpush1.msra.mxu0 %v3802
      %3969 = vmatprep.subr.mxu0 %v3806
      %3970 = vmatpush1.msra.mxu0 %v3805
      %3971 = vmatprep.subr.mxu0 %v3809
      %3972 = vmatpush1.msra.mxu0 %v3808
      %3973 = vmatprep.subr.mxu0 %v3812
      %3974 = vmatpush1.msra.mxu0 %v3811
      %3975 = vmatprep.subr.mxu0 %v3815
      %3976 = vmatpush1.msra.mxu0 %v3814
      %3977 = vmatprep.subr.mxu0 %v3818
      %3978 = vmatpush1.msra.mxu0 %v3817
      %3979 = vmatprep.subr.mxu0 %v3821
      %3980 = vmatpush1.msra.mxu0 %v3820
      %3981 = vmatprep.subr.mxu0 %v3824
      %3982 = vmatpush1.msra.mxu0 %v3823
      %3983 = vmatprep.subr.mxu0 %v3827
      %3984 = vmatpush1.msra.mxu0 %v3826
      %3985 = vmatprep.subr.mxu0 %v3830
      %3986 = vmatpush1.msra.mxu0 %v3829
      %3987 = vmatprep.subr.mxu0 %v3833
      %3988 = vmatpush1.msra.mxu0 %v3832
      %3989 = vmatprep.subr.mxu0 %v3836
      %3990 = vmatpush1.msra.mxu0 %v3835
      %3991 = vmatprep.subr.mxu0 %v3839
      %3992 = vmatpush1.msra.mxu0 %v3838
      %3993 = vmatprep.subr.mxu0 %v3842
      %3994 = vmatpush1.msra.mxu0 %v3841
      %3995 = vmatprep.subr.mxu0 %v3845
      %3996 = vmatpush1.msra.mxu0 %v3844
      %3997 = vmatprep.subr.mxu0 %v3848
      %3998 = vmatpush1.msra.mxu0 %v3847
      %3999 = vmatprep.subr.mxu0 %v3851
      %4000 = vmatpush1.msra.mxu0 %v3850
      %4001 = vmatprep.subr.mxu0 %v3854
      %4002 = vmatpush1.msra.mxu0 %v3853
      %4003 = vmatprep.subr.mxu0 %v3857
      %4004 = vmatpush1.msra.mxu0 %v3856
      %4005 = vmatprep.subr.mxu0 %v3860
      %4006 = vmatpush1.msra.mxu0 %v3859
      %4007 = vmatprep.subr.mxu0 %v3863
      %4008 = vmatpush1.msra.mxu0 %v3862
      %4009 = vmatprep.subr.mxu0 %v3866
      %4010 = vmatpush1.msra.mxu0 %v3865
      %4011 = vmatprep.subr.mxu0 %v3869
      %4012 = vmatpush1.msra.mxu0 %v3868
      %4013 = vmatprep.subr.mxu0 %v3872
      %4014 = vmatpush1.msra.mxu0 %v3871
      %4015 = vmatprep.subr.mxu0 %v3875
      %4016 = vmatpush1.msra.mxu0 %v3874
      %4017 = vmatprep.subr.mxu0 %v3878
      %4018 = vmatpush1.msra.mxu0 %v3877
      %4019 = vmatprep.subr.mxu0 %v3881
      %4020 = vmatpush1.msra.mxu0 %v3880
      %4021 = vmatprep.subr.mxu0 %v3884
      %4022 = vmatpush1.msra.mxu0 %v3883
      %4023 = vmatprep.subr.mxu0 %v3887
      %4024 = vmatpush1.msra.mxu0 %v3886
      %4025 = vmatprep.mubr.f32.mxu0 %v3175
      %4026 = vmatmul.mubr.f32.gmra.mrb[0].mxu0 %v3173
      %v4027 = vpop.f32.mrb[0].mxu0
      %v4028 = vadd.f32 %v3492, %v4027
      %v4029 = vpop.f32.mrb[0].mxu0
      %v4030 = vadd.f32 %v3496, %v4029
      %4031 = vdwg.mxu0
      %4032 = vmatprep.subr.mxu0 %v3890
      %4033 = vmatpush1.msra.mxu0 %v3889
      %4034 = vmatprep.subr.mxu0 %v3893
      %4035 = vmatpush1.msra.mxu0 %v3892
      %4036 = vmatprep.subr.mxu0 %v3896
      %4037 = vmatpush1.msra.mxu0 %v3895
      %4038 = vmatprep.subr.mxu0 %v3899
      %4039 = vmatpush1.msra.mxu0 %v3898
      %4040 = vmatprep.subr.mxu0 %v3902
      %4041 = vmatpush1.msra.mxu0 %v3901
      %4042 = vmatprep.subr.mxu0 %v3905
      %4043 = vmatpush1.msra.mxu0 %v3904
      %4044 = vmatprep.subr.mxu0 %v3908
      %4045 = vmatpush1.msra.mxu0 %v3907
      %4046 = vmatprep.subr.mxu0 %v3911
      %4047 = vmatpush1.msra.mxu0 %v3910
      %4048 = vmatprep.subr.mxu0 %v3914
      %4049 = vmatpush1.msra.mxu0 %v3913
      %4050 = vmatprep.subr.mxu0 %v3917
      %4051 = vmatpush1.msra.mxu0 %v3916
      %4052 = vmatprep.subr.mxu0 %v3920
      %4053 = vmatpush1.msra.mxu0 %v3919
      %4054 = vmatprep.subr.mxu0 %v3923
      %4055 = vmatpush1.msra.mxu0 %v3922
      %4056 = vmatprep.subr.mxu0 %v3926
      %4057 = vmatpush1.msra.mxu0 %v3925
      %4058 = vmatprep.subr.mxu0 %v3929
      %4059 = vmatpush1.msra.mxu0 %v3928
      %4060 = vmatprep.subr.mxu0 %v3932
      %4061 = vmatpush1.msra.mxu0 %v3931
      %4062 = vmatprep.subr.mxu0 %v3935
      %4063 = vmatpush1.msra.mxu0 %v3934
      %4064 = vmatprep.subr.mxu0 %v3938
      %4065 = vmatpush1.msra.mxu0 %v3937
      %4066 = vmatprep.subr.mxu0 %v3941
      %4067 = vmatpush1.msra.mxu0 %v3940
      %4068 = vmatprep.subr.mxu0 %v3944
      %4069 = vmatpush1.msra.mxu0 %v3943
      %4070 = vmatprep.subr.mxu0 %v3947
      %4071 = vmatpush1.msra.mxu0 %v3946
      %4072 = vmatprep.subr.mxu0 %v3950
      %4073 = vmatpush1.msra.mxu0 %v3949
      %4074 = vmatprep.subr.mxu0 %v3953
      %4075 = vmatpush1.msra.mxu0 %v3952
      %4076 = vmatprep.subr.mxu0 %v3956
      %4077 = vmatpush1.msra.mxu0 %v3955
      %4078 = vmatprep.subr.mxu0 %v3959
      %4079 = vmatpush1.msra.mxu0 %v3958
      %4080 = vmatprep.subr.mxu0 0.0
      %4081 = vmatpush1.msra.mxu0 0.0
      %4082 = vmatprep.subr.mxu0 0.0
      %4083 = vmatpush1.msra.mxu0 0.0
      %4084 = vmatprep.subr.mxu0 0.0
      %4085 = vmatpush1.msra.mxu0 0.0
      %4086 = vmatprep.subr.mxu0 0.0
      %4087 = vmatpush1.msra.mxu0 0.0
      %4088 = vmatprep.subr.mxu0 0.0
      %4089 = vmatpush1.msra.mxu0 0.0
      %4090 = vmatprep.subr.mxu0 0.0
      %4091 = vmatpush1.msra.mxu0 0.0
      %4092 = vmatprep.subr.mxu0 0.0
      %4093 = vmatpush1.msra.mxu0 0.0
      %4094 = vmatprep.subr.mxu0 0.0
      %4095 = vmatpush1.msra.mxu0 0.0
      %4096 = vmatprep.mubr.f32.mxu0 %v3506
      %4097 = vmatmul.mubr.f32.gmra.mrb[0].mxu0 %v3315
      %v4098 = vpop.f32.mrb[0].mxu0
      %v4099 = vadd.f32 %v4028, %v4098
      %v4100 = vpop.f32.mrb[0].mxu0
      %v4101 = vadd.f32 %v4030, %v4100
      %4102 = vdwg.mxu0
      %4103 = vmatprep.subr.mxu0 0.0
      %4104 = vmatpush1.msra.mxu0 %v3795
      %4105 = vmatprep.subr.mxu0 0.0
      %4106 = vmatpush1.msra.mxu0 %v3798
      %4107 = vmatprep.subr.mxu0 0.0
      %4108 = vmatpush1.msra.mxu0 %v3801
      %4109 = vmatprep.subr.mxu0 0.0
      %4110 = vmatpush1.msra.mxu0 %v3804
      %4111 = vmatprep.subr.mxu0 0.0
      %4112 = vmatpush1.msra.mxu0 %v3807
      %4113 = vmatprep.subr.mxu0 0.0
      %4114 = vmatpush1.msra.mxu0 %v3810
      %4115 = vmatprep.subr.mxu0 0.0
      %4116 = vmatpush1.msra.mxu0 %v3813
      %4117 = vmatprep.subr.mxu0 0.0
      %4118 = vmatpush1.msra.mxu0 %v3816
      %4119 = vmatprep.subr.mxu0 0.0
      %4120 = vmatpush1.msra.mxu0 %v3819
      %4121 = vmatprep.subr.mxu0 0.0
      %4122 = vmatpush1.msra.mxu0 %v3822
      %4123 = vmatprep.subr.mxu0 0.0
      %4124 = vmatpush1.msra.mxu0 %v3825
      %4125 = vmatprep.subr.mxu0 0.0
      %4126 = vmatpush1.msra.mxu0 %v3828
      %4127 = vmatprep.subr.mxu0 0.0
      %4128 = vmatpush1.msra.mxu0 %v3831
      %4129 = vmatprep.subr.mxu0 0.0
      %4130 = vmatpush1.msra.mxu0 %v3834
      %4131 = vmatprep.subr.mxu0 0.0
      %4132 = vmatpush1.msra.mxu0 %v3837
      %4133 = vmatprep.subr.mxu0 0.0
      %4134 = vmatpush1.msra.mxu0 %v3840
      %4135 = vmatprep.subr.mxu0 0.0
      %4136 = vmatpush1.msra.mxu0 %v3843
      %4137 = vmatprep.subr.mxu0 0.0
      %4138 = vmatpush1.msra.mxu0 %v3846
      %4139 = vmatprep.subr.mxu0 0.0
      %4140 = vmatpush1.msra.mxu0 %v3849
      %4141 = vmatprep.subr.mxu0 0.0
      %4142 = vmatpush1.msra.mxu0 %v3852
      %4143 = vmatprep.subr.mxu0 0.0
      %4144 = vmatpush1.msra.mxu0 %v3855
      %4145 = vmatprep.subr.mxu0 0.0
      %4146 = vmatpush1.msra.mxu0 %v3858
      %4147 = vmatprep.subr.mxu0 0.0
      %4148 = vmatpush1.msra.mxu0 %v3861
      %4149 = vmatprep.subr.mxu0 0.0
      %4150 = vmatpush1.msra.mxu0 %v3864
      %4151 = vmatprep.subr.mxu0 0.0
      %4152 = vmatpush1.msra.mxu0 %v3867
      %4153 = vmatprep.subr.mxu0 0.0
      %4154 = vmatpush1.msra.mxu0 %v3870
      %4155 = vmatprep.subr.mxu0 0.0
      %4156 = vmatpush1.msra.mxu0 %v3873
      %4157 = vmatprep.subr.mxu0 0.0
      %4158 = vmatpush1.msra.mxu0 %v3876
      %4159 = vmatprep.subr.mxu0 0.0
      %4160 = vmatpush1.msra.mxu0 %v3879
      %4161 = vmatprep.subr.mxu0 0.0
      %4162 = vmatpush1.msra.mxu0 %v3882
      %4163 = vmatprep.subr.mxu0 0.0
      %4164 = vmatpush1.msra.mxu0 %v3885
      %4165 = vmatprep.subr.mxu0 0.0
      %4166 = vmatpush1.msra.mxu0 %v3888
      %4167 = vmatprep.mubr.f32.mxu0 %v3175
      %4168 = vmatmul.mubr.f32.gmra.mrb[0].mxu0 %v3173
      %v4169 = vpop.f32.mrb[0].mxu0
      %v4170 = vadd.f32 %v3500, %v4169
      %v4171 = vpop.f32.mrb[0].mxu0
      %4172 = vdwg.mxu0
      %4173 = vmatprep.subr.mxu0 0.0
      %4174 = vmatpush1.msra.mxu0 %v3891
      %4175 = vmatprep.subr.mxu0 0.0
      %4176 = vmatpush1.msra.mxu0 %v3894
      %4177 = vmatprep.subr.mxu0 0.0
      %4178 = vmatpush1.msra.mxu0 %v3897
      %4179 = vmatprep.subr.mxu0 0.0
      %4180 = vmatpush1.msra.mxu0 %v3900
      %4181 = vmatprep.subr.mxu0 0.0
      %4182 = vmatpush1.msra.mxu0 %v3903
      %4183 = vmatprep.subr.mxu0 0.0
      %4184 = vmatpush1.msra.mxu0 %v3906
      %4185 = vmatprep.subr.mxu0 0.0
      %4186 = vmatpush1.msra.mxu0 %v3909
      %4187 = vmatprep.subr.mxu0 0.0
      %4188 = vmatpush1.msra.mxu0 %v3912
      %4189 = vmatprep.subr.mxu0 0.0
      %4190 = vmatpush1.msra.mxu0 %v3915
      %4191 = vmatprep.subr.mxu0 0.0
      %4192 = vmatpush1.msra.mxu0 %v3918
      %4193 = vmatprep.subr.mxu0 0.0
      %4194 = vmatpush1.msra.mxu0 %v3921
      %4195 = vmatprep.subr.mxu0 0.0
      %4196 = vmatpush1.msra.mxu0 %v3924
      %4197 = vmatprep.subr.mxu0 0.0
      %4198 = vmatpush1.msra.mxu0 %v3927
      %4199 = vmatprep.subr.mxu0 0.0
      %4200 = vmatpush1.msra.mxu0 %v3930
      %4201 = vmatprep.subr.mxu0 0.0
      %4202 = vmatpush1.msra.mxu0 %v3933
      %4203 = vmatprep.subr.mxu0 0.0
      %4204 = vmatpush1.msra.mxu0 %v3936
      %4205 = vmatprep.subr.mxu0 0.0
      %4206 = vmatpush1.msra.mxu0 %v3939
      %4207 = vmatprep.subr.mxu0 0.0
      %4208 = vmatpush1.msra.mxu0 %v3942
      %4209 = vmatprep.subr.mxu0 0.0
      %4210 = vmatpush1.msra.mxu0 %v3945
      %4211 = vmatprep.subr.mxu0 0.0
      %4212 = vmatpush1.msra.mxu0 %v3948
      %4213 = vmatprep.subr.mxu0 0.0
      %4214 = vmatpush1.msra.mxu0 %v3951
      %4215 = vmatprep.subr.mxu0 0.0
      %4216 = vmatpush1.msra.mxu0 %v3954
      %4217 = vmatprep.subr.mxu0 0.0
      %4218 = vmatpush1.msra.mxu0 %v3957
      %4219 = vmatprep.subr.mxu0 0.0
      %4220 = vmatpush1.msra.mxu0 %v3960
      %4221 = vmatprep.subr.mxu0 0.0
      %4222 = vmatpush1.msra.mxu0 0.0
      %4223 = vmatprep.subr.mxu0 0.0
      %4224 = vmatpush1.msra.mxu0 0.0
      %4225 = vmatprep.subr.mxu0 0.0
      %4226 = vmatpush1.msra.mxu0 0.0
      %4227 = vmatprep.subr.mxu0 0.0
      %4228 = vmatpush1.msra.mxu0 0.0
      %4229 = vmatprep.subr.mxu0 0.0
      %4230 = vmatpush1.msra.mxu0 0.0
      %4231 = vmatprep.subr.mxu0 0.0
      %4232 = vmatpush1.msra.mxu0 0.0
      %4233 = vmatprep.subr.mxu0 0.0
      %4234 = vmatpush1.msra.mxu0 0.0
      %4235 = vmatprep.subr.mxu0 0.0
      %4236 = vmatpush1.msra.mxu0 0.0
      %4237 = vmatprep.mubr.f32.mxu0 %v3506
      %4238 = vmatmul.mubr.f32.gmra.mrb[0].mxu0 %v3315
      %v4239 = vpop.f32.mrb[0].mxu0
      %v4240 = vadd.f32 %v4170, %v4239
      %v4241 = vpop.f32.mrb[0].mxu0
      %4242 = vdwg.mxu0
      %v4243 = vmax.f32 %v4099, 0.0
      %v4244 = vmax.f32 %v4101, 0.0
      %v4245 = vmax.f32 %v4240, 0.0
      %v4246 = vld [vmem:[%s23] sm:$0xff]
      %v4247 = vld [vmem:[%s23 + $0x8] sm:$0xff]
      %v4248 = vld [vmem:[%s23 + $0x10] sm:$0xff]
      %v4249 = vld [vmem:[%s23 + $0x18] sm:$0xff]
      %v4250 = vld [vmem:[%s23 + $0x20] sm:$0xff]
      %v4251 = vld [vmem:[%s23 + $0x28] sm:$0xff]
      %v4252 = vld [vmem:[%s23 + $0x30] sm:$0xff]
      %v4253 = vld [vmem:[%s23 + $0x38] sm:$0xff]
      %v4254 = vld [vmem:[%s23 + $0x40] sm:$0xff]
      %v4255 = vld [vmem:[%s23 + $0x48] sm:$0xff]
      %v4256 = vld [vmem:[%s23 + $0x50] sm:$0xff]
      %v4257 = vld [vmem:[%s23 + $0x58] sm:$0xff]
      %v4258 = vld [vmem:[%s23 + $0x60] sm:$0xff]
      %v4259 = vld [vmem:[%s23 + $0x68] sm:$0xff]
      %v4260 = vld [vmem:[%s23 + $0x70] sm:$0xff]
      %v4261 = vld [vmem:[%s23 + $0x78] sm:$0xff]
      %v4262 = vld [vmem:[%s23 + $0x80] sm:$0xff]
      %v4263 = vld [vmem:[%s23 + $0x88] sm:$0xff]
      %v4264 = vld [vmem:[%s23 + $0x90] sm:$0xff]
      %v4265 = vld [vmem:[%s23 + $0x98] sm:$0xff]
      %v4266 = vld [vmem:[%s23 + $0xa0] sm:$0xff]
      %v4267 = vld [vmem:[%s23 + $0xa8] sm:$0xff]
      %v4268 = vld [vmem:[%s23 + $0xb0] sm:$0xff]
      %v4269 = vld [vmem:[%s23 + $0xb8] sm:$0xff]
      %v4270 = vld [vmem:[%s23 + $0xc0] sm:$0xff]
      %v4271 = vld [vmem:[%s23 + $0xc8] sm:$0xff]
      %v4272 = vld [vmem:[%s23 + $0xd0] sm:$0xff]
      %v4273 = vld [vmem:[%s23 + $0xd8] sm:$0xff]
      %v4274 = vld [vmem:[%s23 + $0xe0] sm:$0xff]
      %v4275 = vld [vmem:[%s23 + $0xe8] sm:$0xff]
      %v4276 = vld [vmem:[%s23 + $0xf0] sm:$0xff]
      %v4277 = vld [vmem:[%s23 + $0xf8] sm:$0xff]
      %v4278 = vld [vmem:[%s23 + $0x100] sm:$0xff]
      %v4279 = vld [vmem:[%s23 + $0x108] sm:$0xff]
      %v4280 = vld [vmem:[%s23 + $0x110] sm:$0xff]
      %v4281 = vld [vmem:[%s23 + $0x118] sm:$0xff]
      %v4282 = vld [vmem:[%s23 + $0x120] sm:$0xff]
      %v4283 = vld [vmem:[%s23 + $0x128] sm:$0xff]
      %v4284 = vld [vmem:[%s23 + $0x130] sm:$0xff]
      %v4285 = vld [vmem:[%s23 + $0x138] sm:$0xff]
      %v4286 = vld [vmem:[%s23 + $0x140] sm:$0xff]
      %v4287 = vld [vmem:[%s23 + $0x148] sm:$0xff]
      %v4288 = vld [vmem:[%s23 + $0x150] sm:$0xff]
      %v4289 = vld [vmem:[%s23 + $0x158] sm:$0xff]
      %v4290 = vld [vmem:[%s23 + $0x160] sm:$0xff]
      %v4291 = vld [vmem:[%s23 + $0x168] sm:$0xff]
      %v4292 = vld [vmem:[%s23 + $0x170] sm:$0xff]
      %v4293 = vld [vmem:[%s23 + $0x178] sm:$0xff]
      %v4294 = vld [vmem:[%s23 + $0x180] sm:$0xff]
      %v4295 = vld [vmem:[%s23 + $0x188] sm:$0xff]
      %v4296 = vld [vmem:[%s23 + $0x190] sm:$0xff]
      %v4297 = vld [vmem:[%s23 + $0x198] sm:$0xff]
      %v4298 = vld [vmem:[%s23 + $0x1a0] sm:$0xff]
      %v4299 = vld [vmem:[%s23 + $0x1a8] sm:$0xff]
      %v4300 = vld [vmem:[%s23 + $0x1b0] sm:$0xff]
      %v4301 = vld [vmem:[%s23 + $0x1b8] sm:$0xff]
      %v4302 = vld [vmem:[%s23 + $0x1c0] sm:$0xff]
      %v4303 = vld [vmem:[%s23 + $0x1c8] sm:$0xff]
      %v4304 = vld [vmem:[%s23 + $0x1d0] sm:$0xff]
      %v4305 = vld [vmem:[%s23 + $0x1d8] sm:$0xff]
      %v4306 = vld [vmem:[%s23 + $0x1e0] sm:$0xff]
      %v4307 = vld [vmem:[%s23 + $0x1e8] sm:$0xff]
      %v4308 = vld [vmem:[%s23 + $0x1f0] sm:$0xff]
      %v4309 = vld [vmem:[%s23 + $0x1f8] sm:$0xff]
      %v4310 = vld [vmem:[%s23 + $0x200] sm:$0xff]
      %v4311 = vld [vmem:[%s23 + $0x208] sm:$0xff]
      %v4312 = vld [vmem:[%s23 + $0x210] sm:$0xff]
      %v4313 = vld [vmem:[%s23 + $0x218] sm:$0xff]
      %v4314 = vld [vmem:[%s23 + $0x220] sm:$0xff]
      %v4315 = vld [vmem:[%s23 + $0x228] sm:$0xff]
      %v4316 = vld [vmem:[%s23 + $0x230] sm:$0xff]
      %v4317 = vld [vmem:[%s23 + $0x238] sm:$0xff]
      %v4318 = vld [vmem:[%s23 + $0x240] sm:$0xff]
      %v4319 = vld [vmem:[%s23 + $0x248] sm:$0xff]
      %v4320 = vld [vmem:[%s23 + $0x250] sm:$0xff]
      %v4321 = vld [vmem:[%s23 + $0x258] sm:$0xff]
      %v4322 = vld [vmem:[%s23 + $0x260] sm:$0xff]
      %v4323 = vld [vmem:[%s23 + $0x268] sm:$0xff]
      %v4324 = vld [vmem:[%s23 + $0x270] sm:$0xff]
      %v4325 = vld [vmem:[%s23 + $0x278] sm:$0xff]
      %v4326 = vld [vmem:[%s23 + $0x280] sm:$0xff]
      %v4327 = vld [vmem:[%s23 + $0x288] sm:$0xff]
      %v4328 = vld [vmem:[%s23 + $0x290] sm:$0xff]
      %v4329 = vld [vmem:[%s23 + $0x298] sm:$0xff]
      %v4330 = vld [vmem:[%s23 + $0x2a0] sm:$0xff]
      %v4331 = vld [vmem:[%s23 + $0x2a8] sm:$0xff]
      %v4332 = vld [vmem:[%s23 + $0x2b0] sm:$0xff]
      %v4333 = vld [vmem:[%s23 + $0x2b8] sm:$0xff]
      %v4334 = vld [vmem:[%s23 + $0x2c0] sm:$0xff]
      %v4335 = vld [vmem:[%s23 + $0x2c8] sm:$0xff]
      %v4336 = vld [vmem:[%s23 + $0x2d0] sm:$0xff]
      %v4337 = vld [vmem:[%s23 + $0x2d8] sm:$0xff]
      %v4338 = vld [vmem:[%s23 + $0x2e0] sm:$0xff]
      %v4339 = vld [vmem:[%s23 + $0x2e8] sm:$0xff]
      %v4340 = vld [vmem:[%s23 + $0x2f0] sm:$0xff]
      %v4341 = vld [vmem:[%s23 + $0x2f8] sm:$0xff]
      %v4342 = vld [vmem:[%s23 + $0x300] sm:$0xff]
      %v4343 = vld [vmem:[%s23 + $0x308] sm:$0xff]
      %v4344 = vld [vmem:[%s23 + $0x310] sm:$0xff]
      %v4345 = vld [vmem:[%s23 + $0x318] sm:$0xff]
      %v4346 = vld [vmem:[%s23 + $0x320] sm:$0xff]
      %v4347 = vld [vmem:[%s23 + $0x328] sm:$0xff]
      %v4348 = vld [vmem:[%s23 + $0x330] sm:$0xff]
      %v4349 = vld [vmem:[%s23 + $0x338] sm:$0xff]
      %v4350 = vld [vmem:[%s23 + $0x340] sm:$0xff]
      %v4351 = vld [vmem:[%s23 + $0x348] sm:$0xff]
      %v4352 = vld [vmem:[%s23 + $0x350] sm:$0xff]
      %v4353 = vld [vmem:[%s23 + $0x358] sm:$0xff]
      %v4354 = vld [vmem:[%s23 + $0x360] sm:$0xff]
      %v4355 = vld [vmem:[%s23 + $0x368] sm:$0xff]
      %v4356 = vld [vmem:[%s23 + $0x370] sm:$0xff]
      %v4357 = vld [vmem:[%s23 + $0x378] sm:$0xff]
      %v4358 = vld [vmem:[%s23 + $0x380] sm:$0xff]
      %v4359 = vld [vmem:[%s23 + $0x388] sm:$0xff]
      %v4360 = vld [vmem:[%s23 + $0x390] sm:$0xff]
      %v4361 = vld [vmem:[%s23 + $0x398] sm:$0xff]
      %v4362 = vld [vmem:[%s23 + $0x3a0] sm:$0xff]
      %v4363 = vld [vmem:[%s23 + $0x3a8] sm:$0xff]
      %v4364 = vld [vmem:[%s23 + $0x3b0] sm:$0xff]
      %v4365 = vld [vmem:[%s23 + $0x3b8] sm:$0xff]
      %v4366 = vld [vmem:[%s23 + $0x3c0] sm:$0xff]
      %v4367 = vld [vmem:[%s23 + $0x3c8] sm:$0xff]
      %v4368 = vld [vmem:[%s23 + $0x3d0] sm:$0xff]
      %v4369 = vld [vmem:[%s23 + $0x3d8] sm:$0xff]
      %v4370 = vld [vmem:[%s23 + $0x3e0] sm:$0xff]
      %v4371 = vld [vmem:[%s23 + $0x3e8] sm:$0xff]
      %v4372 = vld [vmem:[%s23 + $0x3f0] sm:$0xff]
      %v4373 = vld [vmem:[%s23 + $0x3f8] sm:$0xff]
      %v4374 = vld [vmem:[%s23 + $0x400] sm:$0xff]
      %v4375 = vld [vmem:[%s23 + $0x408] sm:$0xff]
      %v4376 = vld [vmem:[%s23 + $0x410] sm:$0xff]
      %v4377 = vld [vmem:[%s23 + $0x418] sm:$0xff]
      %v4378 = vld [vmem:[%s23 + $0x420] sm:$0xff]
      %v4379 = vld [vmem:[%s23 + $0x428] sm:$0xff]
      %v4380 = vld [vmem:[%s23 + $0x430] sm:$0xff]
      %v4381 = vld [vmem:[%s23 + $0x438] sm:$0xff]
      %v4382 = vld [vmem:[%s23 + $0x440] sm:$0xff]
      %v4383 = vld [vmem:[%s23 + $0x448] sm:$0xff]
      %v4384 = vld [vmem:[%s23 + $0x450] sm:$0xff]
      %v4385 = vld [vmem:[%s23 + $0x458] sm:$0xff]
      %v4386 = vld [vmem:[%s23 + $0x460] sm:$0xff]
      %v4387 = vld [vmem:[%s23 + $0x468] sm:$0xff]
      %v4388 = vld [vmem:[%s23 + $0x470] sm:$0xff]
      %v4389 = vld [vmem:[%s23 + $0x478] sm:$0xff]
      %v4390 = vld [vmem:[%s23 + $0x480] sm:$0xff]
      %v4391 = vld [vmem:[%s23 + $0x488] sm:$0xff]
      %v4392 = vld [vmem:[%s23 + $0x490] sm:$0xff]
      %v4393 = vld [vmem:[%s23 + $0x498] sm:$0xff]
      %v4394 = vld [vmem:[%s23 + $0x4a0] sm:$0xff]
      %v4395 = vld [vmem:[%s23 + $0x4a8] sm:$0xff]
      %v4396 = vld [vmem:[%s23 + $0x4b0] sm:$0xff]
      %v4397 = vld [vmem:[%s23 + $0x4b8] sm:$0xff]
      %v4398 = vld [vmem:[%s23 + $0x4c0] sm:$0xff]
      %v4399 = vld [vmem:[%s23 + $0x4c8] sm:$0xff]
      %v4400 = vld [vmem:[%s23 + $0x4d0] sm:$0xff]
      %v4401 = vld [vmem:[%s23 + $0x4d8] sm:$0xff]
      %v4402 = vld [vmem:[%s23 + $0x4e0] sm:$0xff]
      %v4403 = vld [vmem:[%s23 + $0x4e8] sm:$0xff]
      %v4404 = vld [vmem:[%s23 + $0x4f0] sm:$0xff]
      %v4405 = vld [vmem:[%s23 + $0x4f8] sm:$0xff]
      %v4406 = vld [vmem:[%s23 + $0x500] sm:$0xff]
      %v4407 = vld [vmem:[%s23 + $0x508] sm:$0xff]
      %v4408 = vld [vmem:[%s23 + $0x510] sm:$0xff]
      %v4409 = vld [vmem:[%s23 + $0x518] sm:$0xff]
      %v4410 = vld [vmem:[%s23 + $0x520] sm:$0xff]
      %v4411 = vld [vmem:[%s23 + $0x528] sm:$0xff]
      %v4412 = vld [vmem:[%s23 + $0x530] sm:$0xff]
      %v4413 = vld [vmem:[%s23 + $0x538] sm:$0xff]
      %4414 = vmatprep.subr.mxu0 %v4247
      %4415 = vmatpush1.msra.mxu0 %v4246
      %4416 = vmatprep.subr.mxu0 %v4250
      %4417 = vmatpush1.msra.mxu0 %v4249
      %4418 = vmatprep.subr.mxu0 %v4253
      %4419 = vmatpush1.msra.mxu0 %v4252
      %4420 = vmatprep.subr.mxu0 %v4256
      %4421 = vmatpush1.msra.mxu0 %v4255
      %4422 = vmatprep.subr.mxu0 %v4259
      %4423 = vmatpush1.msra.mxu0 %v4258
      %4424 = vmatprep.subr.mxu0 %v4262
      %4425 = vmatpush1.msra.mxu0 %v4261
      %4426 = vmatprep.subr.mxu0 %v4265
      %4427 = vmatpush1.msra.mxu0 %v4264
      %4428 = vmatprep.subr.mxu0 %v4268
      %4429 = vmatpush1.msra.mxu0 %v4267
      %4430 = vmatprep.subr.mxu0 %v4271
      %4431 = vmatpush1.msra.mxu0 %v4270
      %4432 = vmatprep.subr.mxu0 %v4274
      %4433 = vmatpush1.msra.mxu0 %v4273
      %4434 = vmatprep.subr.mxu0 %v4277
      %4435 = vmatpush1.msra.mxu0 %v4276
      %4436 = vmatprep.subr.mxu0 %v4280
      %4437 = vmatpush1.msra.mxu0 %v4279
      %4438 = vmatprep.subr.mxu0 %v4283
      %4439 = vmatpush1.msra.mxu0 %v4282
      %4440 = vmatprep.subr.mxu0 %v4286
      %4441 = vmatpush1.msra.mxu0 %v4285
      %4442 = vmatprep.subr.mxu0 %v4289
      %4443 = vmatpush1.msra.mxu0 %v4288
      %4444 = vmatprep.subr.mxu0 %v4292
      %4445 = vmatpush1.msra.mxu0 %v4291
      %4446 = vmatprep.subr.mxu0 %v4295
      %4447 = vmatpush1.msra.mxu0 %v4294
      %4448 = vmatprep.subr.mxu0 %v4298
      %4449 = vmatpush1.msra.mxu0 %v4297
      %4450 = vmatprep.subr.mxu0 %v4301
      %4451 = vmatpush1.msra.mxu0 %v4300
      %4452 = vmatprep.subr.mxu0 %v4304
      %4453 = vmatpush1.msra.mxu0 %v4303
      %4454 = vmatprep.subr.mxu0 %v4307
      %4455 = vmatpush1.msra.mxu0 %v4306
      %4456 = vmatprep.subr.mxu0 %v4310
      %4457 = vmatpush1.msra.mxu0 %v4309
      %4458 = vmatprep.subr.mxu0 %v4313
      %4459 = vmatpush1.msra.mxu0 %v4312
      %4460 = vmatprep.subr.mxu0 %v4316
      %4461 = vmatpush1.msra.mxu0 %v4315
      %4462 = vmatprep.subr.mxu0 %v4319
      %4463 = vmatpush1.msra.mxu0 %v4318
      %4464 = vmatprep.subr.mxu0 %v4322
      %4465 = vmatpush1.msra.mxu0 %v4321
      %4466 = vmatprep.subr.mxu0 %v4325
      %4467 = vmatpush1.msra.mxu0 %v4324
      %4468 = vmatprep.subr.mxu0 %v4328
      %4469 = vmatpush1.msra.mxu0 %v4327
      %4470 = vmatprep.subr.mxu0 %v4331
      %4471 = vmatpush1.msra.mxu0 %v4330
      %4472 = vmatprep.subr.mxu0 %v4334
      %4473 = vmatpush1.msra.mxu0 %v4333
      %4474 = vmatprep.subr.mxu0 %v4337
      %4475 = vmatpush1.msra.mxu0 %v4336
      %4476 = vmatprep.subr.mxu0 %v4340
      %4477 = vmatpush1.msra.mxu0 %v4339
      %4478 = vmatprep.mubr.f32.mxu0 %v3175
      %4479 = vmatmul.mubr.f32.gmra.mrb[0].mxu0 %v3173
      %v4480 = vpop.f32.mrb[0].mxu0
      %v4481 = vadd.f32 %v3492, %v4480
      %v4482 = vpop.f32.mrb[0].mxu0
      %v4483 = vadd.f32 %v3496, %v4482
      %4484 = vdwg.mxu0
      %4485 = vmatprep.subr.mxu0 %v4343
      %4486 = vmatpush1.msra.mxu0 %v4342
      %4487 = vmatprep.subr.mxu0 %v4346
      %4488 = vmatpush1.msra.mxu0 %v4345
      %4489 = vmatprep.subr.mxu0 %v4349
      %4490 = vmatpush1.msra.mxu0 %v4348
      %4491 = vmatprep.subr.mxu0 %v4352
      %4492 = vmatpush1.msra.mxu0 %v4351
      %4493 = vmatprep.subr.mxu0 %v4355
      %4494 = vmatpush1.msra.mxu0 %v4354
      %4495 = vmatprep.subr.mxu0 %v4358
      %4496 = vmatpush1.msra.mxu0 %v4357
      %4497 = vmatprep.subr.mxu0 %v4361
      %4498 = vmatpush1.msra.mxu0 %v4360
      %4499 = vmatprep.subr.mxu0 %v4364
      %4500 = vmatpush1.msra.mxu0 %v4363
      %4501 = vmatprep.subr.mxu0 %v4367
      %4502 = vmatpush1.msra.mxu0 %v4366
      %4503 = vmatprep.subr.mxu0 %v4370
      %4504 = vmatpush1.msra.mxu0 %v4369
      %4505 = vmatprep.subr.mxu0 %v4373
      %4506 = vmatpush1.msra.mxu0 %v4372
      %4507 = vmatprep.subr.mxu0 %v4376
      %4508 = vmatpush1.msra.mxu0 %v4375
      %4509 = vmatprep.subr.mxu0 %v4379
      %4510 = vmatpush1.msra.mxu0 %v4378
      %4511 = vmatprep.subr.mxu0 %v4382
      %4512 = vmatpush1.msra.mxu0 %v4381
      %4513 = vmatprep.subr.mxu0 %v4385
      %4514 = vmatpush1.msra.mxu0 %v4384
      %4515 = vmatprep.subr.mxu0 %v4388
      %4516 = vmatpush1.msra.mxu0 %v4387
      %4517 = vmatprep.subr.mxu0 %v4391
      %4518 = vmatpush1.msra.mxu0 %v4390
      %4519 = vmatprep.subr.mxu0 %v4394
      %4520 = vmatpush1.msra.mxu0 %v4393
      %4521 = vmatprep.subr.mxu0 %v4397
      %4522 = vmatpush1.msra.mxu0 %v4396
      %4523 = vmatprep.subr.mxu0 %v4400
      %4524 = vmatpush1.msra.mxu0 %v4399
      %4525 = vmatprep.subr.mxu0 %v4403
      %4526 = vmatpush1.msra.mxu0 %v4402
      %4527 = vmatprep.subr.mxu0 %v4406
      %4528 = vmatpush1.msra.mxu0 %v4405
      %4529 = vmatprep.subr.mxu0 %v4409
      %4530 = vmatpush1.msra.mxu0 %v4408
      %4531 = vmatprep.subr.mxu0 %v4412
      %4532 = vmatpush1.msra.mxu0 %v4411
      %4533 = vmatprep.subr.mxu0 0.0
      %4534 = vmatpush1.msra.mxu0 0.0
      %4535 = vmatprep.subr.mxu0 0.0
      %4536 = vmatpush1.msra.mxu0 0.0
      %4537 = vmatprep.subr.mxu0 0.0
      %4538 = vmatpush1.msra.mxu0 0.0
      %4539 = vmatprep.subr.mxu0 0.0
      %4540 = vmatpush1.msra.mxu0 0.0
      %4541 = vmatprep.subr.mxu0 0.0
      %4542 = vmatpush1.msra.mxu0 0.0
      %4543 = vmatprep.subr.mxu0 0.0
      %4544 = vmatpush1.msra.mxu0 0.0
      %4545 = vmatprep.subr.mxu0 0.0
      %4546 = vmatpush1.msra.mxu0 0.0
      %4547 = vmatprep.subr.mxu0 0.0
      %4548 = vmatpush1.msra.mxu0 0.0
      %4549 = vmatprep.mubr.f32.mxu0 %v3506
      %4550 = vmatmul.mubr.f32.gmra.mrb[0].mxu0 %v3315
      %v4551 = vpop.f32.mrb[0].mxu0
      %v4552 = vadd.f32 %v4481, %v4551
      %v4553 = vpop.f32.mrb[0].mxu0
      %v4554 = vadd.f32 %v4483, %v4553
      %4555 = vdwg.mxu0
      %4556 = vmatprep.subr.mxu0 0.0
      %4557 = vmatpush1.msra.mxu0 %v4248
      %4558 = vmatprep.subr.mxu0 0.0
      %4559 = vmatpush1.msra.mxu0 %v4251
      %4560 = vmatprep.subr.mxu0 0.0
      %4561 = vmatpush1.msra.mxu0 %v4254
      %4562 = vmatprep.subr.mxu0 0.0
      %4563 = vmatpush1.msra.mxu0 %v4257
      %4564 = vmatprep.subr.mxu0 0.0
      %4565 = vmatpush1.msra.mxu0 %v4260
      %4566 = vmatprep.subr.mxu0 0.0
      %4567 = vmatpush1.msra.mxu0 %v4263
      %4568 = vmatprep.subr.mxu0 0.0
      %4569 = vmatpush1.msra.mxu0 %v4266
      %4570 = vmatprep.subr.mxu0 0.0
      %4571 = vmatpush1.msra.mxu0 %v4269
      %4572 = vmatprep.subr.mxu0 0.0
      %4573 = vmatpush1.msra.mxu0 %v4272
      %4574 = vmatprep.subr.mxu0 0.0
      %4575 = vmatpush1.msra.mxu0 %v4275
      %4576 = vmatprep.subr.mxu0 0.0
      %4577 = vmatpush1.msra.mxu0 %v4278
      %4578 = vmatprep.subr.mxu0 0.0
      %4579 = vmatpush1.msra.mxu0 %v4281
      %4580 = vmatprep.subr.mxu0 0.0
      %4581 = vmatpush1.msra.mxu0 %v4284
      %4582 = vmatprep.subr.mxu0 0.0
      %4583 = vmatpush1.msra.mxu0 %v4287
      %4584 = vmatprep.subr.mxu0 0.0
      %4585 = vmatpush1.msra.mxu0 %v4290
      %4586 = vmatprep.subr.mxu0 0.0
      %4587 = vmatpush1.msra.mxu0 %v4293
      %4588 = vmatprep.subr.mxu0 0.0
      %4589 = vmatpush1.msra.mxu0 %v4296
      %4590 = vmatprep.subr.mxu0 0.0
      %4591 = vmatpush1.msra.mxu0 %v4299
      %4592 = vmatprep.subr.mxu0 0.0
      %4593 = vmatpush1.msra.mxu0 %v4302
      %4594 = vmatprep.subr.mxu0 0.0
      %4595 = vmatpush1.msra.mxu0 %v4305
      %4596 = vmatprep.subr.mxu0 0.0
      %4597 = vmatpush1.msra.mxu0 %v4308
      %4598 = vmatprep.subr.mxu0 0.0
      %4599 = vmatpush1.msra.mxu0 %v4311
      %4600 = vmatprep.subr.mxu0 0.0
      %4601 = vmatpush1.msra.mxu0 %v4314
      %4602 = vmatprep.subr.mxu0 0.0
      %4603 = vmatpush1.msra.mxu0 %v4317
      %4604 = vmatprep.subr.mxu0 0.0
      %4605 = vmatpush1.msra.mxu0 %v4320
      %4606 = vmatprep.subr.mxu0 0.0
      %4607 = vmatpush1.msra.mxu0 %v4323
      %4608 = vmatprep.subr.mxu0 0.0
      %4609 = vmatpush1.msra.mxu0 %v4326
      %4610 = vmatprep.subr.mxu0 0.0
      %4611 = vmatpush1.msra.mxu0 %v4329
      %4612 = vmatprep.subr.mxu0 0.0
      %4613 = vmatpush1.msra.mxu0 %v4332
      %4614 = vmatprep.subr.mxu0 0.0
      %4615 = vmatpush1.msra.mxu0 %v4335
      %4616 = vmatprep.subr.mxu0 0.0
      %4617 = vmatpush1.msra.mxu0 %v4338
      %4618 = vmatprep.subr.mxu0 0.0
      %4619 = vmatpush1.msra.mxu0 %v4341
      %4620 = vmatprep.mubr.f32.mxu0 %v3175
      %4621 = vmatmul.mubr.f32.gmra.mrb[0].mxu0 %v3173
      %v4622 = vpop.f32.mrb[0].mxu0
      %v4623 = vadd.f32 %v3500, %v4622
      %v4624 = vpop.f32.mrb[0].mxu0
      %4625 = vdwg.mxu0
      %4626 = vmatprep.subr.mxu0 0.0
      %4627 = vmatpush1.msra.mxu0 %v4344
      %4628 = vmatprep.subr.mxu0 0.0
      %4629 = vmatpush1.msra.mxu0 %v4347
      %4630 = vmatprep.subr.mxu0 0.0
      %4631 = vmatpush1.msra.mxu0 %v4350
      %4632 = vmatprep.subr.mxu0 0.0
      %4633 = vmatpush1.msra.mxu0 %v4353
      %4634 = vmatprep.subr.mxu0 0.0
      %4635 = vmatpush1.msra.mxu0 %v4356
      %4636 = vmatprep.subr.mxu0 0.0
      %4637 = vmatpush1.msra.mxu0 %v4359
      %4638 = vmatprep.subr.mxu0 0.0
      %4639 = vmatpush1.msra.mxu0 %v4362
      %4640 = vmatprep.subr.mxu0 0.0
      %4641 = vmatpush1.msra.mxu0 %v4365
      %4642 = vmatprep.subr.mxu0 0.0
      %4643 = vmatpush1.msra.mxu0 %v4368
      %4644 = vmatprep.subr.mxu0 0.0
      %4645 = vmatpush1.msra.mxu0 %v4371
      %4646 = vmatprep.subr.mxu0 0.0
      %4647 = vmatpush1.msra.mxu0 %v4374
      %4648 = vmatprep.subr.mxu0 0.0
      %4649 = vmatpush1.msra.mxu0 %v4377
      %4650 = vmatprep.subr.mxu0 0.0
      %4651 = vmatpush1.msra.mxu0 %v4380
      %4652 = vmatprep.subr.mxu0 0.0
      %4653 = vmatpush1.msra.mxu0 %v4383
      %4654 = vmatprep.subr.mxu0 0.0
      %4655 = vmatpush1.msra.mxu0 %v4386
      %4656 = vmatprep.subr.mxu0 0.0
      %4657 = vmatpush1.msra.mxu0 %v4389
      %4658 = vmatprep.subr.mxu0 0.0
      %4659 = vmatpush1.msra.mxu0 %v4392
      %4660 = vmatprep.subr.mxu0 0.0
      %4661 = vmatpush1.msra.mxu0 %v4395
      %4662 = vmatprep.subr.mxu0 0.0
      %4663 = vmatpush1.msra.mxu0 %v4398
      %4664 = vmatprep.subr.mxu0 0.0
      %4665 = vmatpush1.msra.mxu0 %v4401
      %4666 = vmatprep.subr.mxu0 0.0
      %4667 = vmatpush1.msra.mxu0 %v4404
      %4668 = vmatprep.subr.mxu0 0.0
      %4669 = vmatpush1.msra.mxu0 %v4407
      %4670 = vmatprep.subr.mxu0 0.0
      %4671 = vmatpush1.msra.mxu0 %v4410
      %4672 = vmatprep.subr.mxu0 0.0
      %4673 = vmatpush1.msra.mxu0 %v4413
      %4674 = vmatprep.subr.mxu0 0.0
      %4675 = vmatpush1.msra.mxu0 0.0
      %4676 = vmatprep.subr.mxu0 0.0
      %4677 = vmatpush1.msra.mxu0 0.0
      %4678 = vmatprep.subr.mxu0 0.0
      %4679 = vmatpush1.msra.mxu0 0.0
      %4680 = vmatprep.subr.mxu0 0.0
      %4681 = vmatpush1.msra.mxu0 0.0
      %4682 = vmatprep.subr.mxu0 0.0
      %4683 = vmatpush1.msra.mxu0 0.0
      %4684 = vmatprep.subr.mxu0 0.0
      %4685 = vmatpush1.msra.mxu0 0.0
      %4686 = vmatprep.subr.mxu0 0.0
      %4687 = vmatpush1.msra.mxu0 0.0
      %4688 = vmatprep.subr.mxu0 0.0
      %4689 = vmatpush1.msra.mxu0 0.0
      %4690 = vmatprep.mubr.f32.mxu0 %v3506
      %4691 = vmatmul.mubr.f32.gmra.mrb[0].mxu0 %v3315
      %v4692 = vpop.f32.mrb[0].mxu0
      %v4693 = vadd.f32 %v4623, %v4692
      %v4694 = vpop.f32.mrb[0].mxu0
      %4695 = vdwg.mxu0
      %v4696 = vmax.f32 %v4552, 0.0
      %v4697 = vmax.f32 %v4554, 0.0
      %v4698 = vmax.f32 %v4693, 0.0
      %v4699 = vmax.f32 %v3790, %v4243
      %v4700 = vmax.f32 %v3791, %v4244
      %v4701 = vmax.f32 %v3792, %v4245
      %v4702 = vmax.f32 %v4699, %v4696
      %v4703 = vmax.f32 %v4700, %v4697
      %v4704 = vmax.f32 %v4701, %v4698
      %v4705 = vld [vmem:[%s27] sm:$0xff]
      %v4706 = vld [vmem:[%s27 + $0x8] sm:$0xff]
      %v4707 = vld [vmem:[%s27 + $0x10] sm:$0xff]
      %v4708 = vld [vmem:[%s27 + $0x18] sm:$0xff]
      %v4709 = vld [vmem:[%s27 + $0x20] sm:$0xff]
      %v4710 = vld [vmem:[%s27 + $0x28] sm:$0xff]
      %v4711 = vld [vmem:[%s27 + $0x30] sm:$0xff]
      %v4712 = vld [vmem:[%s27 + $0x38] sm:$0xff]
      %v4713 = vld [vmem:[%s27 + $0x40] sm:$0xff]
      %v4714 = vld [vmem:[%s27 + $0x48] sm:$0xff]
      %v4715 = vld [vmem:[%s27 + $0x50] sm:$0xff]
      %v4716 = vld [vmem:[%s27 + $0x58] sm:$0xff]
      %v4717 = vld [vmem:[%s27 + $0x60] sm:$0xff]
      %v4718 = vld [vmem:[%s27 + $0x68] sm:$0xff]
      %v4719 = vld [vmem:[%s27 + $0x70] sm:$0xff]
      %v4720 = vld [vmem:[%s27 + $0x78] sm:$0xff]
      %v4721 = vld [vmem:[%s27 + $0x80] sm:$0xff]
      %v4722 = vld [vmem:[%s27 + $0x88] sm:$0xff]
      %v4723 = vld [vmem:[%s27 + $0x90] sm:$0xff]
      %v4724 = vld [vmem:[%s27 + $0x98] sm:$0xff]
      %v4725 = vld [vmem:[%s27 + $0xa0] sm:$0xff]
      %v4726 = vld [vmem:[%s27 + $0xa8] sm:$0xff]
      %v4727 = vld [vmem:[%s27 + $0xb0] sm:$0xff]
      %v4728 = vld [vmem:[%s27 + $0xb8] sm:$0xff]
      %v4729 = vld [vmem:[%s27 + $0xc0] sm:$0xff]
      %v4730 = vld [vmem:[%s27 + $0xc8] sm:$0xff]
      %v4731 = vld [vmem:[%s27 + $0xd0] sm:$0xff]
      %v4732 = vld [vmem:[%s27 + $0xd8] sm:$0xff]
      %v4733 = vld [vmem:[%s27 + $0xe0] sm:$0xff]
      %v4734 = vld [vmem:[%s27 + $0xe8] sm:$0xff]
      %v4735 = vld [vmem:[%s27 + $0xf0] sm:$0xff]
      %v4736 = vld [vmem:[%s27 + $0xf8] sm:$0xff]
      %v4737 = vld [vmem:[%s27 + $0x100] sm:$0xff]
      %v4738 = vld [vmem:[%s27 + $0x108] sm:$0xff]
      %v4739 = vld [vmem:[%s27 + $0x110] sm:$0xff]
      %v4740 = vld [vmem:[%s27 + $0x118] sm:$0xff]
      %v4741 = vld [vmem:[%s27 + $0x120] sm:$0xff]
      %v4742 = vld [vmem:[%s27 + $0x128] sm:$0xff]
      %v4743 = vld [vmem:[%s27 + $0x130] sm:$0xff]
      %v4744 = vld [vmem:[%s27 + $0x138] sm:$0xff]
      %v4745 = vld [vmem:[%s27 + $0x140] sm:$0xff]
      %v4746 = vld [vmem:[%s27 + $0x148] sm:$0xff]
      %v4747 = vld [vmem:[%s27 + $0x150] sm:$0xff]
      %v4748 = vld [vmem:[%s27 + $0x158] sm:$0xff]
      %v4749 = vld [vmem:[%s27 + $0x160] sm:$0xff]
      %v4750 = vld [vmem:[%s27 + $0x168] sm:$0xff]
      %v4751 = vld [vmem:[%s27 + $0x170] sm:$0xff]
      %v4752 = vld [vmem:[%s27 + $0x178] sm:$0xff]
      %v4753 = vld [vmem:[%s29] sm:$0x1]
      %v4755 = vlaneseq
      %v4756 = vshrl.u32 %v4755, 7
      %v4757 = vsub.s32 0, %v4756
      %v4758 = vrot.slane %v4753, %v4757
      %4760 = vmatprep.subr.mxu0 0.0
      %4761 = vmatpush1.msra.mxu0 %v4705
      %4762 = vmatprep.subr.mxu0 0.0
      %4763 = vmatpush1.msra.mxu0 %v4706
      %4764 = vmatprep.subr.mxu0 0.0
      %4765 = vmatpush1.msra.mxu0 %v4707
      %4766 = vmatprep.subr.mxu0 0.0
      %4767 = vmatpush1.msra.mxu0 %v4708
      %4768 = vmatprep.subr.mxu0 0.0
      %4769 = vmatpush1.msra.mxu0 %v4709
      %4770 = vmatprep.subr.mxu0 0.0
      %4771 = vmatpush1.msra.mxu0 %v4710
      %4772 = vmatprep.subr.mxu0 0.0
      %4773 = vmatpush1.msra.mxu0 %v4711
      %4774 = vmatprep.subr.mxu0 0.0
      %4775 = vmatpush1.msra.mxu0 %v4712
      %4776 = vmatprep.subr.mxu0 0.0
      %4777 = vmatpush1.msra.mxu0 %v4713
      %4778 = vmatprep.subr.mxu0 0.0
      %4779 = vmatpush1.msra.mxu0 %v4714
      %4780 = vmatprep.subr.mxu0 0.0
      %4781 = vmatpush1.msra.mxu0 %v4715
      %4782 = vmatprep.subr.mxu0 0.0
      %4783 = vmatpush1.msra.mxu0 %v4716
      %4784 = vmatprep.subr.mxu0 0.0
      %4785 = vmatpush1.msra.mxu0 %v4717
      %4786 = vmatprep.subr.mxu0 0.0
      %4787 = vmatpush1.msra.mxu0 %v4718
      %4788 = vmatprep.subr.mxu0 0.0
      %4789 = vmatpush1.msra.mxu0 %v4719
      %4790 = vmatprep.subr.mxu0 0.0
      %4791 = vmatpush1.msra.mxu0 %v4720
      %4792 = vmatprep.subr.mxu0 0.0
      %4793 = vmatpush1.msra.mxu0 %v4721
      %4794 = vmatprep.subr.mxu0 0.0
      %4795 = vmatpush1.msra.mxu0 %v4722
      %4796 = vmatprep.subr.mxu0 0.0
      %4797 = vmatpush1.msra.mxu0 %v4723
      %4798 = vmatprep.subr.mxu0 0.0
      %4799 = vmatpush1.msra.mxu0 %v4724
      %4800 = vmatprep.subr.mxu0 0.0
      %4801 = vmatpush1.msra.mxu0 %v4725
      %4802 = vmatprep.subr.mxu0 0.0
      %4803 = vmatpush1.msra.mxu0 %v4726
      %4804 = vmatprep.subr.mxu0 0.0
      %4805 = vmatpush1.msra.mxu0 %v4727
      %4806 = vmatprep.subr.mxu0 0.0
      %4807 = vmatpush1.msra.mxu0 %v4728
      %4808 = vmatprep.subr.mxu0 0.0
      %4809 = vmatpush1.msra.mxu0 %v4729
      %4810 = vmatprep.subr.mxu0 0.0
      %4811 = vmatpush1.msra.mxu0 %v4730
      %4812 = vmatprep.subr.mxu0 0.0
      %4813 = vmatpush1.msra.mxu0 %v4731
      %4814 = vmatprep.subr.mxu0 0.0
      %4815 = vmatpush1.msra.mxu0 %v4732
      %4816 = vmatprep.subr.mxu0 0.0
      %4817 = vmatpush1.msra.mxu0 %v4733
      %4818 = vmatprep.subr.mxu0 0.0
      %4819 = vmatpush1.msra.mxu0 %v4734
      %4820 = vmatprep.subr.mxu0 0.0
      %4821 = vmatpush1.msra.mxu0 %v4735
      %4822 = vmatprep.subr.mxu0 0.0
      %4823 = vmatpush1.msra.mxu0 %v4736
      %4824 = vmatprep.mubr.f32.mxu0 %v4703
      %4825 = vmatmul.mubr.f32.gmra.mrb[0].mxu0 %v4702
      %v4826 = vpop.f32.mrb[0].mxu0
      %v4827 = vadd.f32 %v4758, %v4826
      %v4828 = vpop.f32.mrb[0].mxu0
      %4829 = vdwg.mxu0
      %4830 = vmatprep.subr.mxu0 0.0
      %4831 = vmatpush1.msra.mxu0 %v4737
      %4832 = vmatprep.subr.mxu0 0.0
      %4833 = vmatpush1.msra.mxu0 %v4738
      %4834 = vmatprep.subr.mxu0 0.0
      %4835 = vmatpush1.msra.mxu0 %v4739
      %4836 = vmatprep.subr.mxu0 0.0
      %4837 = vmatpush1.msra.mxu0 %v4740
      %4838 = vmatprep.subr.mxu0 0.0
      %4839 = vmatpush1.msra.mxu0 %v4741
      %4840 = vmatprep.subr.mxu0 0.0
      %4841 = vmatpush1.msra.mxu0 %v4742
      %4842 = vmatprep.subr.mxu0 0.0
      %4843 = vmatpush1.msra.mxu0 %v4743
      %4844 = vmatprep.subr.mxu0 0.0
      %4845 = vmatpush1.msra.mxu0 %v4744
      %4846 = vmatprep.subr.mxu0 0.0
      %4847 = vmatpush1.msra.mxu0 %v4745
      %4848 = vmatprep.subr.mxu0 0.0
      %4849 = vmatpush1.msra.mxu0 %v4746
      %4850 = vmatprep.subr.mxu0 0.0
      %4851 = vmatpush1.msra.mxu0 %v4747
      %4852 = vmatprep.subr.mxu0 0.0
      %4853 = vmatpush1.msra.mxu0 %v4748
      %4854 = vmatprep.subr.mxu0 0.0
      %4855 = vmatpush1.msra.mxu0 %v4749
      %4856 = vmatprep.subr.mxu0 0.0
      %4857 = vmatpush1.msra.mxu0 %v4750
      %4858 = vmatprep.subr.mxu0 0.0
      %4859 = vmatpush1.msra.mxu0 %v4751
      %4860 = vmatprep.subr.mxu0 0.0
      %4861 = vmatpush1.msra.mxu0 %v4752
      %4862 = vmatprep.subr.mxu0 0.0
      %4863 = vmatpush1.msra.mxu0 0.0
      %4864 = vmatprep.subr.mxu0 0.0
      %4865 = vmatpush1.msra.mxu0 0.0
      %4866 = vmatprep.subr.mxu0 0.0
      %4867 = vmatpush1.msra.mxu0 0.0
      %4868 = vmatprep.subr.mxu0 0.0
      %4869 = vmatpush1.msra.mxu0 0.0
      %4870 = vmatprep.subr.mxu0 0.0
      %4871 = vmatpush1.msra.mxu0 0.0
      %4872 = vmatprep.subr.mxu0 0.0
      %4873 = vmatpush1.msra.mxu0 0.0
      %4874 = vmatprep.subr.mxu0 0.0
      %4875 = vmatpush1.msra.mxu0 0.0
      %4876 = vmatprep.subr.mxu0 0.0
      %4877 = vmatpush1.msra.mxu0 0.0
      %4878 = vmatprep.subr.mxu0 0.0
      %4879 = vmatpush1.msra.mxu0 0.0
      %4880 = vmatprep.subr.mxu0 0.0
      %4881 = vmatpush1.msra.mxu0 0.0
      %4882 = vmatprep.subr.mxu0 0.0
      %4883 = vmatpush1.msra.mxu0 0.0
      %4884 = vmatprep.subr.mxu0 0.0
      %4885 = vmatpush1.msra.mxu0 0.0
      %4886 = vmatprep.subr.mxu0 0.0
      %4887 = vmatpush1.msra.mxu0 0.0
      %4888 = vmatprep.subr.mxu0 0.0
      %4889 = vmatpush1.msra.mxu0 0.0
      %4890 = vmatprep.subr.mxu0 0.0
      %4891 = vmatpush1.msra.mxu0 0.0
      %4892 = vmatprep.subr.mxu0 0.0
      %4893 = vmatpush1.msra.mxu0 0.0
      %4894 = vmatprep.mubr.f32.mxu0 0.0
      %4895 = vmatmul.mubr.f32.gmra.mrb[0].mxu0 %v4704
      %v4896 = vpop.f32.mrb[0].mxu0
      %v4897 = vadd.f32 %v4827, %v4896
      %v4898 = vpop.f32.mrb[0].mxu0
      %4899 = vdwg.mxu0
      %v4900 = vld [vmem:[%s31] sm:$0xff]
      %v4901 = vld [vmem:[%s31 + $0x8] sm:$0xff]
      %v4902 = vld [vmem:[%s31 + $0x10] sm:$0xff]
      %v4903 = vld [vmem:[%s31 + $0x18] sm:$0xff]
      %v4904 = vld [vmem:[%s31 + $0x20] sm:$0xff]
      %v4905 = vld [vmem:[%s31 + $0x28] sm:$0xff]
      %v4906 = vld [vmem:[%s31 + $0x30] sm:$0xff]
      %v4907 = vld [vmem:[%s31 + $0x38] sm:$0xff]
      %v4908 = vld [vmem:[%s31 + $0x40] sm:$0xff]
      %v4909 = vld [vmem:[%s33] sm:$0x1]
      %v4911 = vlaneseq
      %v4912 = vshrl.u32 %v4911, 7
      %v4913 = vsub.s32 0, %v4912
      %v4914 = vrot.slane %v4909, %v4913
      %vm4916 = vcmask 588800
      %v4918 = vsel %vm4916, %v4897, 0
      %4920 = vmatprep.subr.mxu0 0.0
      %4921 = vmatpush1.msra.mxu0 %v4900
      %4922 = vmatprep.subr.mxu0 0.0
      %4923 = vmatpush1.msra.mxu0 %v4901
      %4924 = vmatprep.subr.mxu0 0.0
      %4925 = vmatpush1.msra.mxu0 %v4902
      %4926 = vmatprep.subr.mxu0 0.0
      %4927 = vmatpush1.msra.mxu0 %v4903
      %4928 = vmatprep.subr.mxu0 0.0
      %4929 = vmatpush1.msra.mxu0 %v4904
      %4930 = vmatprep.subr.mxu0 0.0
      %4931 = vmatpush1.msra.mxu0 %v4905
      %4932 = vmatprep.subr.mxu0 0.0
      %4933 = vmatpush1.msra.mxu0 %v4906
      %4934 = vmatprep.subr.mxu0 0.0
      %4935 = vmatpush1.msra.mxu0 %v4907
      %4936 = vmatprep.subr.mxu0 0.0
      %4937 = vmatpush1.msra.mxu0 %v4908
      %4938 = vmatprep.subr.mxu0 0.0
      %4939 = vmatpush1.msra.mxu0 0.0
      %4940 = vmatprep.subr.mxu0 0.0
      %4941 = vmatpush1.msra.mxu0 0.0
      %4942 = vmatprep.subr.mxu0 0.0
      %4943 = vmatpush1.msra.mxu0 0.0
      %4944 = vmatprep.subr.mxu0 0.0
      %4945 = vmatpush1.msra.mxu0 0.0
      %4946 = vmatprep.subr.mxu0 0.0
      %4947 = vmatpush1.msra.mxu0 0.0
      %4948 = vmatprep.subr.mxu0 0.0
      %4949 = vmatpush1.msra.mxu0 0.0
      %4950 = vmatprep.subr.mxu0 0.0
      %4951 = vmatpush1.msra.mxu0 0.0
      %4952 = vmatprep.subr.mxu0 0.0
      %4953 = vmatpush1.msra.mxu0 0.0
      %4954 = vmatprep.subr.mxu0 0.0
      %4955 = vmatpush1.msra.mxu0 0.0
      %4956 = vmatprep.subr.mxu0 0.0
      %4957 = vmatpush1.msra.mxu0 0.0
      %4958 = vmatprep.subr.mxu0 0.0
      %4959 = vmatpush1.msra.mxu0 0.0
      %4960 = vmatprep.subr.mxu0 0.0
      %4961 = vmatpush1.msra.mxu0 0.0
      %4962 = vmatprep.subr.mxu0 0.0
      %4963 = vmatpush1.msra.mxu0 0.0
      %4964 = vmatprep.subr.mxu0 0.0
      %4965 = vmatpush1.msra.mxu0 0.0
      %4966 = vmatprep.subr.mxu0 0.0
      %4967 = vmatpush1.msra.mxu0 0.0
      %4968 = vmatprep.subr.mxu0 0.0
      %4969 = vmatpush1.msra.mxu0 0.0
      %4970 = vmatprep.subr.mxu0 0.0
      %4971 = vmatpush1.msra.mxu0 0.0
      %4972 = vmatprep.subr.mxu0 0.0
      %4973 = vmatpush1.msra.mxu0 0.0
      %4974 = vmatprep.subr.mxu0 0.0
      %4975 = vmatpush1.msra.mxu0 0.0
      %4976 = vmatprep.subr.mxu0 0.0
      %4977 = vmatpush1.msra.mxu0 0.0
      %4978 = vmatprep.subr.mxu0 0.0
      %4979 = vmatpush1.msra.mxu0 0.0
      %4980 = vmatprep.subr.mxu0 0.0
      %4981 = vmatpush1.msra.mxu0 0.0
      %4982 = vmatprep.subr.mxu0 0.0
      %4983 = vmatpush1.msra.mxu0 0.0
      %4984 = vmatprep.mubr.f32.mxu0 0.0
      %4985 = vmatmul.mubr.f32.gmra.mrb[0].mxu0 %v4918
      %v4986 = vpop.f32.mrb[0].mxu0
      %v4987 = vadd.f32 %v4914, %v4986
      %v4988 = vpop.f32.mrb[0].mxu0
      %4989 = vdwg.mxu0
      %v4990 = vld [vmem:[%s39] sm:$0x3]
      %v4991 = vld [vmem:[%s35] ss:$2 sm:$0x3]
      %4993 = vset.pattern.permute.xlu0 0
      %4994 = vperm.xlu0 %4993, %v4987
      %v4995 = vpop.permute.xlu0 %4994
      %v4998 = vlaneseq
      %v4999 = vshrl.u32 %v4998, 7
      %v5000 = vsub.s32 0, %v4999
      %v5001 = vrot.slane %v4991, %v5000
      %v5002 = vlaneseq
      %v5003 = vshrl.u32 %v5002, 7
      %v5004 = vsub.s32 1, %v5003
      %v5005 = vrot.slane %v4991, %v5004
      %v5008 = vmul.f32 %v4995, %v5001
      %v5009 = vmul.f32 %v4995, %v5005
      %s5010 = scalar_lea.vmem %s35, 1
      %v5011 = vld [vmem:[%s5010] ss:$2 sm:$0x3]
      %5012 = vset.pattern.permute.xlu0 5
      %5013 = vperm.xlu0 %5012, %v4987
      %v5014 = vpop.permute.xlu0 %5013
      %v5017 = vlaneseq
      %v5018 = vshrl.u32 %v5017, 7
      %v5019 = vsub.s32 0, %v5018
      %v5020 = vrot.slane %v5011, %v5019
      %v5021 = vlaneseq
      %v5022 = vshrl.u32 %v5021, 7
      %v5023 = vsub.s32 1, %v5022
      %v5024 = vrot.slane %v5011, %v5023
      %v5027 = vmul.f32 %v5014, %v5020
      %v5028 = vmul.f32 %v5014, %v5024
      %v5029 = vadd.f32 %v5008, %v5027
      %v5030 = vadd.f32 %v5009, %v5028
      %v5031 = vld [vmem:[%s37] sm:$0xff]
      %v5032 = vld [vmem:[%s37 + $0x8] sm:$0xff]
      %v5033 = vld [vmem:[%s37 + $0x10] sm:$0xff]
      %v5034 = vld [vmem:[%s37 + $0x18] sm:$0xff]
      %v5035 = vld [vmem:[%s37 + $0x20] sm:$0xff]
      %v5036 = vld [vmem:[%s37 + $0x28] sm:$0xff]
      %v5037 = vld [vmem:[%s37 + $0x30] sm:$0xff]
      %v5038 = vld [vmem:[%s37 + $0x38] sm:$0xff]
      %v5039 = vld [vmem:[%s37 + $0x40] sm:$0xff]
      %v5040 = vld [vmem:[%s37 + $0x48] sm:$0xff]
      %v5041 = vld [vmem:[%s37 + $0x50] sm:$0xff]
      %v5042 = vld [vmem:[%s37 + $0x58] sm:$0xff]
      %v5043 = vld [vmem:[%s37 + $0x60] sm:$0xff]
      %v5044 = vld [vmem:[%s37 + $0x68] sm:$0xff]
      %v5045 = vld [vmem:[%s37 + $0x70] sm:$0xff]
      %v5046 = vld [vmem:[%s37 + $0x78] sm:$0xff]
      %v5048 = vsel %vm3504, 0.0, 0
      %5050 = vmatprep.subr.mxu0 %v5032
      %5051 = vmatpush1.msra.mxu0 %v5031
      %5052 = vmatprep.subr.mxu0 %v5034
      %5053 = vmatpush1.msra.mxu0 %v5033
      %5054 = vmatprep.subr.mxu0 %v5036
      %5055 = vmatpush1.msra.mxu0 %v5035
      %5056 = vmatprep.subr.mxu0 %v5038
      %5057 = vmatpush1.msra.mxu0 %v5037
      %5058 = vmatprep.subr.mxu0 %v5040
      %5059 = vmatpush1.msra.mxu0 %v5039
      %5060 = vmatprep.subr.mxu0 %v5042
      %5061 = vmatpush1.msra.mxu0 %v5041
      %5062 = vmatprep.subr.mxu0 %v5044
      %5063 = vmatpush1.msra.mxu0 %v5043
      %5064 = vmatprep.subr.mxu0 %v5046
      %5065 = vmatpush1.msra.mxu0 %v5045
      %5066 = vmatprep.subr.mxu0 0.0
      %5067 = vmatpush1.msra.mxu0 0.0
      %5068 = vmatprep.subr.mxu0 0.0
      %5069 = vmatpush1.msra.mxu0 0.0
      %5070 = vmatprep.subr.mxu0 0.0
      %5071 = vmatpush1.msra.mxu0 0.0
      %5072 = vmatprep.subr.mxu0 0.0
      %5073 = vmatpush1.msra.mxu0 0.0
      %5074 = vmatprep.subr.mxu0 0.0
      %5075 = vmatpush1.msra.mxu0 0.0
      %5076 = vmatprep.subr.mxu0 0.0
      %5077 = vmatpush1.msra.mxu0 0.0
      %5078 = vmatprep.subr.mxu0 0.0
      %5079 = vmatpush1.msra.mxu0 0.0
      %5080 = vmatprep.subr.mxu0 0.0
      %5081 = vmatpush1.msra.mxu0 0.0
      %5082 = vmatprep.subr.mxu0 0.0
      %5083 = vmatpush1.msra.mxu0 0.0
      %5084 = vmatprep.subr.mxu0 0.0
      %5085 = vmatpush1.msra.mxu0 0.0
      %5086 = vmatprep.subr.mxu0 0.0
      %5087 = vmatpush1.msra.mxu0 0.0
      %5088 = vmatprep.subr.mxu0 0.0
      %5089 = vmatpush1.msra.mxu0 0.0
      %5090 = vmatprep.subr.mxu0 0.0
      %5091 = vmatpush1.msra.mxu0 0.0
      %5092 = vmatprep.subr.mxu0 0.0
      %5093 = vmatpush1.msra.mxu0 0.0
      %5094 = vmatprep.subr.mxu0 0.0
      %5095 = vmatpush1.msra.mxu0 0.0
      %5096 = vmatprep.subr.mxu0 0.0
      %5097 = vmatpush1.msra.mxu0 0.0
      %5098 = vmatprep.subr.mxu0 0.0
      %5099 = vmatpush1.msra.mxu0 0.0
      %5100 = vmatprep.subr.mxu0 0.0
      %5101 = vmatpush1.msra.mxu0 0.0
      %5102 = vmatprep.subr.mxu0 0.0
      %5103 = vmatpush1.msra.mxu0 0.0
      %5104 = vmatprep.subr.mxu0 0.0
      %5105 = vmatpush1.msra.mxu0 0.0
      %5106 = vmatprep.subr.mxu0 0.0
      %5107 = vmatpush1.msra.mxu0 0.0
      %5108 = vmatprep.subr.mxu0 0.0
      %5109 = vmatpush1.msra.mxu0 0.0
      %5110 = vmatprep.subr.mxu0 0.0
      %5111 = vmatpush1.msra.mxu0 0.0
      %5112 = vmatprep.subr.mxu0 0.0
      %5113 = vmatpush1.msra.mxu0 0.0
      %5114 = vmatprep.mubr.f32.mxu0 0.0
      %5115 = vmatmul.mubr.f32.gmra.mrb[0].mxu0 %v5048
      %v5116 = vpop.f32.mrb[0].mxu0
      %v5117 = vadd.f32 0.0, %v5116
      %v5118 = vpop.f32.mrb[0].mxu0
      %v5119 = vadd.f32 0.0, %v5118
      %5120 = vdwg.mxu0
      %v5121 = vadd.f32 %v5029, %v5117
      %v5122 = vadd.f32 %v5030, %v5119
      %v5124 = vlaneseq
      %v5125 = vshrl.u32 %v5124, 7
      %v5126 = vsub.s32 0, %v5125
      %v5127 = vrot.slane %v4990, %v5126
      %v5128 = vlaneseq
      %v5129 = vshrl.u32 %v5128, 7
      %v5130 = vsub.s32 1, %v5129
      %v5131 = vrot.slane %v4990, %v5130
      %v5134 = vadd.f32 %v5121, %v5127
      %v5135 = vadd.f32 %v5122, %v5131
      %v5136 = vsub.f32 0.0, %v5134
      %v5137 = vsub.f32 0.0, %v5135
      %v5138 = vmul.f32 %v5136, 1.442695
      %v5139 = vpow.pop %v5138
      %v5140 = vmul.f32 %v5137, 1.442695
      %v5141 = vpow.pop %v5140
      %v5142 = vadd.f32 %v5139, 1.0
      %v5143 = vadd.f32 %v5141, 1.0
      %v5144 = vrcp.pop %v5142
      %v5145 = vmul.f32 1.0, %v5144
      %v5146 = vrcp.pop %v5143
      %v5147 = vmul.f32 1.0, %v5146
      %v5148 = vtanh.pop %v5135
      %v5149 = vmul.f32 %v5145, 0.0
      %5151 = vrot.lane.b32.xlu0 %v5148, 64
      %v5152 = vpop.permute.xlu0 %5151
      %v5154 = vmul.f32 %v5145, %v5152
      %5156 = vrot.lane.b32.xlu0 %v5154, 64
      %v5157 = vpop.permute.xlu0 %5156
      %v5159 = vadd.f32 %v5149, %v5157
      %v5160 = vtanh.pop %v5159
      %5162 = vrot.lane.b32.xlu0 %v5160, 64
      %v5163 = vpop.permute.xlu0 %5162
      %v5165 = vmul.f32 %v5147, %v5163
      %5166 = vset.pattern.permute.xlu0 1
      %5167 = vperm.xlu0 %5166, %v4987
      %v5168 = vpop.permute.xlu0 %5167
      %v5170 = vmul.f32 %v5168, %v5001
      %v5171 = vmul.f32 %v5168, %v5005
      %5172 = vset.pattern.permute.xlu0 4
      %5173 = vperm.xlu0 %5172, %v4987
      %v5174 = vpop.permute.xlu0 %5173
      %v5176 = vmul.f32 %v5174, %v5020
      %v5177 = vmul.f32 %v5174, %v5024
      %v5178 = vadd.f32 %v5170, %v5176
      %v5179 = vadd.f32 %v5171, %v5177
      %v5181 = vsel %vm3504, %v5165, 0
      %5183 = vmatprep.subr.mxu0 %v5032
      %5184 = vmatpush1.msra.mxu0 %v5031
      %5185 = vmatprep.subr.mxu0 %v5034
      %5186 = vmatpush1.msra.mxu0 %v5033
      %5187 = vmatprep.subr.mxu0 %v5036
      %5188 = vmatpush1.msra.mxu0 %v5035
      %5189 = vmatprep.subr.mxu0 %v5038
      %5190 = vmatpush1.msra.mxu0 %v5037
      %5191 = vmatprep.subr.mxu0 %v5040
      %5192 = vmatpush1.msra.mxu0 %v5039
      %5193 = vmatprep.subr.mxu0 %v5042
      %5194 = vmatpush1.msra.mxu0 %v5041
      %5195 = vmatprep.subr.mxu0 %v5044
      %5196 = vmatpush1.msra.mxu0 %v5043
      %5197 = vmatprep.subr.mxu0 %v5046
      %5198 = vmatpush1.msra.mxu0 %v5045
      %5199 = vmatprep.subr.mxu0 0.0
      %5200 = vmatpush1.msra.mxu0 0.0
      %5201 = vmatprep.subr.mxu0 0.0
      %5202 = vmatpush1.msra.mxu0 0.0
      %5203 = vmatprep.subr.mxu0 0.0
      %5204 = vmatpush1.msra.mxu0 0.0
      %5205 = vmatprep.subr.mxu0 0.0
      %5206 = vmatpush1.msra.mxu0 0.0
      %5207 = vmatprep.subr.mxu0 0.0
      %5208 = vmatpush1.msra.mxu0 0.0
      %5209 = vmatprep.subr.mxu0 0.0
      %5210 = vmatpush1.msra.mxu0 0.0
      %5211 = vmatprep.subr.mxu0 0.0
      %5212 = vmatpush1.msra.mxu0 0.0
      %5213 = vmatprep.subr.mxu0 0.0
      %5214 = vmatpush1.msra.mxu0 0.0
      %5215 = vmatprep.subr.mxu0 0.0
      %5216 = vmatpush1.msra.mxu0 0.0
      %5217 = vmatprep.subr.mxu0 0.0
      %5218 = vmatpush1.msra.mxu0 0.0
      %5219 = vmatprep.subr.mxu0 0.0
      %5220 = vmatpush1.msra.mxu0 0.0
      %5221 = vmatprep.subr.mxu0 0.0
      %5222 = vmatpush1.msra.mxu0 0.0
      %5223 = vmatprep.subr.mxu0 0.0
      %5224 = vmatpush1.msra.mxu0 0.0
      %5225 = vmatprep.subr.mxu0 0.0
      %5226 = vmatpush1.msra.mxu0 0.0
      %5227 = vmatprep.subr.mxu0 0.0
      %5228 = vmatpush1.msra.mxu0 0.0
      %5229 = vmatprep.subr.mxu0 0.0
      %5230 = vmatpush1.msra.mxu0 0.0
      %5231 = vmatprep.subr.mxu0 0.0
      %5232 = vmatpush1.msra.mxu0 0.0
      %5233 = vmatprep.subr.mxu0 0.0
      %5234 = vmatpush1.msra.mxu0 0.0
      %5235 = vmatprep.subr.mxu0 0.0
      %5236 = vmatpush1.msra.mxu0 0.0
      %5237 = vmatprep.subr.mxu0 0.0
      %5238 = vmatpush1.msra.mxu0 0.0
      %5239 = vmatprep.subr.mxu0 0.0
      %5240 = vmatpush1.msra.mxu0 0.0
      %5241 = vmatprep.subr.mxu0 0.0
      %5242 = vmatpush1.msra.mxu0 0.0
      %5243 = vmatprep.subr.mxu0 0.0
      %5244 = vmatpush1.msra.mxu0 0.0
      %5245 = vmatprep.subr.mxu0 0.0
      %5246 = vmatpush1.msra.mxu0 0.0
      %5247 = vmatprep.mubr.f32.mxu0 0.0
      %5248 = vmatmul.mubr.f32.gmra.mrb[0].mxu0 %v5181
      %v5249 = vpop.f32.mrb[0].mxu0
      %v5250 = vadd.f32 0.0, %v5249
      %v5251 = vpop.f32.mrb[0].mxu0
      %v5252 = vadd.f32 0.0, %v5251
      %5253 = vdwg.mxu0
      %v5254 = vadd.f32 %v5178, %v5250
      %v5255 = vadd.f32 %v5179, %v5252
      %v5256 = vadd.f32 %v5254, %v5127
      %v5257 = vadd.f32 %v5255, %v5131
      %v5258 = vsub.f32 0.0, %v5256
      %v5259 = vsub.f32 0.0, %v5257
      %v5260 = vmul.f32 %v5258, 1.442695
      %v5261 = vpow.pop %v5260
      %v5262 = vmul.f32 %v5259, 1.442695
      %v5263 = vpow.pop %v5262
      %v5264 = vadd.f32 %v5261, 1.0
      %v5265 = vadd.f32 %v5263, 1.0
      %v5266 = vrcp.pop %v5264
      %v5267 = vmul.f32 1.0, %v5266
      %v5268 = vrcp.pop %v5265
      %v5269 = vmul.f32 1.0, %v5268
      %v5270 = vtanh.pop %v5257
      %v5271 = vmul.f32 %v5267, %v5159
      %5273 = vrot.lane.b32.xlu0 %v5270, 64
      %v5274 = vpop.permute.xlu0 %5273
      %v5276 = vmul.f32 %v5267, %v5274
      %5278 = vrot.lane.b32.xlu0 %v5276, 64
      %v5279 = vpop.permute.xlu0 %5278
      %v5281 = vadd.f32 %v5271, %v5279
      %v5282 = vtanh.pop %v5281
      %5284 = vrot.lane.b32.xlu0 %v5282, 64
      %v5285 = vpop.permute.xlu0 %5284
      %v5287 = vmul.f32 %v5269, %v5285
      %5288 = vset.pattern.permute.xlu0 2
      %5289 = vperm.xlu0 %5288, %v4987
      %v5290 = vpop.permute.xlu0 %5289
      %v5292 = vmul.f32 %v5290, %v5001
      %v5293 = vmul.f32 %v5290, %v5005
      %5294 = vset.pattern.permute.xlu0 3
      %5295 = vperm.xlu0 %5294, %v4987
      %v5296 = vpop.permute.xlu0 %5295
      %v5298 = vmul.f32 %v5296, %v5020
      %v5299 = vmul.f32 %v5296, %v5024
      %v5300 = vadd.f32 %v5292, %v5298
      %v5301 = vadd.f32 %v5293, %v5299
      %v5303 = vsel %vm3504, %v5287, 0
      %5305 = vmatprep.subr.mxu0 %v5032
      %5306 = vmatpush1.msra.mxu0 %v5031
      %5307 = vmatprep.subr.mxu0 %v5034
      %5308 = vmatpush1.msra.mxu0 %v5033
      %5309 = vmatprep.subr.mxu0 %v5036
      %5310 = vmatpush1.msra.mxu0 %v5035
      %5311 = vmatprep.subr.mxu0 %v5038
      %5312 = vmatpush1.msra.mxu0 %v5037
      %5313 = vmatprep.subr.mxu0 %v5040
      %5314 = vmatpush1.msra.mxu0 %v5039
      %5315 = vmatprep.subr.mxu0 %v5042
      %5316 = vmatpush1.msra.mxu0 %v5041
      %5317 = vmatprep.subr.mxu0 %v5044
      %5318 = vmatpush1.msra.mxu0 %v5043
      %5319 = vmatprep.subr.mxu0 %v5046
      %5320 = vmatpush1.msra.mxu0 %v5045
      %5321 = vmatprep.subr.mxu0 0.0
      %5322 = vmatpush1.msra.mxu0 0.0
      %5323 = vmatprep.subr.mxu0 0.0
      %5324 = vmatpush1.msra.mxu0 0.0
      %5325 = vmatprep.subr.mxu0 0.0
      %5326 = vmatpush1.msra.mxu0 0.0
      %5327 = vmatprep.subr.mxu0 0.0
      %5328 = vmatpush1.msra.mxu0 0.0
      %5329 = vmatprep.subr.mxu0 0.0
      %5330 = vmatpush1.msra.mxu0 0.0
      %5331 = vmatprep.subr.mxu0 0.0
      %5332 = vmatpush1.msra.mxu0 0.0
      %5333 = vmatprep.subr.mxu0 0.0
      %5334 = vmatpush1.msra.mxu0 0.0
      %5335 = vmatprep.subr.mxu0 0.0
      %5336 = vmatpush1.msra.mxu0 0.0
      %5337 = vmatprep.subr.mxu0 0.0
      %5338 = vmatpush1.msra.mxu0 0.0
      %5339 = vmatprep.subr.mxu0 0.0
      %5340 = vmatpush1.msra.mxu0 0.0
      %5341 = vmatprep.subr.mxu0 0.0
      %5342 = vmatpush1.msra.mxu0 0.0
      %5343 = vmatprep.subr.mxu0 0.0
      %5344 = vmatpush1.msra.mxu0 0.0
      %5345 = vmatprep.subr.mxu0 0.0
      %5346 = vmatpush1.msra.mxu0 0.0
      %5347 = vmatprep.subr.mxu0 0.0
      %5348 = vmatpush1.msra.mxu0 0.0
      %5349 = vmatprep.subr.mxu0 0.0
      %5350 = vmatpush1.msra.mxu0 0.0
      %5351 = vmatprep.subr.mxu0 0.0
      %5352 = vmatpush1.msra.mxu0 0.0
      %5353 = vmatprep.subr.mxu0 0.0
      %5354 = vmatpush1.msra.mxu0 0.0
      %5355 = vmatprep.subr.mxu0 0.0
      %5356 = vmatpush1.msra.mxu0 0.0
      %5357 = vmatprep.subr.mxu0 0.0
      %5358 = vmatpush1.msra.mxu0 0.0
      %5359 = vmatprep.subr.mxu0 0.0
      %5360 = vmatpush1.msra.mxu0 0.0
      %5361 = vmatprep.subr.mxu0 0.0
      %5362 = vmatpush1.msra.mxu0 0.0
      %5363 = vmatprep.subr.mxu0 0.0
      %5364 = vmatpush1.msra.mxu0 0.0
      %5365 = vmatprep.subr.mxu0 0.0
      %5366 = vmatpush1.msra.mxu0 0.0
      %5367 = vmatprep.subr.mxu0 0.0
      %5368 = vmatpush1.msra.mxu0 0.0
      %5369 = vmatprep.mubr.f32.mxu0 0.0
      %5370 = vmatmul.mubr.f32.gmra.mrb[0].mxu0 %v5303
      %v5371 = vpop.f32.mrb[0].mxu0
      %v5372 = vadd.f32 0.0, %v5371
      %v5373 = vpop.f32.mrb[0].mxu0
      %v5374 = vadd.f32 0.0, %v5373
      %5375 = vdwg.mxu0
      %v5376 = vadd.f32 %v5300, %v5372
      %v5377 = vadd.f32 %v5301, %v5374
      %v5378 = vadd.f32 %v5376, %v5127
      %v5379 = vadd.f32 %v5377, %v5131
      %v5380 = vsub.f32 0.0, %v5378
      %v5381 = vsub.f32 0.0, %v5379
      %v5382 = vmul.f32 %v5380, 1.442695
      %v5383 = vpow.pop %v5382
      %v5384 = vmul.f32 %v5381, 1.442695
      %v5385 = vpow.pop %v5384
      %v5386 = vadd.f32 %v5383, 1.0
      %v5387 = vadd.f32 %v5385, 1.0
      %v5388 = vrcp.pop %v5386
      %v5389 = vmul.f32 1.0, %v5388
      %v5390 = vrcp.pop %v5387
      %v5391 = vmul.f32 1.0, %v5390
      %v5392 = vtanh.pop %v5379
      %v5393 = vmul.f32 %v5389, %v5281
      %5395 = vrot.lane.b32.xlu0 %v5392, 64
      %v5396 = vpop.permute.xlu0 %5395
      %v5398 = vmul.f32 %v5389, %v5396
      %5400 = vrot.lane.b32.xlu0 %v5398, 64
      %v5401 = vpop.permute.xlu0 %5400
      %v5403 = vadd.f32 %v5393, %v5401
      %v5404 = vtanh.pop %v5403
      %5406 = vrot.lane.b32.xlu0 %v5404, 64
      %v5407 = vpop.permute.xlu0 %5406
      %v5409 = vmul.f32 %v5391, %v5407
      %v5410 = vmul.f32 %v5296, %v5001
      %v5411 = vmul.f32 %v5296, %v5005
      %v5412 = vmul.f32 %v5290, %v5020
      %v5413 = vmul.f32 %v5290, %v5024
      %v5414 = vadd.f32 %v5410, %v5412
      %v5415 = vadd.f32 %v5411, %v5413
      %v5417 = vsel %vm3504, %v5409, 0
      %5419 = vmatprep.subr.mxu0 %v5032
      %5420 = vmatpush1.msra.mxu0 %v5031
      %5421 = vmatprep.subr.mxu0 %v5034
      %5422 = vmatpush1.msra.mxu0 %v5033
      %5423 = vmatprep.subr.mxu0 %v5036
      %5424 = vmatpush1.msra.mxu0 %v5035
      %5425 = vmatprep.subr.mxu0 %v5038
      %5426 = vmatpush1.msra.mxu0 %v5037
      %5427 = vmatprep.subr.mxu0 %v5040
      %5428 = vmatpush1.msra.mxu0 %v5039
      %5429 = vmatprep.subr.mxu0 %v5042
      %5430 = vmatpush1.msra.mxu0 %v5041
      %5431 = vmatprep.subr.mxu0 %v5044
      %5432 = vmatpush1.msra.mxu0 %v5043
      %5433 = vmatprep.subr.mxu0 %v5046
      %5434 = vmatpush1.msra.mxu0 %v5045
      %5435 = vmatprep.subr.mxu0 0.0
      %5436 = vmatpush1.msra.mxu0 0.0
      %5437 = vmatprep.subr.mxu0 0.0
      %5438 = vmatpush1.msra.mxu0 0.0
      %5439 = vmatprep.subr.mxu0 0.0
      %5440 = vmatpush1.msra.mxu0 0.0
      %5441 = vmatprep.subr.mxu0 0.0
      %5442 = vmatpush1.msra.mxu0 0.0
      %5443 = vmatprep.subr.mxu0 0.0
      %5444 = vmatpush1.msra.mxu0 0.0
      %5445 = vmatprep.subr.mxu0 0.0
      %5446 = vmatpush1.msra.mxu0 0.0
      %5447 = vmatprep.subr.mxu0 0.0
      %5448 = vmatpush1.msra.mxu0 0.0
      %5449 = vmatprep.subr.mxu0 0.0
      %5450 = vmatpush1.msra.mxu0 0.0
      %5451 = vmatprep.subr.mxu0 0.0
      %5452 = vmatpush1.msra.mxu0 0.0
      %5453 = vmatprep.subr.mxu0 0.0
      %5454 = vmatpush1.msra.mxu0 0.0
      %5455 = vmatprep.subr.mxu0 0.0
      %5456 = vmatpush1.msra.mxu0 0.0
      %5457 = vmatprep.subr.mxu0 0.0
      %5458 = vmatpush1.msra.mxu0 0.0
      %5459 = vmatprep.subr.mxu0 0.0
      %5460 = vmatpush1.msra.mxu0 0.0
      %5461 = vmatprep.subr.mxu0 0.0
      %5462 = vmatpush1.msra.mxu0 0.0
      %5463 = vmatprep.subr.mxu0 0.0
      %5464 = vmatpush1.msra.mxu0 0.0
      %5465 = vmatprep.subr.mxu0 0.0
      %5466 = vmatpush1.msra.mxu0 0.0
      %5467 = vmatprep.subr.mxu0 0.0
      %5468 = vmatpush1.msra.mxu0 0.0
      %5469 = vmatprep.subr.mxu0 0.0
      %5470 = vmatpush1.msra.mxu0 0.0
      %5471 = vmatprep.subr.mxu0 0.0
      %5472 = vmatpush1.msra.mxu0 0.0
      %5473 = vmatprep.subr.mxu0 0.0
      %5474 = vmatpush1.msra.mxu0 0.0
      %5475 = vmatprep.subr.mxu0 0.0
      %5476 = vmatpush1.msra.mxu0 0.0
      %5477 = vmatprep.subr.mxu0 0.0
      %5478 = vmatpush1.msra.mxu0 0.0
      %5479 = vmatprep.subr.mxu0 0.0
      %5480 = vmatpush1.msra.mxu0 0.0
      %5481 = vmatprep.subr.mxu0 0.0
      %5482 = vmatpush1.msra.mxu0 0.0
      %5483 = vmatprep.mubr.f32.mxu0 0.0
      %5484 = vmatmul.mubr.f32.gmra.mrb[0].mxu0 %v5417
      %v5485 = vpop.f32.mrb[0].mxu0
      %v5486 = vadd.f32 0.0, %v5485
      %v5487 = vpop.f32.mrb[0].mxu0
      %v5488 = vadd.f32 0.0, %v5487
      %5489 = vdwg.mxu0
      %v5490 = vadd.f32 %v5414, %v5486
      %v5491 = vadd.f32 %v5415, %v5488
      %v5492 = vadd.f32 %v5490, %v5127
      %v5493 = vadd.f32 %v5491, %v5131
      %v5494 = vsub.f32 0.0, %v5492
      %v5495 = vsub.f32 0.0, %v5493
      %v5496 = vmul.f32 %v5494, 1.442695
      %v5497 = vpow.pop %v5496
      %v5498 = vmul.f32 %v5495, 1.442695
      %v5499 = vpow.pop %v5498
      %v5500 = vadd.f32 %v5497, 1.0
      %v5501 = vadd.f32 %v5499, 1.0
      %v5502 = vrcp.pop %v5500
      %v5503 = vmul.f32 1.0, %v5502
      %v5504 = vrcp.pop %v5501
      %v5505 = vmul.f32 1.0, %v5504
      %v5506 = vtanh.pop %v5493
      %v5507 = vmul.f32 %v5503, %v5403
      %5509 = vrot.lane.b32.xlu0 %v5506, 64
      %v5510 = vpop.permute.xlu0 %5509
      %v5512 = vmul.f32 %v5503, %v5510
      %5514 = vrot.lane.b32.xlu0 %v5512, 64
      %v5515 = vpop.permute.xlu0 %5514
      %v5517 = vadd.f32 %v5507, %v5515
      %v5518 = vtanh.pop %v5517
      %5520 = vrot.lane.b32.xlu0 %v5518, 64
      %v5521 = vpop.permute.xlu0 %5520
      %v5523 = vmul.f32 %v5505, %v5521
      %v5524 = vmul.f32 %v5174, %v5001
      %v5525 = vmul.f32 %v5174, %v5005
      %v5526 = vmul.f32 %v5168, %v5020
      %v5527 = vmul.f32 %v5168, %v5024
      %v5528 = vadd.f32 %v5524, %v5526
      %v5529 = vadd.f32 %v5525, %v5527
      %v5531 = vsel %vm3504, %v5523, 0
      %5533 = vmatprep.subr.mxu0 %v5032
      %5534 = vmatpush1.msra.mxu0 %v5031
      %5535 = vmatprep.subr.mxu0 %v5034
      %5536 = vmatpush1.msra.mxu0 %v5033
      %5537 = vmatprep.subr.mxu0 %v5036
      %5538 = vmatpush1.msra.mxu0 %v5035
      %5539 = vmatprep.subr.mxu0 %v5038
      %5540 = vmatpush1.msra.mxu0 %v5037
      %5541 = vmatprep.subr.mxu0 %v5040
      %5542 = vmatpush1.msra.mxu0 %v5039
      %5543 = vmatprep.subr.mxu0 %v5042
      %5544 = vmatpush1.msra.mxu0 %v5041
      %5545 = vmatprep.subr.mxu0 %v5044
      %5546 = vmatpush1.msra.mxu0 %v5043
      %5547 = vmatprep.subr.mxu0 %v5046
      %5548 = vmatpush1.msra.mxu0 %v5045
      %5549 = vmatprep.subr.mxu0 0.0
      %5550 = vmatpush1.msra.mxu0 0.0
      %5551 = vmatprep.subr.mxu0 0.0
      %5552 = vmatpush1.msra.mxu0 0.0
      %5553 = vmatprep.subr.mxu0 0.0
      %5554 = vmatpush1.msra.mxu0 0.0
      %5555 = vmatprep.subr.mxu0 0.0
      %5556 = vmatpush1.msra.mxu0 0.0
      %5557 = vmatprep.subr.mxu0 0.0
      %5558 = vmatpush1.msra.mxu0 0.0
      %5559 = vmatprep.subr.mxu0 0.0
      %5560 = vmatpush1.msra.mxu0 0.0
      %5561 = vmatprep.subr.mxu0 0.0
      %5562 = vmatpush1.msra.mxu0 0.0
      %5563 = vmatprep.subr.mxu0 0.0
      %5564 = vmatpush1.msra.mxu0 0.0
      %5565 = vmatprep.subr.mxu0 0.0
      %5566 = vmatpush1.msra.mxu0 0.0
      %5567 = vmatprep.subr.mxu0 0.0
      %5568 = vmatpush1.msra.mxu0 0.0
      %5569 = vmatprep.subr.mxu0 0.0
      %5570 = vmatpush1.msra.mxu0 0.0
      %5571 = vmatprep.subr.mxu0 0.0
      %5572 = vmatpush1.msra.mxu0 0.0
      %5573 = vmatprep.subr.mxu0 0.0
      %5574 = vmatpush1.msra.mxu0 0.0
      %5575 = vmatprep.subr.mxu0 0.0
      %5576 = vmatpush1.msra.mxu0 0.0
      %5577 = vmatprep.subr.mxu0 0.0
      %5578 = vmatpush1.msra.mxu0 0.0
      %5579 = vmatprep.subr.mxu0 0.0
      %5580 = vmatpush1.msra.mxu0 0.0
      %5581 = vmatprep.subr.mxu0 0.0
      %5582 = vmatpush1.msra.mxu0 0.0
      %5583 = vmatprep.subr.mxu0 0.0
      %5584 = vmatpush1.msra.mxu0 0.0
      %5585 = vmatprep.subr.mxu0 0.0
      %5586 = vmatpush1.msra.mxu0 0.0
      %5587 = vmatprep.subr.mxu0 0.0
      %5588 = vmatpush1.msra.mxu0 0.0
      %5589 = vmatprep.subr.mxu0 0.0
      %5590 = vmatpush1.msra.mxu0 0.0
      %5591 = vmatprep.subr.mxu0 0.0
      %5592 = vmatpush1.msra.mxu0 0.0
      %5593 = vmatprep.subr.mxu0 0.0
      %5594 = vmatpush1.msra.mxu0 0.0
      %5595 = vmatprep.subr.mxu0 0.0
      %5596 = vmatpush1.msra.mxu0 0.0
      %5597 = vmatprep.mubr.f32.mxu0 0.0
      %5598 = vmatmul.mubr.f32.gmra.mrb[0].mxu0 %v5531
      %v5599 = vpop.f32.mrb[0].mxu0
      %v5600 = vadd.f32 0.0, %v5599
      %v5601 = vpop.f32.mrb[0].mxu0
      %v5602 = vadd.f32 0.0, %v5601
      %5603 = vdwg.mxu0
      %v5604 = vadd.f32 %v5528, %v5600
      %v5605 = vadd.f32 %v5529, %v5602
      %v5606 = vadd.f32 %v5604, %v5127
      %v5607 = vadd.f32 %v5605, %v5131
      %v5608 = vsub.f32 0.0, %v5606
      %v5609 = vsub.f32 0.0, %v5607
      %v5610 = vmul.f32 %v5608, 1.442695
      %v5611 = vpow.pop %v5610
      %v5612 = vmul.f32 %v5609, 1.442695
      %v5613 = vpow.pop %v5612
      %v5614 = vadd.f32 %v5611, 1.0
      %v5615 = vadd.f32 %v5613, 1.0
      %v5616 = vrcp.pop %v5614
      %v5617 = vmul.f32 1.0, %v5616
      %v5618 = vrcp.pop %v5615
      %v5619 = vmul.f32 1.0, %v5618
      %v5620 = vtanh.pop %v5607
      %v5621 = vmul.f32 %v5617, %v5517
      %5623 = vrot.lane.b32.xlu0 %v5620, 64
      %v5624 = vpop.permute.xlu0 %5623
      %v5626 = vmul.f32 %v5617, %v5624
      %5628 = vrot.lane.b32.xlu0 %v5626, 64
      %v5629 = vpop.permute.xlu0 %5628
      %v5631 = vadd.f32 %v5621, %v5629
      %v5632 = vtanh.pop %v5631
      %5634 = vrot.lane.b32.xlu0 %v5632, 64
      %v5635 = vpop.permute.xlu0 %5634
      %v5637 = vmul.f32 %v5619, %v5635
      %v5638 = vmul.f32 %v5014, %v5001
      %v5639 = vmul.f32 %v5014, %v5005
      %v5640 = vmul.f32 %v4995, %v5020
      %v5641 = vmul.f32 %v4995, %v5024
      %v5642 = vadd.f32 %v5638, %v5640
      %v5643 = vadd.f32 %v5639, %v5641
      %v5645 = vsel %vm3504, %v5637, 0
      %5647 = vmatprep.subr.mxu0 %v5032
      %5648 = vmatpush1.msra.mxu0 %v5031
      %5649 = vmatprep.subr.mxu0 %v5034
      %5650 = vmatpush1.msra.mxu0 %v5033
      %5651 = vmatprep.subr.mxu0 %v5036
      %5652 = vmatpush1.msra.mxu0 %v5035
      %5653 = vmatprep.subr.mxu0 %v5038
      %5654 = vmatpush1.msra.mxu0 %v5037
      %5655 = vmatprep.subr.mxu0 %v5040
      %5656 = vmatpush1.msra.mxu0 %v5039
      %5657 = vmatprep.subr.mxu0 %v5042
      %5658 = vmatpush1.msra.mxu0 %v5041
      %5659 = vmatprep.subr.mxu0 %v5044
      %5660 = vmatpush1.msra.mxu0 %v5043
      %5661 = vmatprep.subr.mxu0 %v5046
      %5662 = vmatpush1.msra.mxu0 %v5045
      %5663 = vmatprep.subr.mxu0 0.0
      %5664 = vmatpush1.msra.mxu0 0.0
      %5665 = vmatprep.subr.mxu0 0.0
      %5666 = vmatpush1.msra.mxu0 0.0
      %5667 = vmatprep.subr.mxu0 0.0
      %5668 = vmatpush1.msra.mxu0 0.0
      %5669 = vmatprep.subr.mxu0 0.0
      %5670 = vmatpush1.msra.mxu0 0.0
      %5671 = vmatprep.subr.mxu0 0.0
      %5672 = vmatpush1.msra.mxu0 0.0
      %5673 = vmatprep.subr.mxu0 0.0
      %5674 = vmatpush1.msra.mxu0 0.0
      %5675 = vmatprep.subr.mxu0 0.0
      %5676 = vmatpush1.msra.mxu0 0.0
      %5677 = vmatprep.subr.mxu0 0.0
      %5678 = vmatpush1.msra.mxu0 0.0
      %5679 = vmatprep.subr.mxu0 0.0
      %5680 = vmatpush1.msra.mxu0 0.0
      %5681 = vmatprep.subr.mxu0 0.0
      %5682 = vmatpush1.msra.mxu0 0.0
      %5683 = vmatprep.subr.mxu0 0.0
      %5684 = vmatpush1.msra.mxu0 0.0
      %5685 = vmatprep.subr.mxu0 0.0
      %5686 = vmatpush1.msra.mxu0 0.0
      %5687 = vmatprep.subr.mxu0 0.0
      %5688 = vmatpush1.msra.mxu0 0.0
      %5689 = vmatprep.subr.mxu0 0.0
      %5690 = vmatpush1.msra.mxu0 0.0
      %5691 = vmatprep.subr.mxu0 0.0
      %5692 = vmatpush1.msra.mxu0 0.0
      %5693 = vmatprep.subr.mxu0 0.0
      %5694 = vmatpush1.msra.mxu0 0.0
      %5695 = vmatprep.subr.mxu0 0.0
      %5696 = vmatpush1.msra.mxu0 0.0
      %5697 = vmatprep.subr.mxu0 0.0
      %5698 = vmatpush1.msra.mxu0 0.0
      %5699 = vmatprep.subr.mxu0 0.0
      %5700 = vmatpush1.msra.mxu0 0.0
      %5701 = vmatprep.subr.mxu0 0.0
      %5702 = vmatpush1.msra.mxu0 0.0
      %5703 = vmatprep.subr.mxu0 0.0
      %5704 = vmatpush1.msra.mxu0 0.0
      %5705 = vmatprep.subr.mxu0 0.0
      %5706 = vmatpush1.msra.mxu0 0.0
      %5707 = vmatprep.subr.mxu0 0.0
      %5708 = vmatpush1.msra.mxu0 0.0
      %5709 = vmatprep.subr.mxu0 0.0
      %5710 = vmatpush1.msra.mxu0 0.0
      %5711 = vmatprep.mubr.f32.mxu0 0.0
      %5712 = vmatmul.mubr.f32.gmra.mrb[0].mxu0 %v5645
      %v5713 = vpop.f32.mrb[0].mxu0
      %v5714 = vadd.f32 0.0, %v5713
      %v5715 = vpop.f32.mrb[0].mxu0
      %v5716 = vadd.f32 0.0, %v5715
      %5717 = vdwg.mxu0
      %v5718 = vadd.f32 %v5642, %v5714
      %v5719 = vadd.f32 %v5643, %v5716
      %v5720 = vadd.f32 %v5718, %v5127
      %v5721 = vadd.f32 %v5719, %v5131
      %v5722 = vsub.f32 0.0, %v5720
      %v5723 = vsub.f32 0.0, %v5721
      %v5724 = vmul.f32 %v5722, 1.442695
      %v5725 = vpow.pop %v5724
      %v5726 = vmul.f32 %v5723, 1.442695
      %v5727 = vpow.pop %v5726
      %v5728 = vadd.f32 %v5725, 1.0
      %v5729 = vadd.f32 %v5727, 1.0
      %v5730 = vrcp.pop %v5728
      %v5731 = vmul.f32 1.0, %v5730
      %v5732 = vrcp.pop %v5729
      %v5733 = vmul.f32 1.0, %v5732
      %v5734 = vtanh.pop %v5721
      %v5735 = vmul.f32 %v5731, %v5631
      %5737 = vrot.lane.b32.xlu0 %v5734, 64
      %v5738 = vpop.permute.xlu0 %5737
      %v5740 = vmul.f32 %v5731, %v5738
      %5742 = vrot.lane.b32.xlu0 %v5740, 64
      %v5743 = vpop.permute.xlu0 %5742
      %v5745 = vadd.f32 %v5735, %v5743
      %v5746 = vtanh.pop %v5745
      %5748 = vrot.lane.b32.xlu0 %v5746, 64
      %v5749 = vpop.permute.xlu0 %5748
      %v5751 = vmul.f32 %v5733, %v5749
      %v5752 = vld [vmem:[%s47] sm:$0x3]
      %v5753 = vld [vmem:[%s41] sm:$0xff]
      %v5754 = vld [vmem:[%s41 + $0x8] sm:$0xff]
      %v5755 = vld [vmem:[%s41 + $0x10] sm:$0xff]
      %v5756 = vld [vmem:[%s41 + $0x18] sm:$0xff]
      %v5757 = vld [vmem:[%s41 + $0x20] sm:$0xff]
      %v5758 = vld [vmem:[%s41 + $0x28] sm:$0xff]
      %v5759 = vld [vmem:[%s41 + $0x30] sm:$0xff]
      %v5760 = vld [vmem:[%s41 + $0x38] sm:$0xff]
      %v5761 = vld [vmem:[%s41 + $0x40] sm:$0xff]
      %v5762 = vld [vmem:[%s41 + $0x48] sm:$0xff]
      %v5763 = vld [vmem:[%s41 + $0x50] sm:$0xff]
      %v5764 = vld [vmem:[%s41 + $0x58] sm:$0xff]
      %v5765 = vld [vmem:[%s41 + $0x60] sm:$0xff]
      %v5766 = vld [vmem:[%s41 + $0x68] sm:$0xff]
      %v5767 = vld [vmem:[%s41 + $0x70] sm:$0xff]
      %v5768 = vld [vmem:[%s41 + $0x78] sm:$0xff]
      %v5769 = vld [vmem:[%s43] sm:$0xff]
      %v5770 = vld [vmem:[%s43 + $0x8] sm:$0xff]
      %v5771 = vld [vmem:[%s43 + $0x10] sm:$0xff]
      %v5772 = vld [vmem:[%s43 + $0x18] sm:$0xff]
      %v5773 = vld [vmem:[%s43 + $0x20] sm:$0xff]
      %v5774 = vld [vmem:[%s43 + $0x28] sm:$0xff]
      %v5775 = vld [vmem:[%s43 + $0x30] sm:$0xff]
      %v5776 = vld [vmem:[%s43 + $0x38] sm:$0xff]
      %v5777 = vld [vmem:[%s43 + $0x40] sm:$0xff]
      %v5778 = vld [vmem:[%s43 + $0x48] sm:$0xff]
      %v5779 = vld [vmem:[%s43 + $0x50] sm:$0xff]
      %v5780 = vld [vmem:[%s43 + $0x58] sm:$0xff]
      %v5781 = vld [vmem:[%s43 + $0x60] sm:$0xff]
      %v5782 = vld [vmem:[%s43 + $0x68] sm:$0xff]
      %v5783 = vld [vmem:[%s43 + $0x70] sm:$0xff]
      %v5784 = vld [vmem:[%s43 + $0x78] sm:$0xff]
      %v5786 = vsel %vm3504, %v5751, 0
      %5788 = vmatprep.subr.mxu0 %v5770
      %5789 = vmatpush1.msra.mxu0 %v5769
      %5790 = vmatprep.subr.mxu0 %v5772
      %5791 = vmatpush1.msra.mxu0 %v5771
      %5792 = vmatprep.subr.mxu0 %v5774
      %5793 = vmatpush1.msra.mxu0 %v5773
      %5794 = vmatprep.subr.mxu0 %v5776
      %5795 = vmatpush1.msra.mxu0 %v5775
      %5796 = vmatprep.subr.mxu0 %v5778
      %5797 = vmatpush1.msra.mxu0 %v5777
      %5798 = vmatprep.subr.mxu0 %v5780
      %5799 = vmatpush1.msra.mxu0 %v5779
      %5800 = vmatprep.subr.mxu0 %v5782
      %5801 = vmatpush1.msra.mxu0 %v5781
      %5802 = vmatprep.subr.mxu0 %v5784
      %5803 = vmatpush1.msra.mxu0 %v5783
      %5804 = vmatprep.subr.mxu0 0.0
      %5805 = vmatpush1.msra.mxu0 0.0
      %5806 = vmatprep.subr.mxu0 0.0
      %5807 = vmatpush1.msra.mxu0 0.0
      %5808 = vmatprep.subr.mxu0 0.0
      %5809 = vmatpush1.msra.mxu0 0.0
      %5810 = vmatprep.subr.mxu0 0.0
      %5811 = vmatpush1.msra.mxu0 0.0
      %5812 = vmatprep.subr.mxu0 0.0
      %5813 = vmatpush1.msra.mxu0 0.0
      %5814 = vmatprep.subr.mxu0 0.0
      %5815 = vmatpush1.msra.mxu0 0.0
      %5816 = vmatprep.subr.mxu0 0.0
      %5817 = vmatpush1.msra.mxu0 0.0
      %5818 = vmatprep.subr.mxu0 0.0
      %5819 = vmatpush1.msra.mxu0 0.0
      %5820 = vmatprep.subr.mxu0 0.0
      %5821 = vmatpush1.msra.mxu0 0.0
      %5822 = vmatprep.subr.mxu0 0.0
      %5823 = vmatpush1.msra.mxu0 0.0
      %5824 = vmatprep.subr.mxu0 0.0
      %5825 = vmatpush1.msra.mxu0 0.0
      %5826 = vmatprep.subr.mxu0 0.0
      %5827 = vmatpush1.msra.mxu0 0.0
      %5828 = vmatprep.subr.mxu0 0.0
      %5829 = vmatpush1.msra.mxu0 0.0
      %5830 = vmatprep.subr.mxu0 0.0
      %5831 = vmatpush1.msra.mxu0 0.0
      %5832 = vmatprep.subr.mxu0 0.0
      %5833 = vmatpush1.msra.mxu0 0.0
      %5834 = vmatprep.subr.mxu0 0.0
      %5835 = vmatpush1.msra.mxu0 0.0
      %5836 = vmatprep.subr.mxu0 0.0
      %5837 = vmatpush1.msra.mxu0 0.0
      %5838 = vmatprep.subr.mxu0 0.0
      %5839 = vmatpush1.msra.mxu0 0.0
      %5840 = vmatprep.subr.mxu0 0.0
      %5841 = vmatpush1.msra.mxu0 0.0
      %5842 = vmatprep.subr.mxu0 0.0
      %5843 = vmatpush1.msra.mxu0 0.0
      %5844 = vmatprep.subr.mxu0 0.0
      %5845 = vmatpush1.msra.mxu0 0.0
      %5846 = vmatprep.subr.mxu0 0.0
      %5847 = vmatpush1.msra.mxu0 0.0
      %5848 = vmatprep.subr.mxu0 0.0
      %5849 = vmatpush1.msra.mxu0 0.0
      %5850 = vmatprep.subr.mxu0 0.0
      %5851 = vmatpush1.msra.mxu0 0.0
      %5852 = vmatprep.mubr.f32.mxu0 0.0
      %5853 = vmatmul.mubr.f32.gmra.mrb[0].mxu0 %v5786
      %v5854 = vpop.f32.mrb[0].mxu0
      %v5855 = vadd.f32 0.0, %v5854
      %v5856 = vpop.f32.mrb[0].mxu0
      %v5857 = vadd.f32 0.0, %v5856
      %5858 = vdwg.mxu0
      %5859 = vmatprep.subr.mxu0 %v5754
      %5860 = vmatpush1.msra.mxu0 %v5753
      %5861 = vmatprep.subr.mxu0 %v5756
      %5862 = vmatpush1.msra.mxu0 %v5755
      %5863 = vmatprep.subr.mxu0 %v5758
      %5864 = vmatpush1.msra.mxu0 %v5757
      %5865 = vmatprep.subr.mxu0 %v5760
      %5866 = vmatpush1.msra.mxu0 %v5759
      %5867 = vmatprep.subr.mxu0 %v5762
      %5868 = vmatpush1.msra.mxu0 %v5761
      %5869 = vmatprep.subr.mxu0 %v5764
      %5870 = vmatpush1.msra.mxu0 %v5763
      %5871 = vmatprep.subr.mxu0 %v5766
      %5872 = vmatpush1.msra.mxu0 %v5765
      %5873 = vmatprep.subr.mxu0 %v5768
      %5874 = vmatpush1.msra.mxu0 %v5767
      %5875 = vmatprep.subr.mxu0 0.0
      %5876 = vmatpush1.msra.mxu0 0.0
      %5877 = vmatprep.subr.mxu0 0.0
      %5878 = vmatpush1.msra.mxu0 0.0
      %5879 = vmatprep.subr.mxu0 0.0
      %5880 = vmatpush1.msra.mxu0 0.0
      %5881 = vmatprep.subr.mxu0 0.0
      %5882 = vmatpush1.msra.mxu0 0.0
      %5883 = vmatprep.subr.mxu0 0.0
      %5884 = vmatpush1.msra.mxu0 0.0
      %5885 = vmatprep.subr.mxu0 0.0
      %5886 = vmatpush1.msra.mxu0 0.0
      %5887 = vmatprep.subr.mxu0 0.0
      %5888 = vmatpush1.msra.mxu0 0.0
      %5889 = vmatprep.subr.mxu0 0.0
      %5890 = vmatpush1.msra.mxu0 0.0
      %5891 = vmatprep.subr.mxu0 0.0
      %5892 = vmatpush1.msra.mxu0 0.0
      %5893 = vmatprep.subr.mxu0 0.0
      %5894 = vmatpush1.msra.mxu0 0.0
      %5895 = vmatprep.subr.mxu0 0.0
      %5896 = vmatpush1.msra.mxu0 0.0
      %5897 = vmatprep.subr.mxu0 0.0
      %5898 = vmatpush1.msra.mxu0 0.0
      %5899 = vmatprep.subr.mxu0 0.0
      %5900 = vmatpush1.msra.mxu0 0.0
      %5901 = vmatprep.subr.mxu0 0.0
      %5902 = vmatpush1.msra.mxu0 0.0
      %5903 = vmatprep.subr.mxu0 0.0
      %5904 = vmatpush1.msra.mxu0 0.0
      %5905 = vmatprep.subr.mxu0 0.0
      %5906 = vmatpush1.msra.mxu0 0.0
      %5907 = vmatprep.subr.mxu0 0.0
      %5908 = vmatpush1.msra.mxu0 0.0
      %5909 = vmatprep.subr.mxu0 0.0
      %5910 = vmatpush1.msra.mxu0 0.0
      %5911 = vmatprep.subr.mxu0 0.0
      %5912 = vmatpush1.msra.mxu0 0.0
      %5913 = vmatprep.subr.mxu0 0.0
      %5914 = vmatpush1.msra.mxu0 0.0
      %5915 = vmatprep.subr.mxu0 0.0
      %5916 = vmatpush1.msra.mxu0 0.0
      %5917 = vmatprep.subr.mxu0 0.0
      %5918 = vmatpush1.msra.mxu0 0.0
      %5919 = vmatprep.subr.mxu0 0.0
      %5920 = vmatpush1.msra.mxu0 0.0
      %5921 = vmatprep.subr.mxu0 0.0
      %5922 = vmatpush1.msra.mxu0 0.0
      %5923 = vmatprep.mubr.f32.mxu0 0.0
      %5924 = vmatmul.mubr.f32.gmra.mrb[0].mxu0 %v5181
      %v5925 = vpop.f32.mrb[0].mxu0
      %v5926 = vadd.f32 %v5855, %v5925
      %v5927 = vpop.f32.mrb[0].mxu0
      %v5928 = vadd.f32 %v5857, %v5927
      %5929 = vdwg.mxu0
      %v5930 = vld [vmem:[%s45] sm:$0xff]
      %v5931 = vld [vmem:[%s45 + $0x8] sm:$0xff]
      %v5932 = vld [vmem:[%s45 + $0x10] sm:$0xff]
      %v5933 = vld [vmem:[%s45 + $0x18] sm:$0xff]
      %v5934 = vld [vmem:[%s45 + $0x20] sm:$0xff]
      %v5935 = vld [vmem:[%s45 + $0x28] sm:$0xff]
      %v5936 = vld [vmem:[%s45 + $0x30] sm:$0xff]
      %v5937 = vld [vmem:[%s45 + $0x38] sm:$0xff]
      %v5938 = vld [vmem:[%s45 + $0x40] sm:$0xff]
      %v5939 = vld [vmem:[%s45 + $0x48] sm:$0xff]
      %v5940 = vld [vmem:[%s45 + $0x50] sm:$0xff]
      %v5941 = vld [vmem:[%s45 + $0x58] sm:$0xff]
      %v5942 = vld [vmem:[%s45 + $0x60] sm:$0xff]
      %v5943 = vld [vmem:[%s45 + $0x68] sm:$0xff]
      %v5944 = vld [vmem:[%s45 + $0x70] sm:$0xff]
      %v5945 = vld [vmem:[%s45 + $0x78] sm:$0xff]
      %5946 = vmatprep.subr.mxu0 %v5931
      %5947 = vmatpush1.msra.mxu0 %v5930
      %5948 = vmatprep.subr.mxu0 %v5933
      %5949 = vmatpush1.msra.mxu0 %v5932
      %5950 = vmatprep.subr.mxu0 %v5935
      %5951 = vmatpush1.msra.mxu0 %v5934
      %5952 = vmatprep.subr.mxu0 %v5937
      %5953 = vmatpush1.msra.mxu0 %v5936
      %5954 = vmatprep.subr.mxu0 %v5939
      %5955 = vmatpush1.msra.mxu0 %v5938
      %5956 = vmatprep.subr.mxu0 %v5941
      %5957 = vmatpush1.msra.mxu0 %v5940
      %5958 = vmatprep.subr.mxu0 %v5943
      %5959 = vmatpush1.msra.mxu0 %v5942
      %5960 = vmatprep.subr.mxu0 %v5945
      %5961 = vmatpush1.msra.mxu0 %v5944
      %5962 = vmatprep.subr.mxu0 0.0
      %5963 = vmatpush1.msra.mxu0 0.0
      %5964 = vmatprep.subr.mxu0 0.0
      %5965 = vmatpush1.msra.mxu0 0.0
      %5966 = vmatprep.subr.mxu0 0.0
      %5967 = vmatpush1.msra.mxu0 0.0
      %5968 = vmatprep.subr.mxu0 0.0
      %5969 = vmatpush1.msra.mxu0 0.0
      %5970 = vmatprep.subr.mxu0 0.0
      %5971 = vmatpush1.msra.mxu0 0.0
      %5972 = vmatprep.subr.mxu0 0.0
      %5973 = vmatpush1.msra.mxu0 0.0
      %5974 = vmatprep.subr.mxu0 0.0
      %5975 = vmatpush1.msra.mxu0 0.0
      %5976 = vmatprep.subr.mxu0 0.0
      %5977 = vmatpush1.msra.mxu0 0.0
      %5978 = vmatprep.subr.mxu0 0.0
      %5979 = vmatpush1.msra.mxu0 0.0
      %5980 = vmatprep.subr.mxu0 0.0
      %5981 = vmatpush1.msra.mxu0 0.0
      %5982 = vmatprep.subr.mxu0 0.0
      %5983 = vmatpush1.msra.mxu0 0.0
      %5984 = vmatprep.subr.mxu0 0.0
      %5985 = vmatpush1.msra.mxu0 0.0
      %5986 = vmatprep.subr.mxu0 0.0
      %5987 = vmatpush1.msra.mxu0 0.0
      %5988 = vmatprep.subr.mxu0 0.0
      %5989 = vmatpush1.msra.mxu0 0.0
      %5990 = vmatprep.subr.mxu0 0.0
      %5991 = vmatpush1.msra.mxu0 0.0
      %5992 = vmatprep.subr.mxu0 0.0
      %5993 = vmatpush1.msra.mxu0 0.0
      %5994 = vmatprep.subr.mxu0 0.0
      %5995 = vmatpush1.msra.mxu0 0.0
      %5996 = vmatprep.subr.mxu0 0.0
      %5997 = vmatpush1.msra.mxu0 0.0
      %5998 = vmatprep.subr.mxu0 0.0
      %5999 = vmatpush1.msra.mxu0 0.0
      %6000 = vmatprep.subr.mxu0 0.0
      %6001 = vmatpush1.msra.mxu0 0.0
      %6002 = vmatprep.subr.mxu0 0.0
      %6003 = vmatpush1.msra.mxu0 0.0
      %6004 = vmatprep.subr.mxu0 0.0
      %6005 = vmatpush1.msra.mxu0 0.0
      %6006 = vmatprep.subr.mxu0 0.0
      %6007 = vmatpush1.msra.mxu0 0.0
      %6008 = vmatprep.subr.mxu0 0.0
      %6009 = vmatpush1.msra.mxu0 0.0
      %6010 = vmatprep.mubr.f32.mxu0 0.0
      %6011 = vmatmul.mubr.f32.gmra.mrb[0].mxu0 %v5048
      %v6012 = vpop.f32.mrb[0].mxu0
      %v6013 = vadd.f32 0.0, %v6012
      %v6014 = vpop.f32.mrb[0].mxu0
      %v6015 = vadd.f32 0.0, %v6014
      %6016 = vdwg.mxu0
      %v6017 = vadd.f32 %v5926, %v6013
      %v6018 = vadd.f32 %v5928, %v6015
      %v6020 = vlaneseq
      %v6021 = vshrl.u32 %v6020, 7
      %v6022 = vsub.s32 0, %v6021
      %v6023 = vrot.slane %v5752, %v6022
      %v6024 = vlaneseq
      %v6025 = vshrl.u32 %v6024, 7
      %v6026 = vsub.s32 1, %v6025
      %v6027 = vrot.slane %v5752, %v6026
      %v6030 = vadd.f32 %v6017, %v6023
      %v6031 = vadd.f32 %v6018, %v6027
      %v6032 = vsub.f32 0.0, %v6030
      %v6033 = vsub.f32 0.0, %v6031
      %v6034 = vmul.f32 %v6032, 1.442695
      %v6035 = vpow.pop %v6034
      %v6036 = vmul.f32 %v6033, 1.442695
      %v6037 = vpow.pop %v6036
      %v6038 = vadd.f32 %v6035, 1.0
      %v6039 = vadd.f32 %v6037, 1.0
      %v6040 = vrcp.pop %v6038
      %v6041 = vmul.f32 1.0, %v6040
      %v6042 = vrcp.pop %v6039
      %v6043 = vmul.f32 1.0, %v6042
      %v6044 = vtanh.pop %v6031
      %v6045 = vmul.f32 %v6041, 0.0
      %6047 = vrot.lane.b32.xlu0 %v6044, 64
      %v6048 = vpop.permute.xlu0 %6047
      %v6050 = vmul.f32 %v6041, %v6048
      %6052 = vrot.lane.b32.xlu0 %v6050, 64
      %v6053 = vpop.permute.xlu0 %6052
      %v6055 = vadd.f32 %v6045, %v6053
      %v6056 = vtanh.pop %v6055
      %6058 = vrot.lane.b32.xlu0 %v6056, 64
      %v6059 = vpop.permute.xlu0 %6058
      %v6061 = vmul.f32 %v6043, %v6059
      %6062 = vmatprep.subr.mxu0 %v5770
      %6063 = vmatpush1.msra.mxu0 %v5769
      %6064 = vmatprep.subr.mxu0 %v5772
      %6065 = vmatpush1.msra.mxu0 %v5771
      %6066 = vmatprep.subr.mxu0 %v5774
      %6067 = vmatpush1.msra.mxu0 %v5773
      %6068 = vmatprep.subr.mxu0 %v5776
      %6069 = vmatpush1.msra.mxu0 %v5775
      %6070 = vmatprep.subr.mxu0 %v5778
      %6071 = vmatpush1.msra.mxu0 %v5777
      %6072 = vmatprep.subr.mxu0 %v5780
      %6073 = vmatpush1.msra.mxu0 %v5779
      %6074 = vmatprep.subr.mxu0 %v5782
      %6075 = vmatpush1.msra.mxu0 %v5781
      %6076 = vmatprep.subr.mxu0 %v5784
      %6077 = vmatpush1.msra.mxu0 %v5783
      %6078 = vmatprep.subr.mxu0 0.0
      %6079 = vmatpush1.msra.mxu0 0.0
      %6080 = vmatprep.subr.mxu0 0.0
      %6081 = vmatpush1.msra.mxu0 0.0
      %6082 = vmatprep.subr.mxu0 0.0
      %6083 = vmatpush1.msra.mxu0 0.0
      %6084 = vmatprep.subr.mxu0 0.0
      %6085 = vmatpush1.msra.mxu0 0.0
      %6086 = vmatprep.subr.mxu0 0.0
      %6087 = vmatpush1.msra.mxu0 0.0
      %6088 = vmatprep.subr.mxu0 0.0
      %6089 = vmatpush1.msra.mxu0 0.0
      %6090 = vmatprep.subr.mxu0 0.0
      %6091 = vmatpush1.msra.mxu0 0.0
      %6092 = vmatprep.subr.mxu0 0.0
      %6093 = vmatpush1.msra.mxu0 0.0
      %6094 = vmatprep.subr.mxu0 0.0
      %6095 = vmatpush1.msra.mxu0 0.0
      %6096 = vmatprep.subr.mxu0 0.0
      %6097 = vmatpush1.msra.mxu0 0.0
      %6098 = vmatprep.subr.mxu0 0.0
      %6099 = vmatpush1.msra.mxu0 0.0
      %6100 = vmatprep.subr.mxu0 0.0
      %6101 = vmatpush1.msra.mxu0 0.0
      %6102 = vmatprep.subr.mxu0 0.0
      %6103 = vmatpush1.msra.mxu0 0.0
      %6104 = vmatprep.subr.mxu0 0.0
      %6105 = vmatpush1.msra.mxu0 0.0
      %6106 = vmatprep.subr.mxu0 0.0
      %6107 = vmatpush1.msra.mxu0 0.0
      %6108 = vmatprep.subr.mxu0 0.0
      %6109 = vmatpush1.msra.mxu0 0.0
      %6110 = vmatprep.subr.mxu0 0.0
      %6111 = vmatpush1.msra.mxu0 0.0
      %6112 = vmatprep.subr.mxu0 0.0
      %6113 = vmatpush1.msra.mxu0 0.0
      %6114 = vmatprep.subr.mxu0 0.0
      %6115 = vmatpush1.msra.mxu0 0.0
      %6116 = vmatprep.subr.mxu0 0.0
      %6117 = vmatpush1.msra.mxu0 0.0
      %6118 = vmatprep.subr.mxu0 0.0
      %6119 = vmatpush1.msra.mxu0 0.0
      %6120 = vmatprep.subr.mxu0 0.0
      %6121 = vmatpush1.msra.mxu0 0.0
      %6122 = vmatprep.subr.mxu0 0.0
      %6123 = vmatpush1.msra.mxu0 0.0
      %6124 = vmatprep.subr.mxu0 0.0
      %6125 = vmatpush1.msra.mxu0 0.0
      %6126 = vmatprep.mubr.f32.mxu0 0.0
      %6127 = vmatmul.mubr.f32.gmra.mrb[0].mxu0 %v5645
      %v6128 = vpop.f32.mrb[0].mxu0
      %v6129 = vadd.f32 0.0, %v6128
      %v6130 = vpop.f32.mrb[0].mxu0
      %v6131 = vadd.f32 0.0, %v6130
      %6132 = vdwg.mxu0
      %6133 = vmatprep.subr.mxu0 %v5754
      %6134 = vmatpush1.msra.mxu0 %v5753
      %6135 = vmatprep.subr.mxu0 %v5756
      %6136 = vmatpush1.msra.mxu0 %v5755
      %6137 = vmatprep.subr.mxu0 %v5758
      %6138 = vmatpush1.msra.mxu0 %v5757
      %6139 = vmatprep.subr.mxu0 %v5760
      %6140 = vmatpush1.msra.mxu0 %v5759
      %6141 = vmatprep.subr.mxu0 %v5762
      %6142 = vmatpush1.msra.mxu0 %v5761
      %6143 = vmatprep.subr.mxu0 %v5764
      %6144 = vmatpush1.msra.mxu0 %v5763
      %6145 = vmatprep.subr.mxu0 %v5766
      %6146 = vmatpush1.msra.mxu0 %v5765
      %6147 = vmatprep.subr.mxu0 %v5768
      %6148 = vmatpush1.msra.mxu0 %v5767
      %6149 = vmatprep.subr.mxu0 0.0
      %6150 = vmatpush1.msra.mxu0 0.0
      %6151 = vmatprep.subr.mxu0 0.0
      %6152 = vmatpush1.msra.mxu0 0.0
      %6153 = vmatprep.subr.mxu0 0.0
      %6154 = vmatpush1.msra.mxu0 0.0
      %6155 = vmatprep.subr.mxu0 0.0
      %6156 = vmatpush1.msra.mxu0 0.0
      %6157 = vmatprep.subr.mxu0 0.0
      %6158 = vmatpush1.msra.mxu0 0.0
      %6159 = vmatprep.subr.mxu0 0.0
      %6160 = vmatpush1.msra.mxu0 0.0
      %6161 = vmatprep.subr.mxu0 0.0
      %6162 = vmatpush1.msra.mxu0 0.0
      %6163 = vmatprep.subr.mxu0 0.0
      %6164 = vmatpush1.msra.mxu0 0.0
      %6165 = vmatprep.subr.mxu0 0.0
      %6166 = vmatpush1.msra.mxu0 0.0
      %6167 = vmatprep.subr.mxu0 0.0
      %6168 = vmatpush1.msra.mxu0 0.0
      %6169 = vmatprep.subr.mxu0 0.0
      %6170 = vmatpush1.msra.mxu0 0.0
      %6171 = vmatprep.subr.mxu0 0.0
      %6172 = vmatpush1.msra.mxu0 0.0
      %6173 = vmatprep.subr.mxu0 0.0
      %6174 = vmatpush1.msra.mxu0 0.0
      %6175 = vmatprep.subr.mxu0 0.0
      %6176 = vmatpush1.msra.mxu0 0.0
      %6177 = vmatprep.subr.mxu0 0.0
      %6178 = vmatpush1.msra.mxu0 0.0
      %6179 = vmatprep.subr.mxu0 0.0
      %6180 = vmatpush1.msra.mxu0 0.0
      %6181 = vmatprep.subr.mxu0 0.0
      %6182 = vmatpush1.msra.mxu0 0.0
      %6183 = vmatprep.subr.mxu0 0.0
      %6184 = vmatpush1.msra.mxu0 0.0
      %6185 = vmatprep.subr.mxu0 0.0
      %6186 = vmatpush1.msra.mxu0 0.0
      %6187 = vmatprep.subr.mxu0 0.0
      %6188 = vmatpush1.msra.mxu0 0.0
      %6189 = vmatprep.subr.mxu0 0.0
      %6190 = vmatpush1.msra.mxu0 0.0
      %6191 = vmatprep.subr.mxu0 0.0
      %6192 = vmatpush1.msra.mxu0 0.0
      %6193 = vmatprep.subr.mxu0 0.0
      %6194 = vmatpush1.msra.mxu0 0.0
      %6195 = vmatprep.subr.mxu0 0.0
      %6196 = vmatpush1.msra.mxu0 0.0
      %6197 = vmatprep.mubr.f32.mxu0 0.0
      %6198 = vmatmul.mubr.f32.gmra.mrb[0].mxu0 %v5303
      %v6199 = vpop.f32.mrb[0].mxu0
      %v6200 = vadd.f32 %v6129, %v6199
      %v6201 = vpop.f32.mrb[0].mxu0
      %v6202 = vadd.f32 %v6131, %v6201
      %6203 = vdwg.mxu0
      %v6205 = vsel %vm3504, %v6061, 0
      %6207 = vmatprep.subr.mxu0 %v5931
      %6208 = vmatpush1.msra.mxu0 %v5930
      %6209 = vmatprep.subr.mxu0 %v5933
      %6210 = vmatpush1.msra.mxu0 %v5932
      %6211 = vmatprep.subr.mxu0 %v5935
      %6212 = vmatpush1.msra.mxu0 %v5934
      %6213 = vmatprep.subr.mxu0 %v5937
      %6214 = vmatpush1.msra.mxu0 %v5936
      %6215 = vmatprep.subr.mxu0 %v5939
      %6216 = vmatpush1.msra.mxu0 %v5938
      %6217 = vmatprep.subr.mxu0 %v5941
      %6218 = vmatpush1.msra.mxu0 %v5940
      %6219 = vmatprep.subr.mxu0 %v5943
      %6220 = vmatpush1.msra.mxu0 %v5942
      %6221 = vmatprep.subr.mxu0 %v5945
      %6222 = vmatpush1.msra.mxu0 %v5944
      %6223 = vmatprep.subr.mxu0 0.0
      %6224 = vmatpush1.msra.mxu0 0.0
      %6225 = vmatprep.subr.mxu0 0.0
      %6226 = vmatpush1.msra.mxu0 0.0
      %6227 = vmatprep.subr.mxu0 0.0
      %6228 = vmatpush1.msra.mxu0 0.0
      %6229 = vmatprep.subr.mxu0 0.0
      %6230 = vmatpush1.msra.mxu0 0.0
      %6231 = vmatprep.subr.mxu0 0.0
      %6232 = vmatpush1.msra.mxu0 0.0
      %6233 = vmatprep.subr.mxu0 0.0
      %6234 = vmatpush1.msra.mxu0 0.0
      %6235 = vmatprep.subr.mxu0 0.0
      %6236 = vmatpush1.msra.mxu0 0.0
      %6237 = vmatprep.subr.mxu0 0.0
      %6238 = vmatpush1.msra.mxu0 0.0
      %6239 = vmatprep.subr.mxu0 0.0
      %6240 = vmatpush1.msra.mxu0 0.0
      %6241 = vmatprep.subr.mxu0 0.0
      %6242 = vmatpush1.msra.mxu0 0.0
      %6243 = vmatprep.subr.mxu0 0.0
      %6244 = vmatpush1.msra.mxu0 0.0
      %6245 = vmatprep.subr.mxu0 0.0
      %6246 = vmatpush1.msra.mxu0 0.0
      %6247 = vmatprep.subr.mxu0 0.0
      %6248 = vmatpush1.msra.mxu0 0.0
      %6249 = vmatprep.subr.mxu0 0.0
      %6250 = vmatpush1.msra.mxu0 0.0
      %6251 = vmatprep.subr.mxu0 0.0
      %6252 = vmatpush1.msra.mxu0 0.0
      %6253 = vmatprep.subr.mxu0 0.0
      %6254 = vmatpush1.msra.mxu0 0.0
      %6255 = vmatprep.subr.mxu0 0.0
      %6256 = vmatpush1.msra.mxu0 0.0
      %6257 = vmatprep.subr.mxu0 0.0
      %6258 = vmatpush1.msra.mxu0 0.0
      %6259 = vmatprep.subr.mxu0 0.0
      %6260 = vmatpush1.msra.mxu0 0.0
      %6261 = vmatprep.subr.mxu0 0.0
      %6262 = vmatpush1.msra.mxu0 0.0
      %6263 = vmatprep.subr.mxu0 0.0
      %6264 = vmatpush1.msra.mxu0 0.0
      %6265 = vmatprep.subr.mxu0 0.0
      %6266 = vmatpush1.msra.mxu0 0.0
      %6267 = vmatprep.subr.mxu0 0.0
      %6268 = vmatpush1.msra.mxu0 0.0
      %6269 = vmatprep.subr.mxu0 0.0
      %6270 = vmatpush1.msra.mxu0 0.0
      %6271 = vmatprep.mubr.f32.mxu0 0.0
      %6272 = vmatmul.mubr.f32.gmra.mrb[0].mxu0 %v6205
      %v6273 = vpop.f32.mrb[0].mxu0
      %v6274 = vadd.f32 0.0, %v6273
      %v6275 = vpop.f32.mrb[0].mxu0
      %v6276 = vadd.f32 0.0, %v6275
      %6277 = vdwg.mxu0
      %v6278 = vadd.f32 %v6200, %v6274
      %v6279 = vadd.f32 %v6202, %v6276
      %v6280 = vadd.f32 %v6278, %v6023
      %v6281 = vadd.f32 %v6279, %v6027
      %v6282 = vsub.f32 0.0, %v6280
      %v6283 = vsub.f32 0.0, %v6281
      %v6284 = vmul.f32 %v6282, 1.442695
      %v6285 = vpow.pop %v6284
      %v6286 = vmul.f32 %v6283, 1.442695
      %v6287 = vpow.pop %v6286
      %v6288 = vadd.f32 %v6285, 1.0
      %v6289 = vadd.f32 %v6287, 1.0
      %v6290 = vrcp.pop %v6288
      %v6291 = vmul.f32 1.0, %v6290
      %v6292 = vrcp.pop %v6289
      %v6293 = vmul.f32 1.0, %v6292
      %v6294 = vtanh.pop %v6281
      %v6295 = vmul.f32 %v6291, %v6055
      %6297 = vrot.lane.b32.xlu0 %v6294, 64
      %v6298 = vpop.permute.xlu0 %6297
      %v6300 = vmul.f32 %v6291, %v6298
      %6302 = vrot.lane.b32.xlu0 %v6300, 64
      %v6303 = vpop.permute.xlu0 %6302
      %v6305 = vadd.f32 %v6295, %v6303
      %v6306 = vtanh.pop %v6305
      %6308 = vrot.lane.b32.xlu0 %v6306, 64
      %v6309 = vpop.permute.xlu0 %6308
      %v6311 = vmul.f32 %v6293, %v6309
      %6312 = vmatprep.subr.mxu0 %v5770
      %6313 = vmatpush1.msra.mxu0 %v5769
      %6314 = vmatprep.subr.mxu0 %v5772
      %6315 = vmatpush1.msra.mxu0 %v5771
      %6316 = vmatprep.subr.mxu0 %v5774
      %6317 = vmatpush1.msra.mxu0 %v5773
      %6318 = vmatprep.subr.mxu0 %v5776
      %6319 = vmatpush1.msra.mxu0 %v5775
      %6320 = vmatprep.subr.mxu0 %v5778
      %6321 = vmatpush1.msra.mxu0 %v5777
      %6322 = vmatprep.subr.mxu0 %v5780
      %6323 = vmatpush1.msra.mxu0 %v5779
      %6324 = vmatprep.subr.mxu0 %v5782
      %6325 = vmatpush1.msra.mxu0 %v5781
      %6326 = vmatprep.subr.mxu0 %v5784
      %6327 = vmatpush1.msra.mxu0 %v5783
      %6328 = vmatprep.subr.mxu0 0.0
      %6329 = vmatpush1.msra.mxu0 0.0
      %6330 = vmatprep.subr.mxu0 0.0
      %6331 = vmatpush1.msra.mxu0 0.0
      %6332 = vmatprep.subr.mxu0 0.0
      %6333 = vmatpush1.msra.mxu0 0.0
      %6334 = vmatprep.subr.mxu0 0.0
      %6335 = vmatpush1.msra.mxu0 0.0
      %6336 = vmatprep.subr.mxu0 0.0
      %6337 = vmatpush1.msra.mxu0 0.0
      %6338 = vmatprep.subr.mxu0 0.0
      %6339 = vmatpush1.msra.mxu0 0.0
      %6340 = vmatprep.subr.mxu0 0.0
      %6341 = vmatpush1.msra.mxu0 0.0
      %6342 = vmatprep.subr.mxu0 0.0
      %6343 = vmatpush1.msra.mxu0 0.0
      %6344 = vmatprep.subr.mxu0 0.0
      %6345 = vmatpush1.msra.mxu0 0.0
      %6346 = vmatprep.subr.mxu0 0.0
      %6347 = vmatpush1.msra.mxu0 0.0
      %6348 = vmatprep.subr.mxu0 0.0
      %6349 = vmatpush1.msra.mxu0 0.0
      %6350 = vmatprep.subr.mxu0 0.0
      %6351 = vmatpush1.msra.mxu0 0.0
      %6352 = vmatprep.subr.mxu0 0.0
      %6353 = vmatpush1.msra.mxu0 0.0
      %6354 = vmatprep.subr.mxu0 0.0
      %6355 = vmatpush1.msra.mxu0 0.0
      %6356 = vmatprep.subr.mxu0 0.0
      %6357 = vmatpush1.msra.mxu0 0.0
      %6358 = vmatprep.subr.mxu0 0.0
      %6359 = vmatpush1.msra.mxu0 0.0
      %6360 = vmatprep.subr.mxu0 0.0
      %6361 = vmatpush1.msra.mxu0 0.0
      %6362 = vmatprep.subr.mxu0 0.0
      %6363 = vmatpush1.msra.mxu0 0.0
      %6364 = vmatprep.subr.mxu0 0.0
      %6365 = vmatpush1.msra.mxu0 0.0
      %6366 = vmatprep.subr.mxu0 0.0
      %6367 = vmatpush1.msra.mxu0 0.0
      %6368 = vmatprep.subr.mxu0 0.0
      %6369 = vmatpush1.msra.mxu0 0.0
      %6370 = vmatprep.subr.mxu0 0.0
      %6371 = vmatpush1.msra.mxu0 0.0
      %6372 = vmatprep.subr.mxu0 0.0
      %6373 = vmatpush1.msra.mxu0 0.0
      %6374 = vmatprep.subr.mxu0 0.0
      %6375 = vmatpush1.msra.mxu0 0.0
      %6376 = vmatprep.mubr.f32.mxu0 0.0
      %6377 = vmatmul.mubr.f32.gmra.mrb[0].mxu0 %v5531
      %v6378 = vpop.f32.mrb[0].mxu0
      %v6379 = vadd.f32 0.0, %v6378
      %v6380 = vpop.f32.mrb[0].mxu0
      %v6381 = vadd.f32 0.0, %v6380
      %6382 = vdwg.mxu0
      %6383 = vmatprep.subr.mxu0 %v5754
      %6384 = vmatpush1.msra.mxu0 %v5753
      %6385 = vmatprep.subr.mxu0 %v5756
      %6386 = vmatpush1.msra.mxu0 %v5755
      %6387 = vmatprep.subr.mxu0 %v5758
      %6388 = vmatpush1.msra.mxu0 %v5757
      %6389 = vmatprep.subr.mxu0 %v5760
      %6390 = vmatpush1.msra.mxu0 %v5759
      %6391 = vmatprep.subr.mxu0 %v5762
      %6392 = vmatpush1.msra.mxu0 %v5761
      %6393 = vmatprep.subr.mxu0 %v5764
      %6394 = vmatpush1.msra.mxu0 %v5763
      %6395 = vmatprep.subr.mxu0 %v5766
      %6396 = vmatpush1.msra.mxu0 %v5765
      %6397 = vmatprep.subr.mxu0 %v5768
      %6398 = vmatpush1.msra.mxu0 %v5767
      %6399 = vmatprep.subr.mxu0 0.0
      %6400 = vmatpush1.msra.mxu0 0.0
      %6401 = vmatprep.subr.mxu0 0.0
      %6402 = vmatpush1.msra.mxu0 0.0
      %6403 = vmatprep.subr.mxu0 0.0
      %6404 = vmatpush1.msra.mxu0 0.0
      %6405 = vmatprep.subr.mxu0 0.0
      %6406 = vmatpush1.msra.mxu0 0.0
      %6407 = vmatprep.subr.mxu0 0.0
      %6408 = vmatpush1.msra.mxu0 0.0
      %6409 = vmatprep.subr.mxu0 0.0
      %6410 = vmatpush1.msra.mxu0 0.0
      %6411 = vmatprep.subr.mxu0 0.0
      %6412 = vmatpush1.msra.mxu0 0.0
      %6413 = vmatprep.subr.mxu0 0.0
      %6414 = vmatpush1.msra.mxu0 0.0
      %6415 = vmatprep.subr.mxu0 0.0
      %6416 = vmatpush1.msra.mxu0 0.0
      %6417 = vmatprep.subr.mxu0 0.0
      %6418 = vmatpush1.msra.mxu0 0.0
      %6419 = vmatprep.subr.mxu0 0.0
      %6420 = vmatpush1.msra.mxu0 0.0
      %6421 = vmatprep.subr.mxu0 0.0
      %6422 = vmatpush1.msra.mxu0 0.0
      %6423 = vmatprep.subr.mxu0 0.0
      %6424 = vmatpush1.msra.mxu0 0.0
      %6425 = vmatprep.subr.mxu0 0.0
      %6426 = vmatpush1.msra.mxu0 0.0
      %6427 = vmatprep.subr.mxu0 0.0
      %6428 = vmatpush1.msra.mxu0 0.0
      %6429 = vmatprep.subr.mxu0 0.0
      %6430 = vmatpush1.msra.mxu0 0.0
      %6431 = vmatprep.subr.mxu0 0.0
      %6432 = vmatpush1.msra.mxu0 0.0
      %6433 = vmatprep.subr.mxu0 0.0
      %6434 = vmatpush1.msra.mxu0 0.0
      %6435 = vmatprep.subr.mxu0 0.0
      %6436 = vmatpush1.msra.mxu0 0.0
      %6437 = vmatprep.subr.mxu0 0.0
      %6438 = vmatpush1.msra.mxu0 0.0
      %6439 = vmatprep.subr.mxu0 0.0
      %6440 = vmatpush1.msra.mxu0 0.0
      %6441 = vmatprep.subr.mxu0 0.0
      %6442 = vmatpush1.msra.mxu0 0.0
      %6443 = vmatprep.subr.mxu0 0.0
      %6444 = vmatpush1.msra.mxu0 0.0
      %6445 = vmatprep.subr.mxu0 0.0
      %6446 = vmatpush1.msra.mxu0 0.0
      %6447 = vmatprep.mubr.f32.mxu0 0.0
      %6448 = vmatmul.mubr.f32.gmra.mrb[0].mxu0 %v5417
      %v6449 = vpop.f32.mrb[0].mxu0
      %v6450 = vadd.f32 %v6379, %v6449
      %v6451 = vpop.f32.mrb[0].mxu0
      %v6452 = vadd.f32 %v6381, %v6451
      %6453 = vdwg.mxu0
      %v6455 = vsel %vm3504, %v6311, 0
      %6457 = vmatprep.subr.mxu0 %v5931
      %6458 = vmatpush1.msra.mxu0 %v5930
      %6459 = vmatprep.subr.mxu0 %v5933
      %6460 = vmatpush1.msra.mxu0 %v5932
      %6461 = vmatprep.subr.mxu0 %v5935
      %6462 = vmatpush1.msra.mxu0 %v5934
      %6463 = vmatprep.subr.mxu0 %v5937
      %6464 = vmatpush1.msra.mxu0 %v5936
      %6465 = vmatprep.subr.mxu0 %v5939
      %6466 = vmatpush1.msra.mxu0 %v5938
      %6467 = vmatprep.subr.mxu0 %v5941
      %6468 = vmatpush1.msra.mxu0 %v5940
      %6469 = vmatprep.subr.mxu0 %v5943
      %6470 = vmatpush1.msra.mxu0 %v5942
      %6471 = vmatprep.subr.mxu0 %v5945
      %6472 = vmatpush1.msra.mxu0 %v5944
      %6473 = vmatprep.subr.mxu0 0.0
      %6474 = vmatpush1.msra.mxu0 0.0
      %6475 = vmatprep.subr.mxu0 0.0
      %6476 = vmatpush1.msra.mxu0 0.0
      %6477 = vmatprep.subr.mxu0 0.0
      %6478 = vmatpush1.msra.mxu0 0.0
      %6479 = vmatprep.subr.mxu0 0.0
      %6480 = vmatpush1.msra.mxu0 0.0
      %6481 = vmatprep.subr.mxu0 0.0
      %6482 = vmatpush1.msra.mxu0 0.0
      %6483 = vmatprep.subr.mxu0 0.0
      %6484 = vmatpush1.msra.mxu0 0.0
      %6485 = vmatprep.subr.mxu0 0.0
      %6486 = vmatpush1.msra.mxu0 0.0
      %6487 = vmatprep.subr.mxu0 0.0
      %6488 = vmatpush1.msra.mxu0 0.0
      %6489 = vmatprep.subr.mxu0 0.0
      %6490 = vmatpush1.msra.mxu0 0.0
      %6491 = vmatprep.subr.mxu0 0.0
      %6492 = vmatpush1.msra.mxu0 0.0
      %6493 = vmatprep.subr.mxu0 0.0
      %6494 = vmatpush1.msra.mxu0 0.0
      %6495 = vmatprep.subr.mxu0 0.0
      %6496 = vmatpush1.msra.mxu0 0.0
      %6497 = vmatprep.subr.mxu0 0.0
      %6498 = vmatpush1.msra.mxu0 0.0
      %6499 = vmatprep.subr.mxu0 0.0
      %6500 = vmatpush1.msra.mxu0 0.0
      %6501 = vmatprep.subr.mxu0 0.0
      %6502 = vmatpush1.msra.mxu0 0.0
      %6503 = vmatprep.subr.mxu0 0.0
      %6504 = vmatpush1.msra.mxu0 0.0
      %6505 = vmatprep.subr.mxu0 0.0
      %6506 = vmatpush1.msra.mxu0 0.0
      %6507 = vmatprep.subr.mxu0 0.0
      %6508 = vmatpush1.msra.mxu0 0.0
      %6509 = vmatprep.subr.mxu0 0.0
      %6510 = vmatpush1.msra.mxu0 0.0
      %6511 = vmatprep.subr.mxu0 0.0
      %6512 = vmatpush1.msra.mxu0 0.0
      %6513 = vmatprep.subr.mxu0 0.0
      %6514 = vmatpush1.msra.mxu0 0.0
      %6515 = vmatprep.subr.mxu0 0.0
      %6516 = vmatpush1.msra.mxu0 0.0
      %6517 = vmatprep.subr.mxu0 0.0
      %6518 = vmatpush1.msra.mxu0 0.0
      %6519 = vmatprep.subr.mxu0 0.0
      %6520 = vmatpush1.msra.mxu0 0.0
      %6521 = vmatprep.mubr.f32.mxu0 0.0
      %6522 = vmatmul.mubr.f32.gmra.mrb[0].mxu0 %v6455
      %v6523 = vpop.f32.mrb[0].mxu0
      %v6524 = vadd.f32 0.0, %v6523
      %v6525 = vpop.f32.mrb[0].mxu0
      %v6526 = vadd.f32 0.0, %v6525
      %6527 = vdwg.mxu0
      %v6528 = vadd.f32 %v6450, %v6524
      %v6529 = vadd.f32 %v6452, %v6526
      %v6530 = vadd.f32 %v6528, %v6023
      %v6531 = vadd.f32 %v6529, %v6027
      %v6532 = vsub.f32 0.0, %v6530
      %v6533 = vsub.f32 0.0, %v6531
      %v6534 = vmul.f32 %v6532, 1.442695
      %v6535 = vpow.pop %v6534
      %v6536 = vmul.f32 %v6533, 1.442695
      %v6537 = vpow.pop %v6536
      %v6538 = vadd.f32 %v6535, 1.0
      %v6539 = vadd.f32 %v6537, 1.0
      %v6540 = vrcp.pop %v6538
      %v6541 = vmul.f32 1.0, %v6540
      %v6542 = vrcp.pop %v6539
      %v6543 = vmul.f32 1.0, %v6542
      %v6544 = vtanh.pop %v6531
      %v6545 = vmul.f32 %v6541, %v6305
      %6547 = vrot.lane.b32.xlu0 %v6544, 64
      %v6548 = vpop.permute.xlu0 %6547
      %v6550 = vmul.f32 %v6541, %v6548
      %6552 = vrot.lane.b32.xlu0 %v6550, 64
      %v6553 = vpop.permute.xlu0 %6552
      %v6555 = vadd.f32 %v6545, %v6553
      %v6556 = vtanh.pop %v6555
      %6558 = vrot.lane.b32.xlu0 %v6556, 64
      %v6559 = vpop.permute.xlu0 %6558
      %v6561 = vmul.f32 %v6543, %v6559
      %6562 = vmatprep.subr.mxu0 %v5770
      %6563 = vmatpush1.msra.mxu0 %v5769
      %6564 = vmatprep.subr.mxu0 %v5772
      %6565 = vmatpush1.msra.mxu0 %v5771
      %6566 = vmatprep.subr.mxu0 %v5774
      %6567 = vmatpush1.msra.mxu0 %v5773
      %6568 = vmatprep.subr.mxu0 %v5776
      %6569 = vmatpush1.msra.mxu0 %v5775
      %6570 = vmatprep.subr.mxu0 %v5778
      %6571 = vmatpush1.msra.mxu0 %v5777
      %6572 = vmatprep.subr.mxu0 %v5780
      %6573 = vmatpush1.msra.mxu0 %v5779
      %6574 = vmatprep.subr.mxu0 %v5782
      %6575 = vmatpush1.msra.mxu0 %v5781
      %6576 = vmatprep.subr.mxu0 %v5784
      %6577 = vmatpush1.msra.mxu0 %v5783
      %6578 = vmatprep.subr.mxu0 0.0
      %6579 = vmatpush1.msra.mxu0 0.0
      %6580 = vmatprep.subr.mxu0 0.0
      %6581 = vmatpush1.msra.mxu0 0.0
      %6582 = vmatprep.subr.mxu0 0.0
      %6583 = vmatpush1.msra.mxu0 0.0
      %6584 = vmatprep.subr.mxu0 0.0
      %6585 = vmatpush1.msra.mxu0 0.0
      %6586 = vmatprep.subr.mxu0 0.0
      %6587 = vmatpush1.msra.mxu0 0.0
      %6588 = vmatprep.subr.mxu0 0.0
      %6589 = vmatpush1.msra.mxu0 0.0
      %6590 = vmatprep.subr.mxu0 0.0
      %6591 = vmatpush1.msra.mxu0 0.0
      %6592 = vmatprep.subr.mxu0 0.0
      %6593 = vmatpush1.msra.mxu0 0.0
      %6594 = vmatprep.subr.mxu0 0.0
      %6595 = vmatpush1.msra.mxu0 0.0
      %6596 = vmatprep.subr.mxu0 0.0
      %6597 = vmatpush1.msra.mxu0 0.0
      %6598 = vmatprep.subr.mxu0 0.0
      %6599 = vmatpush1.msra.mxu0 0.0
      %6600 = vmatprep.subr.mxu0 0.0
      %6601 = vmatpush1.msra.mxu0 0.0
      %6602 = vmatprep.subr.mxu0 0.0
      %6603 = vmatpush1.msra.mxu0 0.0
      %6604 = vmatprep.subr.mxu0 0.0
      %6605 = vmatpush1.msra.mxu0 0.0
      %6606 = vmatprep.subr.mxu0 0.0
      %6607 = vmatpush1.msra.mxu0 0.0
      %6608 = vmatprep.subr.mxu0 0.0
      %6609 = vmatpush1.msra.mxu0 0.0
      %6610 = vmatprep.subr.mxu0 0.0
      %6611 = vmatpush1.msra.mxu0 0.0
      %6612 = vmatprep.subr.mxu0 0.0
      %6613 = vmatpush1.msra.mxu0 0.0
      %6614 = vmatprep.subr.mxu0 0.0
      %6615 = vmatpush1.msra.mxu0 0.0
      %6616 = vmatprep.subr.mxu0 0.0
      %6617 = vmatpush1.msra.mxu0 0.0
      %6618 = vmatprep.subr.mxu0 0.0
      %6619 = vmatpush1.msra.mxu0 0.0
      %6620 = vmatprep.subr.mxu0 0.0
      %6621 = vmatpush1.msra.mxu0 0.0
      %6622 = vmatprep.subr.mxu0 0.0
      %6623 = vmatpush1.msra.mxu0 0.0
      %6624 = vmatprep.subr.mxu0 0.0
      %6625 = vmatpush1.msra.mxu0 0.0
      %6626 = vmatprep.mubr.f32.mxu0 0.0
      %6627 = vmatmul.mubr.f32.gmra.mrb[0].mxu0 %v5417
      %v6628 = vpop.f32.mrb[0].mxu0
      %v6629 = vadd.f32 0.0, %v6628
      %v6630 = vpop.f32.mrb[0].mxu0
      %v6631 = vadd.f32 0.0, %v6630
      %6632 = vdwg.mxu0
      %6633 = vmatprep.subr.mxu0 %v5754
      %6634 = vmatpush1.msra.mxu0 %v5753
      %6635 = vmatprep.subr.mxu0 %v5756
      %6636 = vmatpush1.msra.mxu0 %v5755
      %6637 = vmatprep.subr.mxu0 %v5758
      %6638 = vmatpush1.msra.mxu0 %v5757
      %6639 = vmatprep.subr.mxu0 %v5760
      %6640 = vmatpush1.msra.mxu0 %v5759
      %6641 = vmatprep.subr.mxu0 %v5762
      %6642 = vmatpush1.msra.mxu0 %v5761
      %6643 = vmatprep.subr.mxu0 %v5764
      %6644 = vmatpush1.msra.mxu0 %v5763
      %6645 = vmatprep.subr.mxu0 %v5766
      %6646 = vmatpush1.msra.mxu0 %v5765
      %6647 = vmatprep.subr.mxu0 %v5768
      %6648 = vmatpush1.msra.mxu0 %v5767
      %6649 = vmatprep.subr.mxu0 0.0
      %6650 = vmatpush1.msra.mxu0 0.0
      %6651 = vmatprep.subr.mxu0 0.0
      %6652 = vmatpush1.msra.mxu0 0.0
      %6653 = vmatprep.subr.mxu0 0.0
      %6654 = vmatpush1.msra.mxu0 0.0
      %6655 = vmatprep.subr.mxu0 0.0
      %6656 = vmatpush1.msra.mxu0 0.0
      %6657 = vmatprep.subr.mxu0 0.0
      %6658 = vmatpush1.msra.mxu0 0.0
      %6659 = vmatprep.subr.mxu0 0.0
      %6660 = vmatpush1.msra.mxu0 0.0
      %6661 = vmatprep.subr.mxu0 0.0
      %6662 = vmatpush1.msra.mxu0 0.0
      %6663 = vmatprep.subr.mxu0 0.0
      %6664 = vmatpush1.msra.mxu0 0.0
      %6665 = vmatprep.subr.mxu0 0.0
      %6666 = vmatpush1.msra.mxu0 0.0
      %6667 = vmatprep.subr.mxu0 0.0
      %6668 = vmatpush1.msra.mxu0 0.0
      %6669 = vmatprep.subr.mxu0 0.0
      %6670 = vmatpush1.msra.mxu0 0.0
      %6671 = vmatprep.subr.mxu0 0.0
      %6672 = vmatpush1.msra.mxu0 0.0
      %6673 = vmatprep.subr.mxu0 0.0
      %6674 = vmatpush1.msra.mxu0 0.0
      %6675 = vmatprep.subr.mxu0 0.0
      %6676 = vmatpush1.msra.mxu0 0.0
      %6677 = vmatprep.subr.mxu0 0.0
      %6678 = vmatpush1.msra.mxu0 0.0
      %6679 = vmatprep.subr.mxu0 0.0
      %6680 = vmatpush1.msra.mxu0 0.0
      %6681 = vmatprep.subr.mxu0 0.0
      %6682 = vmatpush1.msra.mxu0 0.0
      %6683 = vmatprep.subr.mxu0 0.0
      %6684 = vmatpush1.msra.mxu0 0.0
      %6685 = vmatprep.subr.mxu0 0.0
      %6686 = vmatpush1.msra.mxu0 0.0
      %6687 = vmatprep.subr.mxu0 0.0
      %6688 = vmatpush1.msra.mxu0 0.0
      %6689 = vmatprep.subr.mxu0 0.0
      %6690 = vmatpush1.msra.mxu0 0.0
      %6691 = vmatprep.subr.mxu0 0.0
      %6692 = vmatpush1.msra.mxu0 0.0
      %6693 = vmatprep.subr.mxu0 0.0
      %6694 = vmatpush1.msra.mxu0 0.0
      %6695 = vmatprep.subr.mxu0 0.0
      %6696 = vmatpush1.msra.mxu0 0.0
      %6697 = vmatprep.mubr.f32.mxu0 0.0
      %6698 = vmatmul.mubr.f32.gmra.mrb[0].mxu0 %v5531
      %v6699 = vpop.f32.mrb[0].mxu0
      %v6700 = vadd.f32 %v6629, %v6699
      %v6701 = vpop.f32.mrb[0].mxu0
      %v6702 = vadd.f32 %v6631, %v6701
      %6703 = vdwg.mxu0
      %v6705 = vsel %vm3504, %v6561, 0
      %6707 = vmatprep.subr.mxu0 %v5931
      %6708 = vmatpush1.msra.mxu0 %v5930
      %6709 = vmatprep.subr.mxu0 %v5933
      %6710 = vmatpush1.msra.mxu0 %v5932
      %6711 = vmatprep.subr.mxu0 %v5935
      %6712 = vmatpush1.msra.mxu0 %v5934
      %6713 = vmatprep.subr.mxu0 %v5937
      %6714 = vmatpush1.msra.mxu0 %v5936
      %6715 = vmatprep.subr.mxu0 %v5939
      %6716 = vmatpush1.msra.mxu0 %v5938
      %6717 = vmatprep.subr.mxu0 %v5941
      %6718 = vmatpush1.msra.mxu0 %v5940
      %6719 = vmatprep.subr.mxu0 %v5943
      %6720 = vmatpush1.msra.mxu0 %v5942
      %6721 = vmatprep.subr.mxu0 %v5945
      %6722 = vmatpush1.msra.mxu0 %v5944
      %6723 = vmatprep.subr.mxu0 0.0
      %6724 = vmatpush1.msra.mxu0 0.0
      %6725 = vmatprep.subr.mxu0 0.0
      %6726 = vmatpush1.msra.mxu0 0.0
      %6727 = vmatprep.subr.mxu0 0.0
      %6728 = vmatpush1.msra.mxu0 0.0
      %6729 = vmatprep.subr.mxu0 0.0
      %6730 = vmatpush1.msra.mxu0 0.0
      %6731 = vmatprep.subr.mxu0 0.0
      %6732 = vmatpush1.msra.mxu0 0.0
      %6733 = vmatprep.subr.mxu0 0.0
      %6734 = vmatpush1.msra.mxu0 0.0
      %6735 = vmatprep.subr.mxu0 0.0
      %6736 = vmatpush1.msra.mxu0 0.0
      %6737 = vmatprep.subr.mxu0 0.0
      %6738 = vmatpush1.msra.mxu0 0.0
      %6739 = vmatprep.subr.mxu0 0.0
      %6740 = vmatpush1.msra.mxu0 0.0
      %6741 = vmatprep.subr.mxu0 0.0
      %6742 = vmatpush1.msra.mxu0 0.0
      %6743 = vmatprep.subr.mxu0 0.0
      %6744 = vmatpush1.msra.mxu0 0.0
      %6745 = vmatprep.subr.mxu0 0.0
      %6746 = vmatpush1.msra.mxu0 0.0
      %6747 = vmatprep.subr.mxu0 0.0
      %6748 = vmatpush1.msra.mxu0 0.0
      %6749 = vmatprep.subr.mxu0 0.0
      %6750 = vmatpush1.msra.mxu0 0.0
      %6751 = vmatprep.subr.mxu0 0.0
      %6752 = vmatpush1.msra.mxu0 0.0
      %6753 = vmatprep.subr.mxu0 0.0
      %6754 = vmatpush1.msra.mxu0 0.0
      %6755 = vmatprep.subr.mxu0 0.0
      %6756 = vmatpush1.msra.mxu0 0.0
      %6757 = vmatprep.subr.mxu0 0.0
      %6758 = vmatpush1.msra.mxu0 0.0
      %6759 = vmatprep.subr.mxu0 0.0
      %6760 = vmatpush1.msra.mxu0 0.0
      %6761 = vmatprep.subr.mxu0 0.0
      %6762 = vmatpush1.msra.mxu0 0.0
      %6763 = vmatprep.subr.mxu0 0.0
      %6764 = vmatpush1.msra.mxu0 0.0
      %6765 = vmatprep.subr.mxu0 0.0
      %6766 = vmatpush1.msra.mxu0 0.0
      %6767 = vmatprep.subr.mxu0 0.0
      %6768 = vmatpush1.msra.mxu0 0.0
      %6769 = vmatprep.subr.mxu0 0.0
      %6770 = vmatpush1.msra.mxu0 0.0
      %6771 = vmatprep.mubr.f32.mxu0 0.0
      %6772 = vmatmul.mubr.f32.gmra.mrb[0].mxu0 %v6705
      %v6773 = vpop.f32.mrb[0].mxu0
      %v6774 = vadd.f32 0.0, %v6773
      %v6775 = vpop.f32.mrb[0].mxu0
      %v6776 = vadd.f32 0.0, %v6775
      %6777 = vdwg.mxu0
      %v6778 = vadd.f32 %v6700, %v6774
      %v6779 = vadd.f32 %v6702, %v6776
      %v6780 = vadd.f32 %v6778, %v6023
      %v6781 = vadd.f32 %v6779, %v6027
      %v6782 = vsub.f32 0.0, %v6780
      %v6783 = vsub.f32 0.0, %v6781
      %v6784 = vmul.f32 %v6782, 1.442695
      %v6785 = vpow.pop %v6784
      %v6786 = vmul.f32 %v6783, 1.442695
      %v6787 = vpow.pop %v6786
      %v6788 = vadd.f32 %v6785, 1.0
      %v6789 = vadd.f32 %v6787, 1.0
      %v6790 = vrcp.pop %v6788
      %v6791 = vmul.f32 1.0, %v6790
      %v6792 = vrcp.pop %v6789
      %v6793 = vmul.f32 1.0, %v6792
      %v6794 = vtanh.pop %v6781
      %v6795 = vmul.f32 %v6791, %v6555
      %6797 = vrot.lane.b32.xlu0 %v6794, 64
      %v6798 = vpop.permute.xlu0 %6797
      %v6800 = vmul.f32 %v6791, %v6798
      %6802 = vrot.lane.b32.xlu0 %v6800, 64
      %v6803 = vpop.permute.xlu0 %6802
      %v6805 = vadd.f32 %v6795, %v6803
      %v6806 = vtanh.pop %v6805
      %6808 = vrot.lane.b32.xlu0 %v6806, 64
      %v6809 = vpop.permute.xlu0 %6808
      %v6811 = vmul.f32 %v6793, %v6809
      %6812 = vmatprep.subr.mxu0 %v5770
      %6813 = vmatpush1.msra.mxu0 %v5769
      %6814 = vmatprep.subr.mxu0 %v5772
      %6815 = vmatpush1.msra.mxu0 %v5771
      %6816 = vmatprep.subr.mxu0 %v5774
      %6817 = vmatpush1.msra.mxu0 %v5773
      %6818 = vmatprep.subr.mxu0 %v5776
      %6819 = vmatpush1.msra.mxu0 %v5775
      %6820 = vmatprep.subr.mxu0 %v5778
      %6821 = vmatpush1.msra.mxu0 %v5777
      %6822 = vmatprep.subr.mxu0 %v5780
      %6823 = vmatpush1.msra.mxu0 %v5779
      %6824 = vmatprep.subr.mxu0 %v5782
      %6825 = vmatpush1.msra.mxu0 %v5781
      %6826 = vmatprep.subr.mxu0 %v5784
      %6827 = vmatpush1.msra.mxu0 %v5783
      %6828 = vmatprep.subr.mxu0 0.0
      %6829 = vmatpush1.msra.mxu0 0.0
      %6830 = vmatprep.subr.mxu0 0.0
      %6831 = vmatpush1.msra.mxu0 0.0
      %6832 = vmatprep.subr.mxu0 0.0
      %6833 = vmatpush1.msra.mxu0 0.0
      %6834 = vmatprep.subr.mxu0 0.0
      %6835 = vmatpush1.msra.mxu0 0.0
      %6836 = vmatprep.subr.mxu0 0.0
      %6837 = vmatpush1.msra.mxu0 0.0
      %6838 = vmatprep.subr.mxu0 0.0
      %6839 = vmatpush1.msra.mxu0 0.0
      %6840 = vmatprep.subr.mxu0 0.0
      %6841 = vmatpush1.msra.mxu0 0.0
      %6842 = vmatprep.subr.mxu0 0.0
      %6843 = vmatpush1.msra.mxu0 0.0
      %6844 = vmatprep.subr.mxu0 0.0
      %6845 = vmatpush1.msra.mxu0 0.0
      %6846 = vmatprep.subr.mxu0 0.0
      %6847 = vmatpush1.msra.mxu0 0.0
      %6848 = vmatprep.subr.mxu0 0.0
      %6849 = vmatpush1.msra.mxu0 0.0
      %6850 = vmatprep.subr.mxu0 0.0
      %6851 = vmatpush1.msra.mxu0 0.0
      %6852 = vmatprep.subr.mxu0 0.0
      %6853 = vmatpush1.msra.mxu0 0.0
      %6854 = vmatprep.subr.mxu0 0.0
      %6855 = vmatpush1.msra.mxu0 0.0
      %6856 = vmatprep.subr.mxu0 0.0
      %6857 = vmatpush1.msra.mxu0 0.0
      %6858 = vmatprep.subr.mxu0 0.0
      %6859 = vmatpush1.msra.mxu0 0.0
      %6860 = vmatprep.subr.mxu0 0.0
      %6861 = vmatpush1.msra.mxu0 0.0
      %6862 = vmatprep.subr.mxu0 0.0
      %6863 = vmatpush1.msra.mxu0 0.0
      %6864 = vmatprep.subr.mxu0 0.0
      %6865 = vmatpush1.msra.mxu0 0.0
      %6866 = vmatprep.subr.mxu0 0.0
      %6867 = vmatpush1.msra.mxu0 0.0
      %6868 = vmatprep.subr.mxu0 0.0
      %6869 = vmatpush1.msra.mxu0 0.0
      %6870 = vmatprep.subr.mxu0 0.0
      %6871 = vmatpush1.msra.mxu0 0.0
      %6872 = vmatprep.subr.mxu0 0.0
      %6873 = vmatpush1.msra.mxu0 0.0
      %6874 = vmatprep.subr.mxu0 0.0
      %6875 = vmatpush1.msra.mxu0 0.0
      %6876 = vmatprep.mubr.f32.mxu0 0.0
      %6877 = vmatmul.mubr.f32.gmra.mrb[0].mxu0 %v5303
      %v6878 = vpop.f32.mrb[0].mxu0
      %v6879 = vadd.f32 0.0, %v6878
      %v6880 = vpop.f32.mrb[0].mxu0
      %v6881 = vadd.f32 0.0, %v6880
      %6882 = vdwg.mxu0
      %6883 = vmatprep.subr.mxu0 %v5754
      %6884 = vmatpush1.msra.mxu0 %v5753
      %6885 = vmatprep.subr.mxu0 %v5756
      %6886 = vmatpush1.msra.mxu0 %v5755
      %6887 = vmatprep.subr.mxu0 %v5758
      %6888 = vmatpush1.msra.mxu0 %v5757
      %6889 = vmatprep.subr.mxu0 %v5760
      %6890 = vmatpush1.msra.mxu0 %v5759
      %6891 = vmatprep.subr.mxu0 %v5762
      %6892 = vmatpush1.msra.mxu0 %v5761
      %6893 = vmatprep.subr.mxu0 %v5764
      %6894 = vmatpush1.msra.mxu0 %v5763
      %6895 = vmatprep.subr.mxu0 %v5766
      %6896 = vmatpush1.msra.mxu0 %v5765
      %6897 = vmatprep.subr.mxu0 %v5768
      %6898 = vmatpush1.msra.mxu0 %v5767
      %6899 = vmatprep.subr.mxu0 0.0
      %6900 = vmatpush1.msra.mxu0 0.0
      %6901 = vmatprep.subr.mxu0 0.0
      %6902 = vmatpush1.msra.mxu0 0.0
      %6903 = vmatprep.subr.mxu0 0.0
      %6904 = vmatpush1.msra.mxu0 0.0
      %6905 = vmatprep.subr.mxu0 0.0
      %6906 = vmatpush1.msra.mxu0 0.0
      %6907 = vmatprep.subr.mxu0 0.0
      %6908 = vmatpush1.msra.mxu0 0.0
      %6909 = vmatprep.subr.mxu0 0.0
      %6910 = vmatpush1.msra.mxu0 0.0
      %6911 = vmatprep.subr.mxu0 0.0
      %6912 = vmatpush1.msra.mxu0 0.0
      %6913 = vmatprep.subr.mxu0 0.0
      %6914 = vmatpush1.msra.mxu0 0.0
      %6915 = vmatprep.subr.mxu0 0.0
      %6916 = vmatpush1.msra.mxu0 0.0
      %6917 = vmatprep.subr.mxu0 0.0
      %6918 = vmatpush1.msra.mxu0 0.0
      %6919 = vmatprep.subr.mxu0 0.0
      %6920 = vmatpush1.msra.mxu0 0.0
      %6921 = vmatprep.subr.mxu0 0.0
      %6922 = vmatpush1.msra.mxu0 0.0
      %6923 = vmatprep.subr.mxu0 0.0
      %6924 = vmatpush1.msra.mxu0 0.0
      %6925 = vmatprep.subr.mxu0 0.0
      %6926 = vmatpush1.msra.mxu0 0.0
      %6927 = vmatprep.subr.mxu0 0.0
      %6928 = vmatpush1.msra.mxu0 0.0
      %6929 = vmatprep.subr.mxu0 0.0
      %6930 = vmatpush1.msra.mxu0 0.0
      %6931 = vmatprep.subr.mxu0 0.0
      %6932 = vmatpush1.msra.mxu0 0.0
      %6933 = vmatprep.subr.mxu0 0.0
      %6934 = vmatpush1.msra.mxu0 0.0
      %6935 = vmatprep.subr.mxu0 0.0
      %6936 = vmatpush1.msra.mxu0 0.0
      %6937 = vmatprep.subr.mxu0 0.0
      %6938 = vmatpush1.msra.mxu0 0.0
      %6939 = vmatprep.subr.mxu0 0.0
      %6940 = vmatpush1.msra.mxu0 0.0
      %6941 = vmatprep.subr.mxu0 0.0
      %6942 = vmatpush1.msra.mxu0 0.0
      %6943 = vmatprep.subr.mxu0 0.0
      %6944 = vmatpush1.msra.mxu0 0.0
      %6945 = vmatprep.subr.mxu0 0.0
      %6946 = vmatpush1.msra.mxu0 0.0
      %6947 = vmatprep.mubr.f32.mxu0 0.0
      %6948 = vmatmul.mubr.f32.gmra.mrb[0].mxu0 %v5645
      %v6949 = vpop.f32.mrb[0].mxu0
      %v6950 = vadd.f32 %v6879, %v6949
      %v6951 = vpop.f32.mrb[0].mxu0
      %v6952 = vadd.f32 %v6881, %v6951
      %6953 = vdwg.mxu0
      %v6955 = vsel %vm3504, %v6811, 0
      %6957 = vmatprep.subr.mxu0 %v5931
      %6958 = vmatpush1.msra.mxu0 %v5930
      %6959 = vmatprep.subr.mxu0 %v5933
      %6960 = vmatpush1.msra.mxu0 %v5932
      %6961 = vmatprep.subr.mxu0 %v5935
      %6962 = vmatpush1.msra.mxu0 %v5934
      %6963 = vmatprep.subr.mxu0 %v5937
      %6964 = vmatpush1.msra.mxu0 %v5936
      %6965 = vmatprep.subr.mxu0 %v5939
      %6966 = vmatpush1.msra.mxu0 %v5938
      %6967 = vmatprep.subr.mxu0 %v5941
      %6968 = vmatpush1.msra.mxu0 %v5940
      %6969 = vmatprep.subr.mxu0 %v5943
      %6970 = vmatpush1.msra.mxu0 %v5942
      %6971 = vmatprep.subr.mxu0 %v5945
      %6972 = vmatpush1.msra.mxu0 %v5944
      %6973 = vmatprep.subr.mxu0 0.0
      %6974 = vmatpush1.msra.mxu0 0.0
      %6975 = vmatprep.subr.mxu0 0.0
      %6976 = vmatpush1.msra.mxu0 0.0
      %6977 = vmatprep.subr.mxu0 0.0
      %6978 = vmatpush1.msra.mxu0 0.0
      %6979 = vmatprep.subr.mxu0 0.0
      %6980 = vmatpush1.msra.mxu0 0.0
      %6981 = vmatprep.subr.mxu0 0.0
      %6982 = vmatpush1.msra.mxu0 0.0
      %6983 = vmatprep.subr.mxu0 0.0
      %6984 = vmatpush1.msra.mxu0 0.0
      %6985 = vmatprep.subr.mxu0 0.0
      %6986 = vmatpush1.msra.mxu0 0.0
      %6987 = vmatprep.subr.mxu0 0.0
      %6988 = vmatpush1.msra.mxu0 0.0
      %6989 = vmatprep.subr.mxu0 0.0
      %6990 = vmatpush1.msra.mxu0 0.0
      %6991 = vmatprep.subr.mxu0 0.0
      %6992 = vmatpush1.msra.mxu0 0.0
      %6993 = vmatprep.subr.mxu0 0.0
      %6994 = vmatpush1.msra.mxu0 0.0
      %6995 = vmatprep.subr.mxu0 0.0
      %6996 = vmatpush1.msra.mxu0 0.0
      %6997 = vmatprep.subr.mxu0 0.0
      %6998 = vmatpush1.msra.mxu0 0.0
      %6999 = vmatprep.subr.mxu0 0.0
      %7000 = vmatpush1.msra.mxu0 0.0
      %7001 = vmatprep.subr.mxu0 0.0
      %7002 = vmatpush1.msra.mxu0 0.0
      %7003 = vmatprep.subr.mxu0 0.0
      %7004 = vmatpush1.msra.mxu0 0.0
      %7005 = vmatprep.subr.mxu0 0.0
      %7006 = vmatpush1.msra.mxu0 0.0
      %7007 = vmatprep.subr.mxu0 0.0
      %7008 = vmatpush1.msra.mxu0 0.0
      %7009 = vmatprep.subr.mxu0 0.0
      %7010 = vmatpush1.msra.mxu0 0.0
      %7011 = vmatprep.subr.mxu0 0.0
      %7012 = vmatpush1.msra.mxu0 0.0
      %7013 = vmatprep.subr.mxu0 0.0
      %7014 = vmatpush1.msra.mxu0 0.0
      %7015 = vmatprep.subr.mxu0 0.0
      %7016 = vmatpush1.msra.mxu0 0.0
      %7017 = vmatprep.subr.mxu0 0.0
      %7018 = vmatpush1.msra.mxu0 0.0
      %7019 = vmatprep.subr.mxu0 0.0
      %7020 = vmatpush1.msra.mxu0 0.0
      %7021 = vmatprep.mubr.f32.mxu0 0.0
      %7022 = vmatmul.mubr.f32.gmra.mrb[0].mxu0 %v6955
      %v7023 = vpop.f32.mrb[0].mxu0
      %v7024 = vadd.f32 0.0, %v7023
      %v7025 = vpop.f32.mrb[0].mxu0
      %v7026 = vadd.f32 0.0, %v7025
      %7027 = vdwg.mxu0
      %v7028 = vadd.f32 %v6950, %v7024
      %v7029 = vadd.f32 %v6952, %v7026
      %v7030 = vadd.f32 %v7028, %v6023
      %v7031 = vadd.f32 %v7029, %v6027
      %v7032 = vsub.f32 0.0, %v7030
      %v7033 = vsub.f32 0.0, %v7031
      %v7034 = vmul.f32 %v7032, 1.442695
      %v7035 = vpow.pop %v7034
      %v7036 = vmul.f32 %v7033, 1.442695
      %v7037 = vpow.pop %v7036
      %v7038 = vadd.f32 %v7035, 1.0
      %v7039 = vadd.f32 %v7037, 1.0
      %v7040 = vrcp.pop %v7038
      %v7041 = vmul.f32 1.0, %v7040
      %v7042 = vrcp.pop %v7039
      %v7043 = vmul.f32 1.0, %v7042
      %v7044 = vtanh.pop %v7031
      %v7045 = vmul.f32 %v7041, %v6805
      %7047 = vrot.lane.b32.xlu0 %v7044, 64
      %v7048 = vpop.permute.xlu0 %7047
      %v7050 = vmul.f32 %v7041, %v7048
      %7052 = vrot.lane.b32.xlu0 %v7050, 64
      %v7053 = vpop.permute.xlu0 %7052
      %v7055 = vadd.f32 %v7045, %v7053
      %v7056 = vtanh.pop %v7055
      %7058 = vrot.lane.b32.xlu0 %v7056, 64
      %v7059 = vpop.permute.xlu0 %7058
      %v7061 = vmul.f32 %v7043, %v7059
      %7062 = vmatprep.subr.mxu0 %v5770
      %7063 = vmatpush1.msra.mxu0 %v5769
      %7064 = vmatprep.subr.mxu0 %v5772
      %7065 = vmatpush1.msra.mxu0 %v5771
      %7066 = vmatprep.subr.mxu0 %v5774
      %7067 = vmatpush1.msra.mxu0 %v5773
      %7068 = vmatprep.subr.mxu0 %v5776
      %7069 = vmatpush1.msra.mxu0 %v5775
      %7070 = vmatprep.subr.mxu0 %v5778
      %7071 = vmatpush1.msra.mxu0 %v5777
      %7072 = vmatprep.subr.mxu0 %v5780
      %7073 = vmatpush1.msra.mxu0 %v5779
      %7074 = vmatprep.subr.mxu0 %v5782
      %7075 = vmatpush1.msra.mxu0 %v5781
      %7076 = vmatprep.subr.mxu0 %v5784
      %7077 = vmatpush1.msra.mxu0 %v5783
      %7078 = vmatprep.subr.mxu0 0.0
      %7079 = vmatpush1.msra.mxu0 0.0
      %7080 = vmatprep.subr.mxu0 0.0
      %7081 = vmatpush1.msra.mxu0 0.0
      %7082 = vmatprep.subr.mxu0 0.0
      %7083 = vmatpush1.msra.mxu0 0.0
      %7084 = vmatprep.subr.mxu0 0.0
      %7085 = vmatpush1.msra.mxu0 0.0
      %7086 = vmatprep.subr.mxu0 0.0
      %7087 = vmatpush1.msra.mxu0 0.0
      %7088 = vmatprep.subr.mxu0 0.0
      %7089 = vmatpush1.msra.mxu0 0.0
      %7090 = vmatprep.subr.mxu0 0.0
      %7091 = vmatpush1.msra.mxu0 0.0
      %7092 = vmatprep.subr.mxu0 0.0
      %7093 = vmatpush1.msra.mxu0 0.0
      %7094 = vmatprep.subr.mxu0 0.0
      %7095 = vmatpush1.msra.mxu0 0.0
      %7096 = vmatprep.subr.mxu0 0.0
      %7097 = vmatpush1.msra.mxu0 0.0
      %7098 = vmatprep.subr.mxu0 0.0
      %7099 = vmatpush1.msra.mxu0 0.0
      %7100 = vmatprep.subr.mxu0 0.0
      %7101 = vmatpush1.msra.mxu0 0.0
      %7102 = vmatprep.subr.mxu0 0.0
      %7103 = vmatpush1.msra.mxu0 0.0
      %7104 = vmatprep.subr.mxu0 0.0
      %7105 = vmatpush1.msra.mxu0 0.0
      %7106 = vmatprep.subr.mxu0 0.0
      %7107 = vmatpush1.msra.mxu0 0.0
      %7108 = vmatprep.subr.mxu0 0.0
      %7109 = vmatpush1.msra.mxu0 0.0
      %7110 = vmatprep.subr.mxu0 0.0
      %7111 = vmatpush1.msra.mxu0 0.0
      %7112 = vmatprep.subr.mxu0 0.0
      %7113 = vmatpush1.msra.mxu0 0.0
      %7114 = vmatprep.subr.mxu0 0.0
      %7115 = vmatpush1.msra.mxu0 0.0
      %7116 = vmatprep.subr.mxu0 0.0
      %7117 = vmatpush1.msra.mxu0 0.0
      %7118 = vmatprep.subr.mxu0 0.0
      %7119 = vmatpush1.msra.mxu0 0.0
      %7120 = vmatprep.subr.mxu0 0.0
      %7121 = vmatpush1.msra.mxu0 0.0
      %7122 = vmatprep.subr.mxu0 0.0
      %7123 = vmatpush1.msra.mxu0 0.0
      %7124 = vmatprep.subr.mxu0 0.0
      %7125 = vmatpush1.msra.mxu0 0.0
      %7126 = vmatprep.mubr.f32.mxu0 0.0
      %7127 = vmatmul.mubr.f32.gmra.mrb[0].mxu0 %v5181
      %v7128 = vpop.f32.mrb[0].mxu0
      %v7129 = vadd.f32 0.0, %v7128
      %v7130 = vpop.f32.mrb[0].mxu0
      %v7131 = vadd.f32 0.0, %v7130
      %7132 = vdwg.mxu0
      %7133 = vmatprep.subr.mxu0 %v5754
      %7134 = vmatpush1.msra.mxu0 %v5753
      %7135 = vmatprep.subr.mxu0 %v5756
      %7136 = vmatpush1.msra.mxu0 %v5755
      %7137 = vmatprep.subr.mxu0 %v5758
      %7138 = vmatpush1.msra.mxu0 %v5757
      %7139 = vmatprep.subr.mxu0 %v5760
      %7140 = vmatpush1.msra.mxu0 %v5759
      %7141 = vmatprep.subr.mxu0 %v5762
      %7142 = vmatpush1.msra.mxu0 %v5761
      %7143 = vmatprep.subr.mxu0 %v5764
      %7144 = vmatpush1.msra.mxu0 %v5763
      %7145 = vmatprep.subr.mxu0 %v5766
      %7146 = vmatpush1.msra.mxu0 %v5765
      %7147 = vmatprep.subr.mxu0 %v5768
      %7148 = vmatpush1.msra.mxu0 %v5767
      %7149 = vmatprep.subr.mxu0 0.0
      %7150 = vmatpush1.msra.mxu0 0.0
      %7151 = vmatprep.subr.mxu0 0.0
      %7152 = vmatpush1.msra.mxu0 0.0
      %7153 = vmatprep.subr.mxu0 0.0
      %7154 = vmatpush1.msra.mxu0 0.0
      %7155 = vmatprep.subr.mxu0 0.0
      %7156 = vmatpush1.msra.mxu0 0.0
      %7157 = vmatprep.subr.mxu0 0.0
      %7158 = vmatpush1.msra.mxu0 0.0
      %7159 = vmatprep.subr.mxu0 0.0
      %7160 = vmatpush1.msra.mxu0 0.0
      %7161 = vmatprep.subr.mxu0 0.0
      %7162 = vmatpush1.msra.mxu0 0.0
      %7163 = vmatprep.subr.mxu0 0.0
      %7164 = vmatpush1.msra.mxu0 0.0
      %7165 = vmatprep.subr.mxu0 0.0
      %7166 = vmatpush1.msra.mxu0 0.0
      %7167 = vmatprep.subr.mxu0 0.0
      %7168 = vmatpush1.msra.mxu0 0.0
      %7169 = vmatprep.subr.mxu0 0.0
      %7170 = vmatpush1.msra.mxu0 0.0
      %7171 = vmatprep.subr.mxu0 0.0
      %7172 = vmatpush1.msra.mxu0 0.0
      %7173 = vmatprep.subr.mxu0 0.0
      %7174 = vmatpush1.msra.mxu0 0.0
      %7175 = vmatprep.subr.mxu0 0.0
      %7176 = vmatpush1.msra.mxu0 0.0
      %7177 = vmatprep.subr.mxu0 0.0
      %7178 = vmatpush1.msra.mxu0 0.0
      %7179 = vmatprep.subr.mxu0 0.0
      %7180 = vmatpush1.msra.mxu0 0.0
      %7181 = vmatprep.subr.mxu0 0.0
      %7182 = vmatpush1.msra.mxu0 0.0
      %7183 = vmatprep.subr.mxu0 0.0
      %7184 = vmatpush1.msra.mxu0 0.0
      %7185 = vmatprep.subr.mxu0 0.0
      %7186 = vmatpush1.msra.mxu0 0.0
      %7187 = vmatprep.subr.mxu0 0.0
      %7188 = vmatpush1.msra.mxu0 0.0
      %7189 = vmatprep.subr.mxu0 0.0
      %7190 = vmatpush1.msra.mxu0 0.0
      %7191 = vmatprep.subr.mxu0 0.0
      %7192 = vmatpush1.msra.mxu0 0.0
      %7193 = vmatprep.subr.mxu0 0.0
      %7194 = vmatpush1.msra.mxu0 0.0
      %7195 = vmatprep.subr.mxu0 0.0
      %7196 = vmatpush1.msra.mxu0 0.0
      %7197 = vmatprep.mubr.f32.mxu0 0.0
      %7198 = vmatmul.mubr.f32.gmra.mrb[0].mxu0 %v5786
      %v7199 = vpop.f32.mrb[0].mxu0
      %v7200 = vadd.f32 %v7129, %v7199
      %v7201 = vpop.f32.mrb[0].mxu0
      %v7202 = vadd.f32 %v7131, %v7201
      %7203 = vdwg.mxu0
      %v7205 = vsel %vm3504, %v7061, 0
      %7207 = vmatprep.subr.mxu0 %v5931
      %7208 = vmatpush1.msra.mxu0 %v5930
      %7209 = vmatprep.subr.mxu0 %v5933
      %7210 = vmatpush1.msra.mxu0 %v5932
      %7211 = vmatprep.subr.mxu0 %v5935
      %7212 = vmatpush1.msra.mxu0 %v5934
      %7213 = vmatprep.subr.mxu0 %v5937
      %7214 = vmatpush1.msra.mxu0 %v5936
      %7215 = vmatprep.subr.mxu0 %v5939
      %7216 = vmatpush1.msra.mxu0 %v5938
      %7217 = vmatprep.subr.mxu0 %v5941
      %7218 = vmatpush1.msra.mxu0 %v5940
      %7219 = vmatprep.subr.mxu0 %v5943
      %7220 = vmatpush1.msra.mxu0 %v5942
      %7221 = vmatprep.subr.mxu0 %v5945
      %7222 = vmatpush1.msra.mxu0 %v5944
      %7223 = vmatprep.subr.mxu0 0.0
      %7224 = vmatpush1.msra.mxu0 0.0
      %7225 = vmatprep.subr.mxu0 0.0
      %7226 = vmatpush1.msra.mxu0 0.0
      %7227 = vmatprep.subr.mxu0 0.0
      %7228 = vmatpush1.msra.mxu0 0.0
      %7229 = vmatprep.subr.mxu0 0.0
      %7230 = vmatpush1.msra.mxu0 0.0
      %7231 = vmatprep.subr.mxu0 0.0
      %7232 = vmatpush1.msra.mxu0 0.0
      %7233 = vmatprep.subr.mxu0 0.0
      %7234 = vmatpush1.msra.mxu0 0.0
      %7235 = vmatprep.subr.mxu0 0.0
      %7236 = vmatpush1.msra.mxu0 0.0
      %7237 = vmatprep.subr.mxu0 0.0
      %7238 = vmatpush1.msra.mxu0 0.0
      %7239 = vmatprep.subr.mxu0 0.0
      %7240 = vmatpush1.msra.mxu0 0.0
      %7241 = vmatprep.subr.mxu0 0.0
      %7242 = vmatpush1.msra.mxu0 0.0
      %7243 = vmatprep.subr.mxu0 0.0
      %7244 = vmatpush1.msra.mxu0 0.0
      %7245 = vmatprep.subr.mxu0 0.0
      %7246 = vmatpush1.msra.mxu0 0.0
      %7247 = vmatprep.subr.mxu0 0.0
      %7248 = vmatpush1.msra.mxu0 0.0
      %7249 = vmatprep.subr.mxu0 0.0
      %7250 = vmatpush1.msra.mxu0 0.0
      %7251 = vmatprep.subr.mxu0 0.0
      %7252 = vmatpush1.msra.mxu0 0.0
      %7253 = vmatprep.subr.mxu0 0.0
      %7254 = vmatpush1.msra.mxu0 0.0
      %7255 = vmatprep.subr.mxu0 0.0
      %7256 = vmatpush1.msra.mxu0 0.0
      %7257 = vmatprep.subr.mxu0 0.0
      %7258 = vmatpush1.msra.mxu0 0.0
      %7259 = vmatprep.subr.mxu0 0.0
      %7260 = vmatpush1.msra.mxu0 0.0
      %7261 = vmatprep.subr.mxu0 0.0
      %7262 = vmatpush1.msra.mxu0 0.0
      %7263 = vmatprep.subr.mxu0 0.0
      %7264 = vmatpush1.msra.mxu0 0.0
      %7265 = vmatprep.subr.mxu0 0.0
      %7266 = vmatpush1.msra.mxu0 0.0
      %7267 = vmatprep.subr.mxu0 0.0
      %7268 = vmatpush1.msra.mxu0 0.0
      %7269 = vmatprep.subr.mxu0 0.0
      %7270 = vmatpush1.msra.mxu0 0.0
      %7271 = vmatprep.mubr.f32.mxu0 0.0
      %7272 = vmatmul.mubr.f32.gmra.mrb[0].mxu0 %v7205
      %v7273 = vpop.f32.mrb[0].mxu0
      %v7274 = vadd.f32 0.0, %v7273
      %v7275 = vpop.f32.mrb[0].mxu0
      %v7276 = vadd.f32 0.0, %v7275
      %7277 = vdwg.mxu0
      %v7278 = vadd.f32 %v7200, %v7274
      %v7279 = vadd.f32 %v7202, %v7276
      %v7280 = vadd.f32 %v7278, %v6023
      %v7281 = vadd.f32 %v7279, %v6027
      %v7282 = vsub.f32 0.0, %v7280
      %v7283 = vsub.f32 0.0, %v7281
      %v7284 = vmul.f32 %v7282, 1.442695
      %v7285 = vpow.pop %v7284
      %v7286 = vmul.f32 %v7283, 1.442695
      %v7287 = vpow.pop %v7286
      %v7288 = vadd.f32 %v7285, 1.0
      %v7289 = vadd.f32 %v7287, 1.0
      %v7290 = vrcp.pop %v7288
      %v7291 = vmul.f32 1.0, %v7290
      %v7292 = vrcp.pop %v7289
      %v7293 = vmul.f32 1.0, %v7292
      %v7294 = vtanh.pop %v7281
      %v7295 = vmul.f32 %v7291, %v7055
      %7297 = vrot.lane.b32.xlu0 %v7294, 64
      %v7298 = vpop.permute.xlu0 %7297
      %v7300 = vmul.f32 %v7291, %v7298
      %7302 = vrot.lane.b32.xlu0 %v7300, 64
      %v7303 = vpop.permute.xlu0 %7302
      %v7305 = vadd.f32 %v7295, %v7303
      %v7306 = vtanh.pop %v7305
      %7308 = vrot.lane.b32.xlu0 %v7306, 64
      %v7309 = vpop.permute.xlu0 %7308
      %v7311 = vmul.f32 %v7293, %v7309
      %v7312 = vld [vmem:[%s49] sm:$0xff]
      %v7313 = vld [vmem:[%s49 + $0x8] sm:$0xff]
      %v7314 = vld [vmem:[%s49 + $0x10] sm:$0xff]
      %v7315 = vld [vmem:[%s49 + $0x18] sm:$0xff]
      %v7316 = vld [vmem:[%s49 + $0x20] sm:$0xff]
      %v7317 = vld [vmem:[%s49 + $0x28] sm:$0xff]
      %v7318 = vld [vmem:[%s49 + $0x30] sm:$0xff]
      %v7319 = vld [vmem:[%s49 + $0x38] sm:$0xff]
      %v7320 = vld [vmem:[%s51] sm:$0xff]
      %v7321 = vld [vmem:[%s51 + $0x8] sm:$0xff]
      %v7322 = vld [vmem:[%s51 + $0x10] sm:$0xff]
      %v7323 = vld [vmem:[%s51 + $0x18] sm:$0xff]
      %v7324 = vld [vmem:[%s51 + $0x20] sm:$0xff]
      %v7325 = vld [vmem:[%s51 + $0x28] sm:$0xff]
      %v7326 = vld [vmem:[%s51 + $0x30] sm:$0xff]
      %v7327 = vld [vmem:[%s51 + $0x38] sm:$0xff]
      %v7329 = vsel %vm3504, %v7311, 0
      %7331 = vmatprep.subr.mxu0 0.0
      %7332 = vmatpush1.msra.mxu0 %v7320
      %7333 = vmatprep.subr.mxu0 0.0
      %7334 = vmatpush1.msra.mxu0 %v7321
      %7335 = vmatprep.subr.mxu0 0.0
      %7336 = vmatpush1.msra.mxu0 %v7322
      %7337 = vmatprep.subr.mxu0 0.0
      %7338 = vmatpush1.msra.mxu0 %v7323
      %7339 = vmatprep.subr.mxu0 0.0
      %7340 = vmatpush1.msra.mxu0 %v7324
      %7341 = vmatprep.subr.mxu0 0.0
      %7342 = vmatpush1.msra.mxu0 %v7325
      %7343 = vmatprep.subr.mxu0 0.0
      %7344 = vmatpush1.msra.mxu0 %v7326
      %7345 = vmatprep.subr.mxu0 0.0
      %7346 = vmatpush1.msra.mxu0 %v7327
      %7347 = vmatprep.subr.mxu0 0.0
      %7348 = vmatpush1.msra.mxu0 0.0
      %7349 = vmatprep.subr.mxu0 0.0
      %7350 = vmatpush1.msra.mxu0 0.0
      %7351 = vmatprep.subr.mxu0 0.0
      %7352 = vmatpush1.msra.mxu0 0.0
      %7353 = vmatprep.subr.mxu0 0.0
      %7354 = vmatpush1.msra.mxu0 0.0
      %7355 = vmatprep.subr.mxu0 0.0
      %7356 = vmatpush1.msra.mxu0 0.0
      %7357 = vmatprep.subr.mxu0 0.0
      %7358 = vmatpush1.msra.mxu0 0.0
      %7359 = vmatprep.subr.mxu0 0.0
      %7360 = vmatpush1.msra.mxu0 0.0
      %7361 = vmatprep.subr.mxu0 0.0
      %7362 = vmatpush1.msra.mxu0 0.0
      %7363 = vmatprep.subr.mxu0 0.0
      %7364 = vmatpush1.msra.mxu0 0.0
      %7365 = vmatprep.subr.mxu0 0.0
      %7366 = vmatpush1.msra.mxu0 0.0
      %7367 = vmatprep.subr.mxu0 0.0
      %7368 = vmatpush1.msra.mxu0 0.0
      %7369 = vmatprep.subr.mxu0 0.0
      %7370 = vmatpush1.msra.mxu0 0.0
      %7371 = vmatprep.subr.mxu0 0.0
      %7372 = vmatpush1.msra.mxu0 0.0
      %7373 = vmatprep.subr.mxu0 0.0
      %7374 = vmatpush1.msra.mxu0 0.0
      %7375 = vmatprep.subr.mxu0 0.0
      %7376 = vmatpush1.msra.mxu0 0.0
      %7377 = vmatprep.subr.mxu0 0.0
      %7378 = vmatpush1.msra.mxu0 0.0
      %7379 = vmatprep.subr.mxu0 0.0
      %7380 = vmatpush1.msra.mxu0 0.0
      %7381 = vmatprep.subr.mxu0 0.0
      %7382 = vmatpush1.msra.mxu0 0.0
      %7383 = vmatprep.subr.mxu0 0.0
      %7384 = vmatpush1.msra.mxu0 0.0
      %7385 = vmatprep.subr.mxu0 0.0
      %7386 = vmatpush1.msra.mxu0 0.0
      %7387 = vmatprep.subr.mxu0 0.0
      %7388 = vmatpush1.msra.mxu0 0.0
      %7389 = vmatprep.subr.mxu0 0.0
      %7390 = vmatpush1.msra.mxu0 0.0
      %7391 = vmatprep.subr.mxu0 0.0
      %7392 = vmatpush1.msra.mxu0 0.0
      %7393 = vmatprep.subr.mxu0 0.0
      %7394 = vmatpush1.msra.mxu0 0.0
      %7395 = vmatprep.mubr.f32.mxu0 0.0
      %7396 = vmatmul.mubr.f32.gmra.mrb[0].mxu0 %v7329
      %v7397 = vpop.f32.mrb[0].mxu0
      %v7398 = vadd.f32 0.0, %v7397
      %v7399 = vpop.f32.mrb[0].mxu0
      %7400 = vdwg.mxu0
      %7401 = vmatprep.subr.mxu0 0.0
      %7402 = vmatpush1.msra.mxu0 %v7312
      %7403 = vmatprep.subr.mxu0 0.0
      %7404 = vmatpush1.msra.mxu0 %v7313
      %7405 = vmatprep.subr.mxu0 0.0
      %7406 = vmatpush1.msra.mxu0 %v7314
      %7407 = vmatprep.subr.mxu0 0.0
      %7408 = vmatpush1.msra.mxu0 %v7315
      %7409 = vmatprep.subr.mxu0 0.0
      %7410 = vmatpush1.msra.mxu0 %v7316
      %7411 = vmatprep.subr.mxu0 0.0
      %7412 = vmatpush1.msra.mxu0 %v7317
      %7413 = vmatprep.subr.mxu0 0.0
      %7414 = vmatpush1.msra.mxu0 %v7318
      %7415 = vmatprep.subr.mxu0 0.0
      %7416 = vmatpush1.msra.mxu0 %v7319
      %7417 = vmatprep.subr.mxu0 0.0
      %7418 = vmatpush1.msra.mxu0 0.0
      %7419 = vmatprep.subr.mxu0 0.0
      %7420 = vmatpush1.msra.mxu0 0.0
      %7421 = vmatprep.subr.mxu0 0.0
      %7422 = vmatpush1.msra.mxu0 0.0
      %7423 = vmatprep.subr.mxu0 0.0
      %7424 = vmatpush1.msra.mxu0 0.0
      %7425 = vmatprep.subr.mxu0 0.0
      %7426 = vmatpush1.msra.mxu0 0.0
      %7427 = vmatprep.subr.mxu0 0.0
      %7428 = vmatpush1.msra.mxu0 0.0
      %7429 = vmatprep.subr.mxu0 0.0
      %7430 = vmatpush1.msra.mxu0 0.0
      %7431 = vmatprep.subr.mxu0 0.0
      %7432 = vmatpush1.msra.mxu0 0.0
      %7433 = vmatprep.subr.mxu0 0.0
      %7434 = vmatpush1.msra.mxu0 0.0
      %7435 = vmatprep.subr.mxu0 0.0
      %7436 = vmatpush1.msra.mxu0 0.0
      %7437 = vmatprep.subr.mxu0 0.0
      %7438 = vmatpush1.msra.mxu0 0.0
      %7439 = vmatprep.subr.mxu0 0.0
      %7440 = vmatpush1.msra.mxu0 0.0
      %7441 = vmatprep.subr.mxu0 0.0
      %7442 = vmatpush1.msra.mxu0 0.0
      %7443 = vmatprep.subr.mxu0 0.0
      %7444 = vmatpush1.msra.mxu0 0.0
      %7445 = vmatprep.subr.mxu0 0.0
      %7446 = vmatpush1.msra.mxu0 0.0
      %7447 = vmatprep.subr.mxu0 0.0
      %7448 = vmatpush1.msra.mxu0 0.0
      %7449 = vmatprep.subr.mxu0 0.0
      %7450 = vmatpush1.msra.mxu0 0.0
      %7451 = vmatprep.subr.mxu0 0.0
      %7452 = vmatpush1.msra.mxu0 0.0
      %7453 = vmatprep.subr.mxu0 0.0
      %7454 = vmatpush1.msra.mxu0 0.0
      %7455 = vmatprep.subr.mxu0 0.0
      %7456 = vmatpush1.msra.mxu0 0.0
      %7457 = vmatprep.subr.mxu0 0.0
      %7458 = vmatpush1.msra.mxu0 0.0
      %7459 = vmatprep.subr.mxu0 0.0
      %7460 = vmatpush1.msra.mxu0 0.0
      %7461 = vmatprep.subr.mxu0 0.0
      %7462 = vmatpush1.msra.mxu0 0.0
      %7463 = vmatprep.subr.mxu0 0.0
      %7464 = vmatpush1.msra.mxu0 0.0
      %7465 = vmatprep.mubr.f32.mxu0 0.0
      %7466 = vmatmul.mubr.f32.gmra.mrb[0].mxu0 %v6205
      %v7467 = vpop.f32.mrb[0].mxu0
      %v7468 = vadd.f32 %v7398, %v7467
      %v7469 = vpop.f32.mrb[0].mxu0
      %7470 = vdwg.mxu0
      %v7471 = vld [vmem:[%s53] sm:$0x1]
      %v7473 = vlaneseq
      %v7474 = vshrl.u32 %v7473, 7
      %v7475 = vsub.s32 0, %v7474
      %v7476 = vrot.slane %v7471, %v7475
      %v7478 = vadd.f32 %v7468, %v7476
      %v7479 = vld [vmem:[%s55] sm:$0xff]
      %v7480 = vld [vmem:[%s55 + $0x8] sm:$0xff]
      %v7481 = vld [vmem:[%s55 + $0x10] sm:$0xff]
      %v7482 = vld [vmem:[%s55 + $0x18] sm:$0xff]
      %v7483 = vld [vmem:[%s55 + $0x20] sm:$0xff]
      %v7484 = vld [vmem:[%s55 + $0x28] sm:$0xff]
      %v7485 = vld [vmem:[%s55 + $0x30] sm:$0xff]
      %v7486 = vld [vmem:[%s55 + $0x38] sm:$0xff]
      %v7487 = vld [vmem:[%s57] sm:$0x1]
      %v7489 = vlaneseq
      %v7490 = vshrl.u32 %v7489, 7
      %v7491 = vsub.s32 0, %v7490
      %v7492 = vrot.slane %v7487, %v7491
      %v7495 = vsel %vm3504, %v7478, 0
      %7497 = vmatprep.subr.mxu0 0.0
      %7498 = vmatpush1.msra.mxu0 %v7479
      %7499 = vmatprep.subr.mxu0 0.0
      %7500 = vmatpush1.msra.mxu0 %v7480
      %7501 = vmatprep.subr.mxu0 0.0
      %7502 = vmatpush1.msra.mxu0 %v7481
      %7503 = vmatprep.subr.mxu0 0.0
      %7504 = vmatpush1.msra.mxu0 %v7482
      %7505 = vmatprep.subr.mxu0 0.0
      %7506 = vmatpush1.msra.mxu0 %v7483
      %7507 = vmatprep.subr.mxu0 0.0
      %7508 = vmatpush1.msra.mxu0 %v7484
      %7509 = vmatprep.subr.mxu0 0.0
      %7510 = vmatpush1.msra.mxu0 %v7485
      %7511 = vmatprep.subr.mxu0 0.0
      %7512 = vmatpush1.msra.mxu0 %v7486
      %7513 = vmatprep.subr.mxu0 0.0
      %7514 = vmatpush1.msra.mxu0 0.0
      %7515 = vmatprep.subr.mxu0 0.0
      %7516 = vmatpush1.msra.mxu0 0.0
      %7517 = vmatprep.subr.mxu0 0.0
      %7518 = vmatpush1.msra.mxu0 0.0
      %7519 = vmatprep.subr.mxu0 0.0
      %7520 = vmatpush1.msra.mxu0 0.0
      %7521 = vmatprep.subr.mxu0 0.0
      %7522 = vmatpush1.msra.mxu0 0.0
      %7523 = vmatprep.subr.mxu0 0.0
      %7524 = vmatpush1.msra.mxu0 0.0
      %7525 = vmatprep.subr.mxu0 0.0
      %7526 = vmatpush1.msra.mxu0 0.0
      %7527 = vmatprep.subr.mxu0 0.0
      %7528 = vmatpush1.msra.mxu0 0.0
      %7529 = vmatprep.subr.mxu0 0.0
      %7530 = vmatpush1.msra.mxu0 0.0
      %7531 = vmatprep.subr.mxu0 0.0
      %7532 = vmatpush1.msra.mxu0 0.0
      %7533 = vmatprep.subr.mxu0 0.0
      %7534 = vmatpush1.msra.mxu0 0.0
      %7535 = vmatprep.subr.mxu0 0.0
      %7536 = vmatpush1.msra.mxu0 0.0
      %7537 = vmatprep.subr.mxu0 0.0
      %7538 = vmatpush1.msra.mxu0 0.0
      %7539 = vmatprep.subr.mxu0 0.0
      %7540 = vmatpush1.msra.mxu0 0.0
      %7541 = vmatprep.subr.mxu0 0.0
      %7542 = vmatpush1.msra.mxu0 0.0
      %7543 = vmatprep.subr.mxu0 0.0
      %7544 = vmatpush1.msra.mxu0 0.0
      %7545 = vmatprep.subr.mxu0 0.0
      %7546 = vmatpush1.msra.mxu0 0.0
      %7547 = vmatprep.subr.mxu0 0.0
      %7548 = vmatpush1.msra.mxu0 0.0
      %7549 = vmatprep.subr.mxu0 0.0
      %7550 = vmatpush1.msra.mxu0 0.0
      %7551 = vmatprep.subr.mxu0 0.0
      %7552 = vmatpush1.msra.mxu0 0.0
      %7553 = vmatprep.subr.mxu0 0.0
      %7554 = vmatpush1.msra.mxu0 0.0
      %7555 = vmatprep.subr.mxu0 0.0
      %7556 = vmatpush1.msra.mxu0 0.0
      %7557 = vmatprep.subr.mxu0 0.0
      %7558 = vmatpush1.msra.mxu0 0.0
      %7559 = vmatprep.subr.mxu0 0.0
      %7560 = vmatpush1.msra.mxu0 0.0
      %7561 = vmatprep.mubr.f32.mxu0 0.0
      %7562 = vmatmul.mubr.f32.gmra.mrb[0].mxu0 %v7495
      %v7563 = vpop.f32.mrb[0].mxu0
      %v7564 = vadd.f32 %v7492, %v7563
      %v7565 = vpop.f32.mrb[0].mxu0
      %7566 = vdwg.mxu0
      %vm7567 = vcmask 23552
      %7568 = vst.msk [vmem:[%s897] sm:$0xff] %vm7567, %v7564
      %p7569 = scmp.lt.s32.totalorder %s70, 1
      %s7570 = scalar_select %p7569, %s70, 1
      %s7571 = smul.addr %s7570, 8
      %s7572 = scalar_lea.vmem %s59, %s7571
      // Predicated region
      $region137: #{seis_forward.1} parent=135 // pred_check
        %p7573 = pneg %p702
      $region138: #{seis_forward.1} parent=135 // pred_check_branch
        %7575 = sbr.rel (%p7573) target = $region140
      $region139: #{seis_forward.1} parent=135 // pred_region
        _
      $region140: #{seis_forward.1} parent=135 // pred_fallthru
        _
    $region136: #{seis_forward.1} parent=5 // pred_fallthru
      _
    %p7576 = scmp.le.s32.totalorder 2, %s65
    // Predicated region
    $region141: #{seis_forward.1} parent=5 // pred_check
      %p7577 = pneg %p7576
    $region142: #{seis_forward.1} parent=5 // pred_check_branch
      %7579 = sbr.rel (%p7577) target = $region144
    $region143: #{seis_forward.1} parent=5 // pred_region
      %s7580 = ssub.s32 %s65, 2
      // Predicated region
      $region145: #{seis_forward.1} parent=143 // pred_check
        %p7581 = pneg %p708
      $region146: #{seis_forward.1} parent=143 // pred_check_branch
        %7583 = sbr.rel (%p7581) target = $region148
      $region147: #{seis_forward.1} parent=143 // pred_region
        %p7584 = scmp.lt.s32.totalorder %s71, 1
        %s7585 = scalar_select %p7584, %s71, 1
        %s7586 = smul.addr %s7585, 8
        %s7587 = scalar_lea.vmem %s59, %s7586
      $region148: #{seis_forward.1} parent=143 // pred_fallthru
        _
    $region144: #{seis_forward.1} parent=5 // pred_fallthru
      _
  $region6: #{seis_forward.1} parent=0 // loop_footer
    %s69 = sadd.s32 1, %s65
  $region7: #{seis_forward.1} parent=0 // loop_footer_branch
    %64 = sbr.rel target = $region3
  $region8: #{seis_forward.1} parent=0 // loop_exit
    _

</llo_original>
